<compile_context>
chip_gen: v7x
topology: tpu7x:2x2x1
jax: 0.10.0
libtpu: 0.0.40
codegen_flags: <defaults>
</compile_context>

<pallas_src>
import math
import functools

import jax
import jax.numpy as jnp
from jax.experimental import pallas as pl
from jax.experimental.pallas import tpu as pltpu


_TM = 256
_VMEM_LIMIT = 48 * 1024 * 1024
_EPS = 1e-5


def _round_up(x, m):
    return (x + m - 1) // m * m


def _pick_tm(M, target=_TM, min_tile=16):
    """Row-tile: multiple of 16 (bf16 sublane packing), >=2 tiles when possible."""
    if M <= min_tile:
        return M
    return min(target, _round_up(-(-M // 2), min_tile))


# ----------------------------------------------------------------------------
# In-kernel helpers
# ----------------------------------------------------------------------------

def _layernorm_f32(y, g, b, true_d):
    """LayerNorm over zero-padded rows; mean/var use the true feature count."""
    inv_d = jnp.float32(1.0 / true_d)
    mean = jnp.sum(y, axis=-1, keepdims=True) * inv_d
    var = jnp.maximum(
        jnp.sum(y * y, axis=-1, keepdims=True) * inv_d - mean * mean, 0.0)
    return (y - mean) * jax.lax.rsqrt(var + _EPS) * g + b


def _heads_attention_oproj(q, kv, mask0, wo_ref, H, dkp, scale):
    """q: (Sq, H*dkp) f32, kv: (Skv, 2*H*dkp) f32 (k heads then v heads).
    Returns sum_h softmax(q_h k_h^T) v_h @ wo_h  : (Sq, Dp) f32."""
    Sq = q.shape[0]
    Dp = wo_ref.shape[1]
    acc = jnp.zeros((Sq, Dp), jnp.float32)
    for h in range(H):                                # static unroll over heads
        qh = q[:, h * dkp:(h + 1) * dkp].astype(jnp.bfloat16)
        kh = kv[:, h * dkp:(h + 1) * dkp].astype(jnp.bfloat16)
        vh = kv[:, (H + h) * dkp:(H + h + 1) * dkp].astype(jnp.bfloat16)
        # contract the (zero-padded) head dim; no explicit transpose of K
        s = jax.lax.dot_general(qh, kh, (((1,), (1,)), ((), ())),
                                preferred_element_type=jnp.float32) * scale
        s = jnp.where(mask0, jnp.float32(-1e9), s)
        mx = jnp.max(s, axis=-1, keepdims=True)
        e = jnp.exp(s - mx)
        p = e * pl.reciprocal(jnp.sum(e, axis=-1, keepdims=True), approx=True)
        ctx = jnp.dot(p.astype(jnp.bfloat16), vh,
                      preferred_element_type=jnp.float32)
        acc = acc + jnp.dot(ctx.astype(jnp.bfloat16),
                            wo_ref[pl.ds(h * dkp, dkp), :],
                            preferred_element_type=jnp.float32)
    return acc


# ----------------------------------------------------------------------------
# Pallas kernels (one per fused sub-layer)
# ----------------------------------------------------------------------------

def _self_attn_layer_kernel(x_ref, m_ref, wqkv_ref, bqkv_ref, wo_ref, bo_ref,
                            g_ref, bta_ref, o_ref, *, H, dkp, d_model, scale):
    # x: (1,S,Dp) bf16 ; mask: (1,S,S) i32 ; weights bf16 ; out bf16
    x = x_ref[0]
    qkv = jnp.dot(x, wqkv_ref[...],
                  preferred_element_type=jnp.float32) + bqkv_ref[...]
    n = H * dkp
    acc = _heads_attention_oproj(qkv[:, :n], qkv[:, n:], m_ref[0] == 0,
                                 wo_ref, H, dkp, scale)
    y = acc + bo_ref[...] + x.astype(jnp.float32)          # residual
    o_ref[0] = _layernorm_f32(y, g_ref[...], bta_ref[...], d_model).astype(o_ref.dtype)


def _cross_attn_layer_kernel(x_ref, src_ref, m_ref, wq_ref, bq_ref, wkv_ref,
                             bkv_ref, wo_ref, bo_ref, g_ref, bta_ref, o_ref,
                             *, H, dkp, d_model, scale):
    x = x_ref[0]                                            # (St, Dp) bf16
    src = src_ref[0]                                        # (Se, Dp) bf16
    q = jnp.dot(x, wq_ref[...],
                preferred_element_type=jnp.float32) + bq_ref[...]
    kv = jnp.dot(src, wkv_ref[...],
                 preferred_element_type=jnp.float32) + bkv_ref[...]
    acc = _heads_attention_oproj(q, kv, m_ref[0] == 0, wo_ref, H, dkp, scale)
    y = acc + bo_ref[...] + x.astype(jnp.float32)
    o_ref[0] = _layernorm_f32(y, g_ref[...], bta_ref[...], d_model).astype(o_ref.dtype)


def _ffn_layer_kernel(x_ref, w1_ref, b1_ref, w2_ref, b2_ref, g_ref, bta_ref,
                      o_ref, *, d_model):
    x = x_ref[...]                                          # (tm, Dp) bf16
    h = jnp.dot(x, w1_ref[...],
                preferred_element_type=jnp.float32) + b1_ref[...]
    # PyTorch F.gelu default = exact erf GELU (f32 math)
    h = 0.5 * h * (1.0 + jax.lax.erf(h * jnp.float32(0.7071067811865476)))
    y = jnp.dot(h.astype(jnp.bfloat16), w2_ref[...],
                preferred_element_type=jnp.float32) + b2_ref[...]
    y = y + x.astype(jnp.float32)                           # residual
    o_ref[...] = _layernorm_f32(y, g_ref[...], bta_ref[...], d_model).astype(o_ref.dtype)


def _layernorm_kernel(x_ref, g_ref, bta_ref, o_ref, *, d_model):
    y = x_ref[...].astype(jnp.float32)
    o_ref[...] = _layernorm_f32(y, g_ref[...], bta_ref[...], d_model).astype(o_ref.dtype)


def _linear_kernel(x_ref, w_ref, b_ref, o_ref):
    o_ref[...] = jnp.dot(x_ref[...], w_ref[...],
                         preferred_element_type=jnp.float32) + b_ref[...]


# ----------------------------------------------------------------------------
# pallas_call wrappers
# ----------------------------------------------------------------------------

def self_attn_layer(x, mask, p, *, num_heads, d_model):
    B, S, Dp = x.shape
    dk = d_model // num_heads
    dkp = _round_up(dk, 128)
    hk = num_heads * dkp
    kern = functools.partial(_self_attn_layer_kernel, H=num_heads, dkp=dkp,
                             d_model=d_model, scale=1.0 / math.sqrt(dk))
    return pl.pallas_call(
        kern,
        out_shape=jax.ShapeDtypeStruct((B, S, Dp), jnp.bfloat16),
        grid=(B,),
        in_specs=[
            pl.BlockSpec((1, S, Dp), lambda b: (b, 0, 0)),
            pl.BlockSpec((1, S, S), lambda b: (b, 0, 0)),
            pl.BlockSpec((Dp, 3 * hk), lambda b: (0, 0)),   # weights: resident
            pl.BlockSpec((1, 3 * hk), lambda b: (0, 0)),
            pl.BlockSpec((hk, Dp), lambda b: (0, 0)),
            pl.BlockSpec((1, Dp), lambda b: (0, 0)),
            pl.BlockSpec((1, Dp), lambda b: (0, 0)),
            pl.BlockSpec((1, Dp), lambda b: (0, 0)),
        ],
        out_specs=pl.BlockSpec((1, S, Dp), lambda b: (b, 0, 0)),
        compiler_params=pltpu.CompilerParams(
            dimension_semantics=("parallel",), vmem_limit_bytes=_VMEM_LIMIT),
    )(x, mask, p["wqkv"], p["bqkv"], p["wo"], p["bo"], p["ln_g"], p["ln_b"])


def cross_attn_layer(x, enc_out, mask, p, *, num_heads, d_model):
    B, St, Dp = x.shape
    Se = enc_out.shape[1]
    dk = d_model // num_heads
    dkp = _round_up(dk, 128)
    hk = num_heads * dkp
    kern = functools.partial(_cross_attn_layer_kernel, H=num_heads, dkp=dkp,
                             d_model=d_model, scale=1.0 / math.sqrt(dk))
    return pl.pallas_call(
        kern,
        out_shape=jax.ShapeDtypeStruct((B, St, Dp), jnp.bfloat16),
        grid=(B,),
        in_specs=[
            pl.BlockSpec((1, St, Dp), lambda b: (b, 0, 0)),
            pl.BlockSpec((1, Se, Dp), lambda b: (b, 0, 0)),
            pl.BlockSpec((1, St, Se), lambda b: (b, 0, 0)),
            pl.BlockSpec((Dp, hk), lambda b: (0, 0)),
            pl.BlockSpec((1, hk), lambda b: (0, 0)),
            pl.BlockSpec((Dp, 2 * hk), lambda b: (0, 0)),
            pl.BlockSpec((1, 2 * hk), lambda b: (0, 0)),
            pl.BlockSpec((hk, Dp), lambda b: (0, 0)),
            pl.BlockSpec((1, Dp), lambda b: (0, 0)),
            pl.BlockSpec((1, Dp), lambda b: (0, 0)),
            pl.BlockSpec((1, Dp), lambda b: (0, 0)),
        ],
        out_specs=pl.BlockSpec((1, St, Dp), lambda b: (b, 0, 0)),
        compiler_params=pltpu.CompilerParams(
            dimension_semantics=("parallel",), vmem_limit_bytes=_VMEM_LIMIT),
    )(x, enc_out, mask, p["wq"], p["bq"], p["wkv"], p["bkv"], p["wo"], p["bo"],
      p["ln_g"], p["ln_b"])


def ffn_layer(x, p, *, d_model):
    B, S, Dp = x.shape
    M = B * S
    Fp = p["w1"].shape[1]
    x2 = x.reshape(M, Dp)
    tm = _pick_tm(M)
    Mp = _round_up(M, tm)
    if Mp != M:
        x2 = jnp.pad(x2, ((0, Mp - M), (0, 0)))
    out = pl.pallas_call(
        functools.partial(_ffn_layer_kernel, d_model=d_model),
        out_shape=jax.ShapeDtypeStruct((Mp, Dp), jnp.bfloat16),
        grid=(Mp // tm,),
        in_specs=[
            pl.BlockSpec((tm, Dp), lambda i: (i, 0)),
            pl.BlockSpec((Dp, Fp), lambda i: (0, 0)),
            pl.BlockSpec((1, Fp), lambda i: (0, 0)),
            pl.BlockSpec((Fp, Dp), lambda i: (0, 0)),
            pl.BlockSpec((1, Dp), lambda i: (0, 0)),
            pl.BlockSpec((1, Dp), lambda i: (0, 0)),
            pl.BlockSpec((1, Dp), lambda i: (0, 0)),
        ],
        out_specs=pl.BlockSpec((tm, Dp), lambda i: (i, 0)),
        compiler_params=pltpu.CompilerParams(
            dimension_semantics=("parallel",), vmem_limit_bytes=_VMEM_LIMIT),
    )(x2, p["w1"], p["b1"], p["w2"], p["b2"], p["ln_g"], p["ln_b"])
    if Mp != M:
        out = out[:M]
    return out.reshape(B, S, Dp)


def layernorm(x2, g, b, *, d_model):
    M, Dp = x2.shape
    tm = _pick_tm(M, target=1024)
    Mp = _round_up(M, tm)
    xp = x2 if Mp == M else jnp.pad(x2, ((0, Mp - M), (0, 0)))
    out = pl.pallas_call(
        functools.partial(_layernorm_kernel, d_model=d_model),
        out_shape=jax.ShapeDtypeStruct((Mp, Dp), jnp.bfloat16),
        grid=(Mp // tm,),
        in_specs=[
            pl.BlockSpec((tm, Dp), lambda i: (i, 0)),
            pl.BlockSpec((1, Dp), lambda i: (0, 0)),
            pl.BlockSpec((1, Dp), lambda i: (0, 0)),
        ],
        out_specs=pl.BlockSpec((tm, Dp), lambda i: (i, 0)),
        compiler_params=pltpu.CompilerParams(
            dimension_semantics=("parallel",), vmem_limit_bytes=_VMEM_LIMIT),
    )(xp, g, b)
    return out[:M] if Mp != M else out


def linear_out(x2, w, b, n_true):
    """Output projection: bf16 x @ bf16 w + b -> f32 logits (lane-dense, padded N)."""
    M, Dp = x2.shape
    Np = w.shape[1]                       # already padded to a multiple of 128
    tm = _pick_tm(M)
    Mp = _round_up(M, tm)
    xp = x2 if Mp == M else jnp.pad(x2, ((0, Mp - M), (0, 0)))
    if Np <= 1024:
        tn = Np
    elif Np % 512 == 0:
        tn = 512
    elif Np % 256 == 0:
        tn = 256
    else:
        tn = 128
    out = pl.pallas_call(
        _linear_kernel,
        out_shape=jax.ShapeDtypeStruct((Mp, Np), jnp.float32),
        grid=(Mp // tm, Np // tn),
        in_specs=[
            pl.BlockSpec((tm, Dp), lambda i, j: (i, 0)),
            pl.BlockSpec((Dp, tn), lambda i, j: (0, j)),
            pl.BlockSpec((1, tn), lambda i, j: (0, j)),
        ],
        out_specs=pl.BlockSpec((tm, tn), lambda i, j: (i, j)),
        compiler_params=pltpu.CompilerParams(
            dimension_semantics=("parallel", "parallel"),
            vmem_limit_bytes=_VMEM_LIMIT),
    )(xp, w, b)
    return out[:M, :n_true]


# ----------------------------------------------------------------------------
# Model glue (plain JAX: embedding, positional encoding, mask broadcast)
# ----------------------------------------------------------------------------

def _prep_mask(mask, B, Sq, Sk):
    if mask is None:
        return jnp.ones((B, Sq, Sk), jnp.int32)
    m = mask.astype(jnp.int32)
    m = m.reshape(B, m.shape[-2], m.shape[-1])
    return jnp.broadcast_to(m, (B, Sq, Sk))


def transformer_forward(kp, src, tgt, src_mask, tgt_mask, cfg):
    # TODO(synk): dropout layers are identity (eval-mode / deterministic forward).
    H = cfg["num_heads"]
    D = cfg["d_model"]
    Dp = _round_up(D, 128)
    B, Ss = src.shape
    St = tgt.shape[1]

    enc_self_mask = _prep_mask(src_mask, B, Ss, Ss)
    cross_mask = _prep_mask(src_mask, B, St, Ss)
    dec_self_mask = _prep_mask(tgt_mask, B, St, St)

    # Encoder
    x = (jnp.take(kp["enc"]["emb"], src, axis=0) * math.sqrt(D)
         + kp["pe"][None, :Ss]).astype(jnp.bfloat16)
    for lp in kp["enc"]["layers"]:
        x = self_attn_layer(x, enc_self_mask, lp["sa"], num_heads=H, d_model=D)
        x = ffn_layer(x, lp["ff"], d_model=D)
    enc_out = layernorm(x.reshape(B * Ss, Dp), kp["enc"]["norm_g"],
                        kp["enc"]["norm_b"], d_model=D).reshape(B, Ss, Dp)

    # Decoder
    y = (jnp.take(kp["dec"]["emb"], tgt, axis=0) * math.sqrt(D)
         + kp["pe"][None, :St]).astype(jnp.bfloat16)
    for lp in kp["dec"]["layers"]:
        y = self_attn_layer(y, dec_self_mask, lp["sa"], num_heads=H, d_model=D)
        y = cross_attn_layer(y, enc_out, cross_mask, lp["ca"],
                             num_heads=H, d_model=D)
        y = ffn_layer(y, lp["ff"], d_model=D)
    dec_out = layernorm(y.reshape(B * St, Dp), kp["dec"]["norm_g"],
                        kp["dec"]["norm_b"], d_model=D)

    logits = linear_out(dec_out, kp["out_w"], kp["out_b"], cfg["tgt_vocab"])
    return logits.reshape(B, St, cfg["tgt_vocab"])


# ----------------------------------------------------------------------------
# Deterministic parameter initialization (PyTorch nn.Linear-like layout)
# ----------------------------------------------------------------------------

class KeyGen:
    def __init__(self, key):
        self.key = key

    def __call__(self):
        self.key, sub = jax.random.split(self.key)
        return sub


def init_linear(kg, in_dim, out_dim):
    bound = 1.0 / math.sqrt(in_dim)
    w = jax.random.uniform(kg(), (in_dim, out_dim), jnp.float32, -bound, bound)
    b = jax.random.uniform(kg(), (out_dim,), jnp.float32, -bound, bound)
    return w, b


def init_mha(kg, d_model):
    wq, bq = init_linear(kg, d_model, d_model)
    wk, bk = init_linear(kg, d_model, d_model)
    wv, bv = init_linear(kg, d_model, d_model)
    wo, bo = init_linear(kg, d_model, d_model)
    return dict(wq=wq, bq=bq, wk=wk, bk=bk, wv=wv, bv=bv, wo=wo, bo=bo)


def init_enc_layer(kg, d_model, d_ff):
    w1, b1 = init_linear(kg, d_model, d_ff)
    w2, b2 = init_linear(kg, d_ff, d_model)
    return {
        "self_attn": init_mha(kg, d_model),
        "w1": w1, "b1": b1, "w2": w2, "b2": b2,
        "norm1_g": jnp.ones((d_model,), jnp.float32),
        "norm1_b": jnp.zeros((d_model,), jnp.float32),
        "norm2_g": jnp.ones((d_model,), jnp.float32),
        "norm2_b": jnp.zeros((d_model,), jnp.float32),
    }


def init_dec_layer(kg, d_model, d_ff):
    w1, b1 = init_linear(kg, d_model, d_ff)
    w2, b2 = init_linear(kg, d_ff, d_model)
    return {
        "self_attn": init_mha(kg, d_model),
        "cross_attn": init_mha(kg, d_model),
        "w1": w1, "b1": b1, "w2": w2, "b2": b2,
        "norm1_g": jnp.ones((d_model,), jnp.float32),
        "norm1_b": jnp.zeros((d_model,), jnp.float32),
        "norm2_g": jnp.ones((d_model,), jnp.float32),
        "norm2_b": jnp.zeros((d_model,), jnp.float32),
        "norm3_g": jnp.ones((d_model,), jnp.float32),
        "norm3_b": jnp.zeros((d_model,), jnp.float32),
    }


def make_positional_encoding(max_len, d_model):
    position = jnp.arange(max_len, dtype=jnp.float32)[:, None]
    div_term = jnp.exp(jnp.arange(0, d_model, 2, dtype=jnp.float32)
                       * (-math.log(10000.0) / d_model))
    pe = jnp.zeros((max_len, d_model), jnp.float32)
    pe = pe.at[:, 0::2].set(jnp.sin(position * div_term))
    pe = pe.at[:, 1::2].set(jnp.cos(position * div_term))
    return pe


def init_params(key, cfg):
    kg = KeyGen(key)
    D, dff = cfg["d_model"], cfg["d_ff"]
    enc = {
        "embedding": jax.random.normal(kg(), (cfg["src_vocab"], D), jnp.float32),
        "layers": [init_enc_layer(kg, D, dff) for _ in range(cfg["num_enc_layers"])],
        "norm_g": jnp.ones((D,), jnp.float32),
        "norm_b": jnp.zeros((D,), jnp.float32),
    }
    dec = {
        "embedding": jax.random.normal(kg(), (cfg["tgt_vocab"], D), jnp.float32),
        "layers": [init_dec_layer(kg, D, dff) for _ in range(cfg["num_dec_layers"])],
        "norm_g": jnp.ones((D,), jnp.float32),
        "norm_b": jnp.zeros((D,), jnp.float32),
    }
    out_w, out_b = init_linear(kg, D, cfg["tgt_vocab"])
    return {"enc": enc, "dec": dec, "out_w": out_w, "out_b": out_b,
            "pe": make_positional_encoding(cfg["max_seq_len"], D)}


# ----------------------------------------------------------------------------
# One-time parameter preparation: zero-pad to lane-dense layouts, pack heads on
# 128-aligned column/row blocks, cast matmul weights to bf16.
# ----------------------------------------------------------------------------

def _pad_vec(v, n):
    return jnp.zeros((n,), v.dtype).at[: v.shape[0]].set(v)


def _pad_mat(m, r, c):
    return jnp.zeros((r, c), m.dtype).at[: m.shape[0], : m.shape[1]].set(m)


def _pack_head_cols(w, H, dk, dkp, Dp):
    """(D, H*dk) -> (Dp, H*dkp); head h occupies lanes [h*dkp, h*dkp+dk)."""
    din = w.shape[0]
    out = jnp.zeros((Dp, H, dkp), jnp.float32)
    out = out.at[:din, :, :dk].set(w.reshape(din, H, dk))
    return out.reshape(Dp, H * dkp)


def _pack_head_cols_bias(b, H, dk, dkp):
    out = jnp.zeros((H, dkp), jnp.float32)
    out = out.at[:, :dk].set(b.reshape(H, dk))
    return out.reshape(H * dkp)


def _pack_head_rows(w, H, dk, dkp, Dp):
    """(H*dk, D) -> (H*dkp, Dp); head h occupies rows [h*dkp, h*dkp+dk)."""
    dout = w.shape[1]
    out = jnp.zeros((H, dkp, Dp), jnp.float32)
    out = out.at[:, :dk, :dout].set(w.reshape(H, dk, dout))
    return out.reshape(H * dkp, Dp)


def _prep_self_attn(p, ln_g, ln_b, H, dk, dkp, Dp):
    wqkv = jnp.concatenate(
        [_pack_head_cols(p[k], H, dk, dkp, Dp) for k in ("wq", "wk", "wv")],
        axis=1).astype(jnp.bfloat16)
    bqkv = jnp.concatenate(
        [_pack_head_cols_bias(p[k], H, dk, dkp) for k in ("bq", "bk", "bv")]
    ).reshape(1, -1)
    return {
        "wqkv": wqkv, "bqkv": bqkv,
        "wo": _pack_head_rows(p["wo"], H, dk, dkp, Dp).astype(jnp.bfloat16),
        "bo": _pad_vec(p["bo"], Dp).reshape(1, Dp),
        "ln_g": _pad_vec(ln_g, Dp).reshape(1, Dp),
        "ln_b": _pad_vec(ln_b, Dp).reshape(1, Dp),
    }


def _prep_cross_attn(p, ln_g, ln_b, H, dk, dkp, Dp):
    wkv = jnp.concatenate(
        [_pack_head_cols(p[k], H, dk, dkp, Dp) for k in ("wk", "wv")],
        axis=1).astype(jnp.bfloat16)
    bkv = jnp.concatenate(
        [_pack_head_cols_bias(p[k], H, dk, dkp) for k in ("bk", "bv")]
    ).reshape(1, -1)
    return {
        "wq": _pack_head_cols(p["wq"], H, dk, dkp, Dp).astype(jnp.bfloat16),
        "bq": _pack_head_cols_bias(p["bq"], H, dk, dkp).reshape(1, -1),
        "wkv": wkv, "bkv": bkv,
        "wo": _pack_head_rows(p["wo"], H, dk, dkp, Dp).astype(jnp.bfloat16),
        "bo": _pad_vec(p["bo"], Dp).reshape(1, Dp),
        "ln_g": _pad_vec(ln_g, Dp).reshape(1, Dp),
        "ln_b": _pad_vec(ln_b, Dp).reshape(1, Dp),
    }


def _prep_ffn(lp, g_key, b_key, Dp, Fp):
    return {
        "w1": _pad_mat(lp["w1"], Dp, Fp).astype(jnp.bfloat16),
        "b1": _pad_vec(lp["b1"], Fp).reshape(1, Fp),
        "w2": _pad_mat(lp["w2"], Fp, Dp).astype(jnp.bfloat16),
        "b2": _pad_vec(lp["b2"], Dp).reshape(1, Dp),
        "ln_g": _pad_vec(lp[g_key], Dp).reshape(1, Dp),
        "ln_b": _pad_vec(lp[b_key], Dp).reshape(1, Dp),
    }


def prepare_params(params, cfg):
    H, D = cfg["num_heads"], cfg["d_model"]
    dk = D // H
    dkp = _round_up(dk, 128)
    Dp = _round_up(D, 128)
    Fp = _round_up(cfg["d_ff"], 128)
    Vp = _round_up(cfg["tgt_vocab"], 128)

    def enc_layer(lp):
        return {"sa": _prep_self_attn(lp["self_attn"], lp["norm1_g"],
                                      lp["norm1_b"], H, dk, dkp, Dp),
                "ff": _prep_ffn(lp, "norm2_g", "norm2_b", Dp, Fp)}

    def dec_layer(lp):
        return {"sa": _prep_self_attn(lp["self_attn"], lp["norm1_g"],
                                      lp["norm1_b"], H, dk, dkp, Dp),
                "ca": _prep_cross_attn(lp["cross_attn"], lp["norm2_g"],
                                       lp["norm2_b"], H, dk, dkp, Dp),
                "ff": _prep_ffn(lp, "norm3_g", "norm3_b", Dp, Fp)}

    return {
        "pe": _pad_mat(params["pe"], params["pe"].shape[0], Dp),
        "enc": {
            "emb": _pad_mat(params["enc"]["embedding"],
                            params["enc"]["embedding"].shape[0], Dp),
            "layers": [enc_layer(lp) for lp in params["enc"]["layers"]],
            "norm_g": _pad_vec(params["enc"]["norm_g"], Dp).reshape(1, Dp),
            "norm_b": _pad_vec(params["enc"]["norm_b"], Dp).reshape(1, Dp),
        },
        "dec": {
            "emb": _pad_mat(params["dec"]["embedding"],
                            params["dec"]["embedding"].shape[0], Dp),
            "layers": [dec_layer(lp) for lp in params["dec"]["layers"]],
            "norm_g": _pad_vec(params["dec"]["norm_g"], Dp).reshape(1, Dp),
            "norm_b": _pad_vec(params["dec"]["norm_b"], Dp).reshape(1, Dp),
        },
        "out_w": _pad_mat(params["out_w"], Dp, Vp).astype(jnp.bfloat16),
        "out_b": _pad_vec(params["out_b"], Vp).reshape(1, Vp),
    }


# ----------------------------------------------------------------------------
# Main
# ----------------------------------------------------------------------------

if __name__ == "__main__":
    cfg = dict(
        src_vocab=37,
        tgt_vocab=41,
        d_model=32,
        num_heads=4,
        d_ff=64,
        num_enc_layers=2,
        num_dec_layers=2,
        max_seq_len=64,
    )
    B, S_src, S_tgt = 2, 8, 8

    key = jax.random.PRNGKey(0)
    k_p, k_src, k_tgt = jax.random.split(key, 3)
    params = init_params(k_p, cfg)
    kparams = prepare_params(params, cfg)   # one-time pad + pack + bf16 cast

    src = jax.random.randint(k_src, (B, S_src), 1, cfg["src_vocab"], jnp.int32)
    tgt = jax.random.randint(k_tgt, (B, S_tgt), 1, cfg["tgt_vocab"], jnp.int32)
    # introduce some padding tokens so the padding mask is exercised
    src = src.at[:, -2:].set(0)
    tgt = tgt.at[:, -1:].set(0)

    # masks (same semantics as Transformer.create_padding_mask / look_ahead)
    src_mask = (src != 0)[:, None, None, :]                       # (B,1,1,S_src)
    look_ahead = ~jnp.triu(jnp.ones((S_tgt, S_tgt), dtype=bool), k=1)
    tgt_mask = (tgt != 0)[:, None, None, :] & look_ahead[None, None, :, :]

    fwd = jax.jit(functools.partial(transformer_forward, cfg=cfg))
    logits = fwd(kparams, src, tgt, src_mask, tgt_mask)
    jax.block_until_ready(logits)

    assert logits.shape == (B, S_tgt, cfg["tgt_vocab"]), logits.shape
    assert bool(jnp.all(jnp.isfinite(logits)))
    print("KERNEL_OK")
</pallas_src>

<mosaic_0001>
module attributes {stable_mosaic.version = 11 : i64} {
  func.func @_ffn_layer_kernel(%arg0: i32, %arg1: memref<16x128xbf16, #tpu.memory_space<vmem>>, %arg2: memref<128x128xbf16, #tpu.memory_space<vmem>>, %arg3: memref<1x128xf32, #tpu.memory_space<vmem>>, %arg4: memref<128x128xbf16, #tpu.memory_space<vmem>>, %arg5: memref<1x128xf32, #tpu.memory_space<vmem>>, %arg6: memref<1x128xf32, #tpu.memory_space<vmem>>, %arg7: memref<1x128xf32, #tpu.memory_space<vmem>>, %arg8: memref<16x128xbf16, #tpu.memory_space<vmem>>) attributes {dimension_semantics = [#tpu.dimension_semantics<parallel>], iteration_bounds = array<i64: 1>, scalar_prefetch = 0 : i64, scratch_operands = 0 : i64, tpu.core_type = #tpu.core_type<tc>, window_params = [{transform_indices = @transform_0, window_bounds = array<i64: 16, 128>}, {pipeline_mode = #tpu.pipeline_mode<synchronous>, transform_indices = @transform_1, window_bounds = array<i64: 128, 128>}, {pipeline_mode = #tpu.pipeline_mode<synchronous>, transform_indices = @transform_2, window_bounds = array<i64: 1, 128>}, {pipeline_mode = #tpu.pipeline_mode<synchronous>, transform_indices = @transform_3, window_bounds = array<i64: 128, 128>}, {pipeline_mode = #tpu.pipeline_mode<synchronous>, transform_indices = @transform_4, window_bounds = array<i64: 1, 128>}, {pipeline_mode = #tpu.pipeline_mode<synchronous>, transform_indices = @transform_5, window_bounds = array<i64: 1, 128>}, {pipeline_mode = #tpu.pipeline_mode<synchronous>, transform_indices = @transform_6, window_bounds = array<i64: 1, 128>}, {transform_indices = @transform_7, window_bounds = array<i64: 16, 128>}]} {
    %c0 = arith.constant 0 : index
    %c0_0 = arith.constant 0 : index
    %0 = vector.load %arg1[%c0, %c0_0] : memref<16x128xbf16, #tpu.memory_space<vmem>>, vector<16x128xbf16>
    %c0_1 = arith.constant 0 : index
    %c0_2 = arith.constant 0 : index
    %1 = vector.load %arg2[%c0_1, %c0_2] : memref<128x128xbf16, #tpu.memory_space<vmem>>, vector<128x128xbf16>
    %cst = arith.constant dense<0.000000e+00> : vector<16x128xf32>
    %2 = tpu.matmul %0, %1, %cst {dimension_numbers = #tpu.dot_dimension_numbers<[1], [0], [0], [1], [0, 0, 1, 1], [], []>} : vector<16x128xbf16>, vector<128x128xbf16>, vector<16x128xf32> -> vector<16x128xf32>
    %c0_3 = arith.constant 0 : index
    %c0_4 = arith.constant 0 : index
    %3 = vector.load %arg3[%c0_3, %c0_4] : memref<1x128xf32, #tpu.memory_space<vmem>>, vector<1x128xf32>
    %4 = vector.broadcast %3 : vector<1x128xf32> to vector<16x128xf32>
    %5 = arith.addf %2, %4 : vector<16x128xf32>
    %cst_5 = arith.constant 5.000000e-01 : f32
    %6 = vector.broadcast %cst_5 : f32 to vector<16x128xf32>
    %7 = arith.mulf %6, %5 : vector<16x128xf32>
    %cst_6 = arith.constant 0.707106769 : f32
    %8 = vector.broadcast %cst_6 : f32 to vector<16x128xf32>
    %9 = arith.mulf %5, %8 : vector<16x128xf32>
    %10 = math.erf %9 : vector<16x128xf32>
    %cst_7 = arith.constant 1.000000e+00 : f32
    %11 = vector.broadcast %cst_7 : f32 to vector<16x128xf32>
    %12 = arith.addf %11, %10 : vector<16x128xf32>
    %13 = arith.mulf %7, %12 : vector<16x128xf32>
    %14 = arith.truncf %13 : vector<16x128xf32> to vector<16x128xbf16>
    %c0_8 = arith.constant 0 : index
    %c0_9 = arith.constant 0 : index
    %15 = vector.load %arg4[%c0_8, %c0_9] : memref<128x128xbf16, #tpu.memory_space<vmem>>, vector<128x128xbf16>
    %cst_10 = arith.constant dense<0.000000e+00> : vector<16x128xf32>
    %16 = tpu.matmul %14, %15, %cst_10 {dimension_numbers = #tpu.dot_dimension_numbers<[1], [0], [0], [1], [0, 0, 1, 1], [], []>} : vector<16x128xbf16>, vector<128x128xbf16>, vector<16x128xf32> -> vector<16x128xf32>
    %c0_11 = arith.constant 0 : index
    %c0_12 = arith.constant 0 : index
    %17 = vector.load %arg5[%c0_11, %c0_12] : memref<1x128xf32, #tpu.memory_space<vmem>>, vector<1x128xf32>
    %18 = vector.broadcast %17 : vector<1x128xf32> to vector<16x128xf32>
    %19 = arith.addf %16, %18 : vector<16x128xf32>
    %20 = arith.extf %0 : vector<16x128xbf16> to vector<16x128xf32>
    %21 = arith.addf %19, %20 : vector<16x128xf32>
    %c0_13 = arith.constant 0 : index
    %c0_14 = arith.constant 0 : index
    %22 = vector.load %arg6[%c0_13, %c0_14] : memref<1x128xf32, #tpu.memory_space<vmem>>, vector<1x128xf32>
    %c0_15 = arith.constant 0 : index
    %c0_16 = arith.constant 0 : index
    %23 = vector.load %arg7[%c0_15, %c0_16] : memref<1x128xf32, #tpu.memory_space<vmem>>, vector<1x128xf32>
    %cst_17 = arith.constant dense<0.000000e+00> : vector<16xf32>
    %24 = vector.multi_reduction <add>, %21, %cst_17 [1] : vector<16x128xf32> to vector<16xf32>
    %25 = vector.shape_cast %24 : vector<16xf32> to vector<16x1xf32>
    %cst_18 = arith.constant 3.125000e-02 : f32
    %26 = vector.broadcast %cst_18 : f32 to vector<16x1xf32>
    %27 = arith.mulf %25, %26 : vector<16x1xf32>
    %28 = arith.mulf %21, %21 : vector<16x128xf32>
    %cst_19 = arith.constant dense<0.000000e+00> : vector<16xf32>
    %29 = vector.multi_reduction <add>, %28, %cst_19 [1] : vector<16x128xf32> to vector<16xf32>
    %30 = vector.shape_cast %29 : vector<16xf32> to vector<16x1xf32>
    %cst_20 = arith.constant 3.125000e-02 : f32
    %31 = vector.broadcast %cst_20 : f32 to vector<16x1xf32>
    %32 = arith.mulf %30, %31 : vector<16x1xf32>
    %33 = arith.mulf %27, %27 : vector<16x1xf32>
    %34 = arith.subf %32, %33 : vector<16x1xf32>
    %cst_21 = arith.constant 0.000000e+00 : f32
    %35 = vector.broadcast %cst_21 : f32 to vector<16x1xf32>
    %36 = arith.maximumf %34, %35 : vector<16x1xf32>
    %37 = vector.broadcast %27 : vector<16x1xf32> to vector<16x128xf32>
    %38 = arith.subf %21, %37 : vector<16x128xf32>
    %cst_22 = arith.constant 9.99999974E-6 : f32
    %39 = vector.broadcast %cst_22 : f32 to vector<16x1xf32>
    %40 = arith.addf %36, %39 : vector<16x1xf32>
    %41 = math.rsqrt %40 : vector<16x1xf32>
    %42 = vector.broadcast %41 : vector<16x1xf32> to vector<16x128xf32>
    %43 = arith.mulf %38, %42 : vector<16x128xf32>
    %44 = vector.broadcast %22 : vector<1x128xf32> to vector<16x128xf32>
    %45 = arith.mulf %43, %44 : vector<16x128xf32>
    %46 = vector.broadcast %23 : vector<1x128xf32> to vector<16x128xf32>
    %47 = arith.addf %45, %46 : vector<16x128xf32>
    %48 = arith.truncf %47 : vector<16x128xf32> to vector<16x128xbf16>
    %c0_23 = arith.constant 0 : index
    %c0_24 = arith.constant 0 : index
    %49 = vector.load %arg8[%c0_23, %c0_24] : memref<16x128xbf16, #tpu.memory_space<vmem>>, vector<16x128xbf16>
    tpu.vector_store %arg8[%c0_23, %c0_24], %48 {strides = array<i32>} : memref<16x128xbf16, #tpu.memory_space<vmem>>, vector<16x128xbf16>,
    return
  }
  func.func @transform_0(%arg0: i32) -> (i32, i32) {
    %c0_i32 = arith.constant 0 : i32
    %c0_i32_0 = arith.constant 0 : i32
    return %arg0, %c0_i32 : i32, i32
  }
  func.func @transform_1(%arg0: i32) -> (i32, i32) {
    %c0_i32 = arith.constant 0 : i32
    %c0_i32_0 = arith.constant 0 : i32
    %c0_i32_1 = arith.constant 0 : i32
    return %c0_i32, %c0_i32_0 : i32, i32
  }
  func.func @transform_2(%arg0: i32) -> (i32, i32) {
    %c0_i32 = arith.constant 0 : i32
    %c0_i32_0 = arith.constant 0 : i32
    %c0_i32_1 = arith.constant 0 : i32
    return %c0_i32, %c0_i32_0 : i32, i32
  }
  func.func @transform_3(%arg0: i32) -> (i32, i32) {
    %c0_i32 = arith.constant 0 : i32
    %c0_i32_0 = arith.constant 0 : i32
    %c0_i32_1 = arith.constant 0 : i32
    return %c0_i32, %c0_i32_0 : i32, i32
  }
  func.func @transform_4(%arg0: i32) -> (i32, i32) {
    %c0_i32 = arith.constant 0 : i32
    %c0_i32_0 = arith.constant 0 : i32
    %c0_i32_1 = arith.constant 0 : i32
    return %c0_i32, %c0_i32_0 : i32, i32
  }
  func.func @transform_5(%arg0: i32) -> (i32, i32) {
    %c0_i32 = arith.constant 0 : i32
    %c0_i32_0 = arith.constant 0 : i32
    %c0_i32_1 = arith.constant 0 : i32
    return %c0_i32, %c0_i32_0 : i32, i32
  }
  func.func @transform_6(%arg0: i32) -> (i32, i32) {
    %c0_i32 = arith.constant 0 : i32
    %c0_i32_0 = arith.constant 0 : i32
    %c0_i32_1 = arith.constant 0 : i32
    return %c0_i32, %c0_i32_0 : i32, i32
  }
  func.func @transform_7(%arg0: i32) -> (i32, i32) {
    %c0_i32 = arith.constant 0 : i32
    %c0_i32_0 = arith.constant 0 : i32
    return %arg0, %c0_i32 : i32, i32
  }
}

module attributes {stable_mosaic.version = 11 : i64} {
  func.func @_self_attn_layer_kernel(%arg0: i32, %arg1: memref<1x8x128xbf16, #tpu.memory_space<vmem>>, %arg2: memref<1x8x8xi32, #tpu.memory_space<vmem>>, %arg3: memref<128x1536xbf16, #tpu.memory_space<vmem>>, %arg4: memref<1x1536xf32, #tpu.memory_space<vmem>>, %arg5: memref<512x128xbf16, #tpu.memory_space<vmem>>, %arg6: memref<1x128xf32, #tpu.memory_space<vmem>>, %arg7: memref<1x128xf32, #tpu.memory_space<vmem>>, %arg8: memref<1x128xf32, #tpu.memory_space<vmem>>, %arg9: memref<1x8x128xbf16, #tpu.memory_space<vmem>>) attributes {dimension_semantics = [#tpu.dimension_semantics<parallel>], iteration_bounds = array<i64: 2>, scalar_prefetch = 0 : i64, scratch_operands = 0 : i64, tpu.core_type = #tpu.core_type<tc>, window_params = [{transform_indices = @transform_0, window_bounds = array<i64: 1, 8, 128>}, {transform_indices = @transform_1, window_bounds = array<i64: 1, 8, 8>}, {pipeline_mode = #tpu.pipeline_mode<synchronous>, transform_indices = @transform_2, window_bounds = array<i64: 128, 1536>}, {pipeline_mode = #tpu.pipeline_mode<synchronous>, transform_indices = @transform_3, window_bounds = array<i64: 1, 1536>}, {pipeline_mode = #tpu.pipeline_mode<synchronous>, transform_indices = @transform_4, window_bounds = array<i64: 512, 128>}, {pipeline_mode = #tpu.pipeline_mode<synchronous>, transform_indices = @transform_5, window_bounds = array<i64: 1, 128>}, {pipeline_mode = #tpu.pipeline_mode<synchronous>, transform_indices = @transform_6, window_bounds = array<i64: 1, 128>}, {pipeline_mode = #tpu.pipeline_mode<synchronous>, transform_indices = @transform_7, window_bounds = array<i64: 1, 128>}, {transform_indices = @transform_8, window_bounds = array<i64: 1, 8, 128>}]} {
    %c0 = arith.constant 0 : index
    %c0_0 = arith.constant 0 : index
    %c0_1 = arith.constant 0 : index
    %0 = vector.load %arg1[%c0, %c0_0, %c0_1] : memref<1x8x128xbf16, #tpu.memory_space<vmem>>, vector<1x8x128xbf16>
    %1 = vector.shape_cast %0 : vector<1x8x128xbf16> to vector<8x128xbf16>
    %c0_2 = arith.constant 0 : index
    %c0_3 = arith.constant 0 : index
    %2 = vector.load %arg3[%c0_2, %c0_3] : memref<128x1536xbf16, #tpu.memory_space<vmem>>, vector<128x1536xbf16>
    %cst = arith.constant dense<0.000000e+00> : vector<8x1536xf32>
    %3 = tpu.matmul %1, %2, %cst {dimension_numbers = #tpu.dot_dimension_numbers<[1], [0], [0], [1], [0, 0, 1, 1], [], []>} : vector<8x128xbf16>, vector<128x1536xbf16>, vector<8x1536xf32> -> vector<8x1536xf32>
    %c0_4 = arith.constant 0 : index
    %c0_5 = arith.constant 0 : index
    %4 = vector.load %arg4[%c0_4, %c0_5] : memref<1x1536xf32, #tpu.memory_space<vmem>>, vector<1x1536xf32>
    %5 = vector.broadcast %4 : vector<1x1536xf32> to vector<8x1536xf32>
    %6 = arith.addf %3, %5 : vector<8x1536xf32>
    %7 = vector.extract_strided_slice %6 {offsets = [0, 0], sizes = [8, 512], strides = [1, 1]} : vector<8x1536xf32> to vector<8x512xf32>
    %8 = vector.extract_strided_slice %6 {offsets = [0, 512], sizes = [8, 1024], strides = [1, 1]} : vector<8x1536xf32> to vector<8x1024xf32>
    %c0_6 = arith.constant 0 : index
    %c0_7 = arith.constant 0 : index
    %c0_8 = arith.constant 0 : index
    %9 = vector.load %arg2[%c0_6, %c0_7, %c0_8] : memref<1x8x8xi32, #tpu.memory_space<vmem>>, vector<1x8x8xi32>
    %10 = vector.shape_cast %9 : vector<1x8x8xi32> to vector<8x8xi32>
    %c0_i32 = arith.constant 0 : i32
    %11 = vector.broadcast %c0_i32 : i32 to vector<8x8xi32>
    %12 = arith.cmpi eq, %10, %11 : vector<8x8xi32>
    %cst_9 = arith.constant 0.000000e+00 : f32
    %13 = vector.broadcast %cst_9 : f32 to vector<8x128xf32>
    %14 = vector.extract_strided_slice %7 {offsets = [0, 0], sizes = [8, 128], strides = [1, 1]} : vector<8x512xf32> to vector<8x128xf32>
    %15 = arith.truncf %14 : vector<8x128xf32> to vector<8x128xbf16>
    %16 = vector.extract_strided_slice %8 {offsets = [0, 0], sizes = [8, 128], strides = [1, 1]} : vector<8x1024xf32> to vector<8x128xf32>
    %17 = arith.truncf %16 : vector<8x128xf32> to vector<8x128xbf16>
    %18 = vector.extract_strided_slice %8 {offsets = [0, 512], sizes = [8, 128], strides = [1, 1]} : vector<8x1024xf32> to vector<8x128xf32>
    %19 = arith.truncf %18 : vector<8x128xf32> to vector<8x128xbf16>
    %cst_10 = arith.constant dense<0.000000e+00> : vector<8x8xf32>
    %20 = tpu.matmul %15, %17, %cst_10 {dimension_numbers = #tpu.dot_dimension_numbers<[1], [1], [0], [0], [0, 0, 1, 0], [], []>} : vector<8x128xbf16>, vector<8x128xbf16>, vector<8x8xf32> -> vector<8x8xf32>
    %cst_11 = arith.constant 0.353553385 : f32
    %21 = vector.broadcast %cst_11 : f32 to vector<8x8xf32>
    %22 = arith.mulf %20, %21 : vector<8x8xf32>
    %cst_12 = arith.constant -1.000000e+09 : f32
    %23 = vector.broadcast %cst_12 : f32 to vector<8x8xf32>
    %24 = arith.select %12, %23, %22 : vector<8x8xi1>, vector<8x8xf32>
    %cst_13 = arith.constant dense<0xFF800000> : vector<8xf32>
    %25 = vector.multi_reduction <maximumf>, %24, %cst_13 [1] : vector<8x8xf32> to vector<8xf32>
    %26 = vector.shape_cast %25 : vector<8xf32> to vector<8x1xf32>
    %27 = vector.broadcast %26 : vector<8x1xf32> to vector<8x8xf32>
    %28 = arith.subf %24, %27 : vector<8x8xf32>
    %29 = math.exp %28 : vector<8x8xf32>
    %cst_14 = arith.constant dense<0.000000e+00> : vector<8xf32>
    %30 = vector.multi_reduction <add>, %29, %cst_14 [1] : vector<8x8xf32> to vector<8xf32>
    %31 = vector.shape_cast %30 : vector<8xf32> to vector<8x1xf32>
    %32 = tpu.reciprocal %31 {approx = true} : vector<8x1xf32> -> vector<8x1xf32>
    %33 = vector.broadcast %32 : vector<8x1xf32> to vector<8x8xf32>
    %34 = arith.mulf %29, %33 : vector<8x8xf32>
    %35 = arith.truncf %34 : vector<8x8xf32> to vector<8x8xbf16>
    %cst_15 = arith.constant dense<0.000000e+00> : vector<8x128xf32>
    %36 = tpu.matmul %35, %19, %cst_15 {dimension_numbers = #tpu.dot_dimension_numbers<[1], [0], [0], [1], [0, 0, 1, 1], [], []>} : vector<8x8xbf16>, vector<8x128xbf16>, vector<8x128xf32> -> vector<8x128xf32>
    %37 = arith.truncf %36 : vector<8x128xf32> to vector<8x128xbf16>
    %c0_16 = arith.constant 0 : index
    %c0_17 = arith.constant 0 : index
    %38 = vector.load %arg5[%c0_16, %c0_17] : memref<512x128xbf16, #tpu.memory_space<vmem>>, vector<128x128xbf16>
    %cst_18 = arith.constant dense<0.000000e+00> : vector<8x128xf32>
    %39 = tpu.matmul %37, %38, %cst_18 {dimension_numbers = #tpu.dot_dimension_numbers<[1], [0], [0], [1], [0, 0, 1, 1], [], []>} : vector<8x128xbf16>, vector<128x128xbf16>, vector<8x128xf32> -> vector<8x128xf32>
    %40 = arith.addf %13, %39 : vector<8x128xf32>
    %41 = vector.extract_strided_slice %7 {offsets = [0, 128], sizes = [8, 128], strides = [1, 1]} : vector<8x512xf32> to vector<8x128xf32>
    %42 = arith.truncf %41 : vector<8x128xf32> to vector<8x128xbf16>
    %43 = vector.extract_strided_slice %8 {offsets = [0, 128], sizes = [8, 128], strides = [1, 1]} : vector<8x1024xf32> to vector<8x128xf32>
    %44 = arith.truncf %43 : vector<8x128xf32> to vector<8x128xbf16>
    %45 = vector.extract_strided_slice %8 {offsets = [0, 640], sizes = [8, 128], strides = [1, 1]} : vector<8x1024xf32> to vector<8x128xf32>
    %46 = arith.truncf %45 : vector<8x128xf32> to vector<8x128xbf16>
    %cst_19 = arith.constant dense<0.000000e+00> : vector<8x8xf32>
    %47 = tpu.matmul %42, %44, %cst_19 {dimension_numbers = #tpu.dot_dimension_numbers<[1], [1], [0], [0], [0, 0, 1, 0], [], []>} : vector<8x128xbf16>, vector<8x128xbf16>, vector<8x8xf32> -> vector<8x8xf32>
    %cst_20 = arith.constant 0.353553385 : f32
    %48 = vector.broadcast %cst_20 : f32 to vector<8x8xf32>
    %49 = arith.mulf %47, %48 : vector<8x8xf32>
    %cst_21 = arith.constant -1.000000e+09 : f32
    %50 = vector.broadcast %cst_21 : f32 to vector<8x8xf32>
    %51 = arith.select %12, %50, %49 : vector<8x8xi1>, vector<8x8xf32>
    %cst_22 = arith.constant dense<0xFF800000> : vector<8xf32>
    %52 = vector.multi_reduction <maximumf>, %51, %cst_22 [1] : vector<8x8xf32> to vector<8xf32>
    %53 = vector.shape_cast %52 : vector<8xf32> to vector<8x1xf32>
    %54 = vector.broadcast %53 : vector<8x1xf32> to vector<8x8xf32>
    %55 = arith.subf %51, %54 : vector<8x8xf32>
    %56 = math.exp %55 : vector<8x8xf32>
    %cst_23 = arith.constant dense<0.000000e+00> : vector<8xf32>
    %57 = vector.multi_reduction <add>, %56, %cst_23 [1] : vector<8x8xf32> to vector<8xf32>
    %58 = vector.shape_cast %57 : vector<8xf32> to vector<8x1xf32>
    %59 = tpu.reciprocal %58 {approx = true} : vector<8x1xf32> -> vector<8x1xf32>
    %60 = vector.broadcast %59 : vector<8x1xf32> to vector<8x8xf32>
    %61 = arith.mulf %56, %60 : vector<8x8xf32>
    %62 = arith.truncf %61 : vector<8x8xf32> to vector<8x8xbf16>
    %cst_24 = arith.constant dense<0.000000e+00> : vector<8x128xf32>
    %63 = tpu.matmul %62, %46, %cst_24 {dimension_numbers = #tpu.dot_dimension_numbers<[1], [0], [0], [1], [0, 0, 1, 1], [], []>} : vector<8x8xbf16>, vector<8x128xbf16>, vector<8x128xf32> -> vector<8x128xf32>
    %64 = arith.truncf %63 : vector<8x128xf32> to vector<8x128xbf16>
    %c128 = arith.constant 128 : index
    %c0_25 = arith.constant 0 : index
    %65 = vector.load %arg5[%c128, %c0_25] : memref<512x128xbf16, #tpu.memory_space<vmem>>, vector<128x128xbf16>
    %cst_26 = arith.constant dense<0.000000e+00> : vector<8x128xf32>
    %66 = tpu.matmul %64, %65, %cst_26 {dimension_numbers = #tpu.dot_dimension_numbers<[1], [0], [0], [1], [0, 0, 1, 1], [], []>} : vector<8x128xbf16>, vector<128x128xbf16>, vector<8x128xf32> -> vector<8x128xf32>
    %67 = arith.addf %40, %66 : vector<8x128xf32>
    %68 = vector.extract_strided_slice %7 {offsets = [0, 256], sizes = [8, 128], strides = [1, 1]} : vector<8x512xf32> to vector<8x128xf32>
    %69 = arith.truncf %68 : vector<8x128xf32> to vector<8x128xbf16>
    %70 = vector.extract_strided_slice %8 {offsets = [0, 256], sizes = [8, 128], strides = [1, 1]} : vector<8x1024xf32> to vector<8x128xf32>
    %71 = arith.truncf %70 : vector<8x128xf32> to vector<8x128xbf16>
    %72 = vector.extract_strided_slice %8 {offsets = [0, 768], sizes = [8, 128], strides = [1, 1]} : vector<8x1024xf32> to vector<8x128xf32>
    %73 = arith.truncf %72 : vector<8x128xf32> to vector<8x128xbf16>
    %cst_27 = arith.constant dense<0.000000e+00> : vector<8x8xf32>
    %74 = tpu.matmul %69, %71, %cst_27 {dimension_numbers = #tpu.dot_dimension_numbers<[1], [1], [0], [0], [0, 0, 1, 0], [], []>} : vector<8x128xbf16>, vector<8x128xbf16>, vector<8x8xf32> -> vector<8x8xf32>
    %cst_28 = arith.constant 0.353553385 : f32
    %75 = vector.broadcast %cst_28 : f32 to vector<8x8xf32>
    %76 = arith.mulf %74, %75 : vector<8x8xf32>
    %cst_29 = arith.constant -1.000000e+09 : f32
    %77 = vector.broadcast %cst_29 : f32 to vector<8x8xf32>
    %78 = arith.select %12, %77, %76 : vector<8x8xi1>, vector<8x8xf32>
    %cst_30 = arith.constant dense<0xFF800000> : vector<8xf32>
    %79 = vector.multi_reduction <maximumf>, %78, %cst_30 [1] : vector<8x8xf32> to vector<8xf32>
    %80 = vector.shape_cast %79 : vector<8xf32> to vector<8x1xf32>
    %81 = vector.broadcast %80 : vector<8x1xf32> to vector<8x8xf32>
    %82 = arith.subf %78, %81 : vector<8x8xf32>
    %83 = math.exp %82 : vector<8x8xf32>
    %cst_31 = arith.constant dense<0.000000e+00> : vector<8xf32>
    %84 = vector.multi_reduction <add>, %83, %cst_31 [1] : vector<8x8xf32> to vector<8xf32>
    %85 = vector.shape_cast %84 : vector<8xf32> to vector<8x1xf32>
    %86 = tpu.reciprocal %85 {approx = true} : vector<8x1xf32> -> vector<8x1xf32>
    %87 = vector.broadcast %86 : vector<8x1xf32> to vector<8x8xf32>
    %88 = arith.mulf %83, %87 : vector<8x8xf32>
    %89 = arith.truncf %88 : vector<8x8xf32> to vector<8x8xbf16>
    %cst_32 = arith.constant dense<0.000000e+00> : vector<8x128xf32>
    %90 = tpu.matmul %89, %73, %cst_32 {dimension_numbers = #tpu.dot_dimension_numbers<[1], [0], [0], [1], [0, 0, 1, 1], [], []>} : vector<8x8xbf16>, vector<8x128xbf16>, vector<8x128xf32> -> vector<8x128xf32>
    %91 = arith.truncf %90 : vector<8x128xf32> to vector<8x128xbf16>
    %c256 = arith.constant 256 : index
    %c0_33 = arith.constant 0 : index
    %92 = vector.load %arg5[%c256, %c0_33] : memref<512x128xbf16, #tpu.memory_space<vmem>>, vector<128x128xbf16>
    %cst_34 = arith.constant dense<0.000000e+00> : vector<8x128xf32>
    %93 = tpu.matmul %91, %92, %cst_34 {dimension_numbers = #tpu.dot_dimension_numbers<[1], [0], [0], [1], [0, 0, 1, 1], [], []>} : vector<8x128xbf16>, vector<128x128xbf16>, vector<8x128xf32> -> vector<8x128xf32>
    %94 = arith.addf %67, %93 : vector<8x128xf32>
    %95 = vector.extract_strided_slice %7 {offsets = [0, 384], sizes = [8, 128], strides = [1, 1]} : vector<8x512xf32> to vector<8x128xf32>
    %96 = arith.truncf %95 : vector<8x128xf32> to vector<8x128xbf16>
    %97 = vector.extract_strided_slice %8 {offsets = [0, 384], sizes = [8, 128], strides = [1, 1]} : vector<8x1024xf32> to vector<8x128xf32>
    %98 = arith.truncf %97 : vector<8x128xf32> to vector<8x128xbf16>
    %99 = vector.extract_strided_slice %8 {offsets = [0, 896], sizes = [8, 128], strides = [1, 1]} : vector<8x1024xf32> to vector<8x128xf32>
    %100 = arith.truncf %99 : vector<8x128xf32> to vector<8x128xbf16>
    %cst_35 = arith.constant dense<0.000000e+00> : vector<8x8xf32>
    %101 = tpu.matmul %96, %98, %cst_35 {dimension_numbers = #tpu.dot_dimension_numbers<[1], [1], [0], [0], [0, 0, 1, 0], [], []>} : vector<8x128xbf16>, vector<8x128xbf16>, vector<8x8xf32> -> vector<8x8xf32>
    %cst_36 = arith.constant 0.353553385 : f32
    %102 = vector.broadcast %cst_36 : f32 to vector<8x8xf32>
    %103 = arith.mulf %101, %102 : vector<8x8xf32>
    %cst_37 = arith.constant -1.000000e+09 : f32
    %104 = vector.broadcast %cst_37 : f32 to vector<8x8xf32>
    %105 = arith.select %12, %104, %103 : vector<8x8xi1>, vector<8x8xf32>
    %cst_38 = arith.constant dense<0xFF800000> : vector<8xf32>
    %106 = vector.multi_reduction <maximumf>, %105, %cst_38 [1] : vector<8x8xf32> to vector<8xf32>
    %107 = vector.shape_cast %106 : vector<8xf32> to vector<8x1xf32>
    %108 = vector.broadcast %107 : vector<8x1xf32> to vector<8x8xf32>
    %109 = arith.subf %105, %108 : vector<8x8xf32>
    %110 = math.exp %109 : vector<8x8xf32>
    %cst_39 = arith.constant dense<0.000000e+00> : vector<8xf32>
    %111 = vector.multi_reduction <add>, %110, %cst_39 [1] : vector<8x8xf32> to vector<8xf32>
    %112 = vector.shape_cast %111 : vector<8xf32> to vector<8x1xf32>
    %113 = tpu.reciprocal %112 {approx = true} : vector<8x1xf32> -> vector<8x1xf32>
    %114 = vector.broadcast %113 : vector<8x1xf32> to vector<8x8xf32>
    %115 = arith.mulf %110, %114 : vector<8x8xf32>
    %116 = arith.truncf %115 : vector<8x8xf32> to vector<8x8xbf16>
    %cst_40 = arith.constant dense<0.000000e+00> : vector<8x128xf32>
    %117 = tpu.matmul %116, %100, %cst_40 {dimension_numbers = #tpu.dot_dimension_numbers<[1], [0], [0], [1], [0, 0, 1, 1], [], []>} : vector<8x8xbf16>, vector<8x128xbf16>, vector<8x128xf32> -> vector<8x128xf32>
    %118 = arith.truncf %117 : vector<8x128xf32> to vector<8x128xbf16>
    %c384 = arith.constant 384 : index
    %c0_41 = arith.constant 0 : index
    %119 = vector.load %arg5[%c384, %c0_41] : memref<512x128xbf16, #tpu.memory_space<vmem>>, vector<128x128xbf16>
    %cst_42 = arith.constant dense<0.000000e+00> : vector<8x128xf32>
    %120 = tpu.matmul %118, %119, %cst_42 {dimension_numbers = #tpu.dot_dimension_numbers<[1], [0], [0], [1], [0, 0, 1, 1], [], []>} : vector<8x128xbf16>, vector<128x128xbf16>, vector<8x128xf32> -> vector<8x128xf32>
    %121 = arith.addf %94, %120 : vector<8x128xf32>
    %c0_43 = arith.constant 0 : index
    %c0_44 = arith.constant 0 : index
    %122 = vector.load %arg6[%c0_43, %c0_44] : memref<1x128xf32, #tpu.memory_space<vmem>>, vector<1x128xf32>
    %123 = vector.broadcast %122 : vector<1x128xf32> to vector<8x128xf32>
    %124 = arith.addf %121, %123 : vector<8x128xf32>
    %125 = arith.extf %1 : vector<8x128xbf16> to vector<8x128xf32>
    %126 = arith.addf %124, %125 : vector<8x128xf32>
    %c0_45 = arith.constant 0 : index
    %c0_46 = arith.constant 0 : index
    %127 = vector.load %arg7[%c0_45, %c0_46] : memref<1x128xf32, #tpu.memory_space<vmem>>, vector<1x128xf32>
    %c0_47 = arith.constant 0 : index
    %c0_48 = arith.constant 0 : index
    %128 = vector.load %arg8[%c0_47, %c0_48] : memref<1x128xf32, #tpu.memory_space<vmem>>, vector<1x128xf32>
    %cst_49 = arith.constant dense<0.000000e+00> : vector<8xf32>
    %129 = vector.multi_reduction <add>, %126, %cst_49 [1] : vector<8x128xf32> to vector<8xf32>
    %130 = vector.shape_cast %129 : vector<8xf32> to vector<8x1xf32>
    %cst_50 = arith.constant 3.125000e-02 : f32
    %131 = vector.broadcast %cst_50 : f32 to vector<8x1xf32>
    %132 = arith.mulf %130, %131 : vector<8x1xf32>
    %133 = arith.mulf %126, %126 : vector<8x128xf32>
    %cst_51 = arith.constant dense<0.000000e+00> : vector<8xf32>
    %134 = vector.multi_reduction <add>, %133, %cst_51 [1] : vector<8x128xf32> to vector<8xf32>
    %135 = vector.shape_cast %134 : vector<8xf32> to vector<8x1xf32>
    %cst_52 = arith.constant 3.125000e-02 : f32
    %136 = vector.broadcast %cst_52 : f32 to vector<8x1xf32>
    %137 = arith.mulf %135, %136 : vector<8x1xf32>
    %138 = arith.mulf %132, %132 : vector<8x1xf32>
    %139 = arith.subf %137, %138 : vector<8x1xf32>
    %cst_53 = arith.constant 0.000000e+00 : f32
    %140 = vector.broadcast %cst_53 : f32 to vector<8x1xf32>
    %141 = arith.maximumf %139, %140 : vector<8x1xf32>
    %142 = vector.broadcast %132 : vector<8x1xf32> to vector<8x128xf32>
    %143 = arith.subf %126, %142 : vector<8x128xf32>
    %cst_54 = arith.constant 9.99999974E-6 : f32
    %144 = vector.broadcast %cst_54 : f32 to vector<8x1xf32>
    %145 = arith.addf %141, %144 : vector<8x1xf32>
    %146 = math.rsqrt %145 : vector<8x1xf32>
    %147 = vector.broadcast %146 : vector<8x1xf32> to vector<8x128xf32>
    %148 = arith.mulf %143, %147 : vector<8x128xf32>
    %149 = vector.broadcast %127 : vector<1x128xf32> to vector<8x128xf32>
    %150 = arith.mulf %148, %149 : vector<8x128xf32>
    %151 = vector.broadcast %128 : vector<1x128xf32> to vector<8x128xf32>
    %152 = arith.addf %150, %151 : vector<8x128xf32>
    %153 = arith.truncf %152 : vector<8x128xf32> to vector<8x128xbf16>
    %c0_55 = arith.constant 0 : index
    %c0_56 = arith.constant 0 : index
    %c0_57 = arith.constant 0 : index
    %154 = vector.load %arg9[%c0_55, %c0_56, %c0_57] : memref<1x8x128xbf16, #tpu.memory_space<vmem>>, vector<1x8x128xbf16>
    %155 = vector.shape_cast %154 : vector<1x8x128xbf16> to vector<8x128xbf16>
    %156 = vector.shape_cast %153 : vector<8x128xbf16> to vector<1x8x128xbf16>
    tpu.vector_store %arg9[%c0_55, %c0_56, %c0_57], %156 {strides = array<i32>} : memref<1x8x128xbf16, #tpu.memory_space<vmem>>, vector<1x8x128xbf16>,
    return
  }
  func.func @transform_0(%arg0: i32) -> (i32, i32, i32) {
    %c0_i32 = arith.constant 0 : i32
    %c0_i32_0 = arith.constant 0 : i32
    %c0_i32_1 = arith.constant 0 : i32
    return %arg0, %c0_i32, %c0_i32_0 : i32, i32, i32
  }
  func.func @transform_1(%arg0: i32) -> (i32, i32, i32) {
    %c0_i32 = arith.constant 0 : i32
    %c0_i32_0 = arith.constant 0 : i32
    %c0_i32_1 = arith.constant 0 : i32
    return %arg0, %c0_i32, %c0_i32_0 : i32, i32, i32
  }
  func.func @transform_2(%arg0: i32) -> (i32, i32) {
    %c0_i32 = arith.constant 0 : i32
    %c0_i32_0 = arith.constant 0 : i32
    %c0_i32_1 = arith.constant 0 : i32
    return %c0_i32, %c0_i32_0 : i32, i32
  }
  func.func @transform_3(%arg0: i32) -> (i32, i32) {
    %c0_i32 = arith.constant 0 : i32
    %c0_i32_0 = arith.constant 0 : i32
    %c0_i32_1 = arith.constant 0 : i32
    return %c0_i32, %c0_i32_0 : i32, i32
  }
  func.func @transform_4(%arg0: i32) -> (i32, i32) {
    %c0_i32 = arith.constant 0 : i32
    %c0_i32_0 = arith.constant 0 : i32
    %c0_i32_1 = arith.constant 0 : i32
    return %c0_i32, %c0_i32_0 : i32, i32
  }
  func.func @transform_5(%arg0: i32) -> (i32, i32) {
    %c0_i32 = arith.constant 0 : i32
    %c0_i32_0 = arith.constant 0 : i32
    %c0_i32_1 = arith.constant 0 : i32
    return %c0_i32, %c0_i32_0 : i32, i32
  }
  func.func @transform_6(%arg0: i32) -> (i32, i32) {
    %c0_i32 = arith.constant 0 : i32
    %c0_i32_0 = arith.constant 0 : i32
    %c0_i32_1 = arith.constant 0 : i32
    return %c0_i32, %c0_i32_0 : i32, i32
  }
  func.func @transform_7(%arg0: i32) -> (i32, i32) {
    %c0_i32 = arith.constant 0 : i32
    %c0_i32_0 = arith.constant 0 : i32
    %c0_i32_1 = arith.constant 0 : i32
    return %c0_i32, %c0_i32_0 : i32, i32
  }
  func.func @transform_8(%arg0: i32) -> (i32, i32, i32) {
    %c0_i32 = arith.constant 0 : i32
    %c0_i32_0 = arith.constant 0 : i32
    %c0_i32_1 = arith.constant 0 : i32
    return %arg0, %c0_i32, %c0_i32_0 : i32, i32, i32
  }
}

module attributes {stable_mosaic.version = 11 : i64} {
  func.func @_layernorm_kernel(%arg0: i32, %arg1: memref<16x128xbf16, #tpu.memory_space<vmem>>, %arg2: memref<1x128xf32, #tpu.memory_space<vmem>>, %arg3: memref<1x128xf32, #tpu.memory_space<vmem>>, %arg4: memref<16x128xbf16, #tpu.memory_space<vmem>>) attributes {dimension_semantics = [#tpu.dimension_semantics<parallel>], iteration_bounds = array<i64: 1>, scalar_prefetch = 0 : i64, scratch_operands = 0 : i64, tpu.core_type = #tpu.core_type<tc>, window_params = [{transform_indices = @transform_0, window_bounds = array<i64: 16, 128>}, {pipeline_mode = #tpu.pipeline_mode<synchronous>, transform_indices = @transform_1, window_bounds = array<i64: 1, 128>}, {pipeline_mode = #tpu.pipeline_mode<synchronous>, transform_indices = @transform_2, window_bounds = array<i64: 1, 128>}, {transform_indices = @transform_3, window_bounds = array<i64: 16, 128>}]} {
    %c0 = arith.constant 0 : index
    %c0_0 = arith.constant 0 : index
    %0 = vector.load %arg1[%c0, %c0_0] : memref<16x128xbf16, #tpu.memory_space<vmem>>, vector<16x128xbf16>
    %1 = arith.extf %0 : vector<16x128xbf16> to vector<16x128xf32>
    %c0_1 = arith.constant 0 : index
    %c0_2 = arith.constant 0 : index
    %2 = vector.load %arg2[%c0_1, %c0_2] : memref<1x128xf32, #tpu.memory_space<vmem>>, vector<1x128xf32>
    %c0_3 = arith.constant 0 : index
    %c0_4 = arith.constant 0 : index
    %3 = vector.load %arg3[%c0_3, %c0_4] : memref<1x128xf32, #tpu.memory_space<vmem>>, vector<1x128xf32>
    %cst = arith.constant dense<0.000000e+00> : vector<16xf32>
    %4 = vector.multi_reduction <add>, %1, %cst [1] : vector<16x128xf32> to vector<16xf32>
    %5 = vector.shape_cast %4 : vector<16xf32> to vector<16x1xf32>
    %cst_5 = arith.constant 3.125000e-02 : f32
    %6 = vector.broadcast %cst_5 : f32 to vector<16x1xf32>
    %7 = arith.mulf %5, %6 : vector<16x1xf32>
    %8 = arith.mulf %1, %1 : vector<16x128xf32>
    %cst_6 = arith.constant dense<0.000000e+00> : vector<16xf32>
    %9 = vector.multi_reduction <add>, %8, %cst_6 [1] : vector<16x128xf32> to vector<16xf32>
    %10 = vector.shape_cast %9 : vector<16xf32> to vector<16x1xf32>
    %cst_7 = arith.constant 3.125000e-02 : f32
    %11 = vector.broadcast %cst_7 : f32 to vector<16x1xf32>
    %12 = arith.mulf %10, %11 : vector<16x1xf32>
    %13 = arith.mulf %7, %7 : vector<16x1xf32>
    %14 = arith.subf %12, %13 : vector<16x1xf32>
    %cst_8 = arith.constant 0.000000e+00 : f32
    %15 = vector.broadcast %cst_8 : f32 to vector<16x1xf32>
    %16 = arith.maximumf %14, %15 : vector<16x1xf32>
    %17 = vector.broadcast %7 : vector<16x1xf32> to vector<16x128xf32>
    %18 = arith.subf %1, %17 : vector<16x128xf32>
    %cst_9 = arith.constant 9.99999974E-6 : f32
    %19 = vector.broadcast %cst_9 : f32 to vector<16x1xf32>
    %20 = arith.addf %16, %19 : vector<16x1xf32>
    %21 = math.rsqrt %20 : vector<16x1xf32>
    %22 = vector.broadcast %21 : vector<16x1xf32> to vector<16x128xf32>
    %23 = arith.mulf %18, %22 : vector<16x128xf32>
    %24 = vector.broadcast %2 : vector<1x128xf32> to vector<16x128xf32>
    %25 = arith.mulf %23, %24 : vector<16x128xf32>
    %26 = vector.broadcast %3 : vector<1x128xf32> to vector<16x128xf32>
    %27 = arith.addf %25, %26 : vector<16x128xf32>
    %28 = arith.truncf %27 : vector<16x128xf32> to vector<16x128xbf16>
    %c0_10 = arith.constant 0 : index
    %c0_11 = arith.constant 0 : index
    %29 = vector.load %arg4[%c0_10, %c0_11] : memref<16x128xbf16, #tpu.memory_space<vmem>>, vector<16x128xbf16>
    tpu.vector_store %arg4[%c0_10, %c0_11], %28 {strides = array<i32>} : memref<16x128xbf16, #tpu.memory_space<vmem>>, vector<16x128xbf16>,
    return
  }
  func.func @transform_0(%arg0: i32) -> (i32, i32) {
    %c0_i32 = arith.constant 0 : i32
    %c0_i32_0 = arith.constant 0 : i32
    return %arg0, %c0_i32 : i32, i32
  }
  func.func @transform_1(%arg0: i32) -> (i32, i32) {
    %c0_i32 = arith.constant 0 : i32
    %c0_i32_0 = arith.constant 0 : i32
    %c0_i32_1 = arith.constant 0 : i32
    return %c0_i32, %c0_i32_0 : i32, i32
  }
  func.func @transform_2(%arg0: i32) -> (i32, i32) {
    %c0_i32 = arith.constant 0 : i32
    %c0_i32_0 = arith.constant 0 : i32
    %c0_i32_1 = arith.constant 0 : i32
    return %c0_i32, %c0_i32_0 : i32, i32
  }
  func.func @transform_3(%arg0: i32) -> (i32, i32) {
    %c0_i32 = arith.constant 0 : i32
    %c0_i32_0 = arith.constant 0 : i32
    return %arg0, %c0_i32 : i32, i32
  }
}

module attributes {stable_mosaic.version = 11 : i64} {
  func.func @_self_attn_layer_kernel(%arg0: i32, %arg1: memref<1x8x128xbf16, #tpu.memory_space<vmem>>, %arg2: memref<1x8x8xi32, #tpu.memory_space<vmem>>, %arg3: memref<128x1536xbf16, #tpu.memory_space<vmem>>, %arg4: memref<1x1536xf32, #tpu.memory_space<vmem>>, %arg5: memref<512x128xbf16, #tpu.memory_space<vmem>>, %arg6: memref<1x128xf32, #tpu.memory_space<vmem>>, %arg7: memref<1x128xf32, #tpu.memory_space<vmem>>, %arg8: memref<1x128xf32, #tpu.memory_space<vmem>>, %arg9: memref<1x8x128xbf16, #tpu.memory_space<vmem>>) attributes {dimension_semantics = [#tpu.dimension_semantics<parallel>], iteration_bounds = array<i64: 2>, scalar_prefetch = 0 : i64, scratch_operands = 0 : i64, tpu.core_type = #tpu.core_type<tc>, window_params = [{transform_indices = @transform_0, window_bounds = array<i64: 1, 8, 128>}, {transform_indices = @transform_1, window_bounds = array<i64: 1, 8, 8>}, {pipeline_mode = #tpu.pipeline_mode<synchronous>, transform_indices = @transform_2, window_bounds = array<i64: 128, 1536>}, {pipeline_mode = #tpu.pipeline_mode<synchronous>, transform_indices = @transform_3, window_bounds = array<i64: 1, 1536>}, {pipeline_mode = #tpu.pipeline_mode<synchronous>, transform_indices = @transform_4, window_bounds = array<i64: 512, 128>}, {pipeline_mode = #tpu.pipeline_mode<synchronous>, transform_indices = @transform_5, window_bounds = array<i64: 1, 128>}, {pipeline_mode = #tpu.pipeline_mode<synchronous>, transform_indices = @transform_6, window_bounds = array<i64: 1, 128>}, {pipeline_mode = #tpu.pipeline_mode<synchronous>, transform_indices = @transform_7, window_bounds = array<i64: 1, 128>}, {transform_indices = @transform_8, window_bounds = array<i64: 1, 8, 128>}]} {
    %c0 = arith.constant 0 : index
    %c0_0 = arith.constant 0 : index
    %c0_1 = arith.constant 0 : index
    %0 = vector.load %arg1[%c0, %c0_0, %c0_1] : memref<1x8x128xbf16, #tpu.memory_space<vmem>>, vector<1x8x128xbf16>
    %1 = vector.shape_cast %0 : vector<1x8x128xbf16> to vector<8x128xbf16>
    %c0_2 = arith.constant 0 : index
    %c0_3 = arith.constant 0 : index
    %2 = vector.load %arg3[%c0_2, %c0_3] : memref<128x1536xbf16, #tpu.memory_space<vmem>>, vector<128x1536xbf16>
    %cst = arith.constant dense<0.000000e+00> : vector<8x1536xf32>
    %3 = tpu.matmul %1, %2, %cst {dimension_numbers = #tpu.dot_dimension_numbers<[1], [0], [0], [1], [0, 0, 1, 1], [], []>} : vector<8x128xbf16>, vector<128x1536xbf16>, vector<8x1536xf32> -> vector<8x1536xf32>
    %c0_4 = arith.constant 0 : index
    %c0_5 = arith.constant 0 : index
    %4 = vector.load %arg4[%c0_4, %c0_5] : memref<1x1536xf32, #tpu.memory_space<vmem>>, vector<1x1536xf32>
    %5 = vector.broadcast %4 : vector<1x1536xf32> to vector<8x1536xf32>
    %6 = arith.addf %3, %5 : vector<8x1536xf32>
    %7 = vector.extract_strided_slice %6 {offsets = [0, 0], sizes = [8, 512], strides = [1, 1]} : vector<8x1536xf32> to vector<8x512xf32>
    %8 = vector.extract_strided_slice %6 {offsets = [0, 512], sizes = [8, 1024], strides = [1, 1]} : vector<8x1536xf32> to vector<8x1024xf32>
    %c0_6 = arith.constant 0 : index
    %c0_7 = arith.constant 0 : index
    %c0_8 = arith.constant 0 : index
    %9 = vector.load %arg2[%c0_6, %c0_7, %c0_8] : memref<1x8x8xi32, #tpu.memory_space<vmem>>, vector<1x8x8xi32>
    %10 = vector.shape_cast %9 : vector<1x8x8xi32> to vector<8x8xi32>
    %c0_i32 = arith.constant 0 : i32
    %11 = vector.broadcast %c0_i32 : i32 to vector<8x8xi32>
    %12 = arith.cmpi eq, %10, %11 : vector<8x8xi32>
    %cst_9 = arith.constant 0.000000e+00 : f32
    %13 = vector.broadcast %cst_9 : f32 to vector<8x128xf32>
    %14 = vector.extract_strided_slice %7 {offsets = [0, 0], sizes = [8, 128], strides = [1, 1]} : vector<8x512xf32> to vector<8x128xf32>
    %15 = arith.truncf %14 : vector<8x128xf32> to vector<8x128xbf16>
    %16 = vector.extract_strided_slice %8 {offsets = [0, 0], sizes = [8, 128], strides = [1, 1]} : vector<8x1024xf32> to vector<8x128xf32>
    %17 = arith.truncf %16 : vector<8x128xf32> to vector<8x128xbf16>
    %18 = vector.extract_strided_slice %8 {offsets = [0, 512], sizes = [8, 128], strides = [1, 1]} : vector<8x1024xf32> to vector<8x128xf32>
    %19 = arith.truncf %18 : vector<8x128xf32> to vector<8x128xbf16>
    %cst_10 = arith.constant dense<0.000000e+00> : vector<8x8xf32>
    %20 = tpu.matmul %15, %17, %cst_10 {dimension_numbers = #tpu.dot_dimension_numbers<[1], [1], [0], [0], [0, 0, 1, 0], [], []>} : vector<8x128xbf16>, vector<8x128xbf16>, vector<8x8xf32> -> vector<8x8xf32>
    %cst_11 = arith.constant 0.353553385 : f32
    %21 = vector.broadcast %cst_11 : f32 to vector<8x8xf32>
    %22 = arith.mulf %20, %21 : vector<8x8xf32>
    %cst_12 = arith.constant -1.000000e+09 : f32
    %23 = vector.broadcast %cst_12 : f32 to vector<8x8xf32>
    %24 = arith.select %12, %23, %22 : vector<8x8xi1>, vector<8x8xf32>
    %cst_13 = arith.constant dense<0xFF800000> : vector<8xf32>
    %25 = vector.multi_reduction <maximumf>, %24, %cst_13 [1] : vector<8x8xf32> to vector<8xf32>
    %26 = vector.shape_cast %25 : vector<8xf32> to vector<8x1xf32>
    %27 = vector.broadcast %26 : vector<8x1xf32> to vector<8x8xf32>
    %28 = arith.subf %24, %27 : vector<8x8xf32>
    %29 = math.exp %28 : vector<8x8xf32>
    %cst_14 = arith.constant dense<0.000000e+00> : vector<8xf32>
    %30 = vector.multi_reduction <add>, %29, %cst_14 [1] : vector<8x8xf32> to vector<8xf32>
    %31 = vector.shape_cast %30 : vector<8xf32> to vector<8x1xf32>
    %32 = tpu.reciprocal %31 {approx = true} : vector<8x1xf32> -> vector<8x1xf32>
    %33 = vector.broadcast %32 : vector<8x1xf32> to vector<8x8xf32>
    %34 = arith.mulf %29, %33 : vector<8x8xf32>
    %35 = arith.truncf %34 : vector<8x8xf32> to vector<8x8xbf16>
    %cst_15 = arith.constant dense<0.000000e+00> : vector<8x128xf32>
    %36 = tpu.matmul %35, %19, %cst_15 {dimension_numbers = #tpu.dot_dimension_numbers<[1], [0], [0], [1], [0, 0, 1, 1], [], []>} : vector<8x8xbf16>, vector<8x128xbf16>, vector<8x128xf32> -> vector<8x128xf32>
    %37 = arith.truncf %36 : vector<8x128xf32> to vector<8x128xbf16>
    %c0_16 = arith.constant 0 : index
    %c0_17 = arith.constant 0 : index
    %38 = vector.load %arg5[%c0_16, %c0_17] : memref<512x128xbf16, #tpu.memory_space<vmem>>, vector<128x128xbf16>
    %cst_18 = arith.constant dense<0.000000e+00> : vector<8x128xf32>
    %39 = tpu.matmul %37, %38, %cst_18 {dimension_numbers = #tpu.dot_dimension_numbers<[1], [0], [0], [1], [0, 0, 1, 1], [], []>} : vector<8x128xbf16>, vector<128x128xbf16>, vector<8x128xf32> -> vector<8x128xf32>
    %40 = arith.addf %13, %39 : vector<8x128xf32>
    %41 = vector.extract_strided_slice %7 {offsets = [0, 128], sizes = [8, 128], strides = [1, 1]} : vector<8x512xf32> to vector<8x128xf32>
    %42 = arith.truncf %41 : vector<8x128xf32> to vector<8x128xbf16>
    %43 = vector.extract_strided_slice %8 {offsets = [0, 128], sizes = [8, 128], strides = [1, 1]} : vector<8x1024xf32> to vector<8x128xf32>
    %44 = arith.truncf %43 : vector<8x128xf32> to vector<8x128xbf16>
    %45 = vector.extract_strided_slice %8 {offsets = [0, 640], sizes = [8, 128], strides = [1, 1]} : vector<8x1024xf32> to vector<8x128xf32>
    %46 = arith.truncf %45 : vector<8x128xf32> to vector<8x128xbf16>
    %cst_19 = arith.constant dense<0.000000e+00> : vector<8x8xf32>
    %47 = tpu.matmul %42, %44, %cst_19 {dimension_numbers = #tpu.dot_dimension_numbers<[1], [1], [0], [0], [0, 0, 1, 0], [], []>} : vector<8x128xbf16>, vector<8x128xbf16>, vector<8x8xf32> -> vector<8x8xf32>
    %cst_20 = arith.constant 0.353553385 : f32
    %48 = vector.broadcast %cst_20 : f32 to vector<8x8xf32>
    %49 = arith.mulf %47, %48 : vector<8x8xf32>
    %cst_21 = arith.constant -1.000000e+09 : f32
    %50 = vector.broadcast %cst_21 : f32 to vector<8x8xf32>
    %51 = arith.select %12, %50, %49 : vector<8x8xi1>, vector<8x8xf32>
    %cst_22 = arith.constant dense<0xFF800000> : vector<8xf32>
    %52 = vector.multi_reduction <maximumf>, %51, %cst_22 [1] : vector<8x8xf32> to vector<8xf32>
    %53 = vector.shape_cast %52 : vector<8xf32> to vector<8x1xf32>
    %54 = vector.broadcast %53 : vector<8x1xf32> to vector<8x8xf32>
    %55 = arith.subf %51, %54 : vector<8x8xf32>
    %56 = math.exp %55 : vector<8x8xf32>
    %cst_23 = arith.constant dense<0.000000e+00> : vector<8xf32>
    %57 = vector.multi_reduction <add>, %56, %cst_23 [1] : vector<8x8xf32> to vector<8xf32>
    %58 = vector.shape_cast %57 : vector<8xf32> to vector<8x1xf32>
    %59 = tpu.reciprocal %58 {approx = true} : vector<8x1xf32> -> vector<8x1xf32>
    %60 = vector.broadcast %59 : vector<8x1xf32> to vector<8x8xf32>
    %61 = arith.mulf %56, %60 : vector<8x8xf32>
    %62 = arith.truncf %61 : vector<8x8xf32> to vector<8x8xbf16>
    %cst_24 = arith.constant dense<0.000000e+00> : vector<8x128xf32>
    %63 = tpu.matmul %62, %46, %cst_24 {dimension_numbers = #tpu.dot_dimension_numbers<[1], [0], [0], [1], [0, 0, 1, 1], [], []>} : vector<8x8xbf16>, vector<8x128xbf16>, vector<8x128xf32> -> vector<8x128xf32>
    %64 = arith.truncf %63 : vector<8x128xf32> to vector<8x128xbf16>
    %c128 = arith.constant 128 : index
    %c0_25 = arith.constant 0 : index
    %65 = vector.load %arg5[%c128, %c0_25] : memref<512x128xbf16, #tpu.memory_space<vmem>>, vector<128x128xbf16>
    %cst_26 = arith.constant dense<0.000000e+00> : vector<8x128xf32>
    %66 = tpu.matmul %64, %65, %cst_26 {dimension_numbers = #tpu.dot_dimension_numbers<[1], [0], [0], [1], [0, 0, 1, 1], [], []>} : vector<8x128xbf16>, vector<128x128xbf16>, vector<8x128xf32> -> vector<8x128xf32>
    %67 = arith.addf %40, %66 : vector<8x128xf32>
    %68 = vector.extract_strided_slice %7 {offsets = [0, 256], sizes = [8, 128], strides = [1, 1]} : vector<8x512xf32> to vector<8x128xf32>
    %69 = arith.truncf %68 : vector<8x128xf32> to vector<8x128xbf16>
    %70 = vector.extract_strided_slice %8 {offsets = [0, 256], sizes = [8, 128], strides = [1, 1]} : vector<8x1024xf32> to vector<8x128xf32>
    %71 = arith.truncf %70 : vector<8x128xf32> to vector<8x128xbf16>
    %72 = vector.extract_strided_slice %8 {offsets = [0, 768], sizes = [8, 128], strides = [1, 1]} : vector<8x1024xf32> to vector<8x128xf32>
    %73 = arith.truncf %72 : vector<8x128xf32> to vector<8x128xbf16>
    %cst_27 = arith.constant dense<0.000000e+00> : vector<8x8xf32>
    %74 = tpu.matmul %69, %71, %cst_27 {dimension_numbers = #tpu.dot_dimension_numbers<[1], [1], [0], [0], [0, 0, 1, 0], [], []>} : vector<8x128xbf16>, vector<8x128xbf16>, vector<8x8xf32> -> vector<8x8xf32>
    %cst_28 = arith.constant 0.353553385 : f32
    %75 = vector.broadcast %cst_28 : f32 to vector<8x8xf32>
    %76 = arith.mulf %74, %75 : vector<8x8xf32>
    %cst_29 = arith.constant -1.000000e+09 : f32
    %77 = vector.broadcast %cst_29 : f32 to vector<8x8xf32>
    %78 = arith.select %12, %77, %76 : vector<8x8xi1>, vector<8x8xf32>
    %cst_30 = arith.constant dense<0xFF800000> : vector<8xf32>
    %79 = vector.multi_reduction <maximumf>, %78, %cst_30 [1] : vector<8x8xf32> to vector<8xf32>
    %80 = vector.shape_cast %79 : vector<8xf32> to vector<8x1xf32>
    %81 = vector.broadcast %80 : vector<8x1xf32> to vector<8x8xf32>
    %82 = arith.subf %78, %81 : vector<8x8xf32>
    %83 = math.exp %82 : vector<8x8xf32>
    %cst_31 = arith.constant dense<0.000000e+00> : vector<8xf32>
    %84 = vector.multi_reduction <add>, %83, %cst_31 [1] : vector<8x8xf32> to vector<8xf32>
    %85 = vector.shape_cast %84 : vector<8xf32> to vector<8x1xf32>
    %86 = tpu.reciprocal %85 {approx = true} : vector<8x1xf32> -> vector<8x1xf32>
    %87 = vector.broadcast %86 : vector<8x1xf32> to vector<8x8xf32>
    %88 = arith.mulf %83, %87 : vector<8x8xf32>
    %89 = arith.truncf %88 : vector<8x8xf32> to vector<8x8xbf16>
    %cst_32 = arith.constant dense<0.000000e+00> : vector<8x128xf32>
    %90 = tpu.matmul %89, %73, %cst_32 {dimension_numbers = #tpu.dot_dimension_numbers<[1], [0], [0], [1], [0, 0, 1, 1], [], []>} : vector<8x8xbf16>, vector<8x128xbf16>, vector<8x128xf32> -> vector<8x128xf32>
    %91 = arith.truncf %90 : vector<8x128xf32> to vector<8x128xbf16>
    %c256 = arith.constant 256 : index
    %c0_33 = arith.constant 0 : index
    %92 = vector.load %arg5[%c256, %c0_33] : memref<512x128xbf16, #tpu.memory_space<vmem>>, vector<128x128xbf16>
    %cst_34 = arith.constant dense<0.000000e+00> : vector<8x128xf32>
    %93 = tpu.matmul %91, %92, %cst_34 {dimension_numbers = #tpu.dot_dimension_numbers<[1], [0], [0], [1], [0, 0, 1, 1], [], []>} : vector<8x128xbf16>, vector<128x128xbf16>, vector<8x128xf32> -> vector<8x128xf32>
    %94 = arith.addf %67, %93 : vector<8x128xf32>
    %95 = vector.extract_strided_slice %7 {offsets = [0, 384], sizes = [8, 128], strides = [1, 1]} : vector<8x512xf32> to vector<8x128xf32>
    %96 = arith.truncf %95 : vector<8x128xf32> to vector<8x128xbf16>
    %97 = vector.extract_strided_slice %8 {offsets = [0, 384], sizes = [8, 128], strides = [1, 1]} : vector<8x1024xf32> to vector<8x128xf32>
    %98 = arith.truncf %97 : vector<8x128xf32> to vector<8x128xbf16>
    %99 = vector.extract_strided_slice %8 {offsets = [0, 896], sizes = [8, 128], strides = [1, 1]} : vector<8x1024xf32> to vector<8x128xf32>
    %100 = arith.truncf %99 : vector<8x128xf32> to vector<8x128xbf16>
    %cst_35 = arith.constant dense<0.000000e+00> : vector<8x8xf32>
    %101 = tpu.matmul %96, %98, %cst_35 {dimension_numbers = #tpu.dot_dimension_numbers<[1], [1], [0], [0], [0, 0, 1, 0], [], []>} : vector<8x128xbf16>, vector<8x128xbf16>, vector<8x8xf32> -> vector<8x8xf32>
    %cst_36 = arith.constant 0.353553385 : f32
    %102 = vector.broadcast %cst_36 : f32 to vector<8x8xf32>
    %103 = arith.mulf %101, %102 : vector<8x8xf32>
    %cst_37 = arith.constant -1.000000e+09 : f32
    %104 = vector.broadcast %cst_37 : f32 to vector<8x8xf32>
    %105 = arith.select %12, %104, %103 : vector<8x8xi1>, vector<8x8xf32>
    %cst_38 = arith.constant dense<0xFF800000> : vector<8xf32>
    %106 = vector.multi_reduction <maximumf>, %105, %cst_38 [1] : vector<8x8xf32> to vector<8xf32>
    %107 = vector.shape_cast %106 : vector<8xf32> to vector<8x1xf32>
    %108 = vector.broadcast %107 : vector<8x1xf32> to vector<8x8xf32>
    %109 = arith.subf %105, %108 : vector<8x8xf32>
    %110 = math.exp %109 : vector<8x8xf32>
    %cst_39 = arith.constant dense<0.000000e+00> : vector<8xf32>
    %111 = vector.multi_reduction <add>, %110, %cst_39 [1] : vector<8x8xf32> to vector<8xf32>
    %112 = vector.shape_cast %111 : vector<8xf32> to vector<8x1xf32>
    %113 = tpu.reciprocal %112 {approx = true} : vector<8x1xf32> -> vector<8x1xf32>
    %114 = vector.broadcast %113 : vector<8x1xf32> to vector<8x8xf32>
    %115 = arith.mulf %110, %114 : vector<8x8xf32>
    %116 = arith.truncf %115 : vector<8x8xf32> to vector<8x8xbf16>
    %cst_40 = arith.constant dense<0.000000e+00> : vector<8x128xf32>
    %117 = tpu.matmul %116, %100, %cst_40 {dimension_numbers = #tpu.dot_dimension_numbers<[1], [0], [0], [1], [0, 0, 1, 1], [], []>} : vector<8x8xbf16>, vector<8x128xbf16>, vector<8x128xf32> -> vector<8x128xf32>
    %118 = arith.truncf %117 : vector<8x128xf32> to vector<8x128xbf16>
    %c384 = arith.constant 384 : index
    %c0_41 = arith.constant 0 : index
    %119 = vector.load %arg5[%c384, %c0_41] : memref<512x128xbf16, #tpu.memory_space<vmem>>, vector<128x128xbf16>
    %cst_42 = arith.constant dense<0.000000e+00> : vector<8x128xf32>
    %120 = tpu.matmul %118, %119, %cst_42 {dimension_numbers = #tpu.dot_dimension_numbers<[1], [0], [0], [1], [0, 0, 1, 1], [], []>} : vector<8x128xbf16>, vector<128x128xbf16>, vector<8x128xf32> -> vector<8x128xf32>
    %121 = arith.addf %94, %120 : vector<8x128xf32>
    %c0_43 = arith.constant 0 : index
    %c0_44 = arith.constant 0 : index
    %122 = vector.load %arg6[%c0_43, %c0_44] : memref<1x128xf32, #tpu.memory_space<vmem>>, vector<1x128xf32>
    %123 = vector.broadcast %122 : vector<1x128xf32> to vector<8x128xf32>
    %124 = arith.addf %121, %123 : vector<8x128xf32>
    %125 = arith.extf %1 : vector<8x128xbf16> to vector<8x128xf32>
    %126 = arith.addf %124, %125 : vector<8x128xf32>
    %c0_45 = arith.constant 0 : index
    %c0_46 = arith.constant 0 : index
    %127 = vector.load %arg7[%c0_45, %c0_46] : memref<1x128xf32, #tpu.memory_space<vmem>>, vector<1x128xf32>
    %c0_47 = arith.constant 0 : index
    %c0_48 = arith.constant 0 : index
    %128 = vector.load %arg8[%c0_47, %c0_48] : memref<1x128xf32, #tpu.memory_space<vmem>>, vector<1x128xf32>
    %cst_49 = arith.constant dense<0.000000e+00> : vector<8xf32>
    %129 = vector.multi_reduction <add>, %126, %cst_49 [1] : vector<8x128xf32> to vector<8xf32>
    %130 = vector.shape_cast %129 : vector<8xf32> to vector<8x1xf32>
    %cst_50 = arith.constant 3.125000e-02 : f32
    %131 = vector.broadcast %cst_50 : f32 to vector<8x1xf32>
    %132 = arith.mulf %130, %131 : vector<8x1xf32>
    %133 = arith.mulf %126, %126 : vector<8x128xf32>
    %cst_51 = arith.constant dense<0.000000e+00> : vector<8xf32>
    %134 = vector.multi_reduction <add>, %133, %cst_51 [1] : vector<8x128xf32> to vector<8xf32>
    %135 = vector.shape_cast %134 : vector<8xf32> to vector<8x1xf32>
    %cst_52 = arith.constant 3.125000e-02 : f32
    %136 = vector.broadcast %cst_52 : f32 to vector<8x1xf32>
    %137 = arith.mulf %135, %136 : vector<8x1xf32>
    %138 = arith.mulf %132, %132 : vector<8x1xf32>
    %139 = arith.subf %137, %138 : vector<8x1xf32>
    %cst_53 = arith.constant 0.000000e+00 : f32
    %140 = vector.broadcast %cst_53 : f32 to vector<8x1xf32>
    %141 = arith.maximumf %139, %140 : vector<8x1xf32>
    %142 = vector.broadcast %132 : vector<8x1xf32> to vector<8x128xf32>
    %143 = arith.subf %126, %142 : vector<8x128xf32>
    %cst_54 = arith.constant 9.99999974E-6 : f32
    %144 = vector.broadcast %cst_54 : f32 to vector<8x1xf32>
    %145 = arith.addf %141, %144 : vector<8x1xf32>
    %146 = math.rsqrt %145 : vector<8x1xf32>
    %147 = vector.broadcast %146 : vector<8x1xf32> to vector<8x128xf32>
    %148 = arith.mulf %143, %147 : vector<8x128xf32>
    %149 = vector.broadcast %127 : vector<1x128xf32> to vector<8x128xf32>
    %150 = arith.mulf %148, %149 : vector<8x128xf32>
    %151 = vector.broadcast %128 : vector<1x128xf32> to vector<8x128xf32>
    %152 = arith.addf %150, %151 : vector<8x128xf32>
    %153 = arith.truncf %152 : vector<8x128xf32> to vector<8x128xbf16>
    %c0_55 = arith.constant 0 : index
    %c0_56 = arith.constant 0 : index
    %c0_57 = arith.constant 0 : index
    %154 = vector.load %arg9[%c0_55, %c0_56, %c0_57] : memref<1x8x128xbf16, #tpu.memory_space<vmem>>, vector<1x8x128xbf16>
    %155 = vector.shape_cast %154 : vector<1x8x128xbf16> to vector<8x128xbf16>
    %156 = vector.shape_cast %153 : vector<8x128xbf16> to vector<1x8x128xbf16>
    tpu.vector_store %arg9[%c0_55, %c0_56, %c0_57], %156 {strides = array<i32>} : memref<1x8x128xbf16, #tpu.memory_space<vmem>>, vector<1x8x128xbf16>,
    return
  }
  func.func @transform_0(%arg0: i32) -> (i32, i32, i32) {
    %c0_i32 = arith.constant 0 : i32
    %c0_i32_0 = arith.constant 0 : i32
    %c0_i32_1 = arith.constant 0 : i32
    return %arg0, %c0_i32, %c0_i32_0 : i32, i32, i32
  }
  func.func @transform_1(%arg0: i32) -> (i32, i32, i32) {
    %c0_i32 = arith.constant 0 : i32
    %c0_i32_0 = arith.constant 0 : i32
    %c0_i32_1 = arith.constant 0 : i32
    return %arg0, %c0_i32, %c0_i32_0 : i32, i32, i32
  }
  func.func @transform_2(%arg0: i32) -> (i32, i32) {
    %c0_i32 = arith.constant 0 : i32
    %c0_i32_0 = arith.constant 0 : i32
    %c0_i32_1 = arith.constant 0 : i32
    return %c0_i32, %c0_i32_0 : i32, i32
  }
  func.func @transform_3(%arg0: i32) -> (i32, i32) {
    %c0_i32 = arith.constant 0 : i32
    %c0_i32_0 = arith.constant 0 : i32
    %c0_i32_1 = arith.constant 0 : i32
    return %c0_i32, %c0_i32_0 : i32, i32
  }
  func.func @transform_4(%arg0: i32) -> (i32, i32) {
    %c0_i32 = arith.constant 0 : i32
    %c0_i32_0 = arith.constant 0 : i32
    %c0_i32_1 = arith.constant 0 : i32
    return %c0_i32, %c0_i32_0 : i32, i32
  }
  func.func @transform_5(%arg0: i32) -> (i32, i32) {
    %c0_i32 = arith.constant 0 : i32
    %c0_i32_0 = arith.constant 0 : i32
    %c0_i32_1 = arith.constant 0 : i32
    return %c0_i32, %c0_i32_0 : i32, i32
  }
  func.func @transform_6(%arg0: i32) -> (i32, i32) {
    %c0_i32 = arith.constant 0 : i32
    %c0_i32_0 = arith.constant 0 : i32
    %c0_i32_1 = arith.constant 0 : i32
    return %c0_i32, %c0_i32_0 : i32, i32
  }
  func.func @transform_7(%arg0: i32) -> (i32, i32) {
    %c0_i32 = arith.constant 0 : i32
    %c0_i32_0 = arith.constant 0 : i32
    %c0_i32_1 = arith.constant 0 : i32
    return %c0_i32, %c0_i32_0 : i32, i32
  }
  func.func @transform_8(%arg0: i32) -> (i32, i32, i32) {
    %c0_i32 = arith.constant 0 : i32
    %c0_i32_0 = arith.constant 0 : i32
    %c0_i32_1 = arith.constant 0 : i32
    return %arg0, %c0_i32, %c0_i32_0 : i32, i32, i32
  }
}

module attributes {stable_mosaic.version = 11 : i64} {
  func.func @_cross_attn_layer_kernel(%arg0: i32, %arg1: memref<1x8x128xbf16, #tpu.memory_space<vmem>>, %arg2: memref<1x8x128xbf16, #tpu.memory_space<vmem>>, %arg3: memref<1x8x8xi32, #tpu.memory_space<vmem>>, %arg4: memref<128x512xbf16, #tpu.memory_space<vmem>>, %arg5: memref<1x512xf32, #tpu.memory_space<vmem>>, %arg6: memref<128x1024xbf16, #tpu.memory_space<vmem>>, %arg7: memref<1x1024xf32, #tpu.memory_space<vmem>>, %arg8: memref<512x128xbf16, #tpu.memory_space<vmem>>, %arg9: memref<1x128xf32, #tpu.memory_space<vmem>>, %arg10: memref<1x128xf32, #tpu.memory_space<vmem>>, %arg11: memref<1x128xf32, #tpu.memory_space<vmem>>, %arg12: memref<1x8x128xbf16, #tpu.memory_space<vmem>>) attributes {dimension_semantics = [#tpu.dimension_semantics<parallel>], iteration_bounds = array<i64: 2>, scalar_prefetch = 0 : i64, scratch_operands = 0 : i64, tpu.core_type = #tpu.core_type<tc>, window_params = [{transform_indices = @transform_0, window_bounds = array<i64: 1, 8, 128>}, {transform_indices = @transform_1, window_bounds = array<i64: 1, 8, 128>}, {transform_indices = @transform_2, window_bounds = array<i64: 1, 8, 8>}, {pipeline_mode = #tpu.pipeline_mode<synchronous>, transform_indices = @transform_3, window_bounds = array<i64: 128, 512>}, {pipeline_mode = #tpu.pipeline_mode<synchronous>, transform_indices = @transform_4, window_bounds = array<i64: 1, 512>}, {pipeline_mode = #tpu.pipeline_mode<synchronous>, transform_indices = @transform_5, window_bounds = array<i64: 128, 1024>}, {pipeline_mode = #tpu.pipeline_mode<synchronous>, transform_indices = @transform_6, window_bounds = array<i64: 1, 1024>}, {pipeline_mode = #tpu.pipeline_mode<synchronous>, transform_indices = @transform_7, window_bounds = array<i64: 512, 128>}, {pipeline_mode = #tpu.pipeline_mode<synchronous>, transform_indices = @transform_8, window_bounds = array<i64: 1, 128>}, {pipeline_mode = #tpu.pipeline_mode<synchronous>, transform_indices = @transform_9, window_bounds = array<i64: 1, 128>}, {pipeline_mode = #tpu.pipeline_mode<synchronous>, transform_indices = @transform_10, window_bounds = array<i64: 1, 128>}, {transform_indices = @transform_11, window_bounds = array<i64: 1, 8, 128>}]} {
    %c0 = arith.constant 0 : index
    %c0_0 = arith.constant 0 : index
    %c0_1 = arith.constant 0 : index
    %0 = vector.load %arg1[%c0, %c0_0, %c0_1] : memref<1x8x128xbf16, #tpu.memory_space<vmem>>, vector<1x8x128xbf16>
    %1 = vector.shape_cast %0 : vector<1x8x128xbf16> to vector<8x128xbf16>
    %c0_2 = arith.constant 0 : index
    %c0_3 = arith.constant 0 : index
    %c0_4 = arith.constant 0 : index
    %2 = vector.load %arg2[%c0_2, %c0_3, %c0_4] : memref<1x8x128xbf16, #tpu.memory_space<vmem>>, vector<1x8x128xbf16>
    %3 = vector.shape_cast %2 : vector<1x8x128xbf16> to vector<8x128xbf16>
    %c0_5 = arith.constant 0 : index
    %c0_6 = arith.constant 0 : index
    %4 = vector.load %arg4[%c0_5, %c0_6] : memref<128x512xbf16, #tpu.memory_space<vmem>>, vector<128x512xbf16>
    %cst = arith.constant dense<0.000000e+00> : vector<8x512xf32>
    %5 = tpu.matmul %1, %4, %cst {dimension_numbers = #tpu.dot_dimension_numbers<[1], [0], [0], [1], [0, 0, 1, 1], [], []>} : vector<8x128xbf16>, vector<128x512xbf16>, vector<8x512xf32> -> vector<8x512xf32>
    %c0_7 = arith.constant 0 : index
    %c0_8 = arith.constant 0 : index
    %6 = vector.load %arg5[%c0_7, %c0_8] : memref<1x512xf32, #tpu.memory_space<vmem>>, vector<1x512xf32>
    %7 = vector.broadcast %6 : vector<1x512xf32> to vector<8x512xf32>
    %8 = arith.addf %5, %7 : vector<8x512xf32>
    %c0_9 = arith.constant 0 : index
    %c0_10 = arith.constant 0 : index
    %9 = vector.load %arg6[%c0_9, %c0_10] : memref<128x1024xbf16, #tpu.memory_space<vmem>>, vector<128x1024xbf16>
    %cst_11 = arith.constant dense<0.000000e+00> : vector<8x1024xf32>
    %10 = tpu.matmul %3, %9, %cst_11 {dimension_numbers = #tpu.dot_dimension_numbers<[1], [0], [0], [1], [0, 0, 1, 1], [], []>} : vector<8x128xbf16>, vector<128x1024xbf16>, vector<8x1024xf32> -> vector<8x1024xf32>
    %c0_12 = arith.constant 0 : index
    %c0_13 = arith.constant 0 : index
    %11 = vector.load %arg7[%c0_12, %c0_13] : memref<1x1024xf32, #tpu.memory_space<vmem>>, vector<1x1024xf32>
    %12 = vector.broadcast %11 : vector<1x1024xf32> to vector<8x1024xf32>
    %13 = arith.addf %10, %12 : vector<8x1024xf32>
    %c0_14 = arith.constant 0 : index
    %c0_15 = arith.constant 0 : index
    %c0_16 = arith.constant 0 : index
    %14 = vector.load %arg3[%c0_14, %c0_15, %c0_16] : memref<1x8x8xi32, #tpu.memory_space<vmem>>, vector<1x8x8xi32>
    %15 = vector.shape_cast %14 : vector<1x8x8xi32> to vector<8x8xi32>
    %c0_i32 = arith.constant 0 : i32
    %16 = vector.broadcast %c0_i32 : i32 to vector<8x8xi32>
    %17 = arith.cmpi eq, %15, %16 : vector<8x8xi32>
    %cst_17 = arith.constant 0.000000e+00 : f32
    %18 = vector.broadcast %cst_17 : f32 to vector<8x128xf32>
    %19 = vector.extract_strided_slice %8 {offsets = [0, 0], sizes = [8, 128], strides = [1, 1]} : vector<8x512xf32> to vector<8x128xf32>
    %20 = arith.truncf %19 : vector<8x128xf32> to vector<8x128xbf16>
    %21 = vector.extract_strided_slice %13 {offsets = [0, 0], sizes = [8, 128], strides = [1, 1]} : vector<8x1024xf32> to vector<8x128xf32>
    %22 = arith.truncf %21 : vector<8x128xf32> to vector<8x128xbf16>
    %23 = vector.extract_strided_slice %13 {offsets = [0, 512], sizes = [8, 128], strides = [1, 1]} : vector<8x1024xf32> to vector<8x128xf32>
    %24 = arith.truncf %23 : vector<8x128xf32> to vector<8x128xbf16>
    %cst_18 = arith.constant dense<0.000000e+00> : vector<8x8xf32>
    %25 = tpu.matmul %20, %22, %cst_18 {dimension_numbers = #tpu.dot_dimension_numbers<[1], [1], [0], [0], [0, 0, 1, 0], [], []>} : vector<8x128xbf16>, vector<8x128xbf16>, vector<8x8xf32> -> vector<8x8xf32>
    %cst_19 = arith.constant 0.353553385 : f32
    %26 = vector.broadcast %cst_19 : f32 to vector<8x8xf32>
    %27 = arith.mulf %25, %26 : vector<8x8xf32>
    %cst_20 = arith.constant -1.000000e+09 : f32
    %28 = vector.broadcast %cst_20 : f32 to vector<8x8xf32>
    %29 = arith.select %17, %28, %27 : vector<8x8xi1>, vector<8x8xf32>
    %cst_21 = arith.constant dense<0xFF800000> : vector<8xf32>
    %30 = vector.multi_reduction <maximumf>, %29, %cst_21 [1] : vector<8x8xf32> to vector<8xf32>
    %31 = vector.shape_cast %30 : vector<8xf32> to vector<8x1xf32>
    %32 = vector.broadcast %31 : vector<8x1xf32> to vector<8x8xf32>
    %33 = arith.subf %29, %32 : vector<8x8xf32>
    %34 = math.exp %33 : vector<8x8xf32>
    %cst_22 = arith.constant dense<0.000000e+00> : vector<8xf32>
    %35 = vector.multi_reduction <add>, %34, %cst_22 [1] : vector<8x8xf32> to vector<8xf32>
    %36 = vector.shape_cast %35 : vector<8xf32> to vector<8x1xf32>
    %37 = tpu.reciprocal %36 {approx = true} : vector<8x1xf32> -> vector<8x1xf32>
    %38 = vector.broadcast %37 : vector<8x1xf32> to vector<8x8xf32>
    %39 = arith.mulf %34, %38 : vector<8x8xf32>
    %40 = arith.truncf %39 : vector<8x8xf32> to vector<8x8xbf16>
    %cst_23 = arith.constant dense<0.000000e+00> : vector<8x128xf32>
    %41 = tpu.matmul %40, %24, %cst_23 {dimension_numbers = #tpu.dot_dimension_numbers<[1], [0], [0], [1], [0, 0, 1, 1], [], []>} : vector<8x8xbf16>, vector<8x128xbf16>, vector<8x128xf32> -> vector<8x128xf32>
    %42 = arith.truncf %41 : vector<8x128xf32> to vector<8x128xbf16>
    %c0_24 = arith.constant 0 : index
    %c0_25 = arith.constant 0 : index
    %43 = vector.load %arg8[%c0_24, %c0_25] : memref<512x128xbf16, #tpu.memory_space<vmem>>, vector<128x128xbf16>
    %cst_26 = arith.constant dense<0.000000e+00> : vector<8x128xf32>
    %44 = tpu.matmul %42, %43, %cst_26 {dimension_numbers = #tpu.dot_dimension_numbers<[1], [0], [0], [1], [0, 0, 1, 1], [], []>} : vector<8x128xbf16>, vector<128x128xbf16>, vector<8x128xf32> -> vector<8x128xf32>
    %45 = arith.addf %18, %44 : vector<8x128xf32>
    %46 = vector.extract_strided_slice %8 {offsets = [0, 128], sizes = [8, 128], strides = [1, 1]} : vector<8x512xf32> to vector<8x128xf32>
    %47 = arith.truncf %46 : vector<8x128xf32> to vector<8x128xbf16>
    %48 = vector.extract_strided_slice %13 {offsets = [0, 128], sizes = [8, 128], strides = [1, 1]} : vector<8x1024xf32> to vector<8x128xf32>
    %49 = arith.truncf %48 : vector<8x128xf32> to vector<8x128xbf16>
    %50 = vector.extract_strided_slice %13 {offsets = [0, 640], sizes = [8, 128], strides = [1, 1]} : vector<8x1024xf32> to vector<8x128xf32>
    %51 = arith.truncf %50 : vector<8x128xf32> to vector<8x128xbf16>
    %cst_27 = arith.constant dense<0.000000e+00> : vector<8x8xf32>
    %52 = tpu.matmul %47, %49, %cst_27 {dimension_numbers = #tpu.dot_dimension_numbers<[1], [1], [0], [0], [0, 0, 1, 0], [], []>} : vector<8x128xbf16>, vector<8x128xbf16>, vector<8x8xf32> -> vector<8x8xf32>
    %cst_28 = arith.constant 0.353553385 : f32
    %53 = vector.broadcast %cst_28 : f32 to vector<8x8xf32>
    %54 = arith.mulf %52, %53 : vector<8x8xf32>
    %cst_29 = arith.constant -1.000000e+09 : f32
    %55 = vector.broadcast %cst_29 : f32 to vector<8x8xf32>
    %56 = arith.select %17, %55, %54 : vector<8x8xi1>, vector<8x8xf32>
    %cst_30 = arith.constant dense<0xFF800000> : vector<8xf32>
    %57 = vector.multi_reduction <maximumf>, %56, %cst_30 [1] : vector<8x8xf32> to vector<8xf32>
    %58 = vector.shape_cast %57 : vector<8xf32> to vector<8x1xf32>
    %59 = vector.broadcast %58 : vector<8x1xf32> to vector<8x8xf32>
    %60 = arith.subf %56, %59 : vector<8x8xf32>
    %61 = math.exp %60 : vector<8x8xf32>
    %cst_31 = arith.constant dense<0.000000e+00> : vector<8xf32>
    %62 = vector.multi_reduction <add>, %61, %cst_31 [1] : vector<8x8xf32> to vector<8xf32>
    %63 = vector.shape_cast %62 : vector<8xf32> to vector<8x1xf32>
    %64 = tpu.reciprocal %63 {approx = true} : vector<8x1xf32> -> vector<8x1xf32>
    %65 = vector.broadcast %64 : vector<8x1xf32> to vector<8x8xf32>
    %66 = arith.mulf %61, %65 : vector<8x8xf32>
    %67 = arith.truncf %66 : vector<8x8xf32> to vector<8x8xbf16>
    %cst_32 = arith.constant dense<0.000000e+00> : vector<8x128xf32>
    %68 = tpu.matmul %67, %51, %cst_32 {dimension_numbers = #tpu.dot_dimension_numbers<[1], [0], [0], [1], [0, 0, 1, 1], [], []>} : vector<8x8xbf16>, vector<8x128xbf16>, vector<8x128xf32> -> vector<8x128xf32>
    %69 = arith.truncf %68 : vector<8x128xf32> to vector<8x128xbf16>
    %c128 = arith.constant 128 : index
    %c0_33 = arith.constant 0 : index
    %70 = vector.load %arg8[%c128, %c0_33] : memref<512x128xbf16, #tpu.memory_space<vmem>>, vector<128x128xbf16>
    %cst_34 = arith.constant dense<0.000000e+00> : vector<8x128xf32>
    %71 = tpu.matmul %69, %70, %cst_34 {dimension_numbers = #tpu.dot_dimension_numbers<[1], [0], [0], [1], [0, 0, 1, 1], [], []>} : vector<8x128xbf16>, vector<128x128xbf16>, vector<8x128xf32> -> vector<8x128xf32>
    %72 = arith.addf %45, %71 : vector<8x128xf32>
    %73 = vector.extract_strided_slice %8 {offsets = [0, 256], sizes = [8, 128], strides = [1, 1]} : vector<8x512xf32> to vector<8x128xf32>
    %74 = arith.truncf %73 : vector<8x128xf32> to vector<8x128xbf16>
    %75 = vector.extract_strided_slice %13 {offsets = [0, 256], sizes = [8, 128], strides = [1, 1]} : vector<8x1024xf32> to vector<8x128xf32>
    %76 = arith.truncf %75 : vector<8x128xf32> to vector<8x128xbf16>
    %77 = vector.extract_strided_slice %13 {offsets = [0, 768], sizes = [8, 128], strides = [1, 1]} : vector<8x1024xf32> to vector<8x128xf32>
    %78 = arith.truncf %77 : vector<8x128xf32> to vector<8x128xbf16>
    %cst_35 = arith.constant dense<0.000000e+00> : vector<8x8xf32>
    %79 = tpu.matmul %74, %76, %cst_35 {dimension_numbers = #tpu.dot_dimension_numbers<[1], [1], [0], [0], [0, 0, 1, 0], [], []>} : vector<8x128xbf16>, vector<8x128xbf16>, vector<8x8xf32> -> vector<8x8xf32>
    %cst_36 = arith.constant 0.353553385 : f32
    %80 = vector.broadcast %cst_36 : f32 to vector<8x8xf32>
    %81 = arith.mulf %79, %80 : vector<8x8xf32>
    %cst_37 = arith.constant -1.000000e+09 : f32
    %82 = vector.broadcast %cst_37 : f32 to vector<8x8xf32>
    %83 = arith.select %17, %82, %81 : vector<8x8xi1>, vector<8x8xf32>
    %cst_38 = arith.constant dense<0xFF800000> : vector<8xf32>
    %84 = vector.multi_reduction <maximumf>, %83, %cst_38 [1] : vector<8x8xf32> to vector<8xf32>
    %85 = vector.shape_cast %84 : vector<8xf32> to vector<8x1xf32>
    %86 = vector.broadcast %85 : vector<8x1xf32> to vector<8x8xf32>
    %87 = arith.subf %83, %86 : vector<8x8xf32>
    %88 = math.exp %87 : vector<8x8xf32>
    %cst_39 = arith.constant dense<0.000000e+00> : vector<8xf32>
    %89 = vector.multi_reduction <add>, %88, %cst_39 [1] : vector<8x8xf32> to vector<8xf32>
    %90 = vector.shape_cast %89 : vector<8xf32> to vector<8x1xf32>
    %91 = tpu.reciprocal %90 {approx = true} : vector<8x1xf32> -> vector<8x1xf32>
    %92 = vector.broadcast %91 : vector<8x1xf32> to vector<8x8xf32>
    %93 = arith.mulf %88, %92 : vector<8x8xf32>
    %94 = arith.truncf %93 : vector<8x8xf32> to vector<8x8xbf16>
    %cst_40 = arith.constant dense<0.000000e+00> : vector<8x128xf32>
    %95 = tpu.matmul %94, %78, %cst_40 {dimension_numbers = #tpu.dot_dimension_numbers<[1], [0], [0], [1], [0, 0, 1, 1], [], []>} : vector<8x8xbf16>, vector<8x128xbf16>, vector<8x128xf32> -> vector<8x128xf32>
    %96 = arith.truncf %95 : vector<8x128xf32> to vector<8x128xbf16>
    %c256 = arith.constant 256 : index
    %c0_41 = arith.constant 0 : index
    %97 = vector.load %arg8[%c256, %c0_41] : memref<512x128xbf16, #tpu.memory_space<vmem>>, vector<128x128xbf16>
    %cst_42 = arith.constant dense<0.000000e+00> : vector<8x128xf32>
    %98 = tpu.matmul %96, %97, %cst_42 {dimension_numbers = #tpu.dot_dimension_numbers<[1], [0], [0], [1], [0, 0, 1, 1], [], []>} : vector<8x128xbf16>, vector<128x128xbf16>, vector<8x128xf32> -> vector<8x128xf32>
    %99 = arith.addf %72, %98 : vector<8x128xf32>
    %100 = vector.extract_strided_slice %8 {offsets = [0, 384], sizes = [8, 128], strides = [1, 1]} : vector<8x512xf32> to vector<8x128xf32>
    %101 = arith.truncf %100 : vector<8x128xf32> to vector<8x128xbf16>
    %102 = vector.extract_strided_slice %13 {offsets = [0, 384], sizes = [8, 128], strides = [1, 1]} : vector<8x1024xf32> to vector<8x128xf32>
    %103 = arith.truncf %102 : vector<8x128xf32> to vector<8x128xbf16>
    %104 = vector.extract_strided_slice %13 {offsets = [0, 896], sizes = [8, 128], strides = [1, 1]} : vector<8x1024xf32> to vector<8x128xf32>
    %105 = arith.truncf %104 : vector<8x128xf32> to vector<8x128xbf16>
    %cst_43 = arith.constant dense<0.000000e+00> : vector<8x8xf32>
    %106 = tpu.matmul %101, %103, %cst_43 {dimension_numbers = #tpu.dot_dimension_numbers<[1], [1], [0], [0], [0, 0, 1, 0], [], []>} : vector<8x128xbf16>, vector<8x128xbf16>, vector<8x8xf32> -> vector<8x8xf32>
    %cst_44 = arith.constant 0.353553385 : f32
    %107 = vector.broadcast %cst_44 : f32 to vector<8x8xf32>
    %108 = arith.mulf %106, %107 : vector<8x8xf32>
    %cst_45 = arith.constant -1.000000e+09 : f32
    %109 = vector.broadcast %cst_45 : f32 to vector<8x8xf32>
    %110 = arith.select %17, %109, %108 : vector<8x8xi1>, vector<8x8xf32>
    %cst_46 = arith.constant dense<0xFF800000> : vector<8xf32>
    %111 = vector.multi_reduction <maximumf>, %110, %cst_46 [1] : vector<8x8xf32> to vector<8xf32>
    %112 = vector.shape_cast %111 : vector<8xf32> to vector<8x1xf32>
    %113 = vector.broadcast %112 : vector<8x1xf32> to vector<8x8xf32>
    %114 = arith.subf %110, %113 : vector<8x8xf32>
    %115 = math.exp %114 : vector<8x8xf32>
    %cst_47 = arith.constant dense<0.000000e+00> : vector<8xf32>
    %116 = vector.multi_reduction <add>, %115, %cst_47 [1] : vector<8x8xf32> to vector<8xf32>
    %117 = vector.shape_cast %116 : vector<8xf32> to vector<8x1xf32>
    %118 = tpu.reciprocal %117 {approx = true} : vector<8x1xf32> -> vector<8x1xf32>
    %119 = vector.broadcast %118 : vector<8x1xf32> to vector<8x8xf32>
    %120 = arith.mulf %115, %119 : vector<8x8xf32>
    %121 = arith.truncf %120 : vector<8x8xf32> to vector<8x8xbf16>
    %cst_48 = arith.constant dense<0.000000e+00> : vector<8x128xf32>
    %122 = tpu.matmul %121, %105, %cst_48 {dimension_numbers = #tpu.dot_dimension_numbers<[1], [0], [0], [1], [0, 0, 1, 1], [], []>} : vector<8x8xbf16>, vector<8x128xbf16>, vector<8x128xf32> -> vector<8x128xf32>
    %123 = arith.truncf %122 : vector<8x128xf32> to vector<8x128xbf16>
    %c384 = arith.constant 384 : index
    %c0_49 = arith.constant 0 : index
    %124 = vector.load %arg8[%c384, %c0_49] : memref<512x128xbf16, #tpu.memory_space<vmem>>, vector<128x128xbf16>
    %cst_50 = arith.constant dense<0.000000e+00> : vector<8x128xf32>
    %125 = tpu.matmul %123, %124, %cst_50 {dimension_numbers = #tpu.dot_dimension_numbers<[1], [0], [0], [1], [0, 0, 1, 1], [], []>} : vector<8x128xbf16>, vector<128x128xbf16>, vector<8x128xf32> -> vector<8x128xf32>
    %126 = arith.addf %99, %125 : vector<8x128xf32>
    %c0_51 = arith.constant 0 : index
    %c0_52 = arith.constant 0 : index
    %127 = vector.load %arg9[%c0_51, %c0_52] : memref<1x128xf32, #tpu.memory_space<vmem>>, vector<1x128xf32>
    %128 = vector.broadcast %127 : vector<1x128xf32> to vector<8x128xf32>
    %129 = arith.addf %126, %128 : vector<8x128xf32>
    %130 = arith.extf %1 : vector<8x128xbf16> to vector<8x128xf32>
    %131 = arith.addf %129, %130 : vector<8x128xf32>
    %c0_53 = arith.constant 0 : index
    %c0_54 = arith.constant 0 : index
    %132 = vector.load %arg10[%c0_53, %c0_54] : memref<1x128xf32, #tpu.memory_space<vmem>>, vector<1x128xf32>
    %c0_55 = arith.constant 0 : index
    %c0_56 = arith.constant 0 : index
    %133 = vector.load %arg11[%c0_55, %c0_56] : memref<1x128xf32, #tpu.memory_space<vmem>>, vector<1x128xf32>
    %cst_57 = arith.constant dense<0.000000e+00> : vector<8xf32>
    %134 = vector.multi_reduction <add>, %131, %cst_57 [1] : vector<8x128xf32> to vector<8xf32>
    %135 = vector.shape_cast %134 : vector<8xf32> to vector<8x1xf32>
    %cst_58 = arith.constant 3.125000e-02 : f32
    %136 = vector.broadcast %cst_58 : f32 to vector<8x1xf32>
    %137 = arith.mulf %135, %136 : vector<8x1xf32>
    %138 = arith.mulf %131, %131 : vector<8x128xf32>
    %cst_59 = arith.constant dense<0.000000e+00> : vector<8xf32>
    %139 = vector.multi_reduction <add>, %138, %cst_59 [1] : vector<8x128xf32> to vector<8xf32>
    %140 = vector.shape_cast %139 : vector<8xf32> to vector<8x1xf32>
    %cst_60 = arith.constant 3.125000e-02 : f32
    %141 = vector.broadcast %cst_60 : f32 to vector<8x1xf32>
    %142 = arith.mulf %140, %141 : vector<8x1xf32>
    %143 = arith.mulf %137, %137 : vector<8x1xf32>
    %144 = arith.subf %142, %143 : vector<8x1xf32>
    %cst_61 = arith.constant 0.000000e+00 : f32
    %145 = vector.broadcast %cst_61 : f32 to vector<8x1xf32>
    %146 = arith.maximumf %144, %145 : vector<8x1xf32>
    %147 = vector.broadcast %137 : vector<8x1xf32> to vector<8x128xf32>
    %148 = arith.subf %131, %147 : vector<8x128xf32>
    %cst_62 = arith.constant 9.99999974E-6 : f32
    %149 = vector.broadcast %cst_62 : f32 to vector<8x1xf32>
    %150 = arith.addf %146, %149 : vector<8x1xf32>
    %151 = math.rsqrt %150 : vector<8x1xf32>
    %152 = vector.broadcast %151 : vector<8x1xf32> to vector<8x128xf32>
    %153 = arith.mulf %148, %152 : vector<8x128xf32>
    %154 = vector.broadcast %132 : vector<1x128xf32> to vector<8x128xf32>
    %155 = arith.mulf %153, %154 : vector<8x128xf32>
    %156 = vector.broadcast %133 : vector<1x128xf32> to vector<8x128xf32>
    %157 = arith.addf %155, %156 : vector<8x128xf32>
    %158 = arith.truncf %157 : vector<8x128xf32> to vector<8x128xbf16>
    %c0_63 = arith.constant 0 : index
    %c0_64 = arith.constant 0 : index
    %c0_65 = arith.constant 0 : index
    %159 = vector.load %arg12[%c0_63, %c0_64, %c0_65] : memref<1x8x128xbf16, #tpu.memory_space<vmem>>, vector<1x8x128xbf16>
    %160 = vector.shape_cast %159 : vector<1x8x128xbf16> to vector<8x128xbf16>
    %161 = vector.shape_cast %158 : vector<8x128xbf16> to vector<1x8x128xbf16>
    tpu.vector_store %arg12[%c0_63, %c0_64, %c0_65], %161 {strides = array<i32>} : memref<1x8x128xbf16, #tpu.memory_space<vmem>>, vector<1x8x128xbf16>,
    return
  }
  func.func @transform_0(%arg0: i32) -> (i32, i32, i32) {
    %c0_i32 = arith.constant 0 : i32
    %c0_i32_0 = arith.constant 0 : i32
    %c0_i32_1 = arith.constant 0 : i32
    return %arg0, %c0_i32, %c0_i32_0 : i32, i32, i32
  }
  func.func @transform_1(%arg0: i32) -> (i32, i32, i32) {
    %c0_i32 = arith.constant 0 : i32
    %c0_i32_0 = arith.constant 0 : i32
    %c0_i32_1 = arith.constant 0 : i32
    return %arg0, %c0_i32, %c0_i32_0 : i32, i32, i32
  }
  func.func @transform_2(%arg0: i32) -> (i32, i32, i32) {
    %c0_i32 = arith.constant 0 : i32
    %c0_i32_0 = arith.constant 0 : i32
    %c0_i32_1 = arith.constant 0 : i32
    return %arg0, %c0_i32, %c0_i32_0 : i32, i32, i32
  }
  func.func @transform_3(%arg0: i32) -> (i32, i32) {
    %c0_i32 = arith.constant 0 : i32
    %c0_i32_0 = arith.constant 0 : i32
    %c0_i32_1 = arith.constant 0 : i32
    return %c0_i32, %c0_i32_0 : i32, i32
  }
  func.func @transform_4(%arg0: i32) -> (i32, i32) {
    %c0_i32 = arith.constant 0 : i32
    %c0_i32_0 = arith.constant 0 : i32
    %c0_i32_1 = arith.constant 0 : i32
    return %c0_i32, %c0_i32_0 : i32, i32
  }
  func.func @transform_5(%arg0: i32) -> (i32, i32) {
    %c0_i32 = arith.constant 0 : i32
    %c0_i32_0 = arith.constant 0 : i32
    %c0_i32_1 = arith.constant 0 : i32
    return %c0_i32, %c0_i32_0 : i32, i32
  }
  func.func @transform_6(%arg0: i32) -> (i32, i32) {
    %c0_i32 = arith.constant 0 : i32
    %c0_i32_0 = arith.constant 0 : i32
    %c0_i32_1 = arith.constant 0 : i32
    return %c0_i32, %c0_i32_0 : i32, i32
  }
  func.func @transform_7(%arg0: i32) -> (i32, i32) {
    %c0_i32 = arith.constant 0 : i32
    %c0_i32_0 = arith.constant 0 : i32
    %c0_i32_1 = arith.constant 0 : i32
    return %c0_i32, %c0_i32_0 : i32, i32
  }
  func.func @transform_8(%arg0: i32) -> (i32, i32) {
    %c0_i32 = arith.constant 0 : i32
    %c0_i32_0 = arith.constant 0 : i32
    %c0_i32_1 = arith.constant 0 : i32
    return %c0_i32, %c0_i32_0 : i32, i32
  }
  func.func @transform_9(%arg0: i32) -> (i32, i32) {
    %c0_i32 = arith.constant 0 : i32
    %c0_i32_0 = arith.constant 0 : i32
    %c0_i32_1 = arith.constant 0 : i32
    return %c0_i32, %c0_i32_0 : i32, i32
  }
  func.func @transform_10(%arg0: i32) -> (i32, i32) {
    %c0_i32 = arith.constant 0 : i32
    %c0_i32_0 = arith.constant 0 : i32
    %c0_i32_1 = arith.constant 0 : i32
    return %c0_i32, %c0_i32_0 : i32, i32
  }
  func.func @transform_11(%arg0: i32) -> (i32, i32, i32) {
    %c0_i32 = arith.constant 0 : i32
    %c0_i32_0 = arith.constant 0 : i32
    %c0_i32_1 = arith.constant 0 : i32
    return %arg0, %c0_i32, %c0_i32_0 : i32, i32, i32
  }
}

module attributes {stable_mosaic.version = 11 : i64} {
  func.func @_linear_kernel(%arg0: i32, %arg1: i32, %arg2: memref<16x128xbf16, #tpu.memory_space<vmem>>, %arg3: memref<128x128xbf16, #tpu.memory_space<vmem>>, %arg4: memref<1x128xf32, #tpu.memory_space<vmem>>, %arg5: memref<16x128xf32, #tpu.memory_space<vmem>>) attributes {dimension_semantics = [#tpu.dimension_semantics<parallel>, #tpu.dimension_semantics<parallel>], iteration_bounds = array<i64: 1, 1>, scalar_prefetch = 0 : i64, scratch_operands = 0 : i64, tpu.core_type = #tpu.core_type<tc>, window_params = [{transform_indices = @transform_0, window_bounds = array<i64: 16, 128>}, {transform_indices = @transform_1, window_bounds = array<i64: 128, 128>}, {transform_indices = @transform_2, window_bounds = array<i64: 1, 128>}, {transform_indices = @transform_3, window_bounds = array<i64: 16, 128>}]} {
    %c0 = arith.constant 0 : index
    %c0_0 = arith.constant 0 : index
    %0 = vector.load %arg2[%c0, %c0_0] : memref<16x128xbf16, #tpu.memory_space<vmem>>, vector<16x128xbf16>
    %c0_1 = arith.constant 0 : index
    %c0_2 = arith.constant 0 : index
    %1 = vector.load %arg3[%c0_1, %c0_2] : memref<128x128xbf16, #tpu.memory_space<vmem>>, vector<128x128xbf16>
    %cst = arith.constant dense<0.000000e+00> : vector<16x128xf32>
    %2 = tpu.matmul %0, %1, %cst {dimension_numbers = #tpu.dot_dimension_numbers<[1], [0], [0], [1], [0, 0, 1, 1], [], []>} : vector<16x128xbf16>, vector<128x128xbf16>, vector<16x128xf32> -> vector<16x128xf32>
    %c0_3 = arith.constant 0 : index
    %c0_4 = arith.constant 0 : index
    %3 = vector.load %arg4[%c0_3, %c0_4] : memref<1x128xf32, #tpu.memory_space<vmem>>, vector<1x128xf32>
    %4 = vector.broadcast %3 : vector<1x128xf32> to vector<16x128xf32>
    %5 = arith.addf %2, %4 : vector<16x128xf32>
    %c0_5 = arith.constant 0 : index
    %c0_6 = arith.constant 0 : index
    %6 = vector.load %arg5[%c0_5, %c0_6] : memref<16x128xf32, #tpu.memory_space<vmem>>, vector<16x128xf32>
    tpu.vector_store %arg5[%c0_5, %c0_6], %5 {strides = array<i32>} : memref<16x128xf32, #tpu.memory_space<vmem>>, vector<16x128xf32>,
    return
  }
  func.func @transform_0(%arg0: i32, %arg1: i32) -> (i32, i32) {
    %c0_i32 = arith.constant 0 : i32
    %c0_i32_0 = arith.constant 0 : i32
    return %arg0, %c0_i32 : i32, i32
  }
  func.func @transform_1(%arg0: i32, %arg1: i32) -> (i32, i32) {
    %c0_i32 = arith.constant 0 : i32
    %c0_i32_0 = arith.constant 0 : i32
    return %c0_i32, %arg1 : i32, i32
  }
  func.func @transform_2(%arg0: i32, %arg1: i32) -> (i32, i32) {
    %c0_i32 = arith.constant 0 : i32
    %c0_i32_0 = arith.constant 0 : i32
    return %c0_i32, %arg1 : i32, i32
  }
  func.func @transform_3(%arg0: i32, %arg1: i32) -> (i32, i32) {
    %c0_i32 = arith.constant 0 : i32
    return %arg0, %arg1 : i32, i32
  }
}

</mosaic_0001>

<llo_original>
// kernel: transformer_forward.17
$region0: #{transformer_forward.17}
  #allocation0 [shape = 'u32[]', space=smem, size = 0x4, offset = 0x4, fixed_abs, tag = 'smem constant byte address 0x4 - core index']
  #allocation1 [shape = 'u32[144,128]{1,0:T(1,128)}', space=vmem, size = 0x12000, scoped, tag = 'internal scratch']
  %s0 = inlined_call_operand.vmem [shape: bf16[16,128], index: 0, kind: input, shape index: {}]
  %s1 = inlined_call_operand.vmem [shape: f32[1,128], index: 1, kind: input, shape index: {}]
  %s2 = inlined_call_operand.vmem [shape: f32[1,128], index: 2, kind: input, shape index: {}]
  %s3 = inlined_call_operand.vmem [shape: bf16[16,128], index: 3, kind: output, shape index: {}]
  %s4 = sld [smem:[#allocation0]]
  $region22: #{transformer_forward.17} parent=0
    _
  %s6 = ssub.s32 1, %s4
  %s7 = scalar_select 0, %s6, %s4
  // Predicated region
  $region2: #{transformer_forward.17} parent=0 // pred_check
    _
  $region3: #{transformer_forward.17} parent=0 // pred_check_branch
    %9 = sbr.rel (0) target = $region5
  $region4: #{transformer_forward.17} parent=0 // pred_region
    _
  $region5: #{transformer_forward.17} parent=0 // pred_fallthru
    _
  // Predicated region
  $region6: #{transformer_forward.17} parent=0 // pred_check
    _
  $region7: #{transformer_forward.17} parent=0 // pred_check_branch
    %11 = sbr.rel (0) target = $region9
  $region8: #{transformer_forward.17} parent=0 // pred_region
    _
  $region9: #{transformer_forward.17} parent=0 // pred_fallthru
    _
  // Predicated region
  $region10: #{transformer_forward.17} parent=0 // pred_check
    _
  $region11: #{transformer_forward.17} parent=0 // pred_check_branch
    %13 = sbr.rel (0) target = $region13
  $region12: #{transformer_forward.17} parent=0 // pred_region
    _
  $region13: #{transformer_forward.17} parent=0 // pred_fallthru
    _
  %v14 = vld [vmem:[%s0] sm:$0xf]
  %v15 = vld [vmem:[%s0 + $0x4] sm:$0xf]
  %v16 = vunpack.c.l.bf16 %v14
  %v17 = vunpack.c.l.bf16 %v15
  %v18 = vld [vmem:[%s1] sm:$0x1]
  %v19 = vld [vmem:[%s2] sm:$0x1]
  %20 = vadd.xlane.f32.xlu0 %v16
  %v21 = vpop.xlane.xlu0 %20
  %22 = vadd.xlane.f32.xlu0 %v17
  %v23 = vpop.xlane.xlu0 %22
  %v24 = vmul.f32 %v21, 0.03125
  %v25 = vmul.f32 %v23, 0.03125
  %v26 = vmul.f32 %v16, %v16
  %v27 = vmul.f32 %v17, %v17
  %28 = vadd.xlane.f32.xlu0 %v26
  %v29 = vpop.xlane.xlu0 %28
  %30 = vadd.xlane.f32.xlu0 %v27
  %v31 = vpop.xlane.xlu0 %30
  %v32 = vmul.f32 %v29, 0.03125
  %v33 = vmul.f32 %v31, 0.03125
  %v34 = vmul.f32 %v24, %v24
  %v35 = vmul.f32 %v25, %v25
  %v36 = vsub.f32 %v32, %v34
  %v37 = vsub.f32 %v33, %v35
  %v38 = vmax.f32 %v36, 0.0
  %v39 = vmax.f32 %v37, 0.0
  %v40 = vsub.f32 %v16, %v24
  %v41 = vsub.f32 %v17, %v25
  %v42 = vadd.f32 %v38, 1e-05
  %v43 = vadd.f32 %v39, 1e-05
  %v44 = vrsqrt.pop %v42
  %v45 = vrsqrt.pop %v43
  %v46 = vmul.f32 %v40, %v44
  %v47 = vmul.f32 %v41, %v45
  %v49 = vlaneseq
  %v50 = vshrl.u32 %v49, 7
  %v51 = vsub.s32 0, %v50
  %v52 = vrot.slane %v18, %v51
  %v54 = vmul.f32 %v46, %v52
  %v55 = vmul.f32 %v47, %v52
  %v57 = vlaneseq
  %v58 = vshrl.u32 %v57, 7
  %v59 = vsub.s32 0, %v58
  %v60 = vrot.slane %v19, %v59
  %v62 = vadd.f32 %v54, %v60
  %v63 = vadd.f32 %v55, %v60
  %v64 = vpack.c.bf16 %v63, %v62
  %v66 = vunpack.c.l.b16 %v64
  %v67 = vunpack.c.h.b16 %v64
  %v68 = vpack.c.b16 %v66, %v66
  %v69 = vpack.c.b16 %v67, %v67
  %72 = vst [vmem:[%s3] sm:$0xf] %v68
  %73 = vst [vmem:[%s3 + $0x4] sm:$0xf] %v69
  // Predicated region
  $region14: #{transformer_forward.17} parent=0 // pred_check
    _
  $region15: #{transformer_forward.17} parent=0 // pred_check_branch
    %75 = sbr.rel (0) target = $region17
  $region16: #{transformer_forward.17} parent=0 // pred_region
    _
  $region17: #{transformer_forward.17} parent=0 // pred_fallthru
    _
  // Predicated region
  $region18: #{transformer_forward.17} parent=0 // pred_check
    _
  $region19: #{transformer_forward.17} parent=0 // pred_check_branch
    %77 = sbr.rel (0) target = $region21
  $region20: #{transformer_forward.17} parent=0 // pred_region
    _
  $region21: #{transformer_forward.17} parent=0 // pred_fallthru
    _

// kernel: transformer_forward.14
$region0: #{transformer_forward.14}
  #allocation0 [shape = 'u32[]', space=smem, size = 0x4, offset = 0x4, fixed_abs, tag = 'smem constant byte address 0x4 - core index']
  #allocation1 [shape = 'u32[144,128]{1,0:T(1,128)}', space=vmem, size = 0x12000, scoped, tag = 'internal scratch']
  %s0 = inlined_call_operand.vmem [shape: bf16[16,128], index: 0, kind: input, shape index: {}]
  %s1 = inlined_call_operand.vmem [shape: bf16[128,128], index: 1, kind: input, shape index: {}]
  %s2 = inlined_call_operand.vmem [shape: f32[1,128], index: 2, kind: input, shape index: {}]
  %s3 = inlined_call_operand.vmem [shape: bf16[128,128], index: 3, kind: input, shape index: {}]
  %s4 = inlined_call_operand.vmem [shape: f32[1,128], index: 4, kind: input, shape index: {}]
  %s5 = inlined_call_operand.vmem [shape: f32[1,128], index: 5, kind: input, shape index: {}]
  %s6 = inlined_call_operand.vmem [shape: f32[1,128], index: 6, kind: input, shape index: {}]
  %s7 = inlined_call_operand.vmem [shape: bf16[16,128], index: 7, kind: output, shape index: {}]
  %s8 = sld [smem:[#allocation0]]
  $region38: #{transformer_forward.14} parent=0
    _
  %s10 = ssub.s32 1, %s8
  %s11 = scalar_select 0, %s10, %s8
  // Predicated region
  $region2: #{transformer_forward.14} parent=0 // pred_check
    _
  $region3: #{transformer_forward.14} parent=0 // pred_check_branch
    %13 = sbr.rel (0) target = $region5
  $region4: #{transformer_forward.14} parent=0 // pred_region
    _
  $region5: #{transformer_forward.14} parent=0 // pred_fallthru
    _
  // Predicated region
  $region6: #{transformer_forward.14} parent=0 // pred_check
    _
  $region7: #{transformer_forward.14} parent=0 // pred_check_branch
    %15 = sbr.rel (0) target = $region9
  $region8: #{transformer_forward.14} parent=0 // pred_region
    _
  $region9: #{transformer_forward.14} parent=0 // pred_fallthru
    _
  // Predicated region
  $region10: #{transformer_forward.14} parent=0 // pred_check
    _
  $region11: #{transformer_forward.14} parent=0 // pred_check_branch
    %17 = sbr.rel (0) target = $region13
  $region12: #{transformer_forward.14} parent=0 // pred_region
    _
  $region13: #{transformer_forward.14} parent=0 // pred_fallthru
    _
  // Predicated region
  $region14: #{transformer_forward.14} parent=0 // pred_check
    _
  $region15: #{transformer_forward.14} parent=0 // pred_check_branch
    %19 = sbr.rel (0) target = $region17
  $region16: #{transformer_forward.14} parent=0 // pred_region
    _
  $region17: #{transformer_forward.14} parent=0 // pred_fallthru
    _
  // Predicated region
  $region18: #{transformer_forward.14} parent=0 // pred_check
    _
  $region19: #{transformer_forward.14} parent=0 // pred_check_branch
    %21 = sbr.rel (0) target = $region21
  $region20: #{transformer_forward.14} parent=0 // pred_region
    _
  $region21: #{transformer_forward.14} parent=0 // pred_fallthru
    _
  // Predicated region
  $region22: #{transformer_forward.14} parent=0 // pred_check
    _
  $region23: #{transformer_forward.14} parent=0 // pred_check_branch
    %23 = sbr.rel (0) target = $region25
  $region24: #{transformer_forward.14} parent=0 // pred_region
    _
  $region25: #{transformer_forward.14} parent=0 // pred_fallthru
    _
  // Predicated region
  $region26: #{transformer_forward.14} parent=0 // pred_check
    _
  $region27: #{transformer_forward.14} parent=0 // pred_check_branch
    %25 = sbr.rel (0) target = $region29
  $region28: #{transformer_forward.14} parent=0 // pred_region
    _
  $region29: #{transformer_forward.14} parent=0 // pred_fallthru
    _
  %v27 = vld [vmem:[%s0] sm:$0xf]
  %v28 = vld [vmem:[%s0 + $0x4] sm:$0xf]
  %v29 = vld [vmem:[%s1] sm:$0xf]
  %v30 = vld [vmem:[%s1 + $0x4] sm:$0xf]
  %v31 = vld [vmem:[%s1 + $0x8] sm:$0xf]
  %v32 = vld [vmem:[%s1 + $0xc] sm:$0xf]
  %v33 = vld [vmem:[%s1 + $0x10] sm:$0xf]
  %v34 = vld [vmem:[%s1 + $0x14] sm:$0xf]
  %v35 = vld [vmem:[%s1 + $0x18] sm:$0xf]
  %v36 = vld [vmem:[%s1 + $0x1c] sm:$0xf]
  %v37 = vld [vmem:[%s1 + $0x20] sm:$0xf]
  %v38 = vld [vmem:[%s1 + $0x24] sm:$0xf]
  %v39 = vld [vmem:[%s1 + $0x28] sm:$0xf]
  %v40 = vld [vmem:[%s1 + $0x2c] sm:$0xf]
  %v41 = vld [vmem:[%s1 + $0x30] sm:$0xf]
  %v42 = vld [vmem:[%s1 + $0x34] sm:$0xf]
  %v43 = vld [vmem:[%s1 + $0x38] sm:$0xf]
  %v44 = vld [vmem:[%s1 + $0x3c] sm:$0xf]
  %v45 = vld [vmem:[%s2] sm:$0x1]
  %v47 = vlaneseq
  %v48 = vshrl.u32 %v47, 7
  %v49 = vsub.s32 0, %v48
  %v50 = vrot.slane %v45, %v49
  %v54 = vunpack.c.l.b16 %v27
  %v55 = vunpack.c.l.b16 %v28
  %v56 = vpack.c.b16 %v55, %v54
  %v74 = vunpack.c.l.b16 %v29
  %v75 = vunpack.c.l.b16 %v30
  %v76 = vunpack.c.l.b16 %v31
  %v77 = vunpack.c.l.b16 %v32
  %v78 = vunpack.c.l.b16 %v33
  %v79 = vunpack.c.l.b16 %v34
  %v80 = vunpack.c.l.b16 %v35
  %v81 = vunpack.c.l.b16 %v36
  %v82 = vunpack.c.l.b16 %v37
  %v83 = vunpack.c.l.b16 %v38
  %v84 = vunpack.c.l.b16 %v39
  %v85 = vunpack.c.l.b16 %v40
  %v86 = vunpack.c.l.b16 %v41
  %v87 = vunpack.c.l.b16 %v42
  %v88 = vunpack.c.l.b16 %v43
  %v89 = vunpack.c.l.b16 %v44
  %v90 = vpack.c.b16 %v75, %v74
  %v91 = vpack.c.b16 %v77, %v76
  %v92 = vpack.c.b16 %v79, %v78
  %v93 = vpack.c.b16 %v81, %v80
  %v94 = vpack.c.b16 %v83, %v82
  %v95 = vpack.c.b16 %v85, %v84
  %v96 = vpack.c.b16 %v87, %v86
  %v97 = vpack.c.b16 %v89, %v88
  %106 = vmatprep.subr.bf16.mxu0 0
  %107 = vmatpush1.bf16.msra.mxu0 %v90
  %108 = vmatprep.subr.bf16.mxu0 0
  %109 = vmatpush1.bf16.msra.mxu0 %v91
  %110 = vmatprep.subr.bf16.mxu0 0
  %111 = vmatpush1.bf16.msra.mxu0 %v92
  %112 = vmatprep.subr.bf16.mxu0 0
  %113 = vmatpush1.bf16.msra.mxu0 %v93
  %114 = vmatprep.subr.bf16.mxu0 0
  %115 = vmatpush1.bf16.msra.mxu0 %v94
  %116 = vmatprep.subr.bf16.mxu0 0
  %117 = vmatpush1.bf16.msra.mxu0 %v95
  %118 = vmatprep.subr.bf16.mxu0 0
  %119 = vmatpush1.bf16.msra.mxu0 %v96
  %120 = vmatprep.subr.bf16.mxu0 0
  %121 = vmatpush1.bf16.msra.mxu0 %v97
  %122 = vmatprep.subr.bf16.mxu0 0
  %123 = vmatpush1.bf16.msra.mxu0 0
  %124 = vmatprep.subr.bf16.mxu0 0
  %125 = vmatpush1.bf16.msra.mxu0 0
  %126 = vmatprep.subr.bf16.mxu0 0
  %127 = vmatpush1.bf16.msra.mxu0 0
  %128 = vmatprep.subr.bf16.mxu0 0
  %129 = vmatpush1.bf16.msra.mxu0 0
  %130 = vmatprep.subr.bf16.mxu0 0
  %131 = vmatpush1.bf16.msra.mxu0 0
  %132 = vmatprep.subr.bf16.mxu0 0
  %133 = vmatpush1.bf16.msra.mxu0 0
  %134 = vmatprep.subr.bf16.mxu0 0
  %135 = vmatpush1.bf16.msra.mxu0 0
  %136 = vmatprep.subr.bf16.mxu0 0
  %137 = vmatpush1.bf16.msra.mxu0 0
  %138 = vmatprep.mubr.bf16.mxu0 0
  %139 = vmatmul.mubr.bf16.gmra.mrb[0].mxu0 %v56
  %v140 = vpop.f32.mrb[0].mxu0
  %v141 = vadd.f32 %v50, %v140
  %v142 = vpop.f32.mrb[0].mxu0
  %v143 = vpop.f32.mrb[0].mxu0
  %v144 = vadd.f32 %v50, %v143
  %v145 = vpop.f32.mrb[0].mxu0
  %146 = vdwg.mxu0
  %v147 = vmul.f32 %v141, 0.5
  %v148 = vmul.f32 %v144, 0.5
  %v149 = vmul.f32 %v141, 0.70710677
  %v150 = vmul.f32 %v144, 0.70710677
  %v151 = verf.f32.pop %v149
  %v152 = verf.f32.pop %v150
  %v153 = vadd.f32 %v151, 1.0
  %v154 = vadd.f32 %v152, 1.0
  %v155 = vmul.f32 %v147, %v153
  %v156 = vmul.f32 %v148, %v154
  %v157 = vpack.c.bf16 %v156, %v155
  %v158 = vld [vmem:[%s3] sm:$0xf]
  %v159 = vld [vmem:[%s3 + $0x4] sm:$0xf]
  %v160 = vld [vmem:[%s3 + $0x8] sm:$0xf]
  %v161 = vld [vmem:[%s3 + $0xc] sm:$0xf]
  %v162 = vld [vmem:[%s3 + $0x10] sm:$0xf]
  %v163 = vld [vmem:[%s3 + $0x14] sm:$0xf]
  %v164 = vld [vmem:[%s3 + $0x18] sm:$0xf]
  %v165 = vld [vmem:[%s3 + $0x1c] sm:$0xf]
  %v166 = vld [vmem:[%s3 + $0x20] sm:$0xf]
  %v167 = vld [vmem:[%s3 + $0x24] sm:$0xf]
  %v168 = vld [vmem:[%s3 + $0x28] sm:$0xf]
  %v169 = vld [vmem:[%s3 + $0x2c] sm:$0xf]
  %v170 = vld [vmem:[%s3 + $0x30] sm:$0xf]
  %v171 = vld [vmem:[%s3 + $0x34] sm:$0xf]
  %v172 = vld [vmem:[%s3 + $0x38] sm:$0xf]
  %v173 = vld [vmem:[%s3 + $0x3c] sm:$0xf]
  %v174 = vld [vmem:[%s4] sm:$0x1]
  %v176 = vlaneseq
  %v177 = vshrl.u32 %v176, 7
  %v178 = vsub.s32 0, %v177
  %v179 = vrot.slane %v174, %v178
  %v197 = vunpack.c.l.b16 %v158
  %v198 = vunpack.c.l.b16 %v159
  %v199 = vunpack.c.l.b16 %v160
  %v200 = vunpack.c.l.b16 %v161
  %v201 = vunpack.c.l.b16 %v162
  %v202 = vunpack.c.l.b16 %v163
  %v203 = vunpack.c.l.b16 %v164
  %v204 = vunpack.c.l.b16 %v165
  %v205 = vunpack.c.l.b16 %v166
  %v206 = vunpack.c.l.b16 %v167
  %v207 = vunpack.c.l.b16 %v168
  %v208 = vunpack.c.l.b16 %v169
  %v209 = vunpack.c.l.b16 %v170
  %v210 = vunpack.c.l.b16 %v171
  %v211 = vunpack.c.l.b16 %v172
  %v212 = vunpack.c.l.b16 %v173
  %v213 = vpack.c.b16 %v198, %v197
  %v214 = vpack.c.b16 %v200, %v199
  %v215 = vpack.c.b16 %v202, %v201
  %v216 = vpack.c.b16 %v204, %v203
  %v217 = vpack.c.b16 %v206, %v205
  %v218 = vpack.c.b16 %v208, %v207
  %v219 = vpack.c.b16 %v210, %v209
  %v220 = vpack.c.b16 %v212, %v211
  %229 = vmatprep.subr.bf16.mxu0 0
  %230 = vmatpush1.bf16.msra.mxu0 %v213
  %231 = vmatprep.subr.bf16.mxu0 0
  %232 = vmatpush1.bf16.msra.mxu0 %v214
  %233 = vmatprep.subr.bf16.mxu0 0
  %234 = vmatpush1.bf16.msra.mxu0 %v215
  %235 = vmatprep.subr.bf16.mxu0 0
  %236 = vmatpush1.bf16.msra.mxu0 %v216
  %237 = vmatprep.subr.bf16.mxu0 0
  %238 = vmatpush1.bf16.msra.mxu0 %v217
  %239 = vmatprep.subr.bf16.mxu0 0
  %240 = vmatpush1.bf16.msra.mxu0 %v218
  %241 = vmatprep.subr.bf16.mxu0 0
  %242 = vmatpush1.bf16.msra.mxu0 %v219
  %243 = vmatprep.subr.bf16.mxu0 0
  %244 = vmatpush1.bf16.msra.mxu0 %v220
  %245 = vmatprep.subr.bf16.mxu0 0
  %246 = vmatpush1.bf16.msra.mxu0 0
  %247 = vmatprep.subr.bf16.mxu0 0
  %248 = vmatpush1.bf16.msra.mxu0 0
  %249 = vmatprep.subr.bf16.mxu0 0
  %250 = vmatpush1.bf16.msra.mxu0 0
  %251 = vmatprep.subr.bf16.mxu0 0
  %252 = vmatpush1.bf16.msra.mxu0 0
  %253 = vmatprep.subr.bf16.mxu0 0
  %254 = vmatpush1.bf16.msra.mxu0 0
  %255 = vmatprep.subr.bf16.mxu0 0
  %256 = vmatpush1.bf16.msra.mxu0 0
  %257 = vmatprep.subr.bf16.mxu0 0
  %258 = vmatpush1.bf16.msra.mxu0 0
  %259 = vmatprep.subr.bf16.mxu0 0
  %260 = vmatpush1.bf16.msra.mxu0 0
  %261 = vmatprep.mubr.bf16.mxu0 0
  %262 = vmatmul.mubr.bf16.gmra.mrb[0].mxu0 %v157
  %v263 = vpop.f32.mrb[0].mxu0
  %v264 = vadd.f32 %v179, %v263
  %v265 = vpop.f32.mrb[0].mxu0
  %v266 = vpop.f32.mrb[0].mxu0
  %v267 = vadd.f32 %v179, %v266
  %v268 = vpop.f32.mrb[0].mxu0
  %269 = vdwg.mxu0
  %v270 = vunpack.c.l.bf16 %v27
  %v271 = vunpack.c.l.bf16 %v28
  %v272 = vadd.f32 %v264, %v270
  %v273 = vadd.f32 %v267, %v271
  %v274 = vld [vmem:[%s5] sm:$0x1]
  %v275 = vld [vmem:[%s6] sm:$0x1]
  %276 = vadd.xlane.f32.xlu0 %v272
  %v277 = vpop.xlane.xlu0 %276
  %278 = vadd.xlane.f32.xlu0 %v273
  %v279 = vpop.xlane.xlu0 %278
  %v280 = vmul.f32 %v277, 0.03125
  %v281 = vmul.f32 %v279, 0.03125
  %v282 = vmul.f32 %v272, %v272
  %v283 = vmul.f32 %v273, %v273
  %284 = vadd.xlane.f32.xlu0 %v282
  %v285 = vpop.xlane.xlu0 %284
  %286 = vadd.xlane.f32.xlu0 %v283
  %v287 = vpop.xlane.xlu0 %286
  %v288 = vmul.f32 %v285, 0.03125
  %v289 = vmul.f32 %v287, 0.03125
  %v290 = vmul.f32 %v280, %v280
  %v291 = vmul.f32 %v281, %v281
  %v292 = vsub.f32 %v288, %v290
  %v293 = vsub.f32 %v289, %v291
  %v294 = vmax.f32 %v292, 0.0
  %v295 = vmax.f32 %v293, 0.0
  %v296 = vsub.f32 %v272, %v280
  %v297 = vsub.f32 %v273, %v281
  %v298 = vadd.f32 %v294, 1e-05
  %v299 = vadd.f32 %v295, 1e-05
  %v300 = vrsqrt.pop %v298
  %v301 = vrsqrt.pop %v299
  %v302 = vmul.f32 %v296, %v300
  %v303 = vmul.f32 %v297, %v301
  %v305 = vlaneseq
  %v306 = vshrl.u32 %v305, 7
  %v307 = vsub.s32 0, %v306
  %v308 = vrot.slane %v274, %v307
  %v310 = vmul.f32 %v302, %v308
  %v311 = vmul.f32 %v303, %v308
  %v313 = vlaneseq
  %v314 = vshrl.u32 %v313, 7
  %v315 = vsub.s32 0, %v314
  %v316 = vrot.slane %v275, %v315
  %v318 = vadd.f32 %v310, %v316
  %v319 = vadd.f32 %v311, %v316
  %v320 = vpack.c.bf16 %v319, %v318
  %v322 = vunpack.c.l.b16 %v320
  %v323 = vunpack.c.h.b16 %v320
  %v324 = vpack.c.b16 %v322, %v322
  %v325 = vpack.c.b16 %v323, %v323
  %328 = vst [vmem:[%s7] sm:$0xf] %v324
  %329 = vst [vmem:[%s7 + $0x4] sm:$0xf] %v325
  // Predicated region
  $region30: #{transformer_forward.14} parent=0 // pred_check
    _
  $region31: #{transformer_forward.14} parent=0 // pred_check_branch
    %331 = sbr.rel (0) target = $region33
  $region32: #{transformer_forward.14} parent=0 // pred_region
    _
  $region33: #{transformer_forward.14} parent=0 // pred_fallthru
    _
  // Predicated region
  $region34: #{transformer_forward.14} parent=0 // pred_check
    _
  $region35: #{transformer_forward.14} parent=0 // pred_check_branch
    %333 = sbr.rel (0) target = $region37
  $region36: #{transformer_forward.14} parent=0 // pred_region
    _
  $region37: #{transformer_forward.14} parent=0 // pred_fallthru
    _

// kernel: transformer_forward.25
$region0: #{transformer_forward.25}
  #allocation0 [shape = 'u32[]', space=smem, size = 0x4, offset = 0x4, fixed_abs, tag = 'smem constant byte address 0x4 - core index']
  #allocation1 [shape = 'u32[144,128]{1,0:T(1,128)}', space=vmem, size = 0x12000, scoped, tag = 'internal scratch']
  %s0 = inlined_call_operand.vmem [shape: bf16[16,128], index: 0, kind: input, shape index: {}]
  %s1 = inlined_call_operand.vmem [shape: bf16[128,128], index: 1, kind: input, shape index: {}]
  %s2 = inlined_call_operand.vmem [shape: f32[1,128], index: 2, kind: input, shape index: {}]
  %s3 = inlined_call_operand.vmem [shape: f32[16,128], index: 3, kind: output, shape index: {}]
  %s4 = sld [smem:[#allocation0]]
  $region22: #{transformer_forward.25} parent=0
    _
  %s6 = ssub.s32 1, %s4
  %s7 = scalar_select 0, %s6, %s4
  // Predicated region
  $region2: #{transformer_forward.25} parent=0 // pred_check
    _
  $region3: #{transformer_forward.25} parent=0 // pred_check_branch
    %9 = sbr.rel (0) target = $region5
  $region4: #{transformer_forward.25} parent=0 // pred_region
    _
  $region5: #{transformer_forward.25} parent=0 // pred_fallthru
    _
  // Predicated region
  $region6: #{transformer_forward.25} parent=0 // pred_check
    _
  $region7: #{transformer_forward.25} parent=0 // pred_check_branch
    %11 = sbr.rel (0) target = $region9
  $region8: #{transformer_forward.25} parent=0 // pred_region
    _
  $region9: #{transformer_forward.25} parent=0 // pred_fallthru
    _
  // Predicated region
  $region10: #{transformer_forward.25} parent=0 // pred_check
    _
  $region11: #{transformer_forward.25} parent=0 // pred_check_branch
    %13 = sbr.rel (0) target = $region13
  $region12: #{transformer_forward.25} parent=0 // pred_region
    _
  $region13: #{transformer_forward.25} parent=0 // pred_fallthru
    _
  %v15 = vld [vmem:[%s0] sm:$0xf]
  %v16 = vld [vmem:[%s0 + $0x4] sm:$0xf]
  %v17 = vld [vmem:[%s1] sm:$0xf]
  %v18 = vld [vmem:[%s1 + $0x4] sm:$0xf]
  %v19 = vld [vmem:[%s1 + $0x8] sm:$0xf]
  %v20 = vld [vmem:[%s1 + $0xc] sm:$0xf]
  %v21 = vld [vmem:[%s1 + $0x10] sm:$0xf]
  %v22 = vld [vmem:[%s1 + $0x14] sm:$0xf]
  %v23 = vld [vmem:[%s1 + $0x18] sm:$0xf]
  %v24 = vld [vmem:[%s1 + $0x1c] sm:$0xf]
  %v25 = vld [vmem:[%s1 + $0x20] sm:$0xf]
  %v26 = vld [vmem:[%s1 + $0x24] sm:$0xf]
  %v27 = vld [vmem:[%s1 + $0x28] sm:$0xf]
  %v28 = vld [vmem:[%s1 + $0x2c] sm:$0xf]
  %v29 = vld [vmem:[%s1 + $0x30] sm:$0xf]
  %v30 = vld [vmem:[%s1 + $0x34] sm:$0xf]
  %v31 = vld [vmem:[%s1 + $0x38] sm:$0xf]
  %v32 = vld [vmem:[%s1 + $0x3c] sm:$0xf]
  %v33 = vld [vmem:[%s2] sm:$0x1]
  %v35 = vlaneseq
  %v36 = vshrl.u32 %v35, 7
  %v37 = vsub.s32 0, %v36
  %v38 = vrot.slane %v33, %v37
  %v42 = vunpack.c.l.b16 %v15
  %v43 = vunpack.c.l.b16 %v16
  %v44 = vpack.c.b16 %v43, %v42
  %v62 = vunpack.c.l.b16 %v17
  %v63 = vunpack.c.l.b16 %v18
  %v64 = vunpack.c.l.b16 %v19
  %v65 = vunpack.c.l.b16 %v20
  %v66 = vunpack.c.l.b16 %v21
  %v67 = vunpack.c.l.b16 %v22
  %v68 = vunpack.c.l.b16 %v23
  %v69 = vunpack.c.l.b16 %v24
  %v70 = vunpack.c.l.b16 %v25
  %v71 = vunpack.c.l.b16 %v26
  %v72 = vunpack.c.l.b16 %v27
  %v73 = vunpack.c.l.b16 %v28
  %v74 = vunpack.c.l.b16 %v29
  %v75 = vunpack.c.l.b16 %v30
  %v76 = vunpack.c.l.b16 %v31
  %v77 = vunpack.c.l.b16 %v32
  %v78 = vpack.c.b16 %v63, %v62
  %v79 = vpack.c.b16 %v65, %v64
  %v80 = vpack.c.b16 %v67, %v66
  %v81 = vpack.c.b16 %v69, %v68
  %v82 = vpack.c.b16 %v71, %v70
  %v83 = vpack.c.b16 %v73, %v72
  %v84 = vpack.c.b16 %v75, %v74
  %v85 = vpack.c.b16 %v77, %v76
  %94 = vmatprep.subr.bf16.mxu0 0
  %95 = vmatpush1.bf16.msra.mxu0 %v78
  %96 = vmatprep.subr.bf16.mxu0 0
  %97 = vmatpush1.bf16.msra.mxu0 %v79
  %98 = vmatprep.subr.bf16.mxu0 0
  %99 = vmatpush1.bf16.msra.mxu0 %v80
  %100 = vmatprep.subr.bf16.mxu0 0
  %101 = vmatpush1.bf16.msra.mxu0 %v81
  %102 = vmatprep.subr.bf16.mxu0 0
  %103 = vmatpush1.bf16.msra.mxu0 %v82
  %104 = vmatprep.subr.bf16.mxu0 0
  %105 = vmatpush1.bf16.msra.mxu0 %v83
  %106 = vmatprep.subr.bf16.mxu0 0
  %107 = vmatpush1.bf16.msra.mxu0 %v84
  %108 = vmatprep.subr.bf16.mxu0 0
  %109 = vmatpush1.bf16.msra.mxu0 %v85
  %110 = vmatprep.subr.bf16.mxu0 0
  %111 = vmatpush1.bf16.msra.mxu0 0
  %112 = vmatprep.subr.bf16.mxu0 0
  %113 = vmatpush1.bf16.msra.mxu0 0
  %114 = vmatprep.subr.bf16.mxu0 0
  %115 = vmatpush1.bf16.msra.mxu0 0
  %116 = vmatprep.subr.bf16.mxu0 0
  %117 = vmatpush1.bf16.msra.mxu0 0
  %118 = vmatprep.subr.bf16.mxu0 0
  %119 = vmatpush1.bf16.msra.mxu0 0
  %120 = vmatprep.subr.bf16.mxu0 0
  %121 = vmatpush1.bf16.msra.mxu0 0
  %122 = vmatprep.subr.bf16.mxu0 0
  %123 = vmatpush1.bf16.msra.mxu0 0
  %124 = vmatprep.subr.bf16.mxu0 0
  %125 = vmatpush1.bf16.msra.mxu0 0
  %126 = vmatprep.mubr.bf16.mxu0 0
  %127 = vmatmul.mubr.bf16.gmra.mrb[0].mxu0 %v44
  %v128 = vpop.f32.mrb[0].mxu0
  %v129 = vadd.f32 %v38, %v128
  %v130 = vpop.f32.mrb[0].mxu0
  %v131 = vpop.f32.mrb[0].mxu0
  %v132 = vadd.f32 %v38, %v131
  %v133 = vpop.f32.mrb[0].mxu0
  %134 = vdwg.mxu0
  %135 = vst [vmem:[%s3] sm:$0xff] %v129
  %136 = vst [vmem:[%s3 + $0x8] sm:$0xff] %v132
  // Predicated region
  $region14: #{transformer_forward.25} parent=0 // pred_check
    _
  $region15: #{transformer_forward.25} parent=0 // pred_check_branch
    %138 = sbr.rel (0) target = $region17
  $region16: #{transformer_forward.25} parent=0 // pred_region
    _
  $region17: #{transformer_forward.25} parent=0 // pred_fallthru
    _
  // Predicated region
  $region18: #{transformer_forward.25} parent=0 // pred_check
    _
  $region19: #{transformer_forward.25} parent=0 // pred_check_branch
    %140 = sbr.rel (0) target = $region21
  $region20: #{transformer_forward.25} parent=0 // pred_region
    _
  $region21: #{transformer_forward.25} parent=0 // pred_fallthru
    _

// kernel: transformer_forward.13
$region0: #{transformer_forward.13}
  #allocation0 [shape = 'u32[]', space=smem, size = 0x4, offset = 0x4, fixed_abs, tag = 'smem constant byte address 0x4 - core index']
  #allocation1 [shape = 'u32[144,128]{1,0:T(1,128)}', space=vmem, size = 0x12000, scoped, tag = 'internal scratch']
  %s0 = inlined_call_operand.vmem [shape: bf16[2,8,128], index: 0, kind: input, shape index: {}]
  %s1 = inlined_call_operand.vmem [shape: s32[2,8,8], index: 1, kind: input, shape index: {}]
  %s2 = inlined_call_operand.hbm [shape: bf16[128,1536], index: 2, kind: input, shape index: {}]
  %s3 = inlined_call_operand.vmem [shape: f32[1,1536], index: 3, kind: input, shape index: {}]
  %s4 = inlined_call_operand.vmem [shape: bf16[512,128], index: 4, kind: input, shape index: {}]
  %s5 = inlined_call_operand.vmem [shape: f32[1,128], index: 5, kind: input, shape index: {}]
  %s6 = inlined_call_operand.vmem [shape: f32[1,128], index: 6, kind: input, shape index: {}]
  %s7 = inlined_call_operand.vmem [shape: f32[1,128], index: 7, kind: input, shape index: {}]
  %s8 = inlined_call_operand.vmem [shape: bf16[2,8,128], index: 8, kind: output, shape index: {}]
  %s9 = sld [smem:[#allocation0]]
  $region69: #{transformer_forward.13} parent=0
    _
  %s11 = ssub.s32 1, %s9
  %s12 = scalar_select 0, %s11, %s9
  $region1: #{transformer_forward.13} parent=0
    #allocation2 [shape = 'u8[393216]{0}', space=vmem, size = 0x60000, scoped, tag = 'input window, operand 2, single buffered']
    #allocation3 [shape = 's32[2]{0}', space=sflag, size = 0x8, scoped, tag = 'scoped memory for transformer_forward.13']
    %13 = vsyncpa [#allocation3], 0
    loop: start=0, step=1, limit=4
    $region2: #{transformer_forward.13} parent=1 // loop_pre_header
      _
    $region3: #{transformer_forward.13} parent=1 // loop_header
      %s15 = sphi 0, %s19
      %p16 = scmp.ge.s32.totalorder %s15, 4
      %s25 = sphi 0, %s27
      %s28 = sphi 0, %s25
      %s29 = sphi 0, %s28
      %s45 = sphi 0, %s29
      %s51 = sphi 0, %s53
      %s54 = sphi 0, %s51
      %s55 = sphi 0, %s54
      %s71 = sphi 0, %s55
      %s75 = sphi 0, %s75
      %s77 = sphi 0, %s75
      %s78 = sphi 0, %s77
      %s92 = sphi 0, %s78
      %s96 = sphi 0, %s96
      %s98 = sphi 0, %s96
      %s99 = sphi 0, %s98
      %s113 = sphi 0, %s99
      %s117 = sphi 0, %s117
      %s119 = sphi 0, %s117
      %s120 = sphi 0, %s119
      %s134 = sphi 0, %s120
      %s138 = sphi 0, %s138
      %s140 = sphi 0, %s138
      %s141 = sphi 0, %s140
      %s155 = sphi 0, %s141
      %s159 = sphi 0, %s159
      %s161 = sphi 0, %s159
      %s162 = sphi 0, %s161
      %s176 = sphi 0, %s162
      %s180 = sphi 0, %s180
      %s182 = sphi 0, %s180
      %s183 = sphi 0, %s182
      %s197 = sphi 0, %s183
      %s203 = sphi 0, %s205
      %s206 = sphi 0, %s203
      %s207 = sphi 0, %s206
      %s223 = sphi 0, %s207
    $region4: #{transformer_forward.13} parent=1 // loop_header_branch
      %18 = sbr.rel (%p16) target = $region8
    $region5: #{transformer_forward.13} parent=1 // loop_body
      %s20 = ssub.s32 %s15, 1
      %s21 = ssub.s32 %s15, 2
      %s22 = sadd.s32 %s15, 1
      %s23 = ssub.s32 %s15, %s22
      %p24 = scmp.eq.s32.totalorder %s23, 0
      %s26 = sadd.s32 %s25, 1
      %s27 = scalar_select %p24, %s25, %s26
      %p30 = pneg %p24
      %p31 = scmp.eq.s32.totalorder %s15, 1
      %p32 = por %p30, %p31
      %p33 = scmp.ne.s32.totalorder %s25, %s28
      %p34 = scmp.eq.s32.totalorder %s15, 0
      %p35 = por %p33, %p34
      %p36 = scmp.ne.s32.totalorder %s25, %s28
      %p37 = scmp.eq.s32.totalorder %s20, 1
      %p38 = por %p36, %p37
      %p39 = scmp.ne.s32.totalorder %s28, %s29
      %p40 = scmp.eq.s32.totalorder %s20, 0
      %p41 = por %p39, %p40
      %p42 = scmp.ne.s32.totalorder %s28, %s29
      %p43 = scmp.eq.s32.totalorder %s21, 1
      %p44 = por %p42, %p43
      %p46 = scmp.ne.s32.totalorder %s29, %s45
      %p47 = scmp.eq.s32.totalorder %s21, 0
      %p48 = por %p46, %p47
      %s49 = ssub.s32 %s15, %s22
      %p50 = scmp.eq.s32.totalorder %s49, 0
      %s52 = sadd.s32 %s51, 1
      %s53 = scalar_select %p50, %s51, %s52
      %p56 = pneg %p50
      %p57 = scmp.eq.s32.totalorder %s15, 1
      %p58 = por %p56, %p57
      %p59 = scmp.ne.s32.totalorder %s51, %s54
      %p60 = scmp.eq.s32.totalorder %s15, 0
      %p61 = por %p59, %p60
      %p62 = scmp.ne.s32.totalorder %s51, %s54
      %p63 = scmp.eq.s32.totalorder %s20, 1
      %p64 = por %p62, %p63
      %p65 = scmp.ne.s32.totalorder %s54, %s55
      %p66 = scmp.eq.s32.totalorder %s20, 0
      %p67 = por %p65, %p66
      %p68 = scmp.ne.s32.totalorder %s54, %s55
      %p69 = scmp.eq.s32.totalorder %s21, 1
      %p70 = por %p68, %p69
      %p72 = scmp.ne.s32.totalorder %s55, %s71
      %p73 = scmp.eq.s32.totalorder %s21, 0
      %p74 = por %p72, %p73
      %s76 = sadd.s32 %s75, 1
      %p79 = scmp.eq.s32.totalorder %s15, 1
      %p80 = scmp.ne.s32.totalorder %s75, %s77
      %p81 = scmp.eq.s32.totalorder %s15, 0
      %p82 = por %p80, %p81
      %p83 = scmp.ne.s32.totalorder %s75, %s77
      %p84 = scmp.eq.s32.totalorder %s20, 1
      %p85 = por %p83, %p84
      %p86 = scmp.ne.s32.totalorder %s77, %s78
      %p87 = scmp.eq.s32.totalorder %s20, 0
      %p88 = por %p86, %p87
      %p89 = scmp.ne.s32.totalorder %s77, %s78
      %p90 = scmp.eq.s32.totalorder %s21, 1
      %p91 = por %p89, %p90
      %p93 = scmp.ne.s32.totalorder %s78, %s92
      %p94 = scmp.eq.s32.totalorder %s21, 0
      %p95 = por %p93, %p94
      %s97 = sadd.s32 %s96, 1
      %p100 = scmp.eq.s32.totalorder %s15, 1
      %p101 = scmp.ne.s32.totalorder %s96, %s98
      %p102 = scmp.eq.s32.totalorder %s15, 0
      %p103 = por %p101, %p102
      %p104 = scmp.ne.s32.totalorder %s96, %s98
      %p105 = scmp.eq.s32.totalorder %s20, 1
      %p106 = por %p104, %p105
      %p107 = scmp.ne.s32.totalorder %s98, %s99
      %p108 = scmp.eq.s32.totalorder %s20, 0
      %p109 = por %p107, %p108
      %p110 = scmp.ne.s32.totalorder %s98, %s99
      %p111 = scmp.eq.s32.totalorder %s21, 1
      %p112 = por %p110, %p111
      %p114 = scmp.ne.s32.totalorder %s99, %s113
      %p115 = scmp.eq.s32.totalorder %s21, 0
      %p116 = por %p114, %p115
      %s118 = sadd.s32 %s117, 1
      %p121 = scmp.eq.s32.totalorder %s15, 1
      %p122 = scmp.ne.s32.totalorder %s117, %s119
      %p123 = scmp.eq.s32.totalorder %s15, 0
      %p124 = por %p122, %p123
      %p125 = scmp.ne.s32.totalorder %s117, %s119
      %p126 = scmp.eq.s32.totalorder %s20, 1
      %p127 = por %p125, %p126
      %p128 = scmp.ne.s32.totalorder %s119, %s120
      %p129 = scmp.eq.s32.totalorder %s20, 0
      %p130 = por %p128, %p129
      %p131 = scmp.ne.s32.totalorder %s119, %s120
      %p132 = scmp.eq.s32.totalorder %s21, 1
      %p133 = por %p131, %p132
      %p135 = scmp.ne.s32.totalorder %s120, %s134
      %p136 = scmp.eq.s32.totalorder %s21, 0
      %p137 = por %p135, %p136
      %s139 = sadd.s32 %s138, 1
      %p142 = scmp.eq.s32.totalorder %s15, 1
      %p143 = scmp.ne.s32.totalorder %s138, %s140
      %p144 = scmp.eq.s32.totalorder %s15, 0
      %p145 = por %p143, %p144
      %p146 = scmp.ne.s32.totalorder %s138, %s140
      %p147 = scmp.eq.s32.totalorder %s20, 1
      %p148 = por %p146, %p147
      %p149 = scmp.ne.s32.totalorder %s140, %s141
      %p150 = scmp.eq.s32.totalorder %s20, 0
      %p151 = por %p149, %p150
      %p152 = scmp.ne.s32.totalorder %s140, %s141
      %p153 = scmp.eq.s32.totalorder %s21, 1
      %p154 = por %p152, %p153
      %p156 = scmp.ne.s32.totalorder %s141, %s155
      %p157 = scmp.eq.s32.totalorder %s21, 0
      %p158 = por %p156, %p157
      %s160 = sadd.s32 %s159, 1
      %p163 = scmp.eq.s32.totalorder %s15, 1
      %p164 = scmp.ne.s32.totalorder %s159, %s161
      %p165 = scmp.eq.s32.totalorder %s15, 0
      %p166 = por %p164, %p165
      %p167 = scmp.ne.s32.totalorder %s159, %s161
      %p168 = scmp.eq.s32.totalorder %s20, 1
      %p169 = por %p167, %p168
      %p170 = scmp.ne.s32.totalorder %s161, %s162
      %p171 = scmp.eq.s32.totalorder %s20, 0
      %p172 = por %p170, %p171
      %p173 = scmp.ne.s32.totalorder %s161, %s162
      %p174 = scmp.eq.s32.totalorder %s21, 1
      %p175 = por %p173, %p174
      %p177 = scmp.ne.s32.totalorder %s162, %s176
      %p178 = scmp.eq.s32.totalorder %s21, 0
      %p179 = por %p177, %p178
      %s181 = sadd.s32 %s180, 1
      %p184 = scmp.eq.s32.totalorder %s15, 1
      %p185 = scmp.ne.s32.totalorder %s180, %s182
      %p186 = scmp.eq.s32.totalorder %s15, 0
      %p187 = por %p185, %p186
      %p188 = scmp.ne.s32.totalorder %s180, %s182
      %p189 = scmp.eq.s32.totalorder %s20, 1
      %p190 = por %p188, %p189
      %p191 = scmp.ne.s32.totalorder %s182, %s183
      %p192 = scmp.eq.s32.totalorder %s20, 0
      %p193 = por %p191, %p192
      %p194 = scmp.ne.s32.totalorder %s182, %s183
      %p195 = scmp.eq.s32.totalorder %s21, 1
      %p196 = por %p194, %p195
      %p198 = scmp.ne.s32.totalorder %s183, %s197
      %p199 = scmp.eq.s32.totalorder %s21, 0
      %p200 = por %p198, %p199
      %s201 = ssub.s32 %s15, %s22
      %p202 = scmp.eq.s32.totalorder %s201, 0
      %s204 = sadd.s32 %s203, 1
      %s205 = scalar_select %p202, %s203, %s204
      %p208 = pneg %p202
      %p209 = scmp.eq.s32.totalorder %s15, 1
      %p210 = por %p208, %p209
      %p211 = scmp.ne.s32.totalorder %s203, %s206
      %p212 = scmp.eq.s32.totalorder %s15, 0
      %p213 = por %p211, %p212
      %p214 = scmp.ne.s32.totalorder %s203, %s206
      %p215 = scmp.eq.s32.totalorder %s20, 1
      %p216 = por %p214, %p215
      %p217 = scmp.ne.s32.totalorder %s206, %s207
      %p218 = scmp.eq.s32.totalorder %s20, 0
      %p219 = por %p217, %p218
      %p220 = scmp.ne.s32.totalorder %s206, %s207
      %p221 = scmp.eq.s32.totalorder %s21, 1
      %p222 = por %p220, %p221
      %p224 = scmp.ne.s32.totalorder %s207, %s223
      %p225 = scmp.eq.s32.totalorder %s21, 0
      %p226 = por %p224, %p225
      %p227 = scmp.le.s32.totalorder 1, %s15
      %p228 = scmp.lt.s32.totalorder %s15, 3
      %p229 = pnand %p227, %p228
      %p230 = pneg %p229
      // Predicated region
      $region9: #{transformer_forward.13} parent=5 // pred_check
        _
      $region10: #{transformer_forward.13} parent=5 // pred_check_branch
        %232 = sbr.rel (%p229) target = $region12
      $region11: #{transformer_forward.13} parent=5 // pred_region
        %s233 = ssub.s32 %s15, 1
        // Predicated region
        $region13: #{transformer_forward.13} parent=11 // pred_check
          %p234 = pneg %p88
        $region14: #{transformer_forward.13} parent=11 // pred_check_branch
          %236 = sbr.rel (%p234) target = $region16
        $region15: #{transformer_forward.13} parent=11 // pred_region
          %s238 = ssub.s32 12288, 12288
          %239 = vsyncadd [#allocation3], %s238
          %s240 = sshll.u32 [#allocation2], 4
          %s241 = int_to_ptr.vmem [resolvable:$true] %s240
          %246 = dma.hbm_to_vmem [thread:$0]  %s2, 12288, %s241, [#allocation3], 768, 768, 48
        $region16: #{transformer_forward.13} parent=11 // pred_fallthru
          _
        // Predicated region
        $region17: #{transformer_forward.13} parent=11 // pred_check
          %p247 = pneg %p109
        $region18: #{transformer_forward.13} parent=11 // pred_check_branch
          %249 = sbr.rel (%p247) target = $region20
        $region19: #{transformer_forward.13} parent=11 // pred_region
          _
        $region20: #{transformer_forward.13} parent=11 // pred_fallthru
          _
        // Predicated region
        $region21: #{transformer_forward.13} parent=11 // pred_check
          %p250 = pneg %p130
        $region22: #{transformer_forward.13} parent=11 // pred_check_branch
          %252 = sbr.rel (%p250) target = $region24
        $region23: #{transformer_forward.13} parent=11 // pred_region
          _
        $region24: #{transformer_forward.13} parent=11 // pred_fallthru
          _
        // Predicated region
        $region25: #{transformer_forward.13} parent=11 // pred_check
          %p253 = pneg %p151
        $region26: #{transformer_forward.13} parent=11 // pred_check_branch
          %255 = sbr.rel (%p253) target = $region28
        $region27: #{transformer_forward.13} parent=11 // pred_region
          _
        $region28: #{transformer_forward.13} parent=11 // pred_fallthru
          _
        // Predicated region
        $region29: #{transformer_forward.13} parent=11 // pred_check
          %p256 = pneg %p172
        $region30: #{transformer_forward.13} parent=11 // pred_check_branch
          %258 = sbr.rel (%p256) target = $region32
        $region31: #{transformer_forward.13} parent=11 // pred_region
          _
        $region32: #{transformer_forward.13} parent=11 // pred_fallthru
          _
        // Predicated region
        $region33: #{transformer_forward.13} parent=11 // pred_check
          %p259 = pneg %p193
        $region34: #{transformer_forward.13} parent=11 // pred_check_branch
          %261 = sbr.rel (%p259) target = $region36
        $region35: #{transformer_forward.13} parent=11 // pred_region
          _
        $region36: #{transformer_forward.13} parent=11 // pred_fallthru
          _
      $region12: #{transformer_forward.13} parent=5 // pred_fallthru
        _
      %p262 = scmp.lt.s32.totalorder %s15, 2
      // Predicated region
      $region37: #{transformer_forward.13} parent=5 // pred_check
        %p263 = pneg %p262
      $region38: #{transformer_forward.13} parent=5 // pred_check_branch
        %265 = sbr.rel (%p263) target = $region40
      $region39: #{transformer_forward.13} parent=5 // pred_region
        // Predicated region
        $region41: #{transformer_forward.13} parent=39 // pred_check
          %p266 = pneg %p35
        $region42: #{transformer_forward.13} parent=39 // pred_check_branch
          %268 = sbr.rel (%p266) target = $region44
        $region43: #{transformer_forward.13} parent=39 // pred_region
          %p269 = scmp.lt.s32.totalorder %s15, 1
          %s270 = scalar_select %p269, %s15, 1
          %s271 = smul.addr %s270, 4
          %s272 = scalar_lea.vmem %s0, %s271
        $region44: #{transformer_forward.13} parent=39 // pred_fallthru
          _
        // Predicated region
        $region45: #{transformer_forward.13} parent=39 // pred_check
          %p273 = pneg %p61
        $region46: #{transformer_forward.13} parent=39 // pred_check_branch
          %275 = sbr.rel (%p273) target = $region48
        $region47: #{transformer_forward.13} parent=39 // pred_region
          %p276 = scmp.lt.s32.totalorder %s15, 1
          %s277 = scalar_select %p276, %s15, 1
          %s278 = smul.addr %s277, 8
          %s279 = scalar_lea.vmem %s1, %s278
        $region48: #{transformer_forward.13} parent=39 // pred_fallthru
          _
      $region40: #{transformer_forward.13} parent=5 // pred_fallthru
        _
      %p280 = scmp.le.s32.totalorder 1, %s15
      %p281 = scmp.lt.s32.totalorder %s15, 3
      %p282 = pnand %p280, %p281
      %p283 = pneg %p282
      // Predicated region
      $region49: #{transformer_forward.13} parent=5 // pred_check
        _
      $region50: #{transformer_forward.13} parent=5 // pred_check_branch
        %285 = sbr.rel (%p282) target = $region52
      $region51: #{transformer_forward.13} parent=5 // pred_region
        %s286 = ssub.s32 %s15, 1
        // Predicated region
        $region53: #{transformer_forward.13} parent=51 // pred_check
          %p287 = pneg %p88
        $region54: #{transformer_forward.13} parent=51 // pred_check_branch
          %289 = sbr.rel (%p287) target = $region56
        $region55: #{transformer_forward.13} parent=51 // pred_region
          %290 = dma.done [#allocation3], 12288
        $region56: #{transformer_forward.13} parent=51 // pred_fallthru
          _
        %p291 = scmp.lt.s32.totalorder %s20, 1
        %s292 = scalar_select %p291, %s20, 1
        %s293 = smul.addr %s292, 4
        %s294 = scalar_lea.vmem %s0, %s293
        %p295 = pneg %p41
        %p296 = pneg %p38
        %p297 = scmp.lt.s32.totalorder %s20, 1
        %s298 = scalar_select %p297, %s20, 1
        %s299 = smul.addr %s298, 8
        %s300 = scalar_lea.vmem %s1, %s299
        %p301 = pneg %p67
        %p302 = pneg %p64
        %p303 = pneg %p88
        %p304 = pneg %p85
        %p305 = pneg %p109
        %p306 = pneg %p106
        %p307 = pneg %p130
        %p308 = pneg %p127
        %p309 = pneg %p151
        %p310 = pneg %p148
        %p311 = pneg %p172
        %p312 = pneg %p169
        %p313 = pneg %p193
        %p314 = pneg %p190
        %p315 = pneg %p219
        %p316 = pneg %p216
        %p317 = scmp.lt.s32.totalorder %s20, 1
        %s318 = scalar_select %p317, %s20, 1
        %s319 = smul.addr %s318, 4
        %s320 = scalar_lea.vmem %s8, %s319
        %p321 = scmp.lt.s32.totalorder %s20, 1
        %s322 = scalar_select %p321, %s20, 1
        %s323 = smul.addr %s322, 4
        %s324 = scalar_lea.vmem %s0, %s323
        %p325 = scmp.lt.s32.totalorder %s20, 1
        %s326 = scalar_select %p325, %s20, 1
        %s327 = smul.addr %s326, 8
        %s328 = scalar_lea.vmem %s1, %s327
        %p329 = scmp.lt.s32.totalorder %s20, 1
        %s330 = scalar_select %p329, %s20, 1
        %s331 = smul.addr %s330, 4
        %s332 = scalar_lea.vmem %s8, %s331
        %v334 = vld [vmem:[%s324] sm:$0xf]
        %v335 = vld [vmem:[#allocation2] sm:$0xff]
        %v336 = vld [vmem:[#allocation2 + $0x8] sm:$0xff]
        %v337 = vld [vmem:[#allocation2 + $0x10] sm:$0xff]
        %v338 = vld [vmem:[#allocation2 + $0x18] sm:$0xff]
        %v339 = vld [vmem:[#allocation2 + $0x20] sm:$0xff]
        %v340 = vld [vmem:[#allocation2 + $0x28] sm:$0xff]
        %v341 = vld [vmem:[#allocation2 + $0x30] sm:$0xff]
        %v342 = vld [vmem:[#allocation2 + $0x38] sm:$0xff]
        %v343 = vld [vmem:[#allocation2 + $0x40] sm:$0xff]
        %v344 = vld [vmem:[#allocation2 + $0x48] sm:$0xff]
        %v345 = vld [vmem:[#allocation2 + $0x50] sm:$0xff]
        %v346 = vld [vmem:[#allocation2 + $0x58] sm:$0xff]
        %v347 = vld [vmem:[#allocation2 + $0x60] sm:$0xff]
        %v348 = vld [vmem:[#allocation2 + $0x68] sm:$0xff]
        %v349 = vld [vmem:[#allocation2 + $0x70] sm:$0xff]
        %v350 = vld [vmem:[#allocation2 + $0x78] sm:$0xff]
        %v351 = vld [vmem:[#allocation2 + $0x80] sm:$0xff]
        %v352 = vld [vmem:[#allocation2 + $0x88] sm:$0xff]
        %v353 = vld [vmem:[#allocation2 + $0x90] sm:$0xff]
        %v354 = vld [vmem:[#allocation2 + $0x98] sm:$0xff]
        %v355 = vld [vmem:[#allocation2 + $0xa0] sm:$0xff]
        %v356 = vld [vmem:[#allocation2 + $0xa8] sm:$0xff]
        %v357 = vld [vmem:[#allocation2 + $0xb0] sm:$0xff]
        %v358 = vld [vmem:[#allocation2 + $0xb8] sm:$0xff]
        %v359 = vld [vmem:[#allocation2 + $0xc0] sm:$0xff]
        %v360 = vld [vmem:[#allocation2 + $0xc8] sm:$0xff]
        %v361 = vld [vmem:[#allocation2 + $0xd0] sm:$0xff]
        %v362 = vld [vmem:[#allocation2 + $0xd8] sm:$0xff]
        %v363 = vld [vmem:[#allocation2 + $0xe0] sm:$0xff]
        %v364 = vld [vmem:[#allocation2 + $0xe8] sm:$0xff]
        %v365 = vld [vmem:[#allocation2 + $0xf0] sm:$0xff]
        %v366 = vld [vmem:[#allocation2 + $0xf8] sm:$0xff]
        %v367 = vld [vmem:[#allocation2 + $0x100] sm:$0xff]
        %v368 = vld [vmem:[#allocation2 + $0x108] sm:$0xff]
        %v369 = vld [vmem:[#allocation2 + $0x110] sm:$0xff]
        %v370 = vld [vmem:[#allocation2 + $0x118] sm:$0xff]
        %v371 = vld [vmem:[#allocation2 + $0x120] sm:$0xff]
        %v372 = vld [vmem:[#allocation2 + $0x128] sm:$0xff]
        %v373 = vld [vmem:[#allocation2 + $0x130] sm:$0xff]
        %v374 = vld [vmem:[#allocation2 + $0x138] sm:$0xff]
        %v375 = vld [vmem:[#allocation2 + $0x140] sm:$0xff]
        %v376 = vld [vmem:[#allocation2 + $0x148] sm:$0xff]
        %v377 = vld [vmem:[#allocation2 + $0x150] sm:$0xff]
        %v378 = vld [vmem:[#allocation2 + $0x158] sm:$0xff]
        %v379 = vld [vmem:[#allocation2 + $0x160] sm:$0xff]
        %v380 = vld [vmem:[#allocation2 + $0x168] sm:$0xff]
        %v381 = vld [vmem:[#allocation2 + $0x170] sm:$0xff]
        %v382 = vld [vmem:[#allocation2 + $0x178] sm:$0xff]
        %v383 = vld [vmem:[#allocation2 + $0x180] sm:$0xff]
        %v384 = vld [vmem:[#allocation2 + $0x188] sm:$0xff]
        %v385 = vld [vmem:[#allocation2 + $0x190] sm:$0xff]
        %v386 = vld [vmem:[#allocation2 + $0x198] sm:$0xff]
        %v387 = vld [vmem:[#allocation2 + $0x1a0] sm:$0xff]
        %v388 = vld [vmem:[#allocation2 + $0x1a8] sm:$0xff]
        %v389 = vld [vmem:[#allocation2 + $0x1b0] sm:$0xff]
        %v390 = vld [vmem:[#allocation2 + $0x1b8] sm:$0xff]
        %v391 = vld [vmem:[#allocation2 + $0x1c0] sm:$0xff]
        %v392 = vld [vmem:[#allocation2 + $0x1c8] sm:$0xff]
        %v393 = vld [vmem:[#allocation2 + $0x1d0] sm:$0xff]
        %v394 = vld [vmem:[#allocation2 + $0x1d8] sm:$0xff]
        %v395 = vld [vmem:[#allocation2 + $0x1e0] sm:$0xff]
        %v396 = vld [vmem:[#allocation2 + $0x1e8] sm:$0xff]
        %v397 = vld [vmem:[#allocation2 + $0x1f0] sm:$0xff]
        %v398 = vld [vmem:[#allocation2 + $0x1f8] sm:$0xff]
        %v399 = vld [vmem:[#allocation2 + $0x200] sm:$0xff]
        %v400 = vld [vmem:[#allocation2 + $0x208] sm:$0xff]
        %v401 = vld [vmem:[#allocation2 + $0x210] sm:$0xff]
        %v402 = vld [vmem:[#allocation2 + $0x218] sm:$0xff]
        %v403 = vld [vmem:[#allocation2 + $0x220] sm:$0xff]
        %v404 = vld [vmem:[#allocation2 + $0x228] sm:$0xff]
        %v405 = vld [vmem:[#allocation2 + $0x230] sm:$0xff]
        %v406 = vld [vmem:[#allocation2 + $0x238] sm:$0xff]
        %v407 = vld [vmem:[#allocation2 + $0x240] sm:$0xff]
        %v408 = vld [vmem:[#allocation2 + $0x248] sm:$0xff]
        %v409 = vld [vmem:[#allocation2 + $0x250] sm:$0xff]
        %v410 = vld [vmem:[#allocation2 + $0x258] sm:$0xff]
        %v411 = vld [vmem:[#allocation2 + $0x260] sm:$0xff]
        %v412 = vld [vmem:[#allocation2 + $0x268] sm:$0xff]
        %v413 = vld [vmem:[#allocation2 + $0x270] sm:$0xff]
        %v414 = vld [vmem:[#allocation2 + $0x278] sm:$0xff]
        %v415 = vld [vmem:[#allocation2 + $0x280] sm:$0xff]
        %v416 = vld [vmem:[#allocation2 + $0x288] sm:$0xff]
        %v417 = vld [vmem:[#allocation2 + $0x290] sm:$0xff]
        %v418 = vld [vmem:[#allocation2 + $0x298] sm:$0xff]
        %v419 = vld [vmem:[#allocation2 + $0x2a0] sm:$0xff]
        %v420 = vld [vmem:[#allocation2 + $0x2a8] sm:$0xff]
        %v421 = vld [vmem:[#allocation2 + $0x2b0] sm:$0xff]
        %v422 = vld [vmem:[#allocation2 + $0x2b8] sm:$0xff]
        %v423 = vld [vmem:[#allocation2 + $0x2c0] sm:$0xff]
        %v424 = vld [vmem:[#allocation2 + $0x2c8] sm:$0xff]
        %v425 = vld [vmem:[#allocation2 + $0x2d0] sm:$0xff]
        %v426 = vld [vmem:[#allocation2 + $0x2d8] sm:$0xff]
        %v427 = vld [vmem:[#allocation2 + $0x2e0] sm:$0xff]
        %v428 = vld [vmem:[#allocation2 + $0x2e8] sm:$0xff]
        %v429 = vld [vmem:[#allocation2 + $0x2f0] sm:$0xff]
        %v430 = vld [vmem:[#allocation2 + $0x2f8] sm:$0xff]
        %v431 = vld [vmem:[%s3] sm:$0xff]
        %v432 = vld [vmem:[%s3 + $0x8] sm:$0xf]
        %v435 = vlaneseq
        %v436 = vshrl.u32 %v435, 7
        %v437 = vsub.s32 0, %v436
        %v438 = vrot.slane %v431, %v437
        %v439 = vlaneseq
        %v440 = vshrl.u32 %v439, 7
        %v441 = vsub.s32 1, %v440
        %v442 = vrot.slane %v431, %v441
        %v443 = vlaneseq
        %v444 = vshrl.u32 %v443, 7
        %v445 = vsub.s32 2, %v444
        %v446 = vrot.slane %v431, %v445
        %v447 = vlaneseq
        %v448 = vshrl.u32 %v447, 7
        %v449 = vsub.s32 3, %v448
        %v450 = vrot.slane %v431, %v449
        %v451 = vlaneseq
        %v452 = vshrl.u32 %v451, 7
        %v453 = vsub.s32 4, %v452
        %v454 = vrot.slane %v431, %v453
        %v455 = vlaneseq
        %v456 = vshrl.u32 %v455, 7
        %v457 = vsub.s32 5, %v456
        %v458 = vrot.slane %v431, %v457
        %v459 = vlaneseq
        %v460 = vshrl.u32 %v459, 7
        %v461 = vsub.s32 6, %v460
        %v462 = vrot.slane %v431, %v461
        %v463 = vlaneseq
        %v464 = vshrl.u32 %v463, 7
        %v465 = vsub.s32 7, %v464
        %v466 = vrot.slane %v431, %v465
        %v467 = vlaneseq
        %v468 = vshrl.u32 %v467, 7
        %v469 = vsub.s32 0, %v468
        %v470 = vrot.slane %v432, %v469
        %v471 = vlaneseq
        %v472 = vshrl.u32 %v471, 7
        %v473 = vsub.s32 1, %v472
        %v474 = vrot.slane %v432, %v473
        %v475 = vlaneseq
        %v476 = vshrl.u32 %v475, 7
        %v477 = vsub.s32 2, %v476
        %v478 = vrot.slane %v432, %v477
        %v479 = vlaneseq
        %v480 = vshrl.u32 %v479, 7
        %v481 = vsub.s32 3, %v480
        %v482 = vrot.slane %v432, %v481
        %v591 = vunpack.c.l.b16 %v335
        %v592 = vunpack.c.h.b16 %v335
        %v593 = vunpack.c.l.b16 %v336
        %v594 = vunpack.c.h.b16 %v336
        %v595 = vunpack.c.l.b16 %v337
        %v596 = vunpack.c.h.b16 %v337
        %v597 = vunpack.c.l.b16 %v338
        %v598 = vunpack.c.h.b16 %v338
        %v599 = vunpack.c.l.b16 %v339
        %v600 = vunpack.c.h.b16 %v339
        %v601 = vunpack.c.l.b16 %v340
        %v602 = vunpack.c.h.b16 %v340
        %v603 = vunpack.c.l.b16 %v341
        %v604 = vunpack.c.h.b16 %v341
        %v605 = vunpack.c.l.b16 %v342
        %v606 = vunpack.c.h.b16 %v342
        %v607 = vunpack.c.l.b16 %v343
        %v608 = vunpack.c.h.b16 %v343
        %v609 = vunpack.c.l.b16 %v344
        %v610 = vunpack.c.h.b16 %v344
        %v611 = vunpack.c.l.b16 %v345
        %v612 = vunpack.c.h.b16 %v345
        %v613 = vunpack.c.l.b16 %v346
        %v614 = vunpack.c.h.b16 %v346
        %v615 = vunpack.c.l.b16 %v347
        %v616 = vunpack.c.h.b16 %v347
        %v617 = vunpack.c.l.b16 %v348
        %v618 = vunpack.c.h.b16 %v348
        %v619 = vunpack.c.l.b16 %v349
        %v620 = vunpack.c.h.b16 %v349
        %v621 = vunpack.c.l.b16 %v350
        %v622 = vunpack.c.h.b16 %v350
        %v623 = vunpack.c.l.b16 %v351
        %v624 = vunpack.c.h.b16 %v351
        %v625 = vunpack.c.l.b16 %v352
        %v626 = vunpack.c.h.b16 %v352
        %v627 = vunpack.c.l.b16 %v353
        %v628 = vunpack.c.h.b16 %v353
        %v629 = vunpack.c.l.b16 %v354
        %v630 = vunpack.c.h.b16 %v354
        %v631 = vunpack.c.l.b16 %v355
        %v632 = vunpack.c.h.b16 %v355
        %v633 = vunpack.c.l.b16 %v356
        %v634 = vunpack.c.h.b16 %v356
        %v635 = vunpack.c.l.b16 %v357
        %v636 = vunpack.c.h.b16 %v357
        %v637 = vunpack.c.l.b16 %v358
        %v638 = vunpack.c.h.b16 %v358
        %v639 = vunpack.c.l.b16 %v359
        %v640 = vunpack.c.h.b16 %v359
        %v641 = vunpack.c.l.b16 %v360
        %v642 = vunpack.c.h.b16 %v360
        %v643 = vunpack.c.l.b16 %v361
        %v644 = vunpack.c.h.b16 %v361
        %v645 = vunpack.c.l.b16 %v362
        %v646 = vunpack.c.h.b16 %v362
        %v647 = vunpack.c.l.b16 %v363
        %v648 = vunpack.c.h.b16 %v363
        %v649 = vunpack.c.l.b16 %v364
        %v650 = vunpack.c.h.b16 %v364
        %v651 = vunpack.c.l.b16 %v365
        %v652 = vunpack.c.h.b16 %v365
        %v653 = vunpack.c.l.b16 %v366
        %v654 = vunpack.c.h.b16 %v366
        %v655 = vunpack.c.l.b16 %v367
        %v656 = vunpack.c.h.b16 %v367
        %v657 = vunpack.c.l.b16 %v368
        %v658 = vunpack.c.h.b16 %v368
        %v659 = vunpack.c.l.b16 %v369
        %v660 = vunpack.c.h.b16 %v369
        %v661 = vunpack.c.l.b16 %v370
        %v662 = vunpack.c.h.b16 %v370
        %v663 = vunpack.c.l.b16 %v371
        %v664 = vunpack.c.h.b16 %v371
        %v665 = vunpack.c.l.b16 %v372
        %v666 = vunpack.c.h.b16 %v372
        %v667 = vunpack.c.l.b16 %v373
        %v668 = vunpack.c.h.b16 %v373
        %v669 = vunpack.c.l.b16 %v374
        %v670 = vunpack.c.h.b16 %v374
        %v671 = vunpack.c.l.b16 %v375
        %v672 = vunpack.c.h.b16 %v375
        %v673 = vunpack.c.l.b16 %v376
        %v674 = vunpack.c.h.b16 %v376
        %v675 = vunpack.c.l.b16 %v377
        %v676 = vunpack.c.h.b16 %v377
        %v677 = vunpack.c.l.b16 %v378
        %v678 = vunpack.c.h.b16 %v378
        %v679 = vunpack.c.l.b16 %v379
        %v680 = vunpack.c.h.b16 %v379
        %v681 = vunpack.c.l.b16 %v380
        %v682 = vunpack.c.h.b16 %v380
        %v683 = vunpack.c.l.b16 %v381
        %v684 = vunpack.c.h.b16 %v381
        %v685 = vunpack.c.l.b16 %v382
        %v686 = vunpack.c.h.b16 %v382
        %v687 = vunpack.c.l.b16 %v383
        %v688 = vunpack.c.h.b16 %v383
        %v689 = vunpack.c.l.b16 %v384
        %v690 = vunpack.c.h.b16 %v384
        %v691 = vunpack.c.l.b16 %v385
        %v692 = vunpack.c.h.b16 %v385
        %v693 = vunpack.c.l.b16 %v386
        %v694 = vunpack.c.h.b16 %v386
        %v695 = vunpack.c.l.b16 %v387
        %v696 = vunpack.c.h.b16 %v387
        %v697 = vunpack.c.l.b16 %v388
        %v698 = vunpack.c.h.b16 %v388
        %v699 = vunpack.c.l.b16 %v389
        %v700 = vunpack.c.h.b16 %v389
        %v701 = vunpack.c.l.b16 %v390
        %v702 = vunpack.c.h.b16 %v390
        %v703 = vunpack.c.l.b16 %v391
        %v704 = vunpack.c.h.b16 %v391
        %v705 = vunpack.c.l.b16 %v392
        %v706 = vunpack.c.h.b16 %v392
        %v707 = vunpack.c.l.b16 %v393
        %v708 = vunpack.c.h.b16 %v393
        %v709 = vunpack.c.l.b16 %v394
        %v710 = vunpack.c.h.b16 %v394
        %v711 = vunpack.c.l.b16 %v395
        %v712 = vunpack.c.h.b16 %v395
        %v713 = vunpack.c.l.b16 %v396
        %v714 = vunpack.c.h.b16 %v396
        %v715 = vunpack.c.l.b16 %v397
        %v716 = vunpack.c.h.b16 %v397
        %v717 = vunpack.c.l.b16 %v398
        %v718 = vunpack.c.h.b16 %v398
        %v719 = vunpack.c.l.b16 %v399
        %v720 = vunpack.c.h.b16 %v399
        %v721 = vunpack.c.l.b16 %v400
        %v722 = vunpack.c.h.b16 %v400
        %v723 = vunpack.c.l.b16 %v401
        %v724 = vunpack.c.h.b16 %v401
        %v725 = vunpack.c.l.b16 %v402
        %v726 = vunpack.c.h.b16 %v402
        %v727 = vunpack.c.l.b16 %v403
        %v728 = vunpack.c.h.b16 %v403
        %v729 = vunpack.c.l.b16 %v404
        %v730 = vunpack.c.h.b16 %v404
        %v731 = vunpack.c.l.b16 %v405
        %v732 = vunpack.c.h.b16 %v405
        %v733 = vunpack.c.l.b16 %v406
        %v734 = vunpack.c.h.b16 %v406
        %v735 = vunpack.c.l.b16 %v407
        %v736 = vunpack.c.h.b16 %v407
        %v737 = vunpack.c.l.b16 %v408
        %v738 = vunpack.c.h.b16 %v408
        %v739 = vunpack.c.l.b16 %v409
        %v740 = vunpack.c.h.b16 %v409
        %v741 = vunpack.c.l.b16 %v410
        %v742 = vunpack.c.h.b16 %v410
        %v743 = vunpack.c.l.b16 %v411
        %v744 = vunpack.c.h.b16 %v411
        %v745 = vunpack.c.l.b16 %v412
        %v746 = vunpack.c.h.b16 %v412
        %v747 = vunpack.c.l.b16 %v413
        %v748 = vunpack.c.h.b16 %v413
        %v749 = vunpack.c.l.b16 %v414
        %v750 = vunpack.c.h.b16 %v414
        %v751 = vunpack.c.l.b16 %v415
        %v752 = vunpack.c.h.b16 %v415
        %v753 = vunpack.c.l.b16 %v416
        %v754 = vunpack.c.h.b16 %v416
        %v755 = vunpack.c.l.b16 %v417
        %v756 = vunpack.c.h.b16 %v417
        %v757 = vunpack.c.l.b16 %v418
        %v758 = vunpack.c.h.b16 %v418
        %v759 = vunpack.c.l.b16 %v419
        %v760 = vunpack.c.h.b16 %v419
        %v761 = vunpack.c.l.b16 %v420
        %v762 = vunpack.c.h.b16 %v420
        %v763 = vunpack.c.l.b16 %v421
        %v764 = vunpack.c.h.b16 %v421
        %v765 = vunpack.c.l.b16 %v422
        %v766 = vunpack.c.h.b16 %v422
        %v767 = vunpack.c.l.b16 %v423
        %v768 = vunpack.c.h.b16 %v423
        %v769 = vunpack.c.l.b16 %v424
        %v770 = vunpack.c.h.b16 %v424
        %v771 = vunpack.c.l.b16 %v425
        %v772 = vunpack.c.h.b16 %v425
        %v773 = vunpack.c.l.b16 %v426
        %v774 = vunpack.c.h.b16 %v426
        %v775 = vunpack.c.l.b16 %v427
        %v776 = vunpack.c.h.b16 %v427
        %v777 = vunpack.c.l.b16 %v428
        %v778 = vunpack.c.h.b16 %v428
        %v779 = vunpack.c.l.b16 %v429
        %v780 = vunpack.c.h.b16 %v429
        %v781 = vunpack.c.l.b16 %v430
        %v782 = vunpack.c.h.b16 %v430
        %v783 = vpack.c.b16 %v603, %v591
        %v784 = vpack.c.b16 %v604, %v592
        %v785 = vpack.c.b16 %v605, %v593
        %v786 = vpack.c.b16 %v606, %v594
        %v787 = vpack.c.b16 %v607, %v595
        %v788 = vpack.c.b16 %v608, %v596
        %v789 = vpack.c.b16 %v609, %v597
        %v790 = vpack.c.b16 %v610, %v598
        %v791 = vpack.c.b16 %v611, %v599
        %v792 = vpack.c.b16 %v612, %v600
        %v793 = vpack.c.b16 %v613, %v601
        %v794 = vpack.c.b16 %v614, %v602
        %v795 = vpack.c.b16 %v627, %v615
        %v796 = vpack.c.b16 %v628, %v616
        %v797 = vpack.c.b16 %v629, %v617
        %v798 = vpack.c.b16 %v630, %v618
        %v799 = vpack.c.b16 %v631, %v619
        %v800 = vpack.c.b16 %v632, %v620
        %v801 = vpack.c.b16 %v633, %v621
        %v802 = vpack.c.b16 %v634, %v622
        %v803 = vpack.c.b16 %v635, %v623
        %v804 = vpack.c.b16 %v636, %v624
        %v805 = vpack.c.b16 %v637, %v625
        %v806 = vpack.c.b16 %v638, %v626
        %v807 = vpack.c.b16 %v651, %v639
        %v808 = vpack.c.b16 %v652, %v640
        %v809 = vpack.c.b16 %v653, %v641
        %v810 = vpack.c.b16 %v654, %v642
        %v811 = vpack.c.b16 %v655, %v643
        %v812 = vpack.c.b16 %v656, %v644
        %v813 = vpack.c.b16 %v657, %v645
        %v814 = vpack.c.b16 %v658, %v646
        %v815 = vpack.c.b16 %v659, %v647
        %v816 = vpack.c.b16 %v660, %v648
        %v817 = vpack.c.b16 %v661, %v649
        %v818 = vpack.c.b16 %v662, %v650
        %v819 = vpack.c.b16 %v675, %v663
        %v820 = vpack.c.b16 %v676, %v664
        %v821 = vpack.c.b16 %v677, %v665
        %v822 = vpack.c.b16 %v678, %v666
        %v823 = vpack.c.b16 %v679, %v667
        %v824 = vpack.c.b16 %v680, %v668
        %v825 = vpack.c.b16 %v681, %v669
        %v826 = vpack.c.b16 %v682, %v670
        %v827 = vpack.c.b16 %v683, %v671
        %v828 = vpack.c.b16 %v684, %v672
        %v829 = vpack.c.b16 %v685, %v673
        %v830 = vpack.c.b16 %v686, %v674
        %v831 = vpack.c.b16 %v699, %v687
        %v832 = vpack.c.b16 %v700, %v688
        %v833 = vpack.c.b16 %v701, %v689
        %v834 = vpack.c.b16 %v702, %v690
        %v835 = vpack.c.b16 %v703, %v691
        %v836 = vpack.c.b16 %v704, %v692
        %v837 = vpack.c.b16 %v705, %v693
        %v838 = vpack.c.b16 %v706, %v694
        %v839 = vpack.c.b16 %v707, %v695
        %v840 = vpack.c.b16 %v708, %v696
        %v841 = vpack.c.b16 %v709, %v697
        %v842 = vpack.c.b16 %v710, %v698
        %v843 = vpack.c.b16 %v723, %v711
        %v844 = vpack.c.b16 %v724, %v712
        %v845 = vpack.c.b16 %v725, %v713
        %v846 = vpack.c.b16 %v726, %v714
        %v847 = vpack.c.b16 %v727, %v715
        %v848 = vpack.c.b16 %v728, %v716
        %v849 = vpack.c.b16 %v729, %v717
        %v850 = vpack.c.b16 %v730, %v718
        %v851 = vpack.c.b16 %v731, %v719
        %v852 = vpack.c.b16 %v732, %v720
        %v853 = vpack.c.b16 %v733, %v721
        %v854 = vpack.c.b16 %v734, %v722
        %v855 = vpack.c.b16 %v747, %v735
        %v856 = vpack.c.b16 %v748, %v736
        %v857 = vpack.c.b16 %v749, %v737
        %v858 = vpack.c.b16 %v750, %v738
        %v859 = vpack.c.b16 %v751, %v739
        %v860 = vpack.c.b16 %v752, %v740
        %v861 = vpack.c.b16 %v753, %v741
        %v862 = vpack.c.b16 %v754, %v742
        %v863 = vpack.c.b16 %v755, %v743
        %v864 = vpack.c.b16 %v756, %v744
        %v865 = vpack.c.b16 %v757, %v745
        %v866 = vpack.c.b16 %v758, %v746
        %v867 = vpack.c.b16 %v771, %v759
        %v868 = vpack.c.b16 %v772, %v760
        %v869 = vpack.c.b16 %v773, %v761
        %v870 = vpack.c.b16 %v774, %v762
        %v871 = vpack.c.b16 %v775, %v763
        %v872 = vpack.c.b16 %v776, %v764
        %v873 = vpack.c.b16 %v777, %v765
        %v874 = vpack.c.b16 %v778, %v766
        %v875 = vpack.c.b16 %v779, %v767
        %v876 = vpack.c.b16 %v780, %v768
        %v877 = vpack.c.b16 %v781, %v769
        %v878 = vpack.c.b16 %v782, %v770
        %975 = vmatprep.subr.bf16.mxu0 %v784
        %976 = vmatpush1.bf16.msra.mxu0 %v783
        %977 = vmatprep.subr.bf16.mxu0 %v796
        %978 = vmatpush1.bf16.msra.mxu0 %v795
        %979 = vmatprep.subr.bf16.mxu0 %v808
        %980 = vmatpush1.bf16.msra.mxu0 %v807
        %981 = vmatprep.subr.bf16.mxu0 %v820
        %982 = vmatpush1.bf16.msra.mxu0 %v819
        %983 = vmatprep.subr.bf16.mxu0 %v832
        %984 = vmatpush1.bf16.msra.mxu0 %v831
        %985 = vmatprep.subr.bf16.mxu0 %v844
        %986 = vmatpush1.bf16.msra.mxu0 %v843
        %987 = vmatprep.subr.bf16.mxu0 %v856
        %988 = vmatpush1.bf16.msra.mxu0 %v855
        %989 = vmatprep.subr.bf16.mxu0 %v868
        %990 = vmatpush1.bf16.msra.mxu0 %v867
        %991 = vmatprep.subr.bf16.mxu0 0
        %992 = vmatpush1.bf16.msra.mxu0 0
        %993 = vmatprep.subr.bf16.mxu0 0
        %994 = vmatpush1.bf16.msra.mxu0 0
        %995 = vmatprep.subr.bf16.mxu0 0
        %996 = vmatpush1.bf16.msra.mxu0 0
        %997 = vmatprep.subr.bf16.mxu0 0
        %998 = vmatpush1.bf16.msra.mxu0 0
        %999 = vmatprep.subr.bf16.mxu0 0
        %1000 = vmatpush1.bf16.msra.mxu0 0
        %1001 = vmatprep.subr.bf16.mxu0 0
        %1002 = vmatpush1.bf16.msra.mxu0 0
        %1003 = vmatprep.subr.bf16.mxu0 0
        %1004 = vmatpush1.bf16.msra.mxu0 0
        %1005 = vmatprep.subr.bf16.mxu0 0
        %1006 = vmatpush1.bf16.msra.mxu0 0
        %1007 = vmatprep.mubr.bf16.mxu0 0
        %1008 = vmatmul.mubr.bf16.gmra.mrb[0].mxu0 %v334
        %v1009 = vpop.f32.mrb[0].mxu0
        %v1010 = vadd.f32 %v438, %v1009
        %v1011 = vpop.f32.mrb[0].mxu0
        %v1012 = vadd.f32 %v442, %v1011
        %v1013 = vpop.f32.mrb[0].mxu0
        %v1014 = vpop.f32.mrb[0].mxu0
        %1015 = vdwg.mxu0
        %1016 = vmatprep.subr.bf16.mxu0 %v786
        %1017 = vmatpush1.bf16.msra.mxu0 %v785
        %1018 = vmatprep.subr.bf16.mxu0 %v798
        %1019 = vmatpush1.bf16.msra.mxu0 %v797
        %1020 = vmatprep.subr.bf16.mxu0 %v810
        %1021 = vmatpush1.bf16.msra.mxu0 %v809
        %1022 = vmatprep.subr.bf16.mxu0 %v822
        %1023 = vmatpush1.bf16.msra.mxu0 %v821
        %1024 = vmatprep.subr.bf16.mxu0 %v834
        %1025 = vmatpush1.bf16.msra.mxu0 %v833
        %1026 = vmatprep.subr.bf16.mxu0 %v846
        %1027 = vmatpush1.bf16.msra.mxu0 %v845
        %1028 = vmatprep.subr.bf16.mxu0 %v858
        %1029 = vmatpush1.bf16.msra.mxu0 %v857
        %1030 = vmatprep.subr.bf16.mxu0 %v870
        %1031 = vmatpush1.bf16.msra.mxu0 %v869
        %1032 = vmatprep.subr.bf16.mxu0 0
        %1033 = vmatpush1.bf16.msra.mxu0 0
        %1034 = vmatprep.subr.bf16.mxu0 0
        %1035 = vmatpush1.bf16.msra.mxu0 0
        %1036 = vmatprep.subr.bf16.mxu0 0
        %1037 = vmatpush1.bf16.msra.mxu0 0
        %1038 = vmatprep.subr.bf16.mxu0 0
        %1039 = vmatpush1.bf16.msra.mxu0 0
        %1040 = vmatprep.subr.bf16.mxu0 0
        %1041 = vmatpush1.bf16.msra.mxu0 0
        %1042 = vmatprep.subr.bf16.mxu0 0
        %1043 = vmatpush1.bf16.msra.mxu0 0
        %1044 = vmatprep.subr.bf16.mxu0 0
        %1045 = vmatpush1.bf16.msra.mxu0 0
        %1046 = vmatprep.subr.bf16.mxu0 0
        %1047 = vmatpush1.bf16.msra.mxu0 0
        %1048 = vmatprep.mubr.bf16.mxu0 0
        %1049 = vmatmul.mubr.bf16.gmra.mrb[0].mxu0 %v334
        %v1050 = vpop.f32.mrb[0].mxu0
        %v1051 = vadd.f32 %v446, %v1050
        %v1052 = vpop.f32.mrb[0].mxu0
        %v1053 = vadd.f32 %v450, %v1052
        %v1054 = vpop.f32.mrb[0].mxu0
        %v1055 = vpop.f32.mrb[0].mxu0
        %1056 = vdwg.mxu0
        %1057 = vmatprep.subr.bf16.mxu0 %v788
        %1058 = vmatpush1.bf16.msra.mxu0 %v787
        %1059 = vmatprep.subr.bf16.mxu0 %v800
        %1060 = vmatpush1.bf16.msra.mxu0 %v799
        %1061 = vmatprep.subr.bf16.mxu0 %v812
        %1062 = vmatpush1.bf16.msra.mxu0 %v811
        %1063 = vmatprep.subr.bf16.mxu0 %v824
        %1064 = vmatpush1.bf16.msra.mxu0 %v823
        %1065 = vmatprep.subr.bf16.mxu0 %v836
        %1066 = vmatpush1.bf16.msra.mxu0 %v835
        %1067 = vmatprep.subr.bf16.mxu0 %v848
        %1068 = vmatpush1.bf16.msra.mxu0 %v847
        %1069 = vmatprep.subr.bf16.mxu0 %v860
        %1070 = vmatpush1.bf16.msra.mxu0 %v859
        %1071 = vmatprep.subr.bf16.mxu0 %v872
        %1072 = vmatpush1.bf16.msra.mxu0 %v871
        %1073 = vmatprep.subr.bf16.mxu0 0
        %1074 = vmatpush1.bf16.msra.mxu0 0
        %1075 = vmatprep.subr.bf16.mxu0 0
        %1076 = vmatpush1.bf16.msra.mxu0 0
        %1077 = vmatprep.subr.bf16.mxu0 0
        %1078 = vmatpush1.bf16.msra.mxu0 0
        %1079 = vmatprep.subr.bf16.mxu0 0
        %1080 = vmatpush1.bf16.msra.mxu0 0
        %1081 = vmatprep.subr.bf16.mxu0 0
        %1082 = vmatpush1.bf16.msra.mxu0 0
        %1083 = vmatprep.subr.bf16.mxu0 0
        %1084 = vmatpush1.bf16.msra.mxu0 0
        %1085 = vmatprep.subr.bf16.mxu0 0
        %1086 = vmatpush1.bf16.msra.mxu0 0
        %1087 = vmatprep.subr.bf16.mxu0 0
        %1088 = vmatpush1.bf16.msra.mxu0 0
        %1089 = vmatprep.mubr.bf16.mxu0 0
        %1090 = vmatmul.mubr.bf16.gmra.mrb[0].mxu0 %v334
        %v1091 = vpop.f32.mrb[0].mxu0
        %v1092 = vadd.f32 %v454, %v1091
        %v1093 = vpop.f32.mrb[0].mxu0
        %v1094 = vadd.f32 %v458, %v1093
        %v1095 = vpop.f32.mrb[0].mxu0
        %v1096 = vpop.f32.mrb[0].mxu0
        %1097 = vdwg.mxu0
        %1098 = vmatprep.subr.bf16.mxu0 %v790
        %1099 = vmatpush1.bf16.msra.mxu0 %v789
        %1100 = vmatprep.subr.bf16.mxu0 %v802
        %1101 = vmatpush1.bf16.msra.mxu0 %v801
        %1102 = vmatprep.subr.bf16.mxu0 %v814
        %1103 = vmatpush1.bf16.msra.mxu0 %v813
        %1104 = vmatprep.subr.bf16.mxu0 %v826
        %1105 = vmatpush1.bf16.msra.mxu0 %v825
        %1106 = vmatprep.subr.bf16.mxu0 %v838
        %1107 = vmatpush1.bf16.msra.mxu0 %v837
        %1108 = vmatprep.subr.bf16.mxu0 %v850
        %1109 = vmatpush1.bf16.msra.mxu0 %v849
        %1110 = vmatprep.subr.bf16.mxu0 %v862
        %1111 = vmatpush1.bf16.msra.mxu0 %v861
        %1112 = vmatprep.subr.bf16.mxu0 %v874
        %1113 = vmatpush1.bf16.msra.mxu0 %v873
        %1114 = vmatprep.subr.bf16.mxu0 0
        %1115 = vmatpush1.bf16.msra.mxu0 0
        %1116 = vmatprep.subr.bf16.mxu0 0
        %1117 = vmatpush1.bf16.msra.mxu0 0
        %1118 = vmatprep.subr.bf16.mxu0 0
        %1119 = vmatpush1.bf16.msra.mxu0 0
        %1120 = vmatprep.subr.bf16.mxu0 0
        %1121 = vmatpush1.bf16.msra.mxu0 0
        %1122 = vmatprep.subr.bf16.mxu0 0
        %1123 = vmatpush1.bf16.msra.mxu0 0
        %1124 = vmatprep.subr.bf16.mxu0 0
        %1125 = vmatpush1.bf16.msra.mxu0 0
        %1126 = vmatprep.subr.bf16.mxu0 0
        %1127 = vmatpush1.bf16.msra.mxu0 0
        %1128 = vmatprep.subr.bf16.mxu0 0
        %1129 = vmatpush1.bf16.msra.mxu0 0
        %1130 = vmatprep.mubr.bf16.mxu0 0
        %1131 = vmatmul.mubr.bf16.gmra.mrb[0].mxu0 %v334
        %v1132 = vpop.f32.mrb[0].mxu0
        %v1133 = vadd.f32 %v462, %v1132
        %v1134 = vpop.f32.mrb[0].mxu0
        %v1135 = vadd.f32 %v466, %v1134
        %v1136 = vpop.f32.mrb[0].mxu0
        %v1137 = vpop.f32.mrb[0].mxu0
        %1138 = vdwg.mxu0
        %1139 = vmatprep.subr.bf16.mxu0 %v792
        %1140 = vmatpush1.bf16.msra.mxu0 %v791
        %1141 = vmatprep.subr.bf16.mxu0 %v804
        %1142 = vmatpush1.bf16.msra.mxu0 %v803
        %1143 = vmatprep.subr.bf16.mxu0 %v816
        %1144 = vmatpush1.bf16.msra.mxu0 %v815
        %1145 = vmatprep.subr.bf16.mxu0 %v828
        %1146 = vmatpush1.bf16.msra.mxu0 %v827
        %1147 = vmatprep.subr.bf16.mxu0 %v840
        %1148 = vmatpush1.bf16.msra.mxu0 %v839
        %1149 = vmatprep.subr.bf16.mxu0 %v852
        %1150 = vmatpush1.bf16.msra.mxu0 %v851
        %1151 = vmatprep.subr.bf16.mxu0 %v864
        %1152 = vmatpush1.bf16.msra.mxu0 %v863
        %1153 = vmatprep.subr.bf16.mxu0 %v876
        %1154 = vmatpush1.bf16.msra.mxu0 %v875
        %1155 = vmatprep.subr.bf16.mxu0 0
        %1156 = vmatpush1.bf16.msra.mxu0 0
        %1157 = vmatprep.subr.bf16.mxu0 0
        %1158 = vmatpush1.bf16.msra.mxu0 0
        %1159 = vmatprep.subr.bf16.mxu0 0
        %1160 = vmatpush1.bf16.msra.mxu0 0
        %1161 = vmatprep.subr.bf16.mxu0 0
        %1162 = vmatpush1.bf16.msra.mxu0 0
        %1163 = vmatprep.subr.bf16.mxu0 0
        %1164 = vmatpush1.bf16.msra.mxu0 0
        %1165 = vmatprep.subr.bf16.mxu0 0
        %1166 = vmatpush1.bf16.msra.mxu0 0
        %1167 = vmatprep.subr.bf16.mxu0 0
        %1168 = vmatpush1.bf16.msra.mxu0 0
        %1169 = vmatprep.subr.bf16.mxu0 0
        %1170 = vmatpush1.bf16.msra.mxu0 0
        %1171 = vmatprep.mubr.bf16.mxu0 0
        %1172 = vmatmul.mubr.bf16.gmra.mrb[0].mxu0 %v334
        %v1173 = vpop.f32.mrb[0].mxu0
        %v1174 = vadd.f32 %v470, %v1173
        %v1175 = vpop.f32.mrb[0].mxu0
        %v1176 = vadd.f32 %v474, %v1175
        %v1177 = vpop.f32.mrb[0].mxu0
        %v1178 = vpop.f32.mrb[0].mxu0
        %1179 = vdwg.mxu0
        %1180 = vmatprep.subr.bf16.mxu0 %v794
        %1181 = vmatpush1.bf16.msra.mxu0 %v793
        %1182 = vmatprep.subr.bf16.mxu0 %v806
        %1183 = vmatpush1.bf16.msra.mxu0 %v805
        %1184 = vmatprep.subr.bf16.mxu0 %v818
        %1185 = vmatpush1.bf16.msra.mxu0 %v817
        %1186 = vmatprep.subr.bf16.mxu0 %v830
        %1187 = vmatpush1.bf16.msra.mxu0 %v829
        %1188 = vmatprep.subr.bf16.mxu0 %v842
        %1189 = vmatpush1.bf16.msra.mxu0 %v841
        %1190 = vmatprep.subr.bf16.mxu0 %v854
        %1191 = vmatpush1.bf16.msra.mxu0 %v853
        %1192 = vmatprep.subr.bf16.mxu0 %v866
        %1193 = vmatpush1.bf16.msra.mxu0 %v865
        %1194 = vmatprep.subr.bf16.mxu0 %v878
        %1195 = vmatpush1.bf16.msra.mxu0 %v877
        %1196 = vmatprep.subr.bf16.mxu0 0
        %1197 = vmatpush1.bf16.msra.mxu0 0
        %1198 = vmatprep.subr.bf16.mxu0 0
        %1199 = vmatpush1.bf16.msra.mxu0 0
        %1200 = vmatprep.subr.bf16.mxu0 0
        %1201 = vmatpush1.bf16.msra.mxu0 0
        %1202 = vmatprep.subr.bf16.mxu0 0
        %1203 = vmatpush1.bf16.msra.mxu0 0
        %1204 = vmatprep.subr.bf16.mxu0 0
        %1205 = vmatpush1.bf16.msra.mxu0 0
        %1206 = vmatprep.subr.bf16.mxu0 0
        %1207 = vmatpush1.bf16.msra.mxu0 0
        %1208 = vmatprep.subr.bf16.mxu0 0
        %1209 = vmatpush1.bf16.msra.mxu0 0
        %1210 = vmatprep.subr.bf16.mxu0 0
        %1211 = vmatpush1.bf16.msra.mxu0 0
        %1212 = vmatprep.mubr.bf16.mxu0 0
        %1213 = vmatmul.mubr.bf16.gmra.mrb[0].mxu0 %v334
        %v1214 = vpop.f32.mrb[0].mxu0
        %v1215 = vadd.f32 %v478, %v1214
        %v1216 = vpop.f32.mrb[0].mxu0
        %v1217 = vadd.f32 %v482, %v1216
        %v1218 = vpop.f32.mrb[0].mxu0
        %v1219 = vpop.f32.mrb[0].mxu0
        %1220 = vdwg.mxu0
        %v1221 = vld [vmem:[%s328] sm:$0xff]
        %vm1222 = vcmp.eq.s32.totalorder %v1221, 0
        %v1223 = vpack.c.bf16 %v1010, %v1010
        %v1224 = vpack.c.bf16 %v1092, %v1092
        %v1225 = vpack.c.bf16 %v1174, %v1174
        %1226 = vmatprep.subr.bf16.mxu0 0
        %1227 = vmatpush1.bf16.xpose.msra.mxu0 %v1224
        %1228 = vmatprep.subr.bf16.mxu0 0
        %1229 = vmatpush1.bf16.xpose.msra.mxu0 0
        %1230 = vmatprep.subr.bf16.mxu0 0
        %1231 = vmatpush1.bf16.xpose.msra.mxu0 0
        %1232 = vmatprep.subr.bf16.mxu0 0
        %1233 = vmatpush1.bf16.xpose.msra.mxu0 0
        %1234 = vmatprep.subr.bf16.mxu0 0
        %1235 = vmatpush1.bf16.xpose.msra.mxu0 0
        %1236 = vmatprep.subr.bf16.mxu0 0
        %1237 = vmatpush1.bf16.xpose.msra.mxu0 0
        %1238 = vmatprep.subr.bf16.mxu0 0
        %1239 = vmatpush1.bf16.xpose.msra.mxu0 0
        %1240 = vmatprep.subr.bf16.mxu0 0
        %1241 = vmatpush1.bf16.xpose.msra.mxu0 0
        %1242 = vmatprep.subr.bf16.mxu0 0
        %1243 = vmatpush1.bf16.xpose.msra.mxu0 0
        %1244 = vmatprep.subr.bf16.mxu0 0
        %1245 = vmatpush1.bf16.xpose.msra.mxu0 0
        %1246 = vmatprep.subr.bf16.mxu0 0
        %1247 = vmatpush1.bf16.xpose.msra.mxu0 0
        %1248 = vmatprep.subr.bf16.mxu0 0
        %1249 = vmatpush1.bf16.xpose.msra.mxu0 0
        %1250 = vmatprep.subr.bf16.mxu0 0
        %1251 = vmatpush1.bf16.xpose.msra.mxu0 0
        %1252 = vmatprep.subr.bf16.mxu0 0
        %1253 = vmatpush1.bf16.xpose.msra.mxu0 0
        %1254 = vmatprep.subr.bf16.mxu0 0
        %1255 = vmatpush1.bf16.xpose.msra.mxu0 0
        %1256 = vmatprep.subr.bf16.mxu0 0
        %1257 = vmatpush1.bf16.xpose.msra.mxu0 0
        %1258 = vmatprep.mubr.bf16.mxu0 0
        %1259 = vmatmul.mubr.bf16.gmra.mrb[0].mxu0 %v1223
        %v1260 = vpop.f32.mrb[0].mxu0
        %v1261 = vadd.f32 0.0, %v1260
        %v1262 = vpop.f32.mrb[0].mxu0
        %v1263 = vpop.f32.mrb[0].mxu0
        %v1264 = vpop.f32.mrb[0].mxu0
        %1265 = vdwg.mxu0
        %v1266 = vmul.f32 %v1261, 0.35355338
        %v1267 = vsel %vm1222, -1e+09, %v1266
        %vm1268 = vcmask 64512
        %v1269 = vsel %vm1268, %v1267, -inf
        %1270 = vmax.xlane.f32.xlu0 %v1269
        %v1271 = vpop.xlane.xlu0 %1270
        %v1272 = vsub.f32 %v1267, %v1271
        %v1273 = vmul.f32 %v1272, 1.442695
        %v1274 = vpow.pop %v1273
        %v1275 = vsel %vm1268, %v1274, 0.0
        %1276 = vadd.xlane.f32.xlu0 %v1275
        %v1277 = vpop.xlane.xlu0 %1276
        %v1278 = vrcp.pop %v1277
        %v1279 = vmul.f32 %v1274, %v1278
        %v1280 = vpack.c.bf16 %v1279, %v1279
        %v1282 = vsel %vm1268, %v1280, 0
        %vm1284 = vcmask 1043456
        %v1286 = vsel %vm1284, %v1225, 0
        %1288 = vmatprep.subr.bf16.mxu0 0
        %1289 = vmatpush1.bf16.msra.mxu0 %v1286
        %1290 = vmatprep.subr.bf16.mxu0 0
        %1291 = vmatpush1.bf16.msra.mxu0 0
        %1292 = vmatprep.subr.bf16.mxu0 0
        %1293 = vmatpush1.bf16.msra.mxu0 0
        %1294 = vmatprep.subr.bf16.mxu0 0
        %1295 = vmatpush1.bf16.msra.mxu0 0
        %1296 = vmatprep.subr.bf16.mxu0 0
        %1297 = vmatpush1.bf16.msra.mxu0 0
        %1298 = vmatprep.subr.bf16.mxu0 0
        %1299 = vmatpush1.bf16.msra.mxu0 0
        %1300 = vmatprep.subr.bf16.mxu0 0
        %1301 = vmatpush1.bf16.msra.mxu0 0
        %1302 = vmatprep.subr.bf16.mxu0 0
        %1303 = vmatpush1.bf16.msra.mxu0 0
        %1304 = vmatprep.subr.bf16.mxu0 0
        %1305 = vmatpush1.bf16.msra.mxu0 0
        %1306 = vmatprep.subr.bf16.mxu0 0
        %1307 = vmatpush1.bf16.msra.mxu0 0
        %1308 = vmatprep.subr.bf16.mxu0 0
        %1309 = vmatpush1.bf16.msra.mxu0 0
        %1310 = vmatprep.subr.bf16.mxu0 0
        %1311 = vmatpush1.bf16.msra.mxu0 0
        %1312 = vmatprep.subr.bf16.mxu0 0
        %1313 = vmatpush1.bf16.msra.mxu0 0
        %1314 = vmatprep.subr.bf16.mxu0 0
        %1315 = vmatpush1.bf16.msra.mxu0 0
        %1316 = vmatprep.subr.bf16.mxu0 0
        %1317 = vmatpush1.bf16.msra.mxu0 0
        %1318 = vmatprep.subr.bf16.mxu0 0
        %1319 = vmatpush1.bf16.msra.mxu0 0
        %1320 = vmatprep.mubr.bf16.mxu0 0
        %1321 = vmatmul.mubr.bf16.gmra.mrb[0].mxu0 %v1282
        %v1322 = vpop.f32.mrb[0].mxu0
        %v1323 = vadd.f32 0.0, %v1322
        %v1324 = vpop.f32.mrb[0].mxu0
        %v1325 = vpop.f32.mrb[0].mxu0
        %v1326 = vpop.f32.mrb[0].mxu0
        %1327 = vdwg.mxu0
        %v1328 = vpack.c.bf16 %v1323, %v1323
        %v1329 = vld [vmem:[%s4] sm:$0xf]
        %v1330 = vld [vmem:[%s4 + $0x4] sm:$0xf]
        %v1331 = vld [vmem:[%s4 + $0x8] sm:$0xf]
        %v1332 = vld [vmem:[%s4 + $0xc] sm:$0xf]
        %v1333 = vld [vmem:[%s4 + $0x10] sm:$0xf]
        %v1334 = vld [vmem:[%s4 + $0x14] sm:$0xf]
        %v1335 = vld [vmem:[%s4 + $0x18] sm:$0xf]
        %v1336 = vld [vmem:[%s4 + $0x1c] sm:$0xf]
        %v1337 = vld [vmem:[%s4 + $0x20] sm:$0xf]
        %v1338 = vld [vmem:[%s4 + $0x24] sm:$0xf]
        %v1339 = vld [vmem:[%s4 + $0x28] sm:$0xf]
        %v1340 = vld [vmem:[%s4 + $0x2c] sm:$0xf]
        %v1341 = vld [vmem:[%s4 + $0x30] sm:$0xf]
        %v1342 = vld [vmem:[%s4 + $0x34] sm:$0xf]
        %v1343 = vld [vmem:[%s4 + $0x38] sm:$0xf]
        %v1344 = vld [vmem:[%s4 + $0x3c] sm:$0xf]
        %v1345 = vpack.c.bf16 %v1012, %v1012
        %v1346 = vpack.c.bf16 %v1094, %v1094
        %v1347 = vpack.c.bf16 %v1176, %v1176
        %1348 = vmatprep.subr.bf16.mxu0 0
        %1349 = vmatpush1.bf16.xpose.msra.mxu0 %v1346
        %1350 = vmatprep.subr.bf16.mxu0 0
        %1351 = vmatpush1.bf16.xpose.msra.mxu0 0
        %1352 = vmatprep.subr.bf16.mxu0 0
        %1353 = vmatpush1.bf16.xpose.msra.mxu0 0
        %1354 = vmatprep.subr.bf16.mxu0 0
        %1355 = vmatpush1.bf16.xpose.msra.mxu0 0
        %1356 = vmatprep.subr.bf16.mxu0 0
        %1357 = vmatpush1.bf16.xpose.msra.mxu0 0
        %1358 = vmatprep.subr.bf16.mxu0 0
        %1359 = vmatpush1.bf16.xpose.msra.mxu0 0
        %1360 = vmatprep.subr.bf16.mxu0 0
        %1361 = vmatpush1.bf16.xpose.msra.mxu0 0
        %1362 = vmatprep.subr.bf16.mxu0 0
        %1363 = vmatpush1.bf16.xpose.msra.mxu0 0
        %1364 = vmatprep.subr.bf16.mxu0 0
        %1365 = vmatpush1.bf16.xpose.msra.mxu0 0
        %1366 = vmatprep.subr.bf16.mxu0 0
        %1367 = vmatpush1.bf16.xpose.msra.mxu0 0
        %1368 = vmatprep.subr.bf16.mxu0 0
        %1369 = vmatpush1.bf16.xpose.msra.mxu0 0
        %1370 = vmatprep.subr.bf16.mxu0 0
        %1371 = vmatpush1.bf16.xpose.msra.mxu0 0
        %1372 = vmatprep.subr.bf16.mxu0 0
        %1373 = vmatpush1.bf16.xpose.msra.mxu0 0
        %1374 = vmatprep.subr.bf16.mxu0 0
        %1375 = vmatpush1.bf16.xpose.msra.mxu0 0
        %1376 = vmatprep.subr.bf16.mxu0 0
        %1377 = vmatpush1.bf16.xpose.msra.mxu0 0
        %1378 = vmatprep.subr.bf16.mxu0 0
        %1379 = vmatpush1.bf16.xpose.msra.mxu0 0
        %1380 = vmatprep.mubr.bf16.mxu0 0
        %1381 = vmatmul.mubr.bf16.gmra.mrb[0].mxu0 %v1345
        %v1382 = vpop.f32.mrb[0].mxu0
        %v1383 = vadd.f32 0.0, %v1382
        %v1384 = vpop.f32.mrb[0].mxu0
        %v1385 = vpop.f32.mrb[0].mxu0
        %v1386 = vpop.f32.mrb[0].mxu0
        %1387 = vdwg.mxu0
        %v1388 = vmul.f32 %v1383, 0.35355338
        %v1389 = vsel %vm1222, -1e+09, %v1388
        %v1390 = vsel %vm1268, %v1389, -inf
        %1391 = vmax.xlane.f32.xlu0 %v1390
        %v1392 = vpop.xlane.xlu0 %1391
        %v1393 = vsub.f32 %v1389, %v1392
        %v1394 = vmul.f32 %v1393, 1.442695
        %v1395 = vpow.pop %v1394
        %v1396 = vsel %vm1268, %v1395, 0.0
        %1397 = vadd.xlane.f32.xlu0 %v1396
        %v1398 = vpop.xlane.xlu0 %1397
        %v1399 = vrcp.pop %v1398
        %v1400 = vmul.f32 %v1395, %v1399
        %v1401 = vpack.c.bf16 %v1400, %v1400
        %v1403 = vsel %vm1268, %v1401, 0
        %v1406 = vsel %vm1284, %v1347, 0
        %1408 = vmatprep.subr.bf16.mxu0 0
        %1409 = vmatpush1.bf16.msra.mxu0 %v1406
        %1410 = vmatprep.subr.bf16.mxu0 0
        %1411 = vmatpush1.bf16.msra.mxu0 0
        %1412 = vmatprep.subr.bf16.mxu0 0
        %1413 = vmatpush1.bf16.msra.mxu0 0
        %1414 = vmatprep.subr.bf16.mxu0 0
        %1415 = vmatpush1.bf16.msra.mxu0 0
        %1416 = vmatprep.subr.bf16.mxu0 0
        %1417 = vmatpush1.bf16.msra.mxu0 0
        %1418 = vmatprep.subr.bf16.mxu0 0
        %1419 = vmatpush1.bf16.msra.mxu0 0
        %1420 = vmatprep.subr.bf16.mxu0 0
        %1421 = vmatpush1.bf16.msra.mxu0 0
        %1422 = vmatprep.subr.bf16.mxu0 0
        %1423 = vmatpush1.bf16.msra.mxu0 0
        %1424 = vmatprep.subr.bf16.mxu0 0
        %1425 = vmatpush1.bf16.msra.mxu0 0
        %1426 = vmatprep.subr.bf16.mxu0 0
        %1427 = vmatpush1.bf16.msra.mxu0 0
        %1428 = vmatprep.subr.bf16.mxu0 0
        %1429 = vmatpush1.bf16.msra.mxu0 0
        %1430 = vmatprep.subr.bf16.mxu0 0
        %1431 = vmatpush1.bf16.msra.mxu0 0
        %1432 = vmatprep.subr.bf16.mxu0 0
        %1433 = vmatpush1.bf16.msra.mxu0 0
        %1434 = vmatprep.subr.bf16.mxu0 0
        %1435 = vmatpush1.bf16.msra.mxu0 0
        %1436 = vmatprep.subr.bf16.mxu0 0
        %1437 = vmatpush1.bf16.msra.mxu0 0
        %1438 = vmatprep.subr.bf16.mxu0 0
        %1439 = vmatpush1.bf16.msra.mxu0 0
        %1440 = vmatprep.mubr.bf16.mxu0 0
        %1441 = vmatmul.mubr.bf16.gmra.mrb[0].mxu0 %v1403
        %v1442 = vpop.f32.mrb[0].mxu0
        %v1443 = vadd.f32 0.0, %v1442
        %v1444 = vpop.f32.mrb[0].mxu0
        %v1445 = vpop.f32.mrb[0].mxu0
        %v1446 = vpop.f32.mrb[0].mxu0
        %1447 = vdwg.mxu0
        %v1448 = vpack.c.bf16 %v1443, %v1443
        %v1449 = vld [vmem:[%s4 + $0x40] sm:$0xf]
        %v1450 = vld [vmem:[%s4 + $0x44] sm:$0xf]
        %v1451 = vld [vmem:[%s4 + $0x48] sm:$0xf]
        %v1452 = vld [vmem:[%s4 + $0x4c] sm:$0xf]
        %v1453 = vld [vmem:[%s4 + $0x50] sm:$0xf]
        %v1454 = vld [vmem:[%s4 + $0x54] sm:$0xf]
        %v1455 = vld [vmem:[%s4 + $0x58] sm:$0xf]
        %v1456 = vld [vmem:[%s4 + $0x5c] sm:$0xf]
        %v1457 = vld [vmem:[%s4 + $0x60] sm:$0xf]
        %v1458 = vld [vmem:[%s4 + $0x64] sm:$0xf]
        %v1459 = vld [vmem:[%s4 + $0x68] sm:$0xf]
        %v1460 = vld [vmem:[%s4 + $0x6c] sm:$0xf]
        %v1461 = vld [vmem:[%s4 + $0x70] sm:$0xf]
        %v1462 = vld [vmem:[%s4 + $0x74] sm:$0xf]
        %v1463 = vld [vmem:[%s4 + $0x78] sm:$0xf]
        %v1464 = vld [vmem:[%s4 + $0x7c] sm:$0xf]
        %v1481 = vunpack.c.l.b16 %v1449
        %v1482 = vunpack.c.l.b16 %v1450
        %v1483 = vunpack.c.l.b16 %v1451
        %v1484 = vunpack.c.l.b16 %v1452
        %v1485 = vunpack.c.l.b16 %v1453
        %v1486 = vunpack.c.l.b16 %v1454
        %v1487 = vunpack.c.l.b16 %v1455
        %v1488 = vunpack.c.l.b16 %v1456
        %v1489 = vunpack.c.l.b16 %v1457
        %v1490 = vunpack.c.l.b16 %v1458
        %v1491 = vunpack.c.l.b16 %v1459
        %v1492 = vunpack.c.l.b16 %v1460
        %v1493 = vunpack.c.l.b16 %v1461
        %v1494 = vunpack.c.l.b16 %v1462
        %v1495 = vunpack.c.l.b16 %v1463
        %v1496 = vunpack.c.l.b16 %v1464
        %v1497 = vpack.c.b16 %v1482, %v1481
        %v1498 = vpack.c.b16 %v1484, %v1483
        %v1499 = vpack.c.b16 %v1486, %v1485
        %v1500 = vpack.c.b16 %v1488, %v1487
        %v1501 = vpack.c.b16 %v1490, %v1489
        %v1502 = vpack.c.b16 %v1492, %v1491
        %v1503 = vpack.c.b16 %v1494, %v1493
        %v1504 = vpack.c.b16 %v1496, %v1495
        %1513 = vmatprep.subr.bf16.mxu0 0
        %1514 = vmatpush1.bf16.msra.mxu0 %v1497
        %1515 = vmatprep.subr.bf16.mxu0 0
        %1516 = vmatpush1.bf16.msra.mxu0 %v1498
        %1517 = vmatprep.subr.bf16.mxu0 0
        %1518 = vmatpush1.bf16.msra.mxu0 %v1499
        %1519 = vmatprep.subr.bf16.mxu0 0
        %1520 = vmatpush1.bf16.msra.mxu0 %v1500
        %1521 = vmatprep.subr.bf16.mxu0 0
        %1522 = vmatpush1.bf16.msra.mxu0 %v1501
        %1523 = vmatprep.subr.bf16.mxu0 0
        %1524 = vmatpush1.bf16.msra.mxu0 %v1502
        %1525 = vmatprep.subr.bf16.mxu0 0
        %1526 = vmatpush1.bf16.msra.mxu0 %v1503
        %1527 = vmatprep.subr.bf16.mxu0 0
        %1528 = vmatpush1.bf16.msra.mxu0 %v1504
        %1529 = vmatprep.subr.bf16.mxu0 0
        %1530 = vmatpush1.bf16.msra.mxu0 0
        %1531 = vmatprep.subr.bf16.mxu0 0
        %1532 = vmatpush1.bf16.msra.mxu0 0
        %1533 = vmatprep.subr.bf16.mxu0 0
        %1534 = vmatpush1.bf16.msra.mxu0 0
        %1535 = vmatprep.subr.bf16.mxu0 0
        %1536 = vmatpush1.bf16.msra.mxu0 0
        %1537 = vmatprep.subr.bf16.mxu0 0
        %1538 = vmatpush1.bf16.msra.mxu0 0
        %1539 = vmatprep.subr.bf16.mxu0 0
        %1540 = vmatpush1.bf16.msra.mxu0 0
        %1541 = vmatprep.subr.bf16.mxu0 0
        %1542 = vmatpush1.bf16.msra.mxu0 0
        %1543 = vmatprep.subr.bf16.mxu0 0
        %1544 = vmatpush1.bf16.msra.mxu0 0
        %1545 = vmatprep.mubr.bf16.mxu0 0
        %1546 = vmatmul.mubr.bf16.gmra.mrb[0].mxu0 %v1448
        %v1547 = vpop.f32.mrb[0].mxu0
        %v1548 = vadd.f32 0.0, %v1547
        %v1549 = vpop.f32.mrb[0].mxu0
        %v1550 = vpop.f32.mrb[0].mxu0
        %v1551 = vpop.f32.mrb[0].mxu0
        %1552 = vdwg.mxu0
        %v1569 = vunpack.c.l.b16 %v1329
        %v1570 = vunpack.c.l.b16 %v1330
        %v1571 = vunpack.c.l.b16 %v1331
        %v1572 = vunpack.c.l.b16 %v1332
        %v1573 = vunpack.c.l.b16 %v1333
        %v1574 = vunpack.c.l.b16 %v1334
        %v1575 = vunpack.c.l.b16 %v1335
        %v1576 = vunpack.c.l.b16 %v1336
        %v1577 = vunpack.c.l.b16 %v1337
        %v1578 = vunpack.c.l.b16 %v1338
        %v1579 = vunpack.c.l.b16 %v1339
        %v1580 = vunpack.c.l.b16 %v1340
        %v1581 = vunpack.c.l.b16 %v1341
        %v1582 = vunpack.c.l.b16 %v1342
        %v1583 = vunpack.c.l.b16 %v1343
        %v1584 = vunpack.c.l.b16 %v1344
        %v1585 = vpack.c.b16 %v1570, %v1569
        %v1586 = vpack.c.b16 %v1572, %v1571
        %v1587 = vpack.c.b16 %v1574, %v1573
        %v1588 = vpack.c.b16 %v1576, %v1575
        %v1589 = vpack.c.b16 %v1578, %v1577
        %v1590 = vpack.c.b16 %v1580, %v1579
        %v1591 = vpack.c.b16 %v1582, %v1581
        %v1592 = vpack.c.b16 %v1584, %v1583
        %1601 = vmatprep.subr.bf16.mxu0 0
        %1602 = vmatpush1.bf16.msra.mxu0 %v1585
        %1603 = vmatprep.subr.bf16.mxu0 0
        %1604 = vmatpush1.bf16.msra.mxu0 %v1586
        %1605 = vmatprep.subr.bf16.mxu0 0
        %1606 = vmatpush1.bf16.msra.mxu0 %v1587
        %1607 = vmatprep.subr.bf16.mxu0 0
        %1608 = vmatpush1.bf16.msra.mxu0 %v1588
        %1609 = vmatprep.subr.bf16.mxu0 0
        %1610 = vmatpush1.bf16.msra.mxu0 %v1589
        %1611 = vmatprep.subr.bf16.mxu0 0
        %1612 = vmatpush1.bf16.msra.mxu0 %v1590
        %1613 = vmatprep.subr.bf16.mxu0 0
        %1614 = vmatpush1.bf16.msra.mxu0 %v1591
        %1615 = vmatprep.subr.bf16.mxu0 0
        %1616 = vmatpush1.bf16.msra.mxu0 %v1592
        %1617 = vmatprep.subr.bf16.mxu0 0
        %1618 = vmatpush1.bf16.msra.mxu0 0
        %1619 = vmatprep.subr.bf16.mxu0 0
        %1620 = vmatpush1.bf16.msra.mxu0 0
        %1621 = vmatprep.subr.bf16.mxu0 0
        %1622 = vmatpush1.bf16.msra.mxu0 0
        %1623 = vmatprep.subr.bf16.mxu0 0
        %1624 = vmatpush1.bf16.msra.mxu0 0
        %1625 = vmatprep.subr.bf16.mxu0 0
        %1626 = vmatpush1.bf16.msra.mxu0 0
        %1627 = vmatprep.subr.bf16.mxu0 0
        %1628 = vmatpush1.bf16.msra.mxu0 0
        %1629 = vmatprep.subr.bf16.mxu0 0
        %1630 = vmatpush1.bf16.msra.mxu0 0
        %1631 = vmatprep.subr.bf16.mxu0 0
        %1632 = vmatpush1.bf16.msra.mxu0 0
        %1633 = vmatprep.mubr.bf16.mxu0 0
        %1634 = vmatmul.mubr.bf16.gmra.mrb[0].mxu0 %v1328
        %v1635 = vpop.f32.mrb[0].mxu0
        %v1636 = vadd.f32 %v1548, %v1635
        %v1637 = vpop.f32.mrb[0].mxu0
        %v1638 = vpop.f32.mrb[0].mxu0
        %v1639 = vpop.f32.mrb[0].mxu0
        %1640 = vdwg.mxu0
        %v1641 = vpack.c.bf16 %v1051, %v1051
        %v1642 = vpack.c.bf16 %v1133, %v1133
        %v1643 = vpack.c.bf16 %v1215, %v1215
        %1644 = vmatprep.subr.bf16.mxu0 0
        %1645 = vmatpush1.bf16.xpose.msra.mxu0 %v1642
        %1646 = vmatprep.subr.bf16.mxu0 0
        %1647 = vmatpush1.bf16.xpose.msra.mxu0 0
        %1648 = vmatprep.subr.bf16.mxu0 0
        %1649 = vmatpush1.bf16.xpose.msra.mxu0 0
        %1650 = vmatprep.subr.bf16.mxu0 0
        %1651 = vmatpush1.bf16.xpose.msra.mxu0 0
        %1652 = vmatprep.subr.bf16.mxu0 0
        %1653 = vmatpush1.bf16.xpose.msra.mxu0 0
        %1654 = vmatprep.subr.bf16.mxu0 0
        %1655 = vmatpush1.bf16.xpose.msra.mxu0 0
        %1656 = vmatprep.subr.bf16.mxu0 0
        %1657 = vmatpush1.bf16.xpose.msra.mxu0 0
        %1658 = vmatprep.subr.bf16.mxu0 0
        %1659 = vmatpush1.bf16.xpose.msra.mxu0 0
        %1660 = vmatprep.subr.bf16.mxu0 0
        %1661 = vmatpush1.bf16.xpose.msra.mxu0 0
        %1662 = vmatprep.subr.bf16.mxu0 0
        %1663 = vmatpush1.bf16.xpose.msra.mxu0 0
        %1664 = vmatprep.subr.bf16.mxu0 0
        %1665 = vmatpush1.bf16.xpose.msra.mxu0 0
        %1666 = vmatprep.subr.bf16.mxu0 0
        %1667 = vmatpush1.bf16.xpose.msra.mxu0 0
        %1668 = vmatprep.subr.bf16.mxu0 0
        %1669 = vmatpush1.bf16.xpose.msra.mxu0 0
        %1670 = vmatprep.subr.bf16.mxu0 0
        %1671 = vmatpush1.bf16.xpose.msra.mxu0 0
        %1672 = vmatprep.subr.bf16.mxu0 0
        %1673 = vmatpush1.bf16.xpose.msra.mxu0 0
        %1674 = vmatprep.subr.bf16.mxu0 0
        %1675 = vmatpush1.bf16.xpose.msra.mxu0 0
        %1676 = vmatprep.mubr.bf16.mxu0 0
        %1677 = vmatmul.mubr.bf16.gmra.mrb[0].mxu0 %v1641
        %v1678 = vpop.f32.mrb[0].mxu0
        %v1679 = vadd.f32 0.0, %v1678
        %v1680 = vpop.f32.mrb[0].mxu0
        %v1681 = vpop.f32.mrb[0].mxu0
        %v1682 = vpop.f32.mrb[0].mxu0
        %1683 = vdwg.mxu0
        %v1684 = vmul.f32 %v1679, 0.35355338
        %v1685 = vsel %vm1222, -1e+09, %v1684
        %v1686 = vsel %vm1268, %v1685, -inf
        %1687 = vmax.xlane.f32.xlu0 %v1686
        %v1688 = vpop.xlane.xlu0 %1687
        %v1689 = vsub.f32 %v1685, %v1688
        %v1690 = vmul.f32 %v1689, 1.442695
        %v1691 = vpow.pop %v1690
        %v1692 = vsel %vm1268, %v1691, 0.0
        %1693 = vadd.xlane.f32.xlu0 %v1692
        %v1694 = vpop.xlane.xlu0 %1693
        %v1695 = vrcp.pop %v1694
        %v1696 = vmul.f32 %v1691, %v1695
        %v1697 = vpack.c.bf16 %v1696, %v1696
        %v1699 = vsel %vm1268, %v1697, 0
        %v1702 = vsel %vm1284, %v1643, 0
        %1704 = vmatprep.subr.bf16.mxu0 0
        %1705 = vmatpush1.bf16.msra.mxu0 %v1702
        %1706 = vmatprep.subr.bf16.mxu0 0
        %1707 = vmatpush1.bf16.msra.mxu0 0
        %1708 = vmatprep.subr.bf16.mxu0 0
        %1709 = vmatpush1.bf16.msra.mxu0 0
        %1710 = vmatprep.subr.bf16.mxu0 0
        %1711 = vmatpush1.bf16.msra.mxu0 0
        %1712 = vmatprep.subr.bf16.mxu0 0
        %1713 = vmatpush1.bf16.msra.mxu0 0
        %1714 = vmatprep.subr.bf16.mxu0 0
        %1715 = vmatpush1.bf16.msra.mxu0 0
        %1716 = vmatprep.subr.bf16.mxu0 0
        %1717 = vmatpush1.bf16.msra.mxu0 0
        %1718 = vmatprep.subr.bf16.mxu0 0
        %1719 = vmatpush1.bf16.msra.mxu0 0
        %1720 = vmatprep.subr.bf16.mxu0 0
        %1721 = vmatpush1.bf16.msra.mxu0 0
        %1722 = vmatprep.subr.bf16.mxu0 0
        %1723 = vmatpush1.bf16.msra.mxu0 0
        %1724 = vmatprep.subr.bf16.mxu0 0
        %1725 = vmatpush1.bf16.msra.mxu0 0
        %1726 = vmatprep.subr.bf16.mxu0 0
        %1727 = vmatpush1.bf16.msra.mxu0 0
        %1728 = vmatprep.subr.bf16.mxu0 0
        %1729 = vmatpush1.bf16.msra.mxu0 0
        %1730 = vmatprep.subr.bf16.mxu0 0
        %1731 = vmatpush1.bf16.msra.mxu0 0
        %1732 = vmatprep.subr.bf16.mxu0 0
        %1733 = vmatpush1.bf16.msra.mxu0 0
        %1734 = vmatprep.subr.bf16.mxu0 0
        %1735 = vmatpush1.bf16.msra.mxu0 0
        %1736 = vmatprep.mubr.bf16.mxu0 0
        %1737 = vmatmul.mubr.bf16.gmra.mrb[0].mxu0 %v1699
        %v1738 = vpop.f32.mrb[0].mxu0
        %v1739 = vadd.f32 0.0, %v1738
        %v1740 = vpop.f32.mrb[0].mxu0
        %v1741 = vpop.f32.mrb[0].mxu0
        %v1742 = vpop.f32.mrb[0].mxu0
        %1743 = vdwg.mxu0
        %v1744 = vpack.c.bf16 %v1739, %v1739
        %v1745 = vld [vmem:[%s4 + $0x80] sm:$0xf]
        %v1746 = vld [vmem:[%s4 + $0x84] sm:$0xf]
        %v1747 = vld [vmem:[%s4 + $0x88] sm:$0xf]
        %v1748 = vld [vmem:[%s4 + $0x8c] sm:$0xf]
        %v1749 = vld [vmem:[%s4 + $0x90] sm:$0xf]
        %v1750 = vld [vmem:[%s4 + $0x94] sm:$0xf]
        %v1751 = vld [vmem:[%s4 + $0x98] sm:$0xf]
        %v1752 = vld [vmem:[%s4 + $0x9c] sm:$0xf]
        %v1753 = vld [vmem:[%s4 + $0xa0] sm:$0xf]
        %v1754 = vld [vmem:[%s4 + $0xa4] sm:$0xf]
        %v1755 = vld [vmem:[%s4 + $0xa8] sm:$0xf]
        %v1756 = vld [vmem:[%s4 + $0xac] sm:$0xf]
        %v1757 = vld [vmem:[%s4 + $0xb0] sm:$0xf]
        %v1758 = vld [vmem:[%s4 + $0xb4] sm:$0xf]
        %v1759 = vld [vmem:[%s4 + $0xb8] sm:$0xf]
        %v1760 = vld [vmem:[%s4 + $0xbc] sm:$0xf]
        %v1777 = vunpack.c.l.b16 %v1745
        %v1778 = vunpack.c.l.b16 %v1746
        %v1779 = vunpack.c.l.b16 %v1747
        %v1780 = vunpack.c.l.b16 %v1748
        %v1781 = vunpack.c.l.b16 %v1749
        %v1782 = vunpack.c.l.b16 %v1750
        %v1783 = vunpack.c.l.b16 %v1751
        %v1784 = vunpack.c.l.b16 %v1752
        %v1785 = vunpack.c.l.b16 %v1753
        %v1786 = vunpack.c.l.b16 %v1754
        %v1787 = vunpack.c.l.b16 %v1755
        %v1788 = vunpack.c.l.b16 %v1756
        %v1789 = vunpack.c.l.b16 %v1757
        %v1790 = vunpack.c.l.b16 %v1758
        %v1791 = vunpack.c.l.b16 %v1759
        %v1792 = vunpack.c.l.b16 %v1760
        %v1793 = vpack.c.b16 %v1778, %v1777
        %v1794 = vpack.c.b16 %v1780, %v1779
        %v1795 = vpack.c.b16 %v1782, %v1781
        %v1796 = vpack.c.b16 %v1784, %v1783
        %v1797 = vpack.c.b16 %v1786, %v1785
        %v1798 = vpack.c.b16 %v1788, %v1787
        %v1799 = vpack.c.b16 %v1790, %v1789
        %v1800 = vpack.c.b16 %v1792, %v1791
        %1809 = vmatprep.subr.bf16.mxu0 0
        %1810 = vmatpush1.bf16.msra.mxu0 %v1793
        %1811 = vmatprep.subr.bf16.mxu0 0
        %1812 = vmatpush1.bf16.msra.mxu0 %v1794
        %1813 = vmatprep.subr.bf16.mxu0 0
        %1814 = vmatpush1.bf16.msra.mxu0 %v1795
        %1815 = vmatprep.subr.bf16.mxu0 0
        %1816 = vmatpush1.bf16.msra.mxu0 %v1796
        %1817 = vmatprep.subr.bf16.mxu0 0
        %1818 = vmatpush1.bf16.msra.mxu0 %v1797
        %1819 = vmatprep.subr.bf16.mxu0 0
        %1820 = vmatpush1.bf16.msra.mxu0 %v1798
        %1821 = vmatprep.subr.bf16.mxu0 0
        %1822 = vmatpush1.bf16.msra.mxu0 %v1799
        %1823 = vmatprep.subr.bf16.mxu0 0
        %1824 = vmatpush1.bf16.msra.mxu0 %v1800
        %1825 = vmatprep.subr.bf16.mxu0 0
        %1826 = vmatpush1.bf16.msra.mxu0 0
        %1827 = vmatprep.subr.bf16.mxu0 0
        %1828 = vmatpush1.bf16.msra.mxu0 0
        %1829 = vmatprep.subr.bf16.mxu0 0
        %1830 = vmatpush1.bf16.msra.mxu0 0
        %1831 = vmatprep.subr.bf16.mxu0 0
        %1832 = vmatpush1.bf16.msra.mxu0 0
        %1833 = vmatprep.subr.bf16.mxu0 0
        %1834 = vmatpush1.bf16.msra.mxu0 0
        %1835 = vmatprep.subr.bf16.mxu0 0
        %1836 = vmatpush1.bf16.msra.mxu0 0
        %1837 = vmatprep.subr.bf16.mxu0 0
        %1838 = vmatpush1.bf16.msra.mxu0 0
        %1839 = vmatprep.subr.bf16.mxu0 0
        %1840 = vmatpush1.bf16.msra.mxu0 0
        %1841 = vmatprep.mubr.bf16.mxu0 0
        %1842 = vmatmul.mubr.bf16.gmra.mrb[0].mxu0 %v1744
        %v1843 = vpop.f32.mrb[0].mxu0
        %v1844 = vadd.f32 0.0, %v1843
        %v1845 = vpop.f32.mrb[0].mxu0
        %v1846 = vpop.f32.mrb[0].mxu0
        %v1847 = vpop.f32.mrb[0].mxu0
        %1848 = vdwg.mxu0
        %v1849 = vadd.f32 %v1636, %v1844
        %v1850 = vpack.c.bf16 %v1053, %v1053
        %v1851 = vpack.c.bf16 %v1135, %v1135
        %v1852 = vpack.c.bf16 %v1217, %v1217
        %1853 = vmatprep.subr.bf16.mxu0 0
        %1854 = vmatpush1.bf16.xpose.msra.mxu0 %v1851
        %1855 = vmatprep.subr.bf16.mxu0 0
        %1856 = vmatpush1.bf16.xpose.msra.mxu0 0
        %1857 = vmatprep.subr.bf16.mxu0 0
        %1858 = vmatpush1.bf16.xpose.msra.mxu0 0
        %1859 = vmatprep.subr.bf16.mxu0 0
        %1860 = vmatpush1.bf16.xpose.msra.mxu0 0
        %1861 = vmatprep.subr.bf16.mxu0 0
        %1862 = vmatpush1.bf16.xpose.msra.mxu0 0
        %1863 = vmatprep.subr.bf16.mxu0 0
        %1864 = vmatpush1.bf16.xpose.msra.mxu0 0
        %1865 = vmatprep.subr.bf16.mxu0 0
        %1866 = vmatpush1.bf16.xpose.msra.mxu0 0
        %1867 = vmatprep.subr.bf16.mxu0 0
        %1868 = vmatpush1.bf16.xpose.msra.mxu0 0
        %1869 = vmatprep.subr.bf16.mxu0 0
        %1870 = vmatpush1.bf16.xpose.msra.mxu0 0
        %1871 = vmatprep.subr.bf16.mxu0 0
        %1872 = vmatpush1.bf16.xpose.msra.mxu0 0
        %1873 = vmatprep.subr.bf16.mxu0 0
        %1874 = vmatpush1.bf16.xpose.msra.mxu0 0
        %1875 = vmatprep.subr.bf16.mxu0 0
        %1876 = vmatpush1.bf16.xpose.msra.mxu0 0
        %1877 = vmatprep.subr.bf16.mxu0 0
        %1878 = vmatpush1.bf16.xpose.msra.mxu0 0
        %1879 = vmatprep.subr.bf16.mxu0 0
        %1880 = vmatpush1.bf16.xpose.msra.mxu0 0
        %1881 = vmatprep.subr.bf16.mxu0 0
        %1882 = vmatpush1.bf16.xpose.msra.mxu0 0
        %1883 = vmatprep.subr.bf16.mxu0 0
        %1884 = vmatpush1.bf16.xpose.msra.mxu0 0
        %1885 = vmatprep.mubr.bf16.mxu0 0
        %1886 = vmatmul.mubr.bf16.gmra.mrb[0].mxu0 %v1850
        %v1887 = vpop.f32.mrb[0].mxu0
        %v1888 = vadd.f32 0.0, %v1887
        %v1889 = vpop.f32.mrb[0].mxu0
        %v1890 = vpop.f32.mrb[0].mxu0
        %v1891 = vpop.f32.mrb[0].mxu0
        %1892 = vdwg.mxu0
        %v1893 = vmul.f32 %v1888, 0.35355338
        %v1894 = vsel %vm1222, -1e+09, %v1893
        %v1895 = vsel %vm1268, %v1894, -inf
        %1896 = vmax.xlane.f32.xlu0 %v1895
        %v1897 = vpop.xlane.xlu0 %1896
        %v1898 = vsub.f32 %v1894, %v1897
        %v1899 = vmul.f32 %v1898, 1.442695
        %v1900 = vpow.pop %v1899
        %v1901 = vsel %vm1268, %v1900, 0.0
        %1902 = vadd.xlane.f32.xlu0 %v1901
        %v1903 = vpop.xlane.xlu0 %1902
        %v1904 = vrcp.pop %v1903
        %v1905 = vmul.f32 %v1900, %v1904
        %v1906 = vpack.c.bf16 %v1905, %v1905
        %v1908 = vsel %vm1268, %v1906, 0
        %v1911 = vsel %vm1284, %v1852, 0
        %1913 = vmatprep.subr.bf16.mxu0 0
        %1914 = vmatpush1.bf16.msra.mxu0 %v1911
        %1915 = vmatprep.subr.bf16.mxu0 0
        %1916 = vmatpush1.bf16.msra.mxu0 0
        %1917 = vmatprep.subr.bf16.mxu0 0
        %1918 = vmatpush1.bf16.msra.mxu0 0
        %1919 = vmatprep.subr.bf16.mxu0 0
        %1920 = vmatpush1.bf16.msra.mxu0 0
        %1921 = vmatprep.subr.bf16.mxu0 0
        %1922 = vmatpush1.bf16.msra.mxu0 0
        %1923 = vmatprep.subr.bf16.mxu0 0
        %1924 = vmatpush1.bf16.msra.mxu0 0
        %1925 = vmatprep.subr.bf16.mxu0 0
        %1926 = vmatpush1.bf16.msra.mxu0 0
        %1927 = vmatprep.subr.bf16.mxu0 0
        %1928 = vmatpush1.bf16.msra.mxu0 0
        %1929 = vmatprep.subr.bf16.mxu0 0
        %1930 = vmatpush1.bf16.msra.mxu0 0
        %1931 = vmatprep.subr.bf16.mxu0 0
        %1932 = vmatpush1.bf16.msra.mxu0 0
        %1933 = vmatprep.subr.bf16.mxu0 0
        %1934 = vmatpush1.bf16.msra.mxu0 0
        %1935 = vmatprep.subr.bf16.mxu0 0
        %1936 = vmatpush1.bf16.msra.mxu0 0
        %1937 = vmatprep.subr.bf16.mxu0 0
        %1938 = vmatpush1.bf16.msra.mxu0 0
        %1939 = vmatprep.subr.bf16.mxu0 0
        %1940 = vmatpush1.bf16.msra.mxu0 0
        %1941 = vmatprep.subr.bf16.mxu0 0
        %1942 = vmatpush1.bf16.msra.mxu0 0
        %1943 = vmatprep.subr.bf16.mxu0 0
        %1944 = vmatpush1.bf16.msra.mxu0 0
        %1945 = vmatprep.mubr.bf16.mxu0 0
        %1946 = vmatmul.mubr.bf16.gmra.mrb[0].mxu0 %v1908
        %v1947 = vpop.f32.mrb[0].mxu0
        %v1948 = vadd.f32 0.0, %v1947
        %v1949 = vpop.f32.mrb[0].mxu0
        %v1950 = vpop.f32.mrb[0].mxu0
        %v1951 = vpop.f32.mrb[0].mxu0
        %1952 = vdwg.mxu0
        %v1953 = vpack.c.bf16 %v1948, %v1948
        %v1954 = vld [vmem:[%s4 + $0xc0] sm:$0xf]
        %v1955 = vld [vmem:[%s4 + $0xc4] sm:$0xf]
        %v1956 = vld [vmem:[%s4 + $0xc8] sm:$0xf]
        %v1957 = vld [vmem:[%s4 + $0xcc] sm:$0xf]
        %v1958 = vld [vmem:[%s4 + $0xd0] sm:$0xf]
        %v1959 = vld [vmem:[%s4 + $0xd4] sm:$0xf]
        %v1960 = vld [vmem:[%s4 + $0xd8] sm:$0xf]
        %v1961 = vld [vmem:[%s4 + $0xdc] sm:$0xf]
        %v1962 = vld [vmem:[%s4 + $0xe0] sm:$0xf]
        %v1963 = vld [vmem:[%s4 + $0xe4] sm:$0xf]
        %v1964 = vld [vmem:[%s4 + $0xe8] sm:$0xf]
        %v1965 = vld [vmem:[%s4 + $0xec] sm:$0xf]
        %v1966 = vld [vmem:[%s4 + $0xf0] sm:$0xf]
        %v1967 = vld [vmem:[%s4 + $0xf4] sm:$0xf]
        %v1968 = vld [vmem:[%s4 + $0xf8] sm:$0xf]
        %v1969 = vld [vmem:[%s4 + $0xfc] sm:$0xf]
        %v1986 = vunpack.c.l.b16 %v1954
        %v1987 = vunpack.c.l.b16 %v1955
        %v1988 = vunpack.c.l.b16 %v1956
        %v1989 = vunpack.c.l.b16 %v1957
        %v1990 = vunpack.c.l.b16 %v1958
        %v1991 = vunpack.c.l.b16 %v1959
        %v1992 = vunpack.c.l.b16 %v1960
        %v1993 = vunpack.c.l.b16 %v1961
        %v1994 = vunpack.c.l.b16 %v1962
        %v1995 = vunpack.c.l.b16 %v1963
        %v1996 = vunpack.c.l.b16 %v1964
        %v1997 = vunpack.c.l.b16 %v1965
        %v1998 = vunpack.c.l.b16 %v1966
        %v1999 = vunpack.c.l.b16 %v1967
        %v2000 = vunpack.c.l.b16 %v1968
        %v2001 = vunpack.c.l.b16 %v1969
        %v2002 = vpack.c.b16 %v1987, %v1986
        %v2003 = vpack.c.b16 %v1989, %v1988
        %v2004 = vpack.c.b16 %v1991, %v1990
        %v2005 = vpack.c.b16 %v1993, %v1992
        %v2006 = vpack.c.b16 %v1995, %v1994
        %v2007 = vpack.c.b16 %v1997, %v1996
        %v2008 = vpack.c.b16 %v1999, %v1998
        %v2009 = vpack.c.b16 %v2001, %v2000
        %2018 = vmatprep.subr.bf16.mxu0 0
        %2019 = vmatpush1.bf16.msra.mxu0 %v2002
        %2020 = vmatprep.subr.bf16.mxu0 0
        %2021 = vmatpush1.bf16.msra.mxu0 %v2003
        %2022 = vmatprep.subr.bf16.mxu0 0
        %2023 = vmatpush1.bf16.msra.mxu0 %v2004
        %2024 = vmatprep.subr.bf16.mxu0 0
        %2025 = vmatpush1.bf16.msra.mxu0 %v2005
        %2026 = vmatprep.subr.bf16.mxu0 0
        %2027 = vmatpush1.bf16.msra.mxu0 %v2006
        %2028 = vmatprep.subr.bf16.mxu0 0
        %2029 = vmatpush1.bf16.msra.mxu0 %v2007
        %2030 = vmatprep.subr.bf16.mxu0 0
        %2031 = vmatpush1.bf16.msra.mxu0 %v2008
        %2032 = vmatprep.subr.bf16.mxu0 0
        %2033 = vmatpush1.bf16.msra.mxu0 %v2009
        %2034 = vmatprep.subr.bf16.mxu0 0
        %2035 = vmatpush1.bf16.msra.mxu0 0
        %2036 = vmatprep.subr.bf16.mxu0 0
        %2037 = vmatpush1.bf16.msra.mxu0 0
        %2038 = vmatprep.subr.bf16.mxu0 0
        %2039 = vmatpush1.bf16.msra.mxu0 0
        %2040 = vmatprep.subr.bf16.mxu0 0
        %2041 = vmatpush1.bf16.msra.mxu0 0
        %2042 = vmatprep.subr.bf16.mxu0 0
        %2043 = vmatpush1.bf16.msra.mxu0 0
        %2044 = vmatprep.subr.bf16.mxu0 0
        %2045 = vmatpush1.bf16.msra.mxu0 0
        %2046 = vmatprep.subr.bf16.mxu0 0
        %2047 = vmatpush1.bf16.msra.mxu0 0
        %2048 = vmatprep.subr.bf16.mxu0 0
        %2049 = vmatpush1.bf16.msra.mxu0 0
        %2050 = vmatprep.mubr.bf16.mxu0 0
        %2051 = vmatmul.mubr.bf16.gmra.mrb[0].mxu0 %v1953
        %v2052 = vpop.f32.mrb[0].mxu0
        %v2053 = vadd.f32 0.0, %v2052
        %v2054 = vpop.f32.mrb[0].mxu0
        %v2055 = vpop.f32.mrb[0].mxu0
        %v2056 = vpop.f32.mrb[0].mxu0
        %2057 = vdwg.mxu0
        %v2058 = vadd.f32 %v1849, %v2053
        %v2059 = vld [vmem:[%s5] sm:$0x1]
        %v2061 = vlaneseq
        %v2062 = vshrl.u32 %v2061, 7
        %v2063 = vsub.s32 0, %v2062
        %v2064 = vrot.slane %v2059, %v2063
        %v2066 = vadd.f32 %v2058, %v2064
        %v2067 = vunpack.c.l.bf16 %v334
        %v2068 = vadd.f32 %v2066, %v2067
        %v2069 = vld [vmem:[%s6] sm:$0x1]
        %v2070 = vld [vmem:[%s7] sm:$0x1]
        %2071 = vadd.xlane.f32.xlu0 %v2068
        %v2072 = vpop.xlane.xlu0 %2071
        %v2073 = vmul.f32 %v2072, 0.03125
        %v2074 = vmul.f32 %v2068, %v2068
        %2075 = vadd.xlane.f32.xlu0 %v2074
        %v2076 = vpop.xlane.xlu0 %2075
        %v2077 = vmul.f32 %v2076, 0.03125
        %v2078 = vmul.f32 %v2073, %v2073
        %v2079 = vsub.f32 %v2077, %v2078
        %v2080 = vmax.f32 %v2079, 0.0
        %v2081 = vsub.f32 %v2068, %v2073
        %v2082 = vadd.f32 %v2080, 1e-05
        %v2083 = vrsqrt.pop %v2082
        %v2084 = vmul.f32 %v2081, %v2083
        %v2086 = vlaneseq
        %v2087 = vshrl.u32 %v2086, 7
        %v2088 = vsub.s32 0, %v2087
        %v2089 = vrot.slane %v2069, %v2088
        %v2091 = vmul.f32 %v2084, %v2089
        %v2093 = vlaneseq
        %v2094 = vshrl.u32 %v2093, 7
        %v2095 = vsub.s32 0, %v2094
        %v2096 = vrot.slane %v2070, %v2095
        %v2098 = vadd.f32 %v2091, %v2096
        %v2099 = vpack.c.bf16 %v2098, %v2098
        %2100 = vst [vmem:[%s332] sm:$0xf] %v2099
        %p2101 = scmp.lt.s32.totalorder %s20, 1
        %s2102 = scalar_select %p2101, %s20, 1
        %s2103 = smul.addr %s2102, 4
        %s2104 = scalar_lea.vmem %s8, %s2103
        // Predicated region
        $region57: #{transformer_forward.13} parent=51 // pred_check
          %p2105 = pneg %p216
        $region58: #{transformer_forward.13} parent=51 // pred_check_branch
          %2107 = sbr.rel (%p2105) target = $region60
        $region59: #{transformer_forward.13} parent=51 // pred_region
          _
        $region60: #{transformer_forward.13} parent=51 // pred_fallthru
          _
      $region52: #{transformer_forward.13} parent=5 // pred_fallthru
        _
      %p2108 = scmp.le.s32.totalorder 2, %s15
      // Predicated region
      $region61: #{transformer_forward.13} parent=5 // pred_check
        %p2109 = pneg %p2108
      $region62: #{transformer_forward.13} parent=5 // pred_check_branch
        %2111 = sbr.rel (%p2109) target = $region64
      $region63: #{transformer_forward.13} parent=5 // pred_region
        %s2112 = ssub.s32 %s15, 2
        // Predicated region
        $region65: #{transformer_forward.13} parent=63 // pred_check
          %p2113 = pneg %p222
        $region66: #{transformer_forward.13} parent=63 // pred_check_branch
          %2115 = sbr.rel (%p2113) target = $region68
        $region67: #{transformer_forward.13} parent=63 // pred_region
          %p2116 = scmp.lt.s32.totalorder %s21, 1
          %s2117 = scalar_select %p2116, %s21, 1
          %s2118 = smul.addr %s2117, 4
          %s2119 = scalar_lea.vmem %s8, %s2118
        $region68: #{transformer_forward.13} parent=63 // pred_fallthru
          _
      $region64: #{transformer_forward.13} parent=5 // pred_fallthru
        _
    $region6: #{transformer_forward.13} parent=1 // loop_footer
      %s19 = sadd.s32 1, %s15
    $region7: #{transformer_forward.13} parent=1 // loop_footer_branch
      %14 = sbr.rel target = $region3
    $region8: #{transformer_forward.13} parent=1 // loop_exit
      _
    %2120 = vsyncpa [#allocation3], 1
    %s2121 = scalar_lea.sflag [#allocation3], 1
    %2122 = vsyncpa %s2121, 1

// kernel: transformer_forward.15
$region0: #{transformer_forward.15}
  #allocation0 [shape = 'u32[]', space=smem, size = 0x4, offset = 0x4, fixed_abs, tag = 'smem constant byte address 0x4 - core index']
  #allocation1 [shape = 'u32[144,128]{1,0:T(1,128)}', space=vmem, size = 0x12000, scoped, tag = 'internal scratch']
  %s0 = inlined_call_operand.vmem [shape: bf16[2,8,128], index: 0, kind: input, shape index: {}]
  %s1 = inlined_call_operand.vmem [shape: s32[2,8,8], index: 1, kind: input, shape index: {}]
  %s2 = inlined_call_operand.vmem [shape: bf16[128,1536], index: 2, kind: input, shape index: {}]
  %s3 = inlined_call_operand.vmem [shape: f32[1,1536], index: 3, kind: input, shape index: {}]
  %s4 = inlined_call_operand.vmem [shape: bf16[512,128], index: 4, kind: input, shape index: {}]
  %s5 = inlined_call_operand.vmem [shape: f32[1,128], index: 5, kind: input, shape index: {}]
  %s6 = inlined_call_operand.vmem [shape: f32[1,128], index: 6, kind: input, shape index: {}]
  %s7 = inlined_call_operand.vmem [shape: f32[1,128], index: 7, kind: input, shape index: {}]
  %s8 = inlined_call_operand.vmem [shape: bf16[2,8,128], index: 8, kind: output, shape index: {}]
  %s9 = sld [smem:[#allocation0]]
  $region65: #{transformer_forward.15} parent=0
    _
  %s11 = ssub.s32 1, %s9
  %s12 = scalar_select 0, %s11, %s9
  loop: start=0, step=1, limit=4
  $region2: #{transformer_forward.15} parent=0 // loop_pre_header
    _
  $region3: #{transformer_forward.15} parent=0 // loop_header
    %s14 = sphi 0, %s18
    %p15 = scmp.ge.s32.totalorder %s14, 4
    %s24 = sphi 0, %s26
    %s27 = sphi 0, %s24
    %s28 = sphi 0, %s27
    %s44 = sphi 0, %s28
    %s50 = sphi 0, %s52
    %s53 = sphi 0, %s50
    %s54 = sphi 0, %s53
    %s70 = sphi 0, %s54
    %s74 = sphi 0, %s74
    %s76 = sphi 0, %s74
    %s77 = sphi 0, %s76
    %s91 = sphi 0, %s77
    %s95 = sphi 0, %s95
    %s97 = sphi 0, %s95
    %s98 = sphi 0, %s97
    %s112 = sphi 0, %s98
    %s116 = sphi 0, %s116
    %s118 = sphi 0, %s116
    %s119 = sphi 0, %s118
    %s133 = sphi 0, %s119
    %s137 = sphi 0, %s137
    %s139 = sphi 0, %s137
    %s140 = sphi 0, %s139
    %s154 = sphi 0, %s140
    %s158 = sphi 0, %s158
    %s160 = sphi 0, %s158
    %s161 = sphi 0, %s160
    %s175 = sphi 0, %s161
    %s179 = sphi 0, %s179
    %s181 = sphi 0, %s179
    %s182 = sphi 0, %s181
    %s196 = sphi 0, %s182
    %s202 = sphi 0, %s204
    %s205 = sphi 0, %s202
    %s206 = sphi 0, %s205
    %s222 = sphi 0, %s206
  $region4: #{transformer_forward.15} parent=0 // loop_header_branch
    %17 = sbr.rel (%p15) target = $region8
  $region5: #{transformer_forward.15} parent=0 // loop_body
    %s19 = ssub.s32 %s14, 1
    %s20 = ssub.s32 %s14, 2
    %s21 = sadd.s32 %s14, 1
    %s22 = ssub.s32 %s14, %s21
    %p23 = scmp.eq.s32.totalorder %s22, 0
    %s25 = sadd.s32 %s24, 1
    %s26 = scalar_select %p23, %s24, %s25
    %p29 = pneg %p23
    %p30 = scmp.eq.s32.totalorder %s14, 1
    %p31 = por %p29, %p30
    %p32 = scmp.ne.s32.totalorder %s24, %s27
    %p33 = scmp.eq.s32.totalorder %s14, 0
    %p34 = por %p32, %p33
    %p35 = scmp.ne.s32.totalorder %s24, %s27
    %p36 = scmp.eq.s32.totalorder %s19, 1
    %p37 = por %p35, %p36
    %p38 = scmp.ne.s32.totalorder %s27, %s28
    %p39 = scmp.eq.s32.totalorder %s19, 0
    %p40 = por %p38, %p39
    %p41 = scmp.ne.s32.totalorder %s27, %s28
    %p42 = scmp.eq.s32.totalorder %s20, 1
    %p43 = por %p41, %p42
    %p45 = scmp.ne.s32.totalorder %s28, %s44
    %p46 = scmp.eq.s32.totalorder %s20, 0
    %p47 = por %p45, %p46
    %s48 = ssub.s32 %s14, %s21
    %p49 = scmp.eq.s32.totalorder %s48, 0
    %s51 = sadd.s32 %s50, 1
    %s52 = scalar_select %p49, %s50, %s51
    %p55 = pneg %p49
    %p56 = scmp.eq.s32.totalorder %s14, 1
    %p57 = por %p55, %p56
    %p58 = scmp.ne.s32.totalorder %s50, %s53
    %p59 = scmp.eq.s32.totalorder %s14, 0
    %p60 = por %p58, %p59
    %p61 = scmp.ne.s32.totalorder %s50, %s53
    %p62 = scmp.eq.s32.totalorder %s19, 1
    %p63 = por %p61, %p62
    %p64 = scmp.ne.s32.totalorder %s53, %s54
    %p65 = scmp.eq.s32.totalorder %s19, 0
    %p66 = por %p64, %p65
    %p67 = scmp.ne.s32.totalorder %s53, %s54
    %p68 = scmp.eq.s32.totalorder %s20, 1
    %p69 = por %p67, %p68
    %p71 = scmp.ne.s32.totalorder %s54, %s70
    %p72 = scmp.eq.s32.totalorder %s20, 0
    %p73 = por %p71, %p72
    %s75 = sadd.s32 %s74, 1
    %p78 = scmp.eq.s32.totalorder %s14, 1
    %p79 = scmp.ne.s32.totalorder %s74, %s76
    %p80 = scmp.eq.s32.totalorder %s14, 0
    %p81 = por %p79, %p80
    %p82 = scmp.ne.s32.totalorder %s74, %s76
    %p83 = scmp.eq.s32.totalorder %s19, 1
    %p84 = por %p82, %p83
    %p85 = scmp.ne.s32.totalorder %s76, %s77
    %p86 = scmp.eq.s32.totalorder %s19, 0
    %p87 = por %p85, %p86
    %p88 = scmp.ne.s32.totalorder %s76, %s77
    %p89 = scmp.eq.s32.totalorder %s20, 1
    %p90 = por %p88, %p89
    %p92 = scmp.ne.s32.totalorder %s77, %s91
    %p93 = scmp.eq.s32.totalorder %s20, 0
    %p94 = por %p92, %p93
    %s96 = sadd.s32 %s95, 1
    %p99 = scmp.eq.s32.totalorder %s14, 1
    %p100 = scmp.ne.s32.totalorder %s95, %s97
    %p101 = scmp.eq.s32.totalorder %s14, 0
    %p102 = por %p100, %p101
    %p103 = scmp.ne.s32.totalorder %s95, %s97
    %p104 = scmp.eq.s32.totalorder %s19, 1
    %p105 = por %p103, %p104
    %p106 = scmp.ne.s32.totalorder %s97, %s98
    %p107 = scmp.eq.s32.totalorder %s19, 0
    %p108 = por %p106, %p107
    %p109 = scmp.ne.s32.totalorder %s97, %s98
    %p110 = scmp.eq.s32.totalorder %s20, 1
    %p111 = por %p109, %p110
    %p113 = scmp.ne.s32.totalorder %s98, %s112
    %p114 = scmp.eq.s32.totalorder %s20, 0
    %p115 = por %p113, %p114
    %s117 = sadd.s32 %s116, 1
    %p120 = scmp.eq.s32.totalorder %s14, 1
    %p121 = scmp.ne.s32.totalorder %s116, %s118
    %p122 = scmp.eq.s32.totalorder %s14, 0
    %p123 = por %p121, %p122
    %p124 = scmp.ne.s32.totalorder %s116, %s118
    %p125 = scmp.eq.s32.totalorder %s19, 1
    %p126 = por %p124, %p125
    %p127 = scmp.ne.s32.totalorder %s118, %s119
    %p128 = scmp.eq.s32.totalorder %s19, 0
    %p129 = por %p127, %p128
    %p130 = scmp.ne.s32.totalorder %s118, %s119
    %p131 = scmp.eq.s32.totalorder %s20, 1
    %p132 = por %p130, %p131
    %p134 = scmp.ne.s32.totalorder %s119, %s133
    %p135 = scmp.eq.s32.totalorder %s20, 0
    %p136 = por %p134, %p135
    %s138 = sadd.s32 %s137, 1
    %p141 = scmp.eq.s32.totalorder %s14, 1
    %p142 = scmp.ne.s32.totalorder %s137, %s139
    %p143 = scmp.eq.s32.totalorder %s14, 0
    %p144 = por %p142, %p143
    %p145 = scmp.ne.s32.totalorder %s137, %s139
    %p146 = scmp.eq.s32.totalorder %s19, 1
    %p147 = por %p145, %p146
    %p148 = scmp.ne.s32.totalorder %s139, %s140
    %p149 = scmp.eq.s32.totalorder %s19, 0
    %p150 = por %p148, %p149
    %p151 = scmp.ne.s32.totalorder %s139, %s140
    %p152 = scmp.eq.s32.totalorder %s20, 1
    %p153 = por %p151, %p152
    %p155 = scmp.ne.s32.totalorder %s140, %s154
    %p156 = scmp.eq.s32.totalorder %s20, 0
    %p157 = por %p155, %p156
    %s159 = sadd.s32 %s158, 1
    %p162 = scmp.eq.s32.totalorder %s14, 1
    %p163 = scmp.ne.s32.totalorder %s158, %s160
    %p164 = scmp.eq.s32.totalorder %s14, 0
    %p165 = por %p163, %p164
    %p166 = scmp.ne.s32.totalorder %s158, %s160
    %p167 = scmp.eq.s32.totalorder %s19, 1
    %p168 = por %p166, %p167
    %p169 = scmp.ne.s32.totalorder %s160, %s161
    %p170 = scmp.eq.s32.totalorder %s19, 0
    %p171 = por %p169, %p170
    %p172 = scmp.ne.s32.totalorder %s160, %s161
    %p173 = scmp.eq.s32.totalorder %s20, 1
    %p174 = por %p172, %p173
    %p176 = scmp.ne.s32.totalorder %s161, %s175
    %p177 = scmp.eq.s32.totalorder %s20, 0
    %p178 = por %p176, %p177
    %s180 = sadd.s32 %s179, 1
    %p183 = scmp.eq.s32.totalorder %s14, 1
    %p184 = scmp.ne.s32.totalorder %s179, %s181
    %p185 = scmp.eq.s32.totalorder %s14, 0
    %p186 = por %p184, %p185
    %p187 = scmp.ne.s32.totalorder %s179, %s181
    %p188 = scmp.eq.s32.totalorder %s19, 1
    %p189 = por %p187, %p188
    %p190 = scmp.ne.s32.totalorder %s181, %s182
    %p191 = scmp.eq.s32.totalorder %s19, 0
    %p192 = por %p190, %p191
    %p193 = scmp.ne.s32.totalorder %s181, %s182
    %p194 = scmp.eq.s32.totalorder %s20, 1
    %p195 = por %p193, %p194
    %p197 = scmp.ne.s32.totalorder %s182, %s196
    %p198 = scmp.eq.s32.totalorder %s20, 0
    %p199 = por %p197, %p198
    %s200 = ssub.s32 %s14, %s21
    %p201 = scmp.eq.s32.totalorder %s200, 0
    %s203 = sadd.s32 %s202, 1
    %s204 = scalar_select %p201, %s202, %s203
    %p207 = pneg %p201
    %p208 = scmp.eq.s32.totalorder %s14, 1
    %p209 = por %p207, %p208
    %p210 = scmp.ne.s32.totalorder %s202, %s205
    %p211 = scmp.eq.s32.totalorder %s14, 0
    %p212 = por %p210, %p211
    %p213 = scmp.ne.s32.totalorder %s202, %s205
    %p214 = scmp.eq.s32.totalorder %s19, 1
    %p215 = por %p213, %p214
    %p216 = scmp.ne.s32.totalorder %s205, %s206
    %p217 = scmp.eq.s32.totalorder %s19, 0
    %p218 = por %p216, %p217
    %p219 = scmp.ne.s32.totalorder %s205, %s206
    %p220 = scmp.eq.s32.totalorder %s20, 1
    %p221 = por %p219, %p220
    %p223 = scmp.ne.s32.totalorder %s206, %s222
    %p224 = scmp.eq.s32.totalorder %s20, 0
    %p225 = por %p223, %p224
    %p226 = scmp.le.s32.totalorder 1, %s14
    %p227 = scmp.lt.s32.totalorder %s14, 3
    %p228 = pnand %p226, %p227
    %p229 = pneg %p228
    // Predicated region
    $region9: #{transformer_forward.15} parent=5 // pred_check
      _
    $region10: #{transformer_forward.15} parent=5 // pred_check_branch
      %231 = sbr.rel (%p228) target = $region12
    $region11: #{transformer_forward.15} parent=5 // pred_region
      %s232 = ssub.s32 %s14, 1
      // Predicated region
      $region13: #{transformer_forward.15} parent=11 // pred_check
        %p233 = pneg %p87
      $region14: #{transformer_forward.15} parent=11 // pred_check_branch
        %235 = sbr.rel (%p233) target = $region16
      $region15: #{transformer_forward.15} parent=11 // pred_region
        _
      $region16: #{transformer_forward.15} parent=11 // pred_fallthru
        _
      // Predicated region
      $region17: #{transformer_forward.15} parent=11 // pred_check
        %p236 = pneg %p108
      $region18: #{transformer_forward.15} parent=11 // pred_check_branch
        %238 = sbr.rel (%p236) target = $region20
      $region19: #{transformer_forward.15} parent=11 // pred_region
        _
      $region20: #{transformer_forward.15} parent=11 // pred_fallthru
        _
      // Predicated region
      $region21: #{transformer_forward.15} parent=11 // pred_check
        %p239 = pneg %p129
      $region22: #{transformer_forward.15} parent=11 // pred_check_branch
        %241 = sbr.rel (%p239) target = $region24
      $region23: #{transformer_forward.15} parent=11 // pred_region
        _
      $region24: #{transformer_forward.15} parent=11 // pred_fallthru
        _
      // Predicated region
      $region25: #{transformer_forward.15} parent=11 // pred_check
        %p242 = pneg %p150
      $region26: #{transformer_forward.15} parent=11 // pred_check_branch
        %244 = sbr.rel (%p242) target = $region28
      $region27: #{transformer_forward.15} parent=11 // pred_region
        _
      $region28: #{transformer_forward.15} parent=11 // pred_fallthru
        _
      // Predicated region
      $region29: #{transformer_forward.15} parent=11 // pred_check
        %p245 = pneg %p171
      $region30: #{transformer_forward.15} parent=11 // pred_check_branch
        %247 = sbr.rel (%p245) target = $region32
      $region31: #{transformer_forward.15} parent=11 // pred_region
        _
      $region32: #{transformer_forward.15} parent=11 // pred_fallthru
        _
      // Predicated region
      $region33: #{transformer_forward.15} parent=11 // pred_check
        %p248 = pneg %p192
      $region34: #{transformer_forward.15} parent=11 // pred_check_branch
        %250 = sbr.rel (%p248) target = $region36
      $region35: #{transformer_forward.15} parent=11 // pred_region
        _
      $region36: #{transformer_forward.15} parent=11 // pred_fallthru
        _
    $region12: #{transformer_forward.15} parent=5 // pred_fallthru
      _
    %p251 = scmp.lt.s32.totalorder %s14, 2
    // Predicated region
    $region37: #{transformer_forward.15} parent=5 // pred_check
      %p252 = pneg %p251
    $region38: #{transformer_forward.15} parent=5 // pred_check_branch
      %254 = sbr.rel (%p252) target = $region40
    $region39: #{transformer_forward.15} parent=5 // pred_region
      // Predicated region
      $region41: #{transformer_forward.15} parent=39 // pred_check
        %p255 = pneg %p34
      $region42: #{transformer_forward.15} parent=39 // pred_check_branch
        %257 = sbr.rel (%p255) target = $region44
      $region43: #{transformer_forward.15} parent=39 // pred_region
        %p258 = scmp.lt.s32.totalorder %s14, 1
        %s259 = scalar_select %p258, %s14, 1
        %s260 = smul.addr %s259, 4
        %s261 = scalar_lea.vmem %s0, %s260
      $region44: #{transformer_forward.15} parent=39 // pred_fallthru
        _
      // Predicated region
      $region45: #{transformer_forward.15} parent=39 // pred_check
        %p262 = pneg %p60
      $region46: #{transformer_forward.15} parent=39 // pred_check_branch
        %264 = sbr.rel (%p262) target = $region48
      $region47: #{transformer_forward.15} parent=39 // pred_region
        %p265 = scmp.lt.s32.totalorder %s14, 1
        %s266 = scalar_select %p265, %s14, 1
        %s267 = smul.addr %s266, 8
        %s268 = scalar_lea.vmem %s1, %s267
      $region48: #{transformer_forward.15} parent=39 // pred_fallthru
        _
    $region40: #{transformer_forward.15} parent=5 // pred_fallthru
      _
    %p269 = scmp.le.s32.totalorder 1, %s14
    %p270 = scmp.lt.s32.totalorder %s14, 3
    %p271 = pnand %p269, %p270
    %p272 = pneg %p271
    // Predicated region
    $region49: #{transformer_forward.15} parent=5 // pred_check
      _
    $region50: #{transformer_forward.15} parent=5 // pred_check_branch
      %274 = sbr.rel (%p271) target = $region52
    $region51: #{transformer_forward.15} parent=5 // pred_region
      %s275 = ssub.s32 %s14, 1
      %p276 = scmp.lt.s32.totalorder %s19, 1
      %s277 = scalar_select %p276, %s19, 1
      %s278 = smul.addr %s277, 4
      %s279 = scalar_lea.vmem %s0, %s278
      %p280 = pneg %p40
      %p281 = pneg %p37
      %p282 = scmp.lt.s32.totalorder %s19, 1
      %s283 = scalar_select %p282, %s19, 1
      %s284 = smul.addr %s283, 8
      %s285 = scalar_lea.vmem %s1, %s284
      %p286 = pneg %p66
      %p287 = pneg %p63
      %p288 = pneg %p87
      %p289 = pneg %p84
      %p290 = pneg %p108
      %p291 = pneg %p105
      %p292 = pneg %p129
      %p293 = pneg %p126
      %p294 = pneg %p150
      %p295 = pneg %p147
      %p296 = pneg %p171
      %p297 = pneg %p168
      %p298 = pneg %p192
      %p299 = pneg %p189
      %p300 = pneg %p218
      %p301 = pneg %p215
      %p302 = scmp.lt.s32.totalorder %s19, 1
      %s303 = scalar_select %p302, %s19, 1
      %s304 = smul.addr %s303, 4
      %s305 = scalar_lea.vmem %s8, %s304
      %p306 = scmp.lt.s32.totalorder %s19, 1
      %s307 = scalar_select %p306, %s19, 1
      %s308 = smul.addr %s307, 4
      %s309 = scalar_lea.vmem %s0, %s308
      %p310 = scmp.lt.s32.totalorder %s19, 1
      %s311 = scalar_select %p310, %s19, 1
      %s312 = smul.addr %s311, 8
      %s313 = scalar_lea.vmem %s1, %s312
      %p314 = scmp.lt.s32.totalorder %s19, 1
      %s315 = scalar_select %p314, %s19, 1
      %s316 = smul.addr %s315, 4
      %s317 = scalar_lea.vmem %s8, %s316
      %v319 = vld [vmem:[%s309] sm:$0xf]
      %v320 = vld [vmem:[%s2] sm:$0xff]
      %v321 = vld [vmem:[%s2 + $0x8] sm:$0xff]
      %v322 = vld [vmem:[%s2 + $0x10] sm:$0xff]
      %v323 = vld [vmem:[%s2 + $0x18] sm:$0xff]
      %v324 = vld [vmem:[%s2 + $0x20] sm:$0xff]
      %v325 = vld [vmem:[%s2 + $0x28] sm:$0xff]
      %v326 = vld [vmem:[%s2 + $0x30] sm:$0xff]
      %v327 = vld [vmem:[%s2 + $0x38] sm:$0xff]
      %v328 = vld [vmem:[%s2 + $0x40] sm:$0xff]
      %v329 = vld [vmem:[%s2 + $0x48] sm:$0xff]
      %v330 = vld [vmem:[%s2 + $0x50] sm:$0xff]
      %v331 = vld [vmem:[%s2 + $0x58] sm:$0xff]
      %v332 = vld [vmem:[%s2 + $0x60] sm:$0xff]
      %v333 = vld [vmem:[%s2 + $0x68] sm:$0xff]
      %v334 = vld [vmem:[%s2 + $0x70] sm:$0xff]
      %v335 = vld [vmem:[%s2 + $0x78] sm:$0xff]
      %v336 = vld [vmem:[%s2 + $0x80] sm:$0xff]
      %v337 = vld [vmem:[%s2 + $0x88] sm:$0xff]
      %v338 = vld [vmem:[%s2 + $0x90] sm:$0xff]
      %v339 = vld [vmem:[%s2 + $0x98] sm:$0xff]
      %v340 = vld [vmem:[%s2 + $0xa0] sm:$0xff]
      %v341 = vld [vmem:[%s2 + $0xa8] sm:$0xff]
      %v342 = vld [vmem:[%s2 + $0xb0] sm:$0xff]
      %v343 = vld [vmem:[%s2 + $0xb8] sm:$0xff]
      %v344 = vld [vmem:[%s2 + $0xc0] sm:$0xff]
      %v345 = vld [vmem:[%s2 + $0xc8] sm:$0xff]
      %v346 = vld [vmem:[%s2 + $0xd0] sm:$0xff]
      %v347 = vld [vmem:[%s2 + $0xd8] sm:$0xff]
      %v348 = vld [vmem:[%s2 + $0xe0] sm:$0xff]
      %v349 = vld [vmem:[%s2 + $0xe8] sm:$0xff]
      %v350 = vld [vmem:[%s2 + $0xf0] sm:$0xff]
      %v351 = vld [vmem:[%s2 + $0xf8] sm:$0xff]
      %v352 = vld [vmem:[%s2 + $0x100] sm:$0xff]
      %v353 = vld [vmem:[%s2 + $0x108] sm:$0xff]
      %v354 = vld [vmem:[%s2 + $0x110] sm:$0xff]
      %v355 = vld [vmem:[%s2 + $0x118] sm:$0xff]
      %v356 = vld [vmem:[%s2 + $0x120] sm:$0xff]
      %v357 = vld [vmem:[%s2 + $0x128] sm:$0xff]
      %v358 = vld [vmem:[%s2 + $0x130] sm:$0xff]
      %v359 = vld [vmem:[%s2 + $0x138] sm:$0xff]
      %v360 = vld [vmem:[%s2 + $0x140] sm:$0xff]
      %v361 = vld [vmem:[%s2 + $0x148] sm:$0xff]
      %v362 = vld [vmem:[%s2 + $0x150] sm:$0xff]
      %v363 = vld [vmem:[%s2 + $0x158] sm:$0xff]
      %v364 = vld [vmem:[%s2 + $0x160] sm:$0xff]
      %v365 = vld [vmem:[%s2 + $0x168] sm:$0xff]
      %v366 = vld [vmem:[%s2 + $0x170] sm:$0xff]
      %v367 = vld [vmem:[%s2 + $0x178] sm:$0xff]
      %v368 = vld [vmem:[%s2 + $0x180] sm:$0xff]
      %v369 = vld [vmem:[%s2 + $0x188] sm:$0xff]
      %v370 = vld [vmem:[%s2 + $0x190] sm:$0xff]
      %v371 = vld [vmem:[%s2 + $0x198] sm:$0xff]
      %v372 = vld [vmem:[%s2 + $0x1a0] sm:$0xff]
      %v373 = vld [vmem:[%s2 + $0x1a8] sm:$0xff]
      %v374 = vld [vmem:[%s2 + $0x1b0] sm:$0xff]
      %v375 = vld [vmem:[%s2 + $0x1b8] sm:$0xff]
      %v376 = vld [vmem:[%s2 + $0x1c0] sm:$0xff]
      %v377 = vld [vmem:[%s2 + $0x1c8] sm:$0xff]
      %v378 = vld [vmem:[%s2 + $0x1d0] sm:$0xff]
      %v379 = vld [vmem:[%s2 + $0x1d8] sm:$0xff]
      %v380 = vld [vmem:[%s2 + $0x1e0] sm:$0xff]
      %v381 = vld [vmem:[%s2 + $0x1e8] sm:$0xff]
      %v382 = vld [vmem:[%s2 + $0x1f0] sm:$0xff]
      %v383 = vld [vmem:[%s2 + $0x1f8] sm:$0xff]
      %v384 = vld [vmem:[%s2 + $0x200] sm:$0xff]
      %v385 = vld [vmem:[%s2 + $0x208] sm:$0xff]
      %v386 = vld [vmem:[%s2 + $0x210] sm:$0xff]
      %v387 = vld [vmem:[%s2 + $0x218] sm:$0xff]
      %v388 = vld [vmem:[%s2 + $0x220] sm:$0xff]
      %v389 = vld [vmem:[%s2 + $0x228] sm:$0xff]
      %v390 = vld [vmem:[%s2 + $0x230] sm:$0xff]
      %v391 = vld [vmem:[%s2 + $0x238] sm:$0xff]
      %v392 = vld [vmem:[%s2 + $0x240] sm:$0xff]
      %v393 = vld [vmem:[%s2 + $0x248] sm:$0xff]
      %v394 = vld [vmem:[%s2 + $0x250] sm:$0xff]
      %v395 = vld [vmem:[%s2 + $0x258] sm:$0xff]
      %v396 = vld [vmem:[%s2 + $0x260] sm:$0xff]
      %v397 = vld [vmem:[%s2 + $0x268] sm:$0xff]
      %v398 = vld [vmem:[%s2 + $0x270] sm:$0xff]
      %v399 = vld [vmem:[%s2 + $0x278] sm:$0xff]
      %v400 = vld [vmem:[%s2 + $0x280] sm:$0xff]
      %v401 = vld [vmem:[%s2 + $0x288] sm:$0xff]
      %v402 = vld [vmem:[%s2 + $0x290] sm:$0xff]
      %v403 = vld [vmem:[%s2 + $0x298] sm:$0xff]
      %v404 = vld [vmem:[%s2 + $0x2a0] sm:$0xff]
      %v405 = vld [vmem:[%s2 + $0x2a8] sm:$0xff]
      %v406 = vld [vmem:[%s2 + $0x2b0] sm:$0xff]
      %v407 = vld [vmem:[%s2 + $0x2b8] sm:$0xff]
      %v408 = vld [vmem:[%s2 + $0x2c0] sm:$0xff]
      %v409 = vld [vmem:[%s2 + $0x2c8] sm:$0xff]
      %v410 = vld [vmem:[%s2 + $0x2d0] sm:$0xff]
      %v411 = vld [vmem:[%s2 + $0x2d8] sm:$0xff]
      %v412 = vld [vmem:[%s2 + $0x2e0] sm:$0xff]
      %v413 = vld [vmem:[%s2 + $0x2e8] sm:$0xff]
      %v414 = vld [vmem:[%s2 + $0x2f0] sm:$0xff]
      %v415 = vld [vmem:[%s2 + $0x2f8] sm:$0xff]
      %v416 = vld [vmem:[%s3] sm:$0xff]
      %v417 = vld [vmem:[%s3 + $0x8] sm:$0xf]
      %v420 = vlaneseq
      %v421 = vshrl.u32 %v420, 7
      %v422 = vsub.s32 0, %v421
      %v423 = vrot.slane %v416, %v422
      %v424 = vlaneseq
      %v425 = vshrl.u32 %v424, 7
      %v426 = vsub.s32 1, %v425
      %v427 = vrot.slane %v416, %v426
      %v428 = vlaneseq
      %v429 = vshrl.u32 %v428, 7
      %v430 = vsub.s32 2, %v429
      %v431 = vrot.slane %v416, %v430
      %v432 = vlaneseq
      %v433 = vshrl.u32 %v432, 7
      %v434 = vsub.s32 3, %v433
      %v435 = vrot.slane %v416, %v434
      %v436 = vlaneseq
      %v437 = vshrl.u32 %v436, 7
      %v438 = vsub.s32 4, %v437
      %v439 = vrot.slane %v416, %v438
      %v440 = vlaneseq
      %v441 = vshrl.u32 %v440, 7
      %v442 = vsub.s32 5, %v441
      %v443 = vrot.slane %v416, %v442
      %v444 = vlaneseq
      %v445 = vshrl.u32 %v444, 7
      %v446 = vsub.s32 6, %v445
      %v447 = vrot.slane %v416, %v446
      %v448 = vlaneseq
      %v449 = vshrl.u32 %v448, 7
      %v450 = vsub.s32 7, %v449
      %v451 = vrot.slane %v416, %v450
      %v452 = vlaneseq
      %v453 = vshrl.u32 %v452, 7
      %v454 = vsub.s32 0, %v453
      %v455 = vrot.slane %v417, %v454
      %v456 = vlaneseq
      %v457 = vshrl.u32 %v456, 7
      %v458 = vsub.s32 1, %v457
      %v459 = vrot.slane %v417, %v458
      %v460 = vlaneseq
      %v461 = vshrl.u32 %v460, 7
      %v462 = vsub.s32 2, %v461
      %v463 = vrot.slane %v417, %v462
      %v464 = vlaneseq
      %v465 = vshrl.u32 %v464, 7
      %v466 = vsub.s32 3, %v465
      %v467 = vrot.slane %v417, %v466
      %v576 = vunpack.c.l.b16 %v320
      %v577 = vunpack.c.h.b16 %v320
      %v578 = vunpack.c.l.b16 %v321
      %v579 = vunpack.c.h.b16 %v321
      %v580 = vunpack.c.l.b16 %v322
      %v581 = vunpack.c.h.b16 %v322
      %v582 = vunpack.c.l.b16 %v323
      %v583 = vunpack.c.h.b16 %v323
      %v584 = vunpack.c.l.b16 %v324
      %v585 = vunpack.c.h.b16 %v324
      %v586 = vunpack.c.l.b16 %v325
      %v587 = vunpack.c.h.b16 %v325
      %v588 = vunpack.c.l.b16 %v326
      %v589 = vunpack.c.h.b16 %v326
      %v590 = vunpack.c.l.b16 %v327
      %v591 = vunpack.c.h.b16 %v327
      %v592 = vunpack.c.l.b16 %v328
      %v593 = vunpack.c.h.b16 %v328
      %v594 = vunpack.c.l.b16 %v329
      %v595 = vunpack.c.h.b16 %v329
      %v596 = vunpack.c.l.b16 %v330
      %v597 = vunpack.c.h.b16 %v330
      %v598 = vunpack.c.l.b16 %v331
      %v599 = vunpack.c.h.b16 %v331
      %v600 = vunpack.c.l.b16 %v332
      %v601 = vunpack.c.h.b16 %v332
      %v602 = vunpack.c.l.b16 %v333
      %v603 = vunpack.c.h.b16 %v333
      %v604 = vunpack.c.l.b16 %v334
      %v605 = vunpack.c.h.b16 %v334
      %v606 = vunpack.c.l.b16 %v335
      %v607 = vunpack.c.h.b16 %v335
      %v608 = vunpack.c.l.b16 %v336
      %v609 = vunpack.c.h.b16 %v336
      %v610 = vunpack.c.l.b16 %v337
      %v611 = vunpack.c.h.b16 %v337
      %v612 = vunpack.c.l.b16 %v338
      %v613 = vunpack.c.h.b16 %v338
      %v614 = vunpack.c.l.b16 %v339
      %v615 = vunpack.c.h.b16 %v339
      %v616 = vunpack.c.l.b16 %v340
      %v617 = vunpack.c.h.b16 %v340
      %v618 = vunpack.c.l.b16 %v341
      %v619 = vunpack.c.h.b16 %v341
      %v620 = vunpack.c.l.b16 %v342
      %v621 = vunpack.c.h.b16 %v342
      %v622 = vunpack.c.l.b16 %v343
      %v623 = vunpack.c.h.b16 %v343
      %v624 = vunpack.c.l.b16 %v344
      %v625 = vunpack.c.h.b16 %v344
      %v626 = vunpack.c.l.b16 %v345
      %v627 = vunpack.c.h.b16 %v345
      %v628 = vunpack.c.l.b16 %v346
      %v629 = vunpack.c.h.b16 %v346
      %v630 = vunpack.c.l.b16 %v347
      %v631 = vunpack.c.h.b16 %v347
      %v632 = vunpack.c.l.b16 %v348
      %v633 = vunpack.c.h.b16 %v348
      %v634 = vunpack.c.l.b16 %v349
      %v635 = vunpack.c.h.b16 %v349
      %v636 = vunpack.c.l.b16 %v350
      %v637 = vunpack.c.h.b16 %v350
      %v638 = vunpack.c.l.b16 %v351
      %v639 = vunpack.c.h.b16 %v351
      %v640 = vunpack.c.l.b16 %v352
      %v641 = vunpack.c.h.b16 %v352
      %v642 = vunpack.c.l.b16 %v353
      %v643 = vunpack.c.h.b16 %v353
      %v644 = vunpack.c.l.b16 %v354
      %v645 = vunpack.c.h.b16 %v354
      %v646 = vunpack.c.l.b16 %v355
      %v647 = vunpack.c.h.b16 %v355
      %v648 = vunpack.c.l.b16 %v356
      %v649 = vunpack.c.h.b16 %v356
      %v650 = vunpack.c.l.b16 %v357
      %v651 = vunpack.c.h.b16 %v357
      %v652 = vunpack.c.l.b16 %v358
      %v653 = vunpack.c.h.b16 %v358
      %v654 = vunpack.c.l.b16 %v359
      %v655 = vunpack.c.h.b16 %v359
      %v656 = vunpack.c.l.b16 %v360
      %v657 = vunpack.c.h.b16 %v360
      %v658 = vunpack.c.l.b16 %v361
      %v659 = vunpack.c.h.b16 %v361
      %v660 = vunpack.c.l.b16 %v362
      %v661 = vunpack.c.h.b16 %v362
      %v662 = vunpack.c.l.b16 %v363
      %v663 = vunpack.c.h.b16 %v363
      %v664 = vunpack.c.l.b16 %v364
      %v665 = vunpack.c.h.b16 %v364
      %v666 = vunpack.c.l.b16 %v365
      %v667 = vunpack.c.h.b16 %v365
      %v668 = vunpack.c.l.b16 %v366
      %v669 = vunpack.c.h.b16 %v366
      %v670 = vunpack.c.l.b16 %v367
      %v671 = vunpack.c.h.b16 %v367
      %v672 = vunpack.c.l.b16 %v368
      %v673 = vunpack.c.h.b16 %v368
      %v674 = vunpack.c.l.b16 %v369
      %v675 = vunpack.c.h.b16 %v369
      %v676 = vunpack.c.l.b16 %v370
      %v677 = vunpack.c.h.b16 %v370
      %v678 = vunpack.c.l.b16 %v371
      %v679 = vunpack.c.h.b16 %v371
      %v680 = vunpack.c.l.b16 %v372
      %v681 = vunpack.c.h.b16 %v372
      %v682 = vunpack.c.l.b16 %v373
      %v683 = vunpack.c.h.b16 %v373
      %v684 = vunpack.c.l.b16 %v374
      %v685 = vunpack.c.h.b16 %v374
      %v686 = vunpack.c.l.b16 %v375
      %v687 = vunpack.c.h.b16 %v375
      %v688 = vunpack.c.l.b16 %v376
      %v689 = vunpack.c.h.b16 %v376
      %v690 = vunpack.c.l.b16 %v377
      %v691 = vunpack.c.h.b16 %v377
      %v692 = vunpack.c.l.b16 %v378
      %v693 = vunpack.c.h.b16 %v378
      %v694 = vunpack.c.l.b16 %v379
      %v695 = vunpack.c.h.b16 %v379
      %v696 = vunpack.c.l.b16 %v380
      %v697 = vunpack.c.h.b16 %v380
      %v698 = vunpack.c.l.b16 %v381
      %v699 = vunpack.c.h.b16 %v381
      %v700 = vunpack.c.l.b16 %v382
      %v701 = vunpack.c.h.b16 %v382
      %v702 = vunpack.c.l.b16 %v383
      %v703 = vunpack.c.h.b16 %v383
      %v704 = vunpack.c.l.b16 %v384
      %v705 = vunpack.c.h.b16 %v384
      %v706 = vunpack.c.l.b16 %v385
      %v707 = vunpack.c.h.b16 %v385
      %v708 = vunpack.c.l.b16 %v386
      %v709 = vunpack.c.h.b16 %v386
      %v710 = vunpack.c.l.b16 %v387
      %v711 = vunpack.c.h.b16 %v387
      %v712 = vunpack.c.l.b16 %v388
      %v713 = vunpack.c.h.b16 %v388
      %v714 = vunpack.c.l.b16 %v389
      %v715 = vunpack.c.h.b16 %v389
      %v716 = vunpack.c.l.b16 %v390
      %v717 = vunpack.c.h.b16 %v390
      %v718 = vunpack.c.l.b16 %v391
      %v719 = vunpack.c.h.b16 %v391
      %v720 = vunpack.c.l.b16 %v392
      %v721 = vunpack.c.h.b16 %v392
      %v722 = vunpack.c.l.b16 %v393
      %v723 = vunpack.c.h.b16 %v393
      %v724 = vunpack.c.l.b16 %v394
      %v725 = vunpack.c.h.b16 %v394
      %v726 = vunpack.c.l.b16 %v395
      %v727 = vunpack.c.h.b16 %v395
      %v728 = vunpack.c.l.b16 %v396
      %v729 = vunpack.c.h.b16 %v396
      %v730 = vunpack.c.l.b16 %v397
      %v731 = vunpack.c.h.b16 %v397
      %v732 = vunpack.c.l.b16 %v398
      %v733 = vunpack.c.h.b16 %v398
      %v734 = vunpack.c.l.b16 %v399
      %v735 = vunpack.c.h.b16 %v399
      %v736 = vunpack.c.l.b16 %v400
      %v737 = vunpack.c.h.b16 %v400
      %v738 = vunpack.c.l.b16 %v401
      %v739 = vunpack.c.h.b16 %v401
      %v740 = vunpack.c.l.b16 %v402
      %v741 = vunpack.c.h.b16 %v402
      %v742 = vunpack.c.l.b16 %v403
      %v743 = vunpack.c.h.b16 %v403
      %v744 = vunpack.c.l.b16 %v404
      %v745 = vunpack.c.h.b16 %v404
      %v746 = vunpack.c.l.b16 %v405
      %v747 = vunpack.c.h.b16 %v405
      %v748 = vunpack.c.l.b16 %v406
      %v749 = vunpack.c.h.b16 %v406
      %v750 = vunpack.c.l.b16 %v407
      %v751 = vunpack.c.h.b16 %v407
      %v752 = vunpack.c.l.b16 %v408
      %v753 = vunpack.c.h.b16 %v408
      %v754 = vunpack.c.l.b16 %v409
      %v755 = vunpack.c.h.b16 %v409
      %v756 = vunpack.c.l.b16 %v410
      %v757 = vunpack.c.h.b16 %v410
      %v758 = vunpack.c.l.b16 %v411
      %v759 = vunpack.c.h.b16 %v411
      %v760 = vunpack.c.l.b16 %v412
      %v761 = vunpack.c.h.b16 %v412
      %v762 = vunpack.c.l.b16 %v413
      %v763 = vunpack.c.h.b16 %v413
      %v764 = vunpack.c.l.b16 %v414
      %v765 = vunpack.c.h.b16 %v414
      %v766 = vunpack.c.l.b16 %v415
      %v767 = vunpack.c.h.b16 %v415
      %v768 = vpack.c.b16 %v588, %v576
      %v769 = vpack.c.b16 %v589, %v577
      %v770 = vpack.c.b16 %v590, %v578
      %v771 = vpack.c.b16 %v591, %v579
      %v772 = vpack.c.b16 %v592, %v580
      %v773 = vpack.c.b16 %v593, %v581
      %v774 = vpack.c.b16 %v594, %v582
      %v775 = vpack.c.b16 %v595, %v583
      %v776 = vpack.c.b16 %v596, %v584
      %v777 = vpack.c.b16 %v597, %v585
      %v778 = vpack.c.b16 %v598, %v586
      %v779 = vpack.c.b16 %v599, %v587
      %v780 = vpack.c.b16 %v612, %v600
      %v781 = vpack.c.b16 %v613, %v601
      %v782 = vpack.c.b16 %v614, %v602
      %v783 = vpack.c.b16 %v615, %v603
      %v784 = vpack.c.b16 %v616, %v604
      %v785 = vpack.c.b16 %v617, %v605
      %v786 = vpack.c.b16 %v618, %v606
      %v787 = vpack.c.b16 %v619, %v607
      %v788 = vpack.c.b16 %v620, %v608
      %v789 = vpack.c.b16 %v621, %v609
      %v790 = vpack.c.b16 %v622, %v610
      %v791 = vpack.c.b16 %v623, %v611
      %v792 = vpack.c.b16 %v636, %v624
      %v793 = vpack.c.b16 %v637, %v625
      %v794 = vpack.c.b16 %v638, %v626
      %v795 = vpack.c.b16 %v639, %v627
      %v796 = vpack.c.b16 %v640, %v628
      %v797 = vpack.c.b16 %v641, %v629
      %v798 = vpack.c.b16 %v642, %v630
      %v799 = vpack.c.b16 %v643, %v631
      %v800 = vpack.c.b16 %v644, %v632
      %v801 = vpack.c.b16 %v645, %v633
      %v802 = vpack.c.b16 %v646, %v634
      %v803 = vpack.c.b16 %v647, %v635
      %v804 = vpack.c.b16 %v660, %v648
      %v805 = vpack.c.b16 %v661, %v649
      %v806 = vpack.c.b16 %v662, %v650
      %v807 = vpack.c.b16 %v663, %v651
      %v808 = vpack.c.b16 %v664, %v652
      %v809 = vpack.c.b16 %v665, %v653
      %v810 = vpack.c.b16 %v666, %v654
      %v811 = vpack.c.b16 %v667, %v655
      %v812 = vpack.c.b16 %v668, %v656
      %v813 = vpack.c.b16 %v669, %v657
      %v814 = vpack.c.b16 %v670, %v658
      %v815 = vpack.c.b16 %v671, %v659
      %v816 = vpack.c.b16 %v684, %v672
      %v817 = vpack.c.b16 %v685, %v673
      %v818 = vpack.c.b16 %v686, %v674
      %v819 = vpack.c.b16 %v687, %v675
      %v820 = vpack.c.b16 %v688, %v676
      %v821 = vpack.c.b16 %v689, %v677
      %v822 = vpack.c.b16 %v690, %v678
      %v823 = vpack.c.b16 %v691, %v679
      %v824 = vpack.c.b16 %v692, %v680
      %v825 = vpack.c.b16 %v693, %v681
      %v826 = vpack.c.b16 %v694, %v682
      %v827 = vpack.c.b16 %v695, %v683
      %v828 = vpack.c.b16 %v708, %v696
      %v829 = vpack.c.b16 %v709, %v697
      %v830 = vpack.c.b16 %v710, %v698
      %v831 = vpack.c.b16 %v711, %v699
      %v832 = vpack.c.b16 %v712, %v700
      %v833 = vpack.c.b16 %v713, %v701
      %v834 = vpack.c.b16 %v714, %v702
      %v835 = vpack.c.b16 %v715, %v703
      %v836 = vpack.c.b16 %v716, %v704
      %v837 = vpack.c.b16 %v717, %v705
      %v838 = vpack.c.b16 %v718, %v706
      %v839 = vpack.c.b16 %v719, %v707
      %v840 = vpack.c.b16 %v732, %v720
      %v841 = vpack.c.b16 %v733, %v721
      %v842 = vpack.c.b16 %v734, %v722
      %v843 = vpack.c.b16 %v735, %v723
      %v844 = vpack.c.b16 %v736, %v724
      %v845 = vpack.c.b16 %v737, %v725
      %v846 = vpack.c.b16 %v738, %v726
      %v847 = vpack.c.b16 %v739, %v727
      %v848 = vpack.c.b16 %v740, %v728
      %v849 = vpack.c.b16 %v741, %v729
      %v850 = vpack.c.b16 %v742, %v730
      %v851 = vpack.c.b16 %v743, %v731
      %v852 = vpack.c.b16 %v756, %v744
      %v853 = vpack.c.b16 %v757, %v745
      %v854 = vpack.c.b16 %v758, %v746
      %v855 = vpack.c.b16 %v759, %v747
      %v856 = vpack.c.b16 %v760, %v748
      %v857 = vpack.c.b16 %v761, %v749
      %v858 = vpack.c.b16 %v762, %v750
      %v859 = vpack.c.b16 %v763, %v751
      %v860 = vpack.c.b16 %v764, %v752
      %v861 = vpack.c.b16 %v765, %v753
      %v862 = vpack.c.b16 %v766, %v754
      %v863 = vpack.c.b16 %v767, %v755
      %960 = vmatprep.subr.bf16.mxu0 %v769
      %961 = vmatpush1.bf16.msra.mxu0 %v768
      %962 = vmatprep.subr.bf16.mxu0 %v781
      %963 = vmatpush1.bf16.msra.mxu0 %v780
      %964 = vmatprep.subr.bf16.mxu0 %v793
      %965 = vmatpush1.bf16.msra.mxu0 %v792
      %966 = vmatprep.subr.bf16.mxu0 %v805
      %967 = vmatpush1.bf16.msra.mxu0 %v804
      %968 = vmatprep.subr.bf16.mxu0 %v817
      %969 = vmatpush1.bf16.msra.mxu0 %v816
      %970 = vmatprep.subr.bf16.mxu0 %v829
      %971 = vmatpush1.bf16.msra.mxu0 %v828
      %972 = vmatprep.subr.bf16.mxu0 %v841
      %973 = vmatpush1.bf16.msra.mxu0 %v840
      %974 = vmatprep.subr.bf16.mxu0 %v853
      %975 = vmatpush1.bf16.msra.mxu0 %v852
      %976 = vmatprep.subr.bf16.mxu0 0
      %977 = vmatpush1.bf16.msra.mxu0 0
      %978 = vmatprep.subr.bf16.mxu0 0
      %979 = vmatpush1.bf16.msra.mxu0 0
      %980 = vmatprep.subr.bf16.mxu0 0
      %981 = vmatpush1.bf16.msra.mxu0 0
      %982 = vmatprep.subr.bf16.mxu0 0
      %983 = vmatpush1.bf16.msra.mxu0 0
      %984 = vmatprep.subr.bf16.mxu0 0
      %985 = vmatpush1.bf16.msra.mxu0 0
      %986 = vmatprep.subr.bf16.mxu0 0
      %987 = vmatpush1.bf16.msra.mxu0 0
      %988 = vmatprep.subr.bf16.mxu0 0
      %989 = vmatpush1.bf16.msra.mxu0 0
      %990 = vmatprep.subr.bf16.mxu0 0
      %991 = vmatpush1.bf16.msra.mxu0 0
      %992 = vmatprep.mubr.bf16.mxu0 0
      %993 = vmatmul.mubr.bf16.gmra.mrb[0].mxu0 %v319
      %v994 = vpop.f32.mrb[0].mxu0
      %v995 = vadd.f32 %v423, %v994
      %v996 = vpop.f32.mrb[0].mxu0
      %v997 = vadd.f32 %v427, %v996
      %v998 = vpop.f32.mrb[0].mxu0
      %v999 = vpop.f32.mrb[0].mxu0
      %1000 = vdwg.mxu0
      %1001 = vmatprep.subr.bf16.mxu0 %v771
      %1002 = vmatpush1.bf16.msra.mxu0 %v770
      %1003 = vmatprep.subr.bf16.mxu0 %v783
      %1004 = vmatpush1.bf16.msra.mxu0 %v782
      %1005 = vmatprep.subr.bf16.mxu0 %v795
      %1006 = vmatpush1.bf16.msra.mxu0 %v794
      %1007 = vmatprep.subr.bf16.mxu0 %v807
      %1008 = vmatpush1.bf16.msra.mxu0 %v806
      %1009 = vmatprep.subr.bf16.mxu0 %v819
      %1010 = vmatpush1.bf16.msra.mxu0 %v818
      %1011 = vmatprep.subr.bf16.mxu0 %v831
      %1012 = vmatpush1.bf16.msra.mxu0 %v830
      %1013 = vmatprep.subr.bf16.mxu0 %v843
      %1014 = vmatpush1.bf16.msra.mxu0 %v842
      %1015 = vmatprep.subr.bf16.mxu0 %v855
      %1016 = vmatpush1.bf16.msra.mxu0 %v854
      %1017 = vmatprep.subr.bf16.mxu0 0
      %1018 = vmatpush1.bf16.msra.mxu0 0
      %1019 = vmatprep.subr.bf16.mxu0 0
      %1020 = vmatpush1.bf16.msra.mxu0 0
      %1021 = vmatprep.subr.bf16.mxu0 0
      %1022 = vmatpush1.bf16.msra.mxu0 0
      %1023 = vmatprep.subr.bf16.mxu0 0
      %1024 = vmatpush1.bf16.msra.mxu0 0
      %1025 = vmatprep.subr.bf16.mxu0 0
      %1026 = vmatpush1.bf16.msra.mxu0 0
      %1027 = vmatprep.subr.bf16.mxu0 0
      %1028 = vmatpush1.bf16.msra.mxu0 0
      %1029 = vmatprep.subr.bf16.mxu0 0
      %1030 = vmatpush1.bf16.msra.mxu0 0
      %1031 = vmatprep.subr.bf16.mxu0 0
      %1032 = vmatpush1.bf16.msra.mxu0 0
      %1033 = vmatprep.mubr.bf16.mxu0 0
      %1034 = vmatmul.mubr.bf16.gmra.mrb[0].mxu0 %v319
      %v1035 = vpop.f32.mrb[0].mxu0
      %v1036 = vadd.f32 %v431, %v1035
      %v1037 = vpop.f32.mrb[0].mxu0
      %v1038 = vadd.f32 %v435, %v1037
      %v1039 = vpop.f32.mrb[0].mxu0
      %v1040 = vpop.f32.mrb[0].mxu0
      %1041 = vdwg.mxu0
      %1042 = vmatprep.subr.bf16.mxu0 %v773
      %1043 = vmatpush1.bf16.msra.mxu0 %v772
      %1044 = vmatprep.subr.bf16.mxu0 %v785
      %1045 = vmatpush1.bf16.msra.mxu0 %v784
      %1046 = vmatprep.subr.bf16.mxu0 %v797
      %1047 = vmatpush1.bf16.msra.mxu0 %v796
      %1048 = vmatprep.subr.bf16.mxu0 %v809
      %1049 = vmatpush1.bf16.msra.mxu0 %v808
      %1050 = vmatprep.subr.bf16.mxu0 %v821
      %1051 = vmatpush1.bf16.msra.mxu0 %v820
      %1052 = vmatprep.subr.bf16.mxu0 %v833
      %1053 = vmatpush1.bf16.msra.mxu0 %v832
      %1054 = vmatprep.subr.bf16.mxu0 %v845
      %1055 = vmatpush1.bf16.msra.mxu0 %v844
      %1056 = vmatprep.subr.bf16.mxu0 %v857
      %1057 = vmatpush1.bf16.msra.mxu0 %v856
      %1058 = vmatprep.subr.bf16.mxu0 0
      %1059 = vmatpush1.bf16.msra.mxu0 0
      %1060 = vmatprep.subr.bf16.mxu0 0
      %1061 = vmatpush1.bf16.msra.mxu0 0
      %1062 = vmatprep.subr.bf16.mxu0 0
      %1063 = vmatpush1.bf16.msra.mxu0 0
      %1064 = vmatprep.subr.bf16.mxu0 0
      %1065 = vmatpush1.bf16.msra.mxu0 0
      %1066 = vmatprep.subr.bf16.mxu0 0
      %1067 = vmatpush1.bf16.msra.mxu0 0
      %1068 = vmatprep.subr.bf16.mxu0 0
      %1069 = vmatpush1.bf16.msra.mxu0 0
      %1070 = vmatprep.subr.bf16.mxu0 0
      %1071 = vmatpush1.bf16.msra.mxu0 0
      %1072 = vmatprep.subr.bf16.mxu0 0
      %1073 = vmatpush1.bf16.msra.mxu0 0
      %1074 = vmatprep.mubr.bf16.mxu0 0
      %1075 = vmatmul.mubr.bf16.gmra.mrb[0].mxu0 %v319
      %v1076 = vpop.f32.mrb[0].mxu0
      %v1077 = vadd.f32 %v439, %v1076
      %v1078 = vpop.f32.mrb[0].mxu0
      %v1079 = vadd.f32 %v443, %v1078
      %v1080 = vpop.f32.mrb[0].mxu0
      %v1081 = vpop.f32.mrb[0].mxu0
      %1082 = vdwg.mxu0
      %1083 = vmatprep.subr.bf16.mxu0 %v775
      %1084 = vmatpush1.bf16.msra.mxu0 %v774
      %1085 = vmatprep.subr.bf16.mxu0 %v787
      %1086 = vmatpush1.bf16.msra.mxu0 %v786
      %1087 = vmatprep.subr.bf16.mxu0 %v799
      %1088 = vmatpush1.bf16.msra.mxu0 %v798
      %1089 = vmatprep.subr.bf16.mxu0 %v811
      %1090 = vmatpush1.bf16.msra.mxu0 %v810
      %1091 = vmatprep.subr.bf16.mxu0 %v823
      %1092 = vmatpush1.bf16.msra.mxu0 %v822
      %1093 = vmatprep.subr.bf16.mxu0 %v835
      %1094 = vmatpush1.bf16.msra.mxu0 %v834
      %1095 = vmatprep.subr.bf16.mxu0 %v847
      %1096 = vmatpush1.bf16.msra.mxu0 %v846
      %1097 = vmatprep.subr.bf16.mxu0 %v859
      %1098 = vmatpush1.bf16.msra.mxu0 %v858
      %1099 = vmatprep.subr.bf16.mxu0 0
      %1100 = vmatpush1.bf16.msra.mxu0 0
      %1101 = vmatprep.subr.bf16.mxu0 0
      %1102 = vmatpush1.bf16.msra.mxu0 0
      %1103 = vmatprep.subr.bf16.mxu0 0
      %1104 = vmatpush1.bf16.msra.mxu0 0
      %1105 = vmatprep.subr.bf16.mxu0 0
      %1106 = vmatpush1.bf16.msra.mxu0 0
      %1107 = vmatprep.subr.bf16.mxu0 0
      %1108 = vmatpush1.bf16.msra.mxu0 0
      %1109 = vmatprep.subr.bf16.mxu0 0
      %1110 = vmatpush1.bf16.msra.mxu0 0
      %1111 = vmatprep.subr.bf16.mxu0 0
      %1112 = vmatpush1.bf16.msra.mxu0 0
      %1113 = vmatprep.subr.bf16.mxu0 0
      %1114 = vmatpush1.bf16.msra.mxu0 0
      %1115 = vmatprep.mubr.bf16.mxu0 0
      %1116 = vmatmul.mubr.bf16.gmra.mrb[0].mxu0 %v319
      %v1117 = vpop.f32.mrb[0].mxu0
      %v1118 = vadd.f32 %v447, %v1117
      %v1119 = vpop.f32.mrb[0].mxu0
      %v1120 = vadd.f32 %v451, %v1119
      %v1121 = vpop.f32.mrb[0].mxu0
      %v1122 = vpop.f32.mrb[0].mxu0
      %1123 = vdwg.mxu0
      %1124 = vmatprep.subr.bf16.mxu0 %v777
      %1125 = vmatpush1.bf16.msra.mxu0 %v776
      %1126 = vmatprep.subr.bf16.mxu0 %v789
      %1127 = vmatpush1.bf16.msra.mxu0 %v788
      %1128 = vmatprep.subr.bf16.mxu0 %v801
      %1129 = vmatpush1.bf16.msra.mxu0 %v800
      %1130 = vmatprep.subr.bf16.mxu0 %v813
      %1131 = vmatpush1.bf16.msra.mxu0 %v812
      %1132 = vmatprep.subr.bf16.mxu0 %v825
      %1133 = vmatpush1.bf16.msra.mxu0 %v824
      %1134 = vmatprep.subr.bf16.mxu0 %v837
      %1135 = vmatpush1.bf16.msra.mxu0 %v836
      %1136 = vmatprep.subr.bf16.mxu0 %v849
      %1137 = vmatpush1.bf16.msra.mxu0 %v848
      %1138 = vmatprep.subr.bf16.mxu0 %v861
      %1139 = vmatpush1.bf16.msra.mxu0 %v860
      %1140 = vmatprep.subr.bf16.mxu0 0
      %1141 = vmatpush1.bf16.msra.mxu0 0
      %1142 = vmatprep.subr.bf16.mxu0 0
      %1143 = vmatpush1.bf16.msra.mxu0 0
      %1144 = vmatprep.subr.bf16.mxu0 0
      %1145 = vmatpush1.bf16.msra.mxu0 0
      %1146 = vmatprep.subr.bf16.mxu0 0
      %1147 = vmatpush1.bf16.msra.mxu0 0
      %1148 = vmatprep.subr.bf16.mxu0 0
      %1149 = vmatpush1.bf16.msra.mxu0 0
      %1150 = vmatprep.subr.bf16.mxu0 0
      %1151 = vmatpush1.bf16.msra.mxu0 0
      %1152 = vmatprep.subr.bf16.mxu0 0
      %1153 = vmatpush1.bf16.msra.mxu0 0
      %1154 = vmatprep.subr.bf16.mxu0 0
      %1155 = vmatpush1.bf16.msra.mxu0 0
      %1156 = vmatprep.mubr.bf16.mxu0 0
      %1157 = vmatmul.mubr.bf16.gmra.mrb[0].mxu0 %v319
      %v1158 = vpop.f32.mrb[0].mxu0
      %v1159 = vadd.f32 %v455, %v1158
      %v1160 = vpop.f32.mrb[0].mxu0
      %v1161 = vadd.f32 %v459, %v1160
      %v1162 = vpop.f32.mrb[0].mxu0
      %v1163 = vpop.f32.mrb[0].mxu0
      %1164 = vdwg.mxu0
      %1165 = vmatprep.subr.bf16.mxu0 %v779
      %1166 = vmatpush1.bf16.msra.mxu0 %v778
      %1167 = vmatprep.subr.bf16.mxu0 %v791
      %1168 = vmatpush1.bf16.msra.mxu0 %v790
      %1169 = vmatprep.subr.bf16.mxu0 %v803
      %1170 = vmatpush1.bf16.msra.mxu0 %v802
      %1171 = vmatprep.subr.bf16.mxu0 %v815
      %1172 = vmatpush1.bf16.msra.mxu0 %v814
      %1173 = vmatprep.subr.bf16.mxu0 %v827
      %1174 = vmatpush1.bf16.msra.mxu0 %v826
      %1175 = vmatprep.subr.bf16.mxu0 %v839
      %1176 = vmatpush1.bf16.msra.mxu0 %v838
      %1177 = vmatprep.subr.bf16.mxu0 %v851
      %1178 = vmatpush1.bf16.msra.mxu0 %v850
      %1179 = vmatprep.subr.bf16.mxu0 %v863
      %1180 = vmatpush1.bf16.msra.mxu0 %v862
      %1181 = vmatprep.subr.bf16.mxu0 0
      %1182 = vmatpush1.bf16.msra.mxu0 0
      %1183 = vmatprep.subr.bf16.mxu0 0
      %1184 = vmatpush1.bf16.msra.mxu0 0
      %1185 = vmatprep.subr.bf16.mxu0 0
      %1186 = vmatpush1.bf16.msra.mxu0 0
      %1187 = vmatprep.subr.bf16.mxu0 0
      %1188 = vmatpush1.bf16.msra.mxu0 0
      %1189 = vmatprep.subr.bf16.mxu0 0
      %1190 = vmatpush1.bf16.msra.mxu0 0
      %1191 = vmatprep.subr.bf16.mxu0 0
      %1192 = vmatpush1.bf16.msra.mxu0 0
      %1193 = vmatprep.subr.bf16.mxu0 0
      %1194 = vmatpush1.bf16.msra.mxu0 0
      %1195 = vmatprep.subr.bf16.mxu0 0
      %1196 = vmatpush1.bf16.msra.mxu0 0
      %1197 = vmatprep.mubr.bf16.mxu0 0
      %1198 = vmatmul.mubr.bf16.gmra.mrb[0].mxu0 %v319
      %v1199 = vpop.f32.mrb[0].mxu0
      %v1200 = vadd.f32 %v463, %v1199
      %v1201 = vpop.f32.mrb[0].mxu0
      %v1202 = vadd.f32 %v467, %v1201
      %v1203 = vpop.f32.mrb[0].mxu0
      %v1204 = vpop.f32.mrb[0].mxu0
      %1205 = vdwg.mxu0
      %v1206 = vld [vmem:[%s313] sm:$0xff]
      %vm1207 = vcmp.eq.s32.totalorder %v1206, 0
      %v1208 = vpack.c.bf16 %v995, %v995
      %v1209 = vpack.c.bf16 %v1077, %v1077
      %v1210 = vpack.c.bf16 %v1159, %v1159
      %1211 = vmatprep.subr.bf16.mxu0 0
      %1212 = vmatpush1.bf16.xpose.msra.mxu0 %v1209
      %1213 = vmatprep.subr.bf16.mxu0 0
      %1214 = vmatpush1.bf16.xpose.msra.mxu0 0
      %1215 = vmatprep.subr.bf16.mxu0 0
      %1216 = vmatpush1.bf16.xpose.msra.mxu0 0
      %1217 = vmatprep.subr.bf16.mxu0 0
      %1218 = vmatpush1.bf16.xpose.msra.mxu0 0
      %1219 = vmatprep.subr.bf16.mxu0 0
      %1220 = vmatpush1.bf16.xpose.msra.mxu0 0
      %1221 = vmatprep.subr.bf16.mxu0 0
      %1222 = vmatpush1.bf16.xpose.msra.mxu0 0
      %1223 = vmatprep.subr.bf16.mxu0 0
      %1224 = vmatpush1.bf16.xpose.msra.mxu0 0
      %1225 = vmatprep.subr.bf16.mxu0 0
      %1226 = vmatpush1.bf16.xpose.msra.mxu0 0
      %1227 = vmatprep.subr.bf16.mxu0 0
      %1228 = vmatpush1.bf16.xpose.msra.mxu0 0
      %1229 = vmatprep.subr.bf16.mxu0 0
      %1230 = vmatpush1.bf16.xpose.msra.mxu0 0
      %1231 = vmatprep.subr.bf16.mxu0 0
      %1232 = vmatpush1.bf16.xpose.msra.mxu0 0
      %1233 = vmatprep.subr.bf16.mxu0 0
      %1234 = vmatpush1.bf16.xpose.msra.mxu0 0
      %1235 = vmatprep.subr.bf16.mxu0 0
      %1236 = vmatpush1.bf16.xpose.msra.mxu0 0
      %1237 = vmatprep.subr.bf16.mxu0 0
      %1238 = vmatpush1.bf16.xpose.msra.mxu0 0
      %1239 = vmatprep.subr.bf16.mxu0 0
      %1240 = vmatpush1.bf16.xpose.msra.mxu0 0
      %1241 = vmatprep.subr.bf16.mxu0 0
      %1242 = vmatpush1.bf16.xpose.msra.mxu0 0
      %1243 = vmatprep.mubr.bf16.mxu0 0
      %1244 = vmatmul.mubr.bf16.gmra.mrb[0].mxu0 %v1208
      %v1245 = vpop.f32.mrb[0].mxu0
      %v1246 = vadd.f32 0.0, %v1245
      %v1247 = vpop.f32.mrb[0].mxu0
      %v1248 = vpop.f32.mrb[0].mxu0
      %v1249 = vpop.f32.mrb[0].mxu0
      %1250 = vdwg.mxu0
      %v1251 = vmul.f32 %v1246, 0.35355338
      %v1252 = vsel %vm1207, -1e+09, %v1251
      %vm1253 = vcmask 64512
      %v1254 = vsel %vm1253, %v1252, -inf
      %1255 = vmax.xlane.f32.xlu0 %v1254
      %v1256 = vpop.xlane.xlu0 %1255
      %v1257 = vsub.f32 %v1252, %v1256
      %v1258 = vmul.f32 %v1257, 1.442695
      %v1259 = vpow.pop %v1258
      %v1260 = vsel %vm1253, %v1259, 0.0
      %1261 = vadd.xlane.f32.xlu0 %v1260
      %v1262 = vpop.xlane.xlu0 %1261
      %v1263 = vrcp.pop %v1262
      %v1264 = vmul.f32 %v1259, %v1263
      %v1265 = vpack.c.bf16 %v1264, %v1264
      %v1267 = vsel %vm1253, %v1265, 0
      %vm1269 = vcmask 1043456
      %v1271 = vsel %vm1269, %v1210, 0
      %1273 = vmatprep.subr.bf16.mxu0 0
      %1274 = vmatpush1.bf16.msra.mxu0 %v1271
      %1275 = vmatprep.subr.bf16.mxu0 0
      %1276 = vmatpush1.bf16.msra.mxu0 0
      %1277 = vmatprep.subr.bf16.mxu0 0
      %1278 = vmatpush1.bf16.msra.mxu0 0
      %1279 = vmatprep.subr.bf16.mxu0 0
      %1280 = vmatpush1.bf16.msra.mxu0 0
      %1281 = vmatprep.subr.bf16.mxu0 0
      %1282 = vmatpush1.bf16.msra.mxu0 0
      %1283 = vmatprep.subr.bf16.mxu0 0
      %1284 = vmatpush1.bf16.msra.mxu0 0
      %1285 = vmatprep.subr.bf16.mxu0 0
      %1286 = vmatpush1.bf16.msra.mxu0 0
      %1287 = vmatprep.subr.bf16.mxu0 0
      %1288 = vmatpush1.bf16.msra.mxu0 0
      %1289 = vmatprep.subr.bf16.mxu0 0
      %1290 = vmatpush1.bf16.msra.mxu0 0
      %1291 = vmatprep.subr.bf16.mxu0 0
      %1292 = vmatpush1.bf16.msra.mxu0 0
      %1293 = vmatprep.subr.bf16.mxu0 0
      %1294 = vmatpush1.bf16.msra.mxu0 0
      %1295 = vmatprep.subr.bf16.mxu0 0
      %1296 = vmatpush1.bf16.msra.mxu0 0
      %1297 = vmatprep.subr.bf16.mxu0 0
      %1298 = vmatpush1.bf16.msra.mxu0 0
      %1299 = vmatprep.subr.bf16.mxu0 0
      %1300 = vmatpush1.bf16.msra.mxu0 0
      %1301 = vmatprep.subr.bf16.mxu0 0
      %1302 = vmatpush1.bf16.msra.mxu0 0
      %1303 = vmatprep.subr.bf16.mxu0 0
      %1304 = vmatpush1.bf16.msra.mxu0 0
      %1305 = vmatprep.mubr.bf16.mxu0 0
      %1306 = vmatmul.mubr.bf16.gmra.mrb[0].mxu0 %v1267
      %v1307 = vpop.f32.mrb[0].mxu0
      %v1308 = vadd.f32 0.0, %v1307
      %v1309 = vpop.f32.mrb[0].mxu0
      %v1310 = vpop.f32.mrb[0].mxu0
      %v1311 = vpop.f32.mrb[0].mxu0
      %1312 = vdwg.mxu0
      %v1313 = vpack.c.bf16 %v1308, %v1308
      %v1314 = vld [vmem:[%s4] sm:$0xf]
      %v1315 = vld [vmem:[%s4 + $0x4] sm:$0xf]
      %v1316 = vld [vmem:[%s4 + $0x8] sm:$0xf]
      %v1317 = vld [vmem:[%s4 + $0xc] sm:$0xf]
      %v1318 = vld [vmem:[%s4 + $0x10] sm:$0xf]
      %v1319 = vld [vmem:[%s4 + $0x14] sm:$0xf]
      %v1320 = vld [vmem:[%s4 + $0x18] sm:$0xf]
      %v1321 = vld [vmem:[%s4 + $0x1c] sm:$0xf]
      %v1322 = vld [vmem:[%s4 + $0x20] sm:$0xf]
      %v1323 = vld [vmem:[%s4 + $0x24] sm:$0xf]
      %v1324 = vld [vmem:[%s4 + $0x28] sm:$0xf]
      %v1325 = vld [vmem:[%s4 + $0x2c] sm:$0xf]
      %v1326 = vld [vmem:[%s4 + $0x30] sm:$0xf]
      %v1327 = vld [vmem:[%s4 + $0x34] sm:$0xf]
      %v1328 = vld [vmem:[%s4 + $0x38] sm:$0xf]
      %v1329 = vld [vmem:[%s4 + $0x3c] sm:$0xf]
      %v1330 = vpack.c.bf16 %v997, %v997
      %v1331 = vpack.c.bf16 %v1079, %v1079
      %v1332 = vpack.c.bf16 %v1161, %v1161
      %1333 = vmatprep.subr.bf16.mxu0 0
      %1334 = vmatpush1.bf16.xpose.msra.mxu0 %v1331
      %1335 = vmatprep.subr.bf16.mxu0 0
      %1336 = vmatpush1.bf16.xpose.msra.mxu0 0
      %1337 = vmatprep.subr.bf16.mxu0 0
      %1338 = vmatpush1.bf16.xpose.msra.mxu0 0
      %1339 = vmatprep.subr.bf16.mxu0 0
      %1340 = vmatpush1.bf16.xpose.msra.mxu0 0
      %1341 = vmatprep.subr.bf16.mxu0 0
      %1342 = vmatpush1.bf16.xpose.msra.mxu0 0
      %1343 = vmatprep.subr.bf16.mxu0 0
      %1344 = vmatpush1.bf16.xpose.msra.mxu0 0
      %1345 = vmatprep.subr.bf16.mxu0 0
      %1346 = vmatpush1.bf16.xpose.msra.mxu0 0
      %1347 = vmatprep.subr.bf16.mxu0 0
      %1348 = vmatpush1.bf16.xpose.msra.mxu0 0
      %1349 = vmatprep.subr.bf16.mxu0 0
      %1350 = vmatpush1.bf16.xpose.msra.mxu0 0
      %1351 = vmatprep.subr.bf16.mxu0 0
      %1352 = vmatpush1.bf16.xpose.msra.mxu0 0
      %1353 = vmatprep.subr.bf16.mxu0 0
      %1354 = vmatpush1.bf16.xpose.msra.mxu0 0
      %1355 = vmatprep.subr.bf16.mxu0 0
      %1356 = vmatpush1.bf16.xpose.msra.mxu0 0
      %1357 = vmatprep.subr.bf16.mxu0 0
      %1358 = vmatpush1.bf16.xpose.msra.mxu0 0
      %1359 = vmatprep.subr.bf16.mxu0 0
      %1360 = vmatpush1.bf16.xpose.msra.mxu0 0
      %1361 = vmatprep.subr.bf16.mxu0 0
      %1362 = vmatpush1.bf16.xpose.msra.mxu0 0
      %1363 = vmatprep.subr.bf16.mxu0 0
      %1364 = vmatpush1.bf16.xpose.msra.mxu0 0
      %1365 = vmatprep.mubr.bf16.mxu0 0
      %1366 = vmatmul.mubr.bf16.gmra.mrb[0].mxu0 %v1330
      %v1367 = vpop.f32.mrb[0].mxu0
      %v1368 = vadd.f32 0.0, %v1367
      %v1369 = vpop.f32.mrb[0].mxu0
      %v1370 = vpop.f32.mrb[0].mxu0
      %v1371 = vpop.f32.mrb[0].mxu0
      %1372 = vdwg.mxu0
      %v1373 = vmul.f32 %v1368, 0.35355338
      %v1374 = vsel %vm1207, -1e+09, %v1373
      %v1375 = vsel %vm1253, %v1374, -inf
      %1376 = vmax.xlane.f32.xlu0 %v1375
      %v1377 = vpop.xlane.xlu0 %1376
      %v1378 = vsub.f32 %v1374, %v1377
      %v1379 = vmul.f32 %v1378, 1.442695
      %v1380 = vpow.pop %v1379
      %v1381 = vsel %vm1253, %v1380, 0.0
      %1382 = vadd.xlane.f32.xlu0 %v1381
      %v1383 = vpop.xlane.xlu0 %1382
      %v1384 = vrcp.pop %v1383
      %v1385 = vmul.f32 %v1380, %v1384
      %v1386 = vpack.c.bf16 %v1385, %v1385
      %v1388 = vsel %vm1253, %v1386, 0
      %v1391 = vsel %vm1269, %v1332, 0
      %1393 = vmatprep.subr.bf16.mxu0 0
      %1394 = vmatpush1.bf16.msra.mxu0 %v1391
      %1395 = vmatprep.subr.bf16.mxu0 0
      %1396 = vmatpush1.bf16.msra.mxu0 0
      %1397 = vmatprep.subr.bf16.mxu0 0
      %1398 = vmatpush1.bf16.msra.mxu0 0
      %1399 = vmatprep.subr.bf16.mxu0 0
      %1400 = vmatpush1.bf16.msra.mxu0 0
      %1401 = vmatprep.subr.bf16.mxu0 0
      %1402 = vmatpush1.bf16.msra.mxu0 0
      %1403 = vmatprep.subr.bf16.mxu0 0
      %1404 = vmatpush1.bf16.msra.mxu0 0
      %1405 = vmatprep.subr.bf16.mxu0 0
      %1406 = vmatpush1.bf16.msra.mxu0 0
      %1407 = vmatprep.subr.bf16.mxu0 0
      %1408 = vmatpush1.bf16.msra.mxu0 0
      %1409 = vmatprep.subr.bf16.mxu0 0
      %1410 = vmatpush1.bf16.msra.mxu0 0
      %1411 = vmatprep.subr.bf16.mxu0 0
      %1412 = vmatpush1.bf16.msra.mxu0 0
      %1413 = vmatprep.subr.bf16.mxu0 0
      %1414 = vmatpush1.bf16.msra.mxu0 0
      %1415 = vmatprep.subr.bf16.mxu0 0
      %1416 = vmatpush1.bf16.msra.mxu0 0
      %1417 = vmatprep.subr.bf16.mxu0 0
      %1418 = vmatpush1.bf16.msra.mxu0 0
      %1419 = vmatprep.subr.bf16.mxu0 0
      %1420 = vmatpush1.bf16.msra.mxu0 0
      %1421 = vmatprep.subr.bf16.mxu0 0
      %1422 = vmatpush1.bf16.msra.mxu0 0
      %1423 = vmatprep.subr.bf16.mxu0 0
      %1424 = vmatpush1.bf16.msra.mxu0 0
      %1425 = vmatprep.mubr.bf16.mxu0 0
      %1426 = vmatmul.mubr.bf16.gmra.mrb[0].mxu0 %v1388
      %v1427 = vpop.f32.mrb[0].mxu0
      %v1428 = vadd.f32 0.0, %v1427
      %v1429 = vpop.f32.mrb[0].mxu0
      %v1430 = vpop.f32.mrb[0].mxu0
      %v1431 = vpop.f32.mrb[0].mxu0
      %1432 = vdwg.mxu0
      %v1433 = vpack.c.bf16 %v1428, %v1428
      %v1434 = vld [vmem:[%s4 + $0x40] sm:$0xf]
      %v1435 = vld [vmem:[%s4 + $0x44] sm:$0xf]
      %v1436 = vld [vmem:[%s4 + $0x48] sm:$0xf]
      %v1437 = vld [vmem:[%s4 + $0x4c] sm:$0xf]
      %v1438 = vld [vmem:[%s4 + $0x50] sm:$0xf]
      %v1439 = vld [vmem:[%s4 + $0x54] sm:$0xf]
      %v1440 = vld [vmem:[%s4 + $0x58] sm:$0xf]
      %v1441 = vld [vmem:[%s4 + $0x5c] sm:$0xf]
      %v1442 = vld [vmem:[%s4 + $0x60] sm:$0xf]
      %v1443 = vld [vmem:[%s4 + $0x64] sm:$0xf]
      %v1444 = vld [vmem:[%s4 + $0x68] sm:$0xf]
      %v1445 = vld [vmem:[%s4 + $0x6c] sm:$0xf]
      %v1446 = vld [vmem:[%s4 + $0x70] sm:$0xf]
      %v1447 = vld [vmem:[%s4 + $0x74] sm:$0xf]
      %v1448 = vld [vmem:[%s4 + $0x78] sm:$0xf]
      %v1449 = vld [vmem:[%s4 + $0x7c] sm:$0xf]
      %v1466 = vunpack.c.l.b16 %v1434
      %v1467 = vunpack.c.l.b16 %v1435
      %v1468 = vunpack.c.l.b16 %v1436
      %v1469 = vunpack.c.l.b16 %v1437
      %v1470 = vunpack.c.l.b16 %v1438
      %v1471 = vunpack.c.l.b16 %v1439
      %v1472 = vunpack.c.l.b16 %v1440
      %v1473 = vunpack.c.l.b16 %v1441
      %v1474 = vunpack.c.l.b16 %v1442
      %v1475 = vunpack.c.l.b16 %v1443
      %v1476 = vunpack.c.l.b16 %v1444
      %v1477 = vunpack.c.l.b16 %v1445
      %v1478 = vunpack.c.l.b16 %v1446
      %v1479 = vunpack.c.l.b16 %v1447
      %v1480 = vunpack.c.l.b16 %v1448
      %v1481 = vunpack.c.l.b16 %v1449
      %v1482 = vpack.c.b16 %v1467, %v1466
      %v1483 = vpack.c.b16 %v1469, %v1468
      %v1484 = vpack.c.b16 %v1471, %v1470
      %v1485 = vpack.c.b16 %v1473, %v1472
      %v1486 = vpack.c.b16 %v1475, %v1474
      %v1487 = vpack.c.b16 %v1477, %v1476
      %v1488 = vpack.c.b16 %v1479, %v1478
      %v1489 = vpack.c.b16 %v1481, %v1480
      %1498 = vmatprep.subr.bf16.mxu0 0
      %1499 = vmatpush1.bf16.msra.mxu0 %v1482
      %1500 = vmatprep.subr.bf16.mxu0 0
      %1501 = vmatpush1.bf16.msra.mxu0 %v1483
      %1502 = vmatprep.subr.bf16.mxu0 0
      %1503 = vmatpush1.bf16.msra.mxu0 %v1484
      %1504 = vmatprep.subr.bf16.mxu0 0
      %1505 = vmatpush1.bf16.msra.mxu0 %v1485
      %1506 = vmatprep.subr.bf16.mxu0 0
      %1507 = vmatpush1.bf16.msra.mxu0 %v1486
      %1508 = vmatprep.subr.bf16.mxu0 0
      %1509 = vmatpush1.bf16.msra.mxu0 %v1487
      %1510 = vmatprep.subr.bf16.mxu0 0
      %1511 = vmatpush1.bf16.msra.mxu0 %v1488
      %1512 = vmatprep.subr.bf16.mxu0 0
      %1513 = vmatpush1.bf16.msra.mxu0 %v1489
      %1514 = vmatprep.subr.bf16.mxu0 0
      %1515 = vmatpush1.bf16.msra.mxu0 0
      %1516 = vmatprep.subr.bf16.mxu0 0
      %1517 = vmatpush1.bf16.msra.mxu0 0
      %1518 = vmatprep.subr.bf16.mxu0 0
      %1519 = vmatpush1.bf16.msra.mxu0 0
      %1520 = vmatprep.subr.bf16.mxu0 0
      %1521 = vmatpush1.bf16.msra.mxu0 0
      %1522 = vmatprep.subr.bf16.mxu0 0
      %1523 = vmatpush1.bf16.msra.mxu0 0
      %1524 = vmatprep.subr.bf16.mxu0 0
      %1525 = vmatpush1.bf16.msra.mxu0 0
      %1526 = vmatprep.subr.bf16.mxu0 0
      %1527 = vmatpush1.bf16.msra.mxu0 0
      %1528 = vmatprep.subr.bf16.mxu0 0
      %1529 = vmatpush1.bf16.msra.mxu0 0
      %1530 = vmatprep.mubr.bf16.mxu0 0
      %1531 = vmatmul.mubr.bf16.gmra.mrb[0].mxu0 %v1433
      %v1532 = vpop.f32.mrb[0].mxu0
      %v1533 = vadd.f32 0.0, %v1532
      %v1534 = vpop.f32.mrb[0].mxu0
      %v1535 = vpop.f32.mrb[0].mxu0
      %v1536 = vpop.f32.mrb[0].mxu0
      %1537 = vdwg.mxu0
      %v1554 = vunpack.c.l.b16 %v1314
      %v1555 = vunpack.c.l.b16 %v1315
      %v1556 = vunpack.c.l.b16 %v1316
      %v1557 = vunpack.c.l.b16 %v1317
      %v1558 = vunpack.c.l.b16 %v1318
      %v1559 = vunpack.c.l.b16 %v1319
      %v1560 = vunpack.c.l.b16 %v1320
      %v1561 = vunpack.c.l.b16 %v1321
      %v1562 = vunpack.c.l.b16 %v1322
      %v1563 = vunpack.c.l.b16 %v1323
      %v1564 = vunpack.c.l.b16 %v1324
      %v1565 = vunpack.c.l.b16 %v1325
      %v1566 = vunpack.c.l.b16 %v1326
      %v1567 = vunpack.c.l.b16 %v1327
      %v1568 = vunpack.c.l.b16 %v1328
      %v1569 = vunpack.c.l.b16 %v1329
      %v1570 = vpack.c.b16 %v1555, %v1554
      %v1571 = vpack.c.b16 %v1557, %v1556
      %v1572 = vpack.c.b16 %v1559, %v1558
      %v1573 = vpack.c.b16 %v1561, %v1560
      %v1574 = vpack.c.b16 %v1563, %v1562
      %v1575 = vpack.c.b16 %v1565, %v1564
      %v1576 = vpack.c.b16 %v1567, %v1566
      %v1577 = vpack.c.b16 %v1569, %v1568
      %1586 = vmatprep.subr.bf16.mxu0 0
      %1587 = vmatpush1.bf16.msra.mxu0 %v1570
      %1588 = vmatprep.subr.bf16.mxu0 0
      %1589 = vmatpush1.bf16.msra.mxu0 %v1571
      %1590 = vmatprep.subr.bf16.mxu0 0
      %1591 = vmatpush1.bf16.msra.mxu0 %v1572
      %1592 = vmatprep.subr.bf16.mxu0 0
      %1593 = vmatpush1.bf16.msra.mxu0 %v1573
      %1594 = vmatprep.subr.bf16.mxu0 0
      %1595 = vmatpush1.bf16.msra.mxu0 %v1574
      %1596 = vmatprep.subr.bf16.mxu0 0
      %1597 = vmatpush1.bf16.msra.mxu0 %v1575
      %1598 = vmatprep.subr.bf16.mxu0 0
      %1599 = vmatpush1.bf16.msra.mxu0 %v1576
      %1600 = vmatprep.subr.bf16.mxu0 0
      %1601 = vmatpush1.bf16.msra.mxu0 %v1577
      %1602 = vmatprep.subr.bf16.mxu0 0
      %1603 = vmatpush1.bf16.msra.mxu0 0
      %1604 = vmatprep.subr.bf16.mxu0 0
      %1605 = vmatpush1.bf16.msra.mxu0 0
      %1606 = vmatprep.subr.bf16.mxu0 0
      %1607 = vmatpush1.bf16.msra.mxu0 0
      %1608 = vmatprep.subr.bf16.mxu0 0
      %1609 = vmatpush1.bf16.msra.mxu0 0
      %1610 = vmatprep.subr.bf16.mxu0 0
      %1611 = vmatpush1.bf16.msra.mxu0 0
      %1612 = vmatprep.subr.bf16.mxu0 0
      %1613 = vmatpush1.bf16.msra.mxu0 0
      %1614 = vmatprep.subr.bf16.mxu0 0
      %1615 = vmatpush1.bf16.msra.mxu0 0
      %1616 = vmatprep.subr.bf16.mxu0 0
      %1617 = vmatpush1.bf16.msra.mxu0 0
      %1618 = vmatprep.mubr.bf16.mxu0 0
      %1619 = vmatmul.mubr.bf16.gmra.mrb[0].mxu0 %v1313
      %v1620 = vpop.f32.mrb[0].mxu0
      %v1621 = vadd.f32 %v1533, %v1620
      %v1622 = vpop.f32.mrb[0].mxu0
      %v1623 = vpop.f32.mrb[0].mxu0
      %v1624 = vpop.f32.mrb[0].mxu0
      %1625 = vdwg.mxu0
      %v1626 = vpack.c.bf16 %v1036, %v1036
      %v1627 = vpack.c.bf16 %v1118, %v1118
      %v1628 = vpack.c.bf16 %v1200, %v1200
      %1629 = vmatprep.subr.bf16.mxu0 0
      %1630 = vmatpush1.bf16.xpose.msra.mxu0 %v1627
      %1631 = vmatprep.subr.bf16.mxu0 0
      %1632 = vmatpush1.bf16.xpose.msra.mxu0 0
      %1633 = vmatprep.subr.bf16.mxu0 0
      %1634 = vmatpush1.bf16.xpose.msra.mxu0 0
      %1635 = vmatprep.subr.bf16.mxu0 0
      %1636 = vmatpush1.bf16.xpose.msra.mxu0 0
      %1637 = vmatprep.subr.bf16.mxu0 0
      %1638 = vmatpush1.bf16.xpose.msra.mxu0 0
      %1639 = vmatprep.subr.bf16.mxu0 0
      %1640 = vmatpush1.bf16.xpose.msra.mxu0 0
      %1641 = vmatprep.subr.bf16.mxu0 0
      %1642 = vmatpush1.bf16.xpose.msra.mxu0 0
      %1643 = vmatprep.subr.bf16.mxu0 0
      %1644 = vmatpush1.bf16.xpose.msra.mxu0 0
      %1645 = vmatprep.subr.bf16.mxu0 0
      %1646 = vmatpush1.bf16.xpose.msra.mxu0 0
      %1647 = vmatprep.subr.bf16.mxu0 0
      %1648 = vmatpush1.bf16.xpose.msra.mxu0 0
      %1649 = vmatprep.subr.bf16.mxu0 0
      %1650 = vmatpush1.bf16.xpose.msra.mxu0 0
      %1651 = vmatprep.subr.bf16.mxu0 0
      %1652 = vmatpush1.bf16.xpose.msra.mxu0 0
      %1653 = vmatprep.subr.bf16.mxu0 0
      %1654 = vmatpush1.bf16.xpose.msra.mxu0 0
      %1655 = vmatprep.subr.bf16.mxu0 0
      %1656 = vmatpush1.bf16.xpose.msra.mxu0 0
      %1657 = vmatprep.subr.bf16.mxu0 0
      %1658 = vmatpush1.bf16.xpose.msra.mxu0 0
      %1659 = vmatprep.subr.bf16.mxu0 0
      %1660 = vmatpush1.bf16.xpose.msra.mxu0 0
      %1661 = vmatprep.mubr.bf16.mxu0 0
      %1662 = vmatmul.mubr.bf16.gmra.mrb[0].mxu0 %v1626
      %v1663 = vpop.f32.mrb[0].mxu0
      %v1664 = vadd.f32 0.0, %v1663
      %v1665 = vpop.f32.mrb[0].mxu0
      %v1666 = vpop.f32.mrb[0].mxu0
      %v1667 = vpop.f32.mrb[0].mxu0
      %1668 = vdwg.mxu0
      %v1669 = vmul.f32 %v1664, 0.35355338
      %v1670 = vsel %vm1207, -1e+09, %v1669
      %v1671 = vsel %vm1253, %v1670, -inf
      %1672 = vmax.xlane.f32.xlu0 %v1671
      %v1673 = vpop.xlane.xlu0 %1672
      %v1674 = vsub.f32 %v1670, %v1673
      %v1675 = vmul.f32 %v1674, 1.442695
      %v1676 = vpow.pop %v1675
      %v1677 = vsel %vm1253, %v1676, 0.0
      %1678 = vadd.xlane.f32.xlu0 %v1677
      %v1679 = vpop.xlane.xlu0 %1678
      %v1680 = vrcp.pop %v1679
      %v1681 = vmul.f32 %v1676, %v1680
      %v1682 = vpack.c.bf16 %v1681, %v1681
      %v1684 = vsel %vm1253, %v1682, 0
      %v1687 = vsel %vm1269, %v1628, 0
      %1689 = vmatprep.subr.bf16.mxu0 0
      %1690 = vmatpush1.bf16.msra.mxu0 %v1687
      %1691 = vmatprep.subr.bf16.mxu0 0
      %1692 = vmatpush1.bf16.msra.mxu0 0
      %1693 = vmatprep.subr.bf16.mxu0 0
      %1694 = vmatpush1.bf16.msra.mxu0 0
      %1695 = vmatprep.subr.bf16.mxu0 0
      %1696 = vmatpush1.bf16.msra.mxu0 0
      %1697 = vmatprep.subr.bf16.mxu0 0
      %1698 = vmatpush1.bf16.msra.mxu0 0
      %1699 = vmatprep.subr.bf16.mxu0 0
      %1700 = vmatpush1.bf16.msra.mxu0 0
      %1701 = vmatprep.subr.bf16.mxu0 0
      %1702 = vmatpush1.bf16.msra.mxu0 0
      %1703 = vmatprep.subr.bf16.mxu0 0
      %1704 = vmatpush1.bf16.msra.mxu0 0
      %1705 = vmatprep.subr.bf16.mxu0 0
      %1706 = vmatpush1.bf16.msra.mxu0 0
      %1707 = vmatprep.subr.bf16.mxu0 0
      %1708 = vmatpush1.bf16.msra.mxu0 0
      %1709 = vmatprep.subr.bf16.mxu0 0
      %1710 = vmatpush1.bf16.msra.mxu0 0
      %1711 = vmatprep.subr.bf16.mxu0 0
      %1712 = vmatpush1.bf16.msra.mxu0 0
      %1713 = vmatprep.subr.bf16.mxu0 0
      %1714 = vmatpush1.bf16.msra.mxu0 0
      %1715 = vmatprep.subr.bf16.mxu0 0
      %1716 = vmatpush1.bf16.msra.mxu0 0
      %1717 = vmatprep.subr.bf16.mxu0 0
      %1718 = vmatpush1.bf16.msra.mxu0 0
      %1719 = vmatprep.subr.bf16.mxu0 0
      %1720 = vmatpush1.bf16.msra.mxu0 0
      %1721 = vmatprep.mubr.bf16.mxu0 0
      %1722 = vmatmul.mubr.bf16.gmra.mrb[0].mxu0 %v1684
      %v1723 = vpop.f32.mrb[0].mxu0
      %v1724 = vadd.f32 0.0, %v1723
      %v1725 = vpop.f32.mrb[0].mxu0
      %v1726 = vpop.f32.mrb[0].mxu0
      %v1727 = vpop.f32.mrb[0].mxu0
      %1728 = vdwg.mxu0
      %v1729 = vpack.c.bf16 %v1724, %v1724
      %v1730 = vld [vmem:[%s4 + $0x80] sm:$0xf]
      %v1731 = vld [vmem:[%s4 + $0x84] sm:$0xf]
      %v1732 = vld [vmem:[%s4 + $0x88] sm:$0xf]
      %v1733 = vld [vmem:[%s4 + $0x8c] sm:$0xf]
      %v1734 = vld [vmem:[%s4 + $0x90] sm:$0xf]
      %v1735 = vld [vmem:[%s4 + $0x94] sm:$0xf]
      %v1736 = vld [vmem:[%s4 + $0x98] sm:$0xf]
      %v1737 = vld [vmem:[%s4 + $0x9c] sm:$0xf]
      %v1738 = vld [vmem:[%s4 + $0xa0] sm:$0xf]
      %v1739 = vld [vmem:[%s4 + $0xa4] sm:$0xf]
      %v1740 = vld [vmem:[%s4 + $0xa8] sm:$0xf]
      %v1741 = vld [vmem:[%s4 + $0xac] sm:$0xf]
      %v1742 = vld [vmem:[%s4 + $0xb0] sm:$0xf]
      %v1743 = vld [vmem:[%s4 + $0xb4] sm:$0xf]
      %v1744 = vld [vmem:[%s4 + $0xb8] sm:$0xf]
      %v1745 = vld [vmem:[%s4 + $0xbc] sm:$0xf]
      %v1762 = vunpack.c.l.b16 %v1730
      %v1763 = vunpack.c.l.b16 %v1731
      %v1764 = vunpack.c.l.b16 %v1732
      %v1765 = vunpack.c.l.b16 %v1733
      %v1766 = vunpack.c.l.b16 %v1734
      %v1767 = vunpack.c.l.b16 %v1735
      %v1768 = vunpack.c.l.b16 %v1736
      %v1769 = vunpack.c.l.b16 %v1737
      %v1770 = vunpack.c.l.b16 %v1738
      %v1771 = vunpack.c.l.b16 %v1739
      %v1772 = vunpack.c.l.b16 %v1740
      %v1773 = vunpack.c.l.b16 %v1741
      %v1774 = vunpack.c.l.b16 %v1742
      %v1775 = vunpack.c.l.b16 %v1743
      %v1776 = vunpack.c.l.b16 %v1744
      %v1777 = vunpack.c.l.b16 %v1745
      %v1778 = vpack.c.b16 %v1763, %v1762
      %v1779 = vpack.c.b16 %v1765, %v1764
      %v1780 = vpack.c.b16 %v1767, %v1766
      %v1781 = vpack.c.b16 %v1769, %v1768
      %v1782 = vpack.c.b16 %v1771, %v1770
      %v1783 = vpack.c.b16 %v1773, %v1772
      %v1784 = vpack.c.b16 %v1775, %v1774
      %v1785 = vpack.c.b16 %v1777, %v1776
      %1794 = vmatprep.subr.bf16.mxu0 0
      %1795 = vmatpush1.bf16.msra.mxu0 %v1778
      %1796 = vmatprep.subr.bf16.mxu0 0
      %1797 = vmatpush1.bf16.msra.mxu0 %v1779
      %1798 = vmatprep.subr.bf16.mxu0 0
      %1799 = vmatpush1.bf16.msra.mxu0 %v1780
      %1800 = vmatprep.subr.bf16.mxu0 0
      %1801 = vmatpush1.bf16.msra.mxu0 %v1781
      %1802 = vmatprep.subr.bf16.mxu0 0
      %1803 = vmatpush1.bf16.msra.mxu0 %v1782
      %1804 = vmatprep.subr.bf16.mxu0 0
      %1805 = vmatpush1.bf16.msra.mxu0 %v1783
      %1806 = vmatprep.subr.bf16.mxu0 0
      %1807 = vmatpush1.bf16.msra.mxu0 %v1784
      %1808 = vmatprep.subr.bf16.mxu0 0
      %1809 = vmatpush1.bf16.msra.mxu0 %v1785
      %1810 = vmatprep.subr.bf16.mxu0 0
      %1811 = vmatpush1.bf16.msra.mxu0 0
      %1812 = vmatprep.subr.bf16.mxu0 0
      %1813 = vmatpush1.bf16.msra.mxu0 0
      %1814 = vmatprep.subr.bf16.mxu0 0
      %1815 = vmatpush1.bf16.msra.mxu0 0
      %1816 = vmatprep.subr.bf16.mxu0 0
      %1817 = vmatpush1.bf16.msra.mxu0 0
      %1818 = vmatprep.subr.bf16.mxu0 0
      %1819 = vmatpush1.bf16.msra.mxu0 0
      %1820 = vmatprep.subr.bf16.mxu0 0
      %1821 = vmatpush1.bf16.msra.mxu0 0
      %1822 = vmatprep.subr.bf16.mxu0 0
      %1823 = vmatpush1.bf16.msra.mxu0 0
      %1824 = vmatprep.subr.bf16.mxu0 0
      %1825 = vmatpush1.bf16.msra.mxu0 0
      %1826 = vmatprep.mubr.bf16.mxu0 0
      %1827 = vmatmul.mubr.bf16.gmra.mrb[0].mxu0 %v1729
      %v1828 = vpop.f32.mrb[0].mxu0
      %v1829 = vadd.f32 0.0, %v1828
      %v1830 = vpop.f32.mrb[0].mxu0
      %v1831 = vpop.f32.mrb[0].mxu0
      %v1832 = vpop.f32.mrb[0].mxu0
      %1833 = vdwg.mxu0
      %v1834 = vadd.f32 %v1621, %v1829
      %v1835 = vpack.c.bf16 %v1038, %v1038
      %v1836 = vpack.c.bf16 %v1120, %v1120
      %v1837 = vpack.c.bf16 %v1202, %v1202
      %1838 = vmatprep.subr.bf16.mxu0 0
      %1839 = vmatpush1.bf16.xpose.msra.mxu0 %v1836
      %1840 = vmatprep.subr.bf16.mxu0 0
      %1841 = vmatpush1.bf16.xpose.msra.mxu0 0
      %1842 = vmatprep.subr.bf16.mxu0 0
      %1843 = vmatpush1.bf16.xpose.msra.mxu0 0
      %1844 = vmatprep.subr.bf16.mxu0 0
      %1845 = vmatpush1.bf16.xpose.msra.mxu0 0
      %1846 = vmatprep.subr.bf16.mxu0 0
      %1847 = vmatpush1.bf16.xpose.msra.mxu0 0
      %1848 = vmatprep.subr.bf16.mxu0 0
      %1849 = vmatpush1.bf16.xpose.msra.mxu0 0
      %1850 = vmatprep.subr.bf16.mxu0 0
      %1851 = vmatpush1.bf16.xpose.msra.mxu0 0
      %1852 = vmatprep.subr.bf16.mxu0 0
      %1853 = vmatpush1.bf16.xpose.msra.mxu0 0
      %1854 = vmatprep.subr.bf16.mxu0 0
      %1855 = vmatpush1.bf16.xpose.msra.mxu0 0
      %1856 = vmatprep.subr.bf16.mxu0 0
      %1857 = vmatpush1.bf16.xpose.msra.mxu0 0
      %1858 = vmatprep.subr.bf16.mxu0 0
      %1859 = vmatpush1.bf16.xpose.msra.mxu0 0
      %1860 = vmatprep.subr.bf16.mxu0 0
      %1861 = vmatpush1.bf16.xpose.msra.mxu0 0
      %1862 = vmatprep.subr.bf16.mxu0 0
      %1863 = vmatpush1.bf16.xpose.msra.mxu0 0
      %1864 = vmatprep.subr.bf16.mxu0 0
      %1865 = vmatpush1.bf16.xpose.msra.mxu0 0
      %1866 = vmatprep.subr.bf16.mxu0 0
      %1867 = vmatpush1.bf16.xpose.msra.mxu0 0
      %1868 = vmatprep.subr.bf16.mxu0 0
      %1869 = vmatpush1.bf16.xpose.msra.mxu0 0
      %1870 = vmatprep.mubr.bf16.mxu0 0
      %1871 = vmatmul.mubr.bf16.gmra.mrb[0].mxu0 %v1835
      %v1872 = vpop.f32.mrb[0].mxu0
      %v1873 = vadd.f32 0.0, %v1872
      %v1874 = vpop.f32.mrb[0].mxu0
      %v1875 = vpop.f32.mrb[0].mxu0
      %v1876 = vpop.f32.mrb[0].mxu0
      %1877 = vdwg.mxu0
      %v1878 = vmul.f32 %v1873, 0.35355338
      %v1879 = vsel %vm1207, -1e+09, %v1878
      %v1880 = vsel %vm1253, %v1879, -inf
      %1881 = vmax.xlane.f32.xlu0 %v1880
      %v1882 = vpop.xlane.xlu0 %1881
      %v1883 = vsub.f32 %v1879, %v1882
      %v1884 = vmul.f32 %v1883, 1.442695
      %v1885 = vpow.pop %v1884
      %v1886 = vsel %vm1253, %v1885, 0.0
      %1887 = vadd.xlane.f32.xlu0 %v1886
      %v1888 = vpop.xlane.xlu0 %1887
      %v1889 = vrcp.pop %v1888
      %v1890 = vmul.f32 %v1885, %v1889
      %v1891 = vpack.c.bf16 %v1890, %v1890
      %v1893 = vsel %vm1253, %v1891, 0
      %v1896 = vsel %vm1269, %v1837, 0
      %1898 = vmatprep.subr.bf16.mxu0 0
      %1899 = vmatpush1.bf16.msra.mxu0 %v1896
      %1900 = vmatprep.subr.bf16.mxu0 0
      %1901 = vmatpush1.bf16.msra.mxu0 0
      %1902 = vmatprep.subr.bf16.mxu0 0
      %1903 = vmatpush1.bf16.msra.mxu0 0
      %1904 = vmatprep.subr.bf16.mxu0 0
      %1905 = vmatpush1.bf16.msra.mxu0 0
      %1906 = vmatprep.subr.bf16.mxu0 0
      %1907 = vmatpush1.bf16.msra.mxu0 0
      %1908 = vmatprep.subr.bf16.mxu0 0
      %1909 = vmatpush1.bf16.msra.mxu0 0
      %1910 = vmatprep.subr.bf16.mxu0 0
      %1911 = vmatpush1.bf16.msra.mxu0 0
      %1912 = vmatprep.subr.bf16.mxu0 0
      %1913 = vmatpush1.bf16.msra.mxu0 0
      %1914 = vmatprep.subr.bf16.mxu0 0
      %1915 = vmatpush1.bf16.msra.mxu0 0
      %1916 = vmatprep.subr.bf16.mxu0 0
      %1917 = vmatpush1.bf16.msra.mxu0 0
      %1918 = vmatprep.subr.bf16.mxu0 0
      %1919 = vmatpush1.bf16.msra.mxu0 0
      %1920 = vmatprep.subr.bf16.mxu0 0
      %1921 = vmatpush1.bf16.msra.mxu0 0
      %1922 = vmatprep.subr.bf16.mxu0 0
      %1923 = vmatpush1.bf16.msra.mxu0 0
      %1924 = vmatprep.subr.bf16.mxu0 0
      %1925 = vmatpush1.bf16.msra.mxu0 0
      %1926 = vmatprep.subr.bf16.mxu0 0
      %1927 = vmatpush1.bf16.msra.mxu0 0
      %1928 = vmatprep.subr.bf16.mxu0 0
      %1929 = vmatpush1.bf16.msra.mxu0 0
      %1930 = vmatprep.mubr.bf16.mxu0 0
      %1931 = vmatmul.mubr.bf16.gmra.mrb[0].mxu0 %v1893
      %v1932 = vpop.f32.mrb[0].mxu0
      %v1933 = vadd.f32 0.0, %v1932
      %v1934 = vpop.f32.mrb[0].mxu0
      %v1935 = vpop.f32.mrb[0].mxu0
      %v1936 = vpop.f32.mrb[0].mxu0
      %1937 = vdwg.mxu0
      %v1938 = vpack.c.bf16 %v1933, %v1933
      %v1939 = vld [vmem:[%s4 + $0xc0] sm:$0xf]
      %v1940 = vld [vmem:[%s4 + $0xc4] sm:$0xf]
      %v1941 = vld [vmem:[%s4 + $0xc8] sm:$0xf]
      %v1942 = vld [vmem:[%s4 + $0xcc] sm:$0xf]
      %v1943 = vld [vmem:[%s4 + $0xd0] sm:$0xf]
      %v1944 = vld [vmem:[%s4 + $0xd4] sm:$0xf]
      %v1945 = vld [vmem:[%s4 + $0xd8] sm:$0xf]
      %v1946 = vld [vmem:[%s4 + $0xdc] sm:$0xf]
      %v1947 = vld [vmem:[%s4 + $0xe0] sm:$0xf]
      %v1948 = vld [vmem:[%s4 + $0xe4] sm:$0xf]
      %v1949 = vld [vmem:[%s4 + $0xe8] sm:$0xf]
      %v1950 = vld [vmem:[%s4 + $0xec] sm:$0xf]
      %v1951 = vld [vmem:[%s4 + $0xf0] sm:$0xf]
      %v1952 = vld [vmem:[%s4 + $0xf4] sm:$0xf]
      %v1953 = vld [vmem:[%s4 + $0xf8] sm:$0xf]
      %v1954 = vld [vmem:[%s4 + $0xfc] sm:$0xf]
      %v1971 = vunpack.c.l.b16 %v1939
      %v1972 = vunpack.c.l.b16 %v1940
      %v1973 = vunpack.c.l.b16 %v1941
      %v1974 = vunpack.c.l.b16 %v1942
      %v1975 = vunpack.c.l.b16 %v1943
      %v1976 = vunpack.c.l.b16 %v1944
      %v1977 = vunpack.c.l.b16 %v1945
      %v1978 = vunpack.c.l.b16 %v1946
      %v1979 = vunpack.c.l.b16 %v1947
      %v1980 = vunpack.c.l.b16 %v1948
      %v1981 = vunpack.c.l.b16 %v1949
      %v1982 = vunpack.c.l.b16 %v1950
      %v1983 = vunpack.c.l.b16 %v1951
      %v1984 = vunpack.c.l.b16 %v1952
      %v1985 = vunpack.c.l.b16 %v1953
      %v1986 = vunpack.c.l.b16 %v1954
      %v1987 = vpack.c.b16 %v1972, %v1971
      %v1988 = vpack.c.b16 %v1974, %v1973
      %v1989 = vpack.c.b16 %v1976, %v1975
      %v1990 = vpack.c.b16 %v1978, %v1977
      %v1991 = vpack.c.b16 %v1980, %v1979
      %v1992 = vpack.c.b16 %v1982, %v1981
      %v1993 = vpack.c.b16 %v1984, %v1983
      %v1994 = vpack.c.b16 %v1986, %v1985
      %2003 = vmatprep.subr.bf16.mxu0 0
      %2004 = vmatpush1.bf16.msra.mxu0 %v1987
      %2005 = vmatprep.subr.bf16.mxu0 0
      %2006 = vmatpush1.bf16.msra.mxu0 %v1988
      %2007 = vmatprep.subr.bf16.mxu0 0
      %2008 = vmatpush1.bf16.msra.mxu0 %v1989
      %2009 = vmatprep.subr.bf16.mxu0 0
      %2010 = vmatpush1.bf16.msra.mxu0 %v1990
      %2011 = vmatprep.subr.bf16.mxu0 0
      %2012 = vmatpush1.bf16.msra.mxu0 %v1991
      %2013 = vmatprep.subr.bf16.mxu0 0
      %2014 = vmatpush1.bf16.msra.mxu0 %v1992
      %2015 = vmatprep.subr.bf16.mxu0 0
      %2016 = vmatpush1.bf16.msra.mxu0 %v1993
      %2017 = vmatprep.subr.bf16.mxu0 0
      %2018 = vmatpush1.bf16.msra.mxu0 %v1994
      %2019 = vmatprep.subr.bf16.mxu0 0
      %2020 = vmatpush1.bf16.msra.mxu0 0
      %2021 = vmatprep.subr.bf16.mxu0 0
      %2022 = vmatpush1.bf16.msra.mxu0 0
      %2023 = vmatprep.subr.bf16.mxu0 0
      %2024 = vmatpush1.bf16.msra.mxu0 0
      %2025 = vmatprep.subr.bf16.mxu0 0
      %2026 = vmatpush1.bf16.msra.mxu0 0
      %2027 = vmatprep.subr.bf16.mxu0 0
      %2028 = vmatpush1.bf16.msra.mxu0 0
      %2029 = vmatprep.subr.bf16.mxu0 0
      %2030 = vmatpush1.bf16.msra.mxu0 0
      %2031 = vmatprep.subr.bf16.mxu0 0
      %2032 = vmatpush1.bf16.msra.mxu0 0
      %2033 = vmatprep.subr.bf16.mxu0 0
      %2034 = vmatpush1.bf16.msra.mxu0 0
      %2035 = vmatprep.mubr.bf16.mxu0 0
      %2036 = vmatmul.mubr.bf16.gmra.mrb[0].mxu0 %v1938
      %v2037 = vpop.f32.mrb[0].mxu0
      %v2038 = vadd.f32 0.0, %v2037
      %v2039 = vpop.f32.mrb[0].mxu0
      %v2040 = vpop.f32.mrb[0].mxu0
      %v2041 = vpop.f32.mrb[0].mxu0
      %2042 = vdwg.mxu0
      %v2043 = vadd.f32 %v1834, %v2038
      %v2044 = vld [vmem:[%s5] sm:$0x1]
      %v2046 = vlaneseq
      %v2047 = vshrl.u32 %v2046, 7
      %v2048 = vsub.s32 0, %v2047
      %v2049 = vrot.slane %v2044, %v2048
      %v2051 = vadd.f32 %v2043, %v2049
      %v2052 = vunpack.c.l.bf16 %v319
      %v2053 = vadd.f32 %v2051, %v2052
      %v2054 = vld [vmem:[%s6] sm:$0x1]
      %v2055 = vld [vmem:[%s7] sm:$0x1]
      %2056 = vadd.xlane.f32.xlu0 %v2053
      %v2057 = vpop.xlane.xlu0 %2056
      %v2058 = vmul.f32 %v2057, 0.03125
      %v2059 = vmul.f32 %v2053, %v2053
      %2060 = vadd.xlane.f32.xlu0 %v2059
      %v2061 = vpop.xlane.xlu0 %2060
      %v2062 = vmul.f32 %v2061, 0.03125
      %v2063 = vmul.f32 %v2058, %v2058
      %v2064 = vsub.f32 %v2062, %v2063
      %v2065 = vmax.f32 %v2064, 0.0
      %v2066 = vsub.f32 %v2053, %v2058
      %v2067 = vadd.f32 %v2065, 1e-05
      %v2068 = vrsqrt.pop %v2067
      %v2069 = vmul.f32 %v2066, %v2068
      %v2071 = vlaneseq
      %v2072 = vshrl.u32 %v2071, 7
      %v2073 = vsub.s32 0, %v2072
      %v2074 = vrot.slane %v2054, %v2073
      %v2076 = vmul.f32 %v2069, %v2074
      %v2078 = vlaneseq
      %v2079 = vshrl.u32 %v2078, 7
      %v2080 = vsub.s32 0, %v2079
      %v2081 = vrot.slane %v2055, %v2080
      %v2083 = vadd.f32 %v2076, %v2081
      %v2084 = vpack.c.bf16 %v2083, %v2083
      %2085 = vst [vmem:[%s317] sm:$0xf] %v2084
      %p2086 = scmp.lt.s32.totalorder %s19, 1
      %s2087 = scalar_select %p2086, %s19, 1
      %s2088 = smul.addr %s2087, 4
      %s2089 = scalar_lea.vmem %s8, %s2088
      // Predicated region
      $region53: #{transformer_forward.15} parent=51 // pred_check
        %p2090 = pneg %p215
      $region54: #{transformer_forward.15} parent=51 // pred_check_branch
        %2092 = sbr.rel (%p2090) target = $region56
      $region55: #{transformer_forward.15} parent=51 // pred_region
        _
      $region56: #{transformer_forward.15} parent=51 // pred_fallthru
        _
    $region52: #{transformer_forward.15} parent=5 // pred_fallthru
      _
    %p2093 = scmp.le.s32.totalorder 2, %s14
    // Predicated region
    $region57: #{transformer_forward.15} parent=5 // pred_check
      %p2094 = pneg %p2093
    $region58: #{transformer_forward.15} parent=5 // pred_check_branch
      %2096 = sbr.rel (%p2094) target = $region60
    $region59: #{transformer_forward.15} parent=5 // pred_region
      %s2097 = ssub.s32 %s14, 2
      // Predicated region
      $region61: #{transformer_forward.15} parent=59 // pred_check
        %p2098 = pneg %p221
      $region62: #{transformer_forward.15} parent=59 // pred_check_branch
        %2100 = sbr.rel (%p2098) target = $region64
      $region63: #{transformer_forward.15} parent=59 // pred_region
        %p2101 = scmp.lt.s32.totalorder %s20, 1
        %s2102 = scalar_select %p2101, %s20, 1
        %s2103 = smul.addr %s2102, 4
        %s2104 = scalar_lea.vmem %s8, %s2103
      $region64: #{transformer_forward.15} parent=59 // pred_fallthru
        _
    $region60: #{transformer_forward.15} parent=5 // pred_fallthru
      _
  $region6: #{transformer_forward.15} parent=0 // loop_footer
    %s18 = sadd.s32 1, %s14
  $region7: #{transformer_forward.15} parent=0 // loop_footer_branch
    %13 = sbr.rel target = $region3
  $region8: #{transformer_forward.15} parent=0 // loop_exit
    _

// kernel: transformer_forward.19
$region0: #{transformer_forward.19}
  #allocation0 [shape = 'u32[]', space=smem, size = 0x4, offset = 0x4, fixed_abs, tag = 'smem constant byte address 0x4 - core index']
  #allocation1 [shape = 'u32[144,128]{1,0:T(1,128)}', space=vmem, size = 0x12000, scoped, tag = 'internal scratch']
  %s0 = inlined_call_operand.vmem [shape: bf16[2,8,128], index: 0, kind: input, shape index: {}]
  %s1 = inlined_call_operand.vmem [shape: bf16[2,8,128], index: 1, kind: input, shape index: {}]
  %s2 = inlined_call_operand.vmem [shape: s32[2,8,8], index: 2, kind: input, shape index: {}]
  %s3 = inlined_call_operand.vmem [shape: bf16[128,512], index: 3, kind: input, shape index: {}]
  %s4 = inlined_call_operand.vmem [shape: f32[1,512], index: 4, kind: input, shape index: {}]
  %s5 = inlined_call_operand.vmem [shape: bf16[128,1024], index: 5, kind: input, shape index: {}]
  %s6 = inlined_call_operand.vmem [shape: f32[1,1024], index: 6, kind: input, shape index: {}]
  %s7 = inlined_call_operand.vmem [shape: bf16[512,128], index: 7, kind: input, shape index: {}]
  %s8 = inlined_call_operand.vmem [shape: f32[1,128], index: 8, kind: input, shape index: {}]
  %s9 = inlined_call_operand.vmem [shape: f32[1,128], index: 9, kind: input, shape index: {}]
  %s10 = inlined_call_operand.vmem [shape: f32[1,128], index: 10, kind: input, shape index: {}]
  %s11 = inlined_call_operand.vmem [shape: bf16[2,8,128], index: 11, kind: output, shape index: {}]
  %s12 = sld [smem:[#allocation0]]
  $region77: #{transformer_forward.19} parent=0
    _
  %s14 = ssub.s32 1, %s12
  %s15 = scalar_select 0, %s14, %s12
  loop: start=0, step=1, limit=4
  $region2: #{transformer_forward.19} parent=0 // loop_pre_header
    _
  $region3: #{transformer_forward.19} parent=0 // loop_header
    %s17 = sphi 0, %s21
    %p18 = scmp.ge.s32.totalorder %s17, 4
    %s27 = sphi 0, %s29
    %s30 = sphi 0, %s27
    %s31 = sphi 0, %s30
    %s47 = sphi 0, %s31
    %s53 = sphi 0, %s55
    %s56 = sphi 0, %s53
    %s57 = sphi 0, %s56
    %s73 = sphi 0, %s57
    %s79 = sphi 0, %s81
    %s82 = sphi 0, %s79
    %s83 = sphi 0, %s82
    %s99 = sphi 0, %s83
    %s103 = sphi 0, %s103
    %s105 = sphi 0, %s103
    %s106 = sphi 0, %s105
    %s120 = sphi 0, %s106
    %s124 = sphi 0, %s124
    %s126 = sphi 0, %s124
    %s127 = sphi 0, %s126
    %s141 = sphi 0, %s127
    %s145 = sphi 0, %s145
    %s147 = sphi 0, %s145
    %s148 = sphi 0, %s147
    %s162 = sphi 0, %s148
    %s166 = sphi 0, %s166
    %s168 = sphi 0, %s166
    %s169 = sphi 0, %s168
    %s183 = sphi 0, %s169
    %s187 = sphi 0, %s187
    %s189 = sphi 0, %s187
    %s190 = sphi 0, %s189
    %s204 = sphi 0, %s190
    %s208 = sphi 0, %s208
    %s210 = sphi 0, %s208
    %s211 = sphi 0, %s210
    %s225 = sphi 0, %s211
    %s229 = sphi 0, %s229
    %s231 = sphi 0, %s229
    %s232 = sphi 0, %s231
    %s246 = sphi 0, %s232
    %s250 = sphi 0, %s250
    %s252 = sphi 0, %s250
    %s253 = sphi 0, %s252
    %s267 = sphi 0, %s253
    %s273 = sphi 0, %s275
    %s276 = sphi 0, %s273
    %s277 = sphi 0, %s276
    %s293 = sphi 0, %s277
  $region4: #{transformer_forward.19} parent=0 // loop_header_branch
    %20 = sbr.rel (%p18) target = $region8
  $region5: #{transformer_forward.19} parent=0 // loop_body
    %s22 = ssub.s32 %s17, 1
    %s23 = ssub.s32 %s17, 2
    %s24 = sadd.s32 %s17, 1
    %s25 = ssub.s32 %s17, %s24
    %p26 = scmp.eq.s32.totalorder %s25, 0
    %s28 = sadd.s32 %s27, 1
    %s29 = scalar_select %p26, %s27, %s28
    %p32 = pneg %p26
    %p33 = scmp.eq.s32.totalorder %s17, 1
    %p34 = por %p32, %p33
    %p35 = scmp.ne.s32.totalorder %s27, %s30
    %p36 = scmp.eq.s32.totalorder %s17, 0
    %p37 = por %p35, %p36
    %p38 = scmp.ne.s32.totalorder %s27, %s30
    %p39 = scmp.eq.s32.totalorder %s22, 1
    %p40 = por %p38, %p39
    %p41 = scmp.ne.s32.totalorder %s30, %s31
    %p42 = scmp.eq.s32.totalorder %s22, 0
    %p43 = por %p41, %p42
    %p44 = scmp.ne.s32.totalorder %s30, %s31
    %p45 = scmp.eq.s32.totalorder %s23, 1
    %p46 = por %p44, %p45
    %p48 = scmp.ne.s32.totalorder %s31, %s47
    %p49 = scmp.eq.s32.totalorder %s23, 0
    %p50 = por %p48, %p49
    %s51 = ssub.s32 %s17, %s24
    %p52 = scmp.eq.s32.totalorder %s51, 0
    %s54 = sadd.s32 %s53, 1
    %s55 = scalar_select %p52, %s53, %s54
    %p58 = pneg %p52
    %p59 = scmp.eq.s32.totalorder %s17, 1
    %p60 = por %p58, %p59
    %p61 = scmp.ne.s32.totalorder %s53, %s56
    %p62 = scmp.eq.s32.totalorder %s17, 0
    %p63 = por %p61, %p62
    %p64 = scmp.ne.s32.totalorder %s53, %s56
    %p65 = scmp.eq.s32.totalorder %s22, 1
    %p66 = por %p64, %p65
    %p67 = scmp.ne.s32.totalorder %s56, %s57
    %p68 = scmp.eq.s32.totalorder %s22, 0
    %p69 = por %p67, %p68
    %p70 = scmp.ne.s32.totalorder %s56, %s57
    %p71 = scmp.eq.s32.totalorder %s23, 1
    %p72 = por %p70, %p71
    %p74 = scmp.ne.s32.totalorder %s57, %s73
    %p75 = scmp.eq.s32.totalorder %s23, 0
    %p76 = por %p74, %p75
    %s77 = ssub.s32 %s17, %s24
    %p78 = scmp.eq.s32.totalorder %s77, 0
    %s80 = sadd.s32 %s79, 1
    %s81 = scalar_select %p78, %s79, %s80
    %p84 = pneg %p78
    %p85 = scmp.eq.s32.totalorder %s17, 1
    %p86 = por %p84, %p85
    %p87 = scmp.ne.s32.totalorder %s79, %s82
    %p88 = scmp.eq.s32.totalorder %s17, 0
    %p89 = por %p87, %p88
    %p90 = scmp.ne.s32.totalorder %s79, %s82
    %p91 = scmp.eq.s32.totalorder %s22, 1
    %p92 = por %p90, %p91
    %p93 = scmp.ne.s32.totalorder %s82, %s83
    %p94 = scmp.eq.s32.totalorder %s22, 0
    %p95 = por %p93, %p94
    %p96 = scmp.ne.s32.totalorder %s82, %s83
    %p97 = scmp.eq.s32.totalorder %s23, 1
    %p98 = por %p96, %p97
    %p100 = scmp.ne.s32.totalorder %s83, %s99
    %p101 = scmp.eq.s32.totalorder %s23, 0
    %p102 = por %p100, %p101
    %s104 = sadd.s32 %s103, 1
    %p107 = scmp.eq.s32.totalorder %s17, 1
    %p108 = scmp.ne.s32.totalorder %s103, %s105
    %p109 = scmp.eq.s32.totalorder %s17, 0
    %p110 = por %p108, %p109
    %p111 = scmp.ne.s32.totalorder %s103, %s105
    %p112 = scmp.eq.s32.totalorder %s22, 1
    %p113 = por %p111, %p112
    %p114 = scmp.ne.s32.totalorder %s105, %s106
    %p115 = scmp.eq.s32.totalorder %s22, 0
    %p116 = por %p114, %p115
    %p117 = scmp.ne.s32.totalorder %s105, %s106
    %p118 = scmp.eq.s32.totalorder %s23, 1
    %p119 = por %p117, %p118
    %p121 = scmp.ne.s32.totalorder %s106, %s120
    %p122 = scmp.eq.s32.totalorder %s23, 0
    %p123 = por %p121, %p122
    %s125 = sadd.s32 %s124, 1
    %p128 = scmp.eq.s32.totalorder %s17, 1
    %p129 = scmp.ne.s32.totalorder %s124, %s126
    %p130 = scmp.eq.s32.totalorder %s17, 0
    %p131 = por %p129, %p130
    %p132 = scmp.ne.s32.totalorder %s124, %s126
    %p133 = scmp.eq.s32.totalorder %s22, 1
    %p134 = por %p132, %p133
    %p135 = scmp.ne.s32.totalorder %s126, %s127
    %p136 = scmp.eq.s32.totalorder %s22, 0
    %p137 = por %p135, %p136
    %p138 = scmp.ne.s32.totalorder %s126, %s127
    %p139 = scmp.eq.s32.totalorder %s23, 1
    %p140 = por %p138, %p139
    %p142 = scmp.ne.s32.totalorder %s127, %s141
    %p143 = scmp.eq.s32.totalorder %s23, 0
    %p144 = por %p142, %p143
    %s146 = sadd.s32 %s145, 1
    %p149 = scmp.eq.s32.totalorder %s17, 1
    %p150 = scmp.ne.s32.totalorder %s145, %s147
    %p151 = scmp.eq.s32.totalorder %s17, 0
    %p152 = por %p150, %p151
    %p153 = scmp.ne.s32.totalorder %s145, %s147
    %p154 = scmp.eq.s32.totalorder %s22, 1
    %p155 = por %p153, %p154
    %p156 = scmp.ne.s32.totalorder %s147, %s148
    %p157 = scmp.eq.s32.totalorder %s22, 0
    %p158 = por %p156, %p157
    %p159 = scmp.ne.s32.totalorder %s147, %s148
    %p160 = scmp.eq.s32.totalorder %s23, 1
    %p161 = por %p159, %p160
    %p163 = scmp.ne.s32.totalorder %s148, %s162
    %p164 = scmp.eq.s32.totalorder %s23, 0
    %p165 = por %p163, %p164
    %s167 = sadd.s32 %s166, 1
    %p170 = scmp.eq.s32.totalorder %s17, 1
    %p171 = scmp.ne.s32.totalorder %s166, %s168
    %p172 = scmp.eq.s32.totalorder %s17, 0
    %p173 = por %p171, %p172
    %p174 = scmp.ne.s32.totalorder %s166, %s168
    %p175 = scmp.eq.s32.totalorder %s22, 1
    %p176 = por %p174, %p175
    %p177 = scmp.ne.s32.totalorder %s168, %s169
    %p178 = scmp.eq.s32.totalorder %s22, 0
    %p179 = por %p177, %p178
    %p180 = scmp.ne.s32.totalorder %s168, %s169
    %p181 = scmp.eq.s32.totalorder %s23, 1
    %p182 = por %p180, %p181
    %p184 = scmp.ne.s32.totalorder %s169, %s183
    %p185 = scmp.eq.s32.totalorder %s23, 0
    %p186 = por %p184, %p185
    %s188 = sadd.s32 %s187, 1
    %p191 = scmp.eq.s32.totalorder %s17, 1
    %p192 = scmp.ne.s32.totalorder %s187, %s189
    %p193 = scmp.eq.s32.totalorder %s17, 0
    %p194 = por %p192, %p193
    %p195 = scmp.ne.s32.totalorder %s187, %s189
    %p196 = scmp.eq.s32.totalorder %s22, 1
    %p197 = por %p195, %p196
    %p198 = scmp.ne.s32.totalorder %s189, %s190
    %p199 = scmp.eq.s32.totalorder %s22, 0
    %p200 = por %p198, %p199
    %p201 = scmp.ne.s32.totalorder %s189, %s190
    %p202 = scmp.eq.s32.totalorder %s23, 1
    %p203 = por %p201, %p202
    %p205 = scmp.ne.s32.totalorder %s190, %s204
    %p206 = scmp.eq.s32.totalorder %s23, 0
    %p207 = por %p205, %p206
    %s209 = sadd.s32 %s208, 1
    %p212 = scmp.eq.s32.totalorder %s17, 1
    %p213 = scmp.ne.s32.totalorder %s208, %s210
    %p214 = scmp.eq.s32.totalorder %s17, 0
    %p215 = por %p213, %p214
    %p216 = scmp.ne.s32.totalorder %s208, %s210
    %p217 = scmp.eq.s32.totalorder %s22, 1
    %p218 = por %p216, %p217
    %p219 = scmp.ne.s32.totalorder %s210, %s211
    %p220 = scmp.eq.s32.totalorder %s22, 0
    %p221 = por %p219, %p220
    %p222 = scmp.ne.s32.totalorder %s210, %s211
    %p223 = scmp.eq.s32.totalorder %s23, 1
    %p224 = por %p222, %p223
    %p226 = scmp.ne.s32.totalorder %s211, %s225
    %p227 = scmp.eq.s32.totalorder %s23, 0
    %p228 = por %p226, %p227
    %s230 = sadd.s32 %s229, 1
    %p233 = scmp.eq.s32.totalorder %s17, 1
    %p234 = scmp.ne.s32.totalorder %s229, %s231
    %p235 = scmp.eq.s32.totalorder %s17, 0
    %p236 = por %p234, %p235
    %p237 = scmp.ne.s32.totalorder %s229, %s231
    %p238 = scmp.eq.s32.totalorder %s22, 1
    %p239 = por %p237, %p238
    %p240 = scmp.ne.s32.totalorder %s231, %s232
    %p241 = scmp.eq.s32.totalorder %s22, 0
    %p242 = por %p240, %p241
    %p243 = scmp.ne.s32.totalorder %s231, %s232
    %p244 = scmp.eq.s32.totalorder %s23, 1
    %p245 = por %p243, %p244
    %p247 = scmp.ne.s32.totalorder %s232, %s246
    %p248 = scmp.eq.s32.totalorder %s23, 0
    %p249 = por %p247, %p248
    %s251 = sadd.s32 %s250, 1
    %p254 = scmp.eq.s32.totalorder %s17, 1
    %p255 = scmp.ne.s32.totalorder %s250, %s252
    %p256 = scmp.eq.s32.totalorder %s17, 0
    %p257 = por %p255, %p256
    %p258 = scmp.ne.s32.totalorder %s250, %s252
    %p259 = scmp.eq.s32.totalorder %s22, 1
    %p260 = por %p258, %p259
    %p261 = scmp.ne.s32.totalorder %s252, %s253
    %p262 = scmp.eq.s32.totalorder %s22, 0
    %p263 = por %p261, %p262
    %p264 = scmp.ne.s32.totalorder %s252, %s253
    %p265 = scmp.eq.s32.totalorder %s23, 1
    %p266 = por %p264, %p265
    %p268 = scmp.ne.s32.totalorder %s253, %s267
    %p269 = scmp.eq.s32.totalorder %s23, 0
    %p270 = por %p268, %p269
    %s271 = ssub.s32 %s17, %s24
    %p272 = scmp.eq.s32.totalorder %s271, 0
    %s274 = sadd.s32 %s273, 1
    %s275 = scalar_select %p272, %s273, %s274
    %p278 = pneg %p272
    %p279 = scmp.eq.s32.totalorder %s17, 1
    %p280 = por %p278, %p279
    %p281 = scmp.ne.s32.totalorder %s273, %s276
    %p282 = scmp.eq.s32.totalorder %s17, 0
    %p283 = por %p281, %p282
    %p284 = scmp.ne.s32.totalorder %s273, %s276
    %p285 = scmp.eq.s32.totalorder %s22, 1
    %p286 = por %p284, %p285
    %p287 = scmp.ne.s32.totalorder %s276, %s277
    %p288 = scmp.eq.s32.totalorder %s22, 0
    %p289 = por %p287, %p288
    %p290 = scmp.ne.s32.totalorder %s276, %s277
    %p291 = scmp.eq.s32.totalorder %s23, 1
    %p292 = por %p290, %p291
    %p294 = scmp.ne.s32.totalorder %s277, %s293
    %p295 = scmp.eq.s32.totalorder %s23, 0
    %p296 = por %p294, %p295
    %p297 = scmp.le.s32.totalorder 1, %s17
    %p298 = scmp.lt.s32.totalorder %s17, 3
    %p299 = pnand %p297, %p298
    %p300 = pneg %p299
    // Predicated region
    $region9: #{transformer_forward.19} parent=5 // pred_check
      _
    $region10: #{transformer_forward.19} parent=5 // pred_check_branch
      %302 = sbr.rel (%p299) target = $region12
    $region11: #{transformer_forward.19} parent=5 // pred_region
      %s303 = ssub.s32 %s17, 1
      // Predicated region
      $region13: #{transformer_forward.19} parent=11 // pred_check
        %p304 = pneg %p116
      $region14: #{transformer_forward.19} parent=11 // pred_check_branch
        %306 = sbr.rel (%p304) target = $region16
      $region15: #{transformer_forward.19} parent=11 // pred_region
        _
      $region16: #{transformer_forward.19} parent=11 // pred_fallthru
        _
      // Predicated region
      $region17: #{transformer_forward.19} parent=11 // pred_check
        %p307 = pneg %p137
      $region18: #{transformer_forward.19} parent=11 // pred_check_branch
        %309 = sbr.rel (%p307) target = $region20
      $region19: #{transformer_forward.19} parent=11 // pred_region
        _
      $region20: #{transformer_forward.19} parent=11 // pred_fallthru
        _
      // Predicated region
      $region21: #{transformer_forward.19} parent=11 // pred_check
        %p310 = pneg %p158
      $region22: #{transformer_forward.19} parent=11 // pred_check_branch
        %312 = sbr.rel (%p310) target = $region24
      $region23: #{transformer_forward.19} parent=11 // pred_region
        _
      $region24: #{transformer_forward.19} parent=11 // pred_fallthru
        _
      // Predicated region
      $region25: #{transformer_forward.19} parent=11 // pred_check
        %p313 = pneg %p179
      $region26: #{transformer_forward.19} parent=11 // pred_check_branch
        %315 = sbr.rel (%p313) target = $region28
      $region27: #{transformer_forward.19} parent=11 // pred_region
        _
      $region28: #{transformer_forward.19} parent=11 // pred_fallthru
        _
      // Predicated region
      $region29: #{transformer_forward.19} parent=11 // pred_check
        %p316 = pneg %p200
      $region30: #{transformer_forward.19} parent=11 // pred_check_branch
        %318 = sbr.rel (%p316) target = $region32
      $region31: #{transformer_forward.19} parent=11 // pred_region
        _
      $region32: #{transformer_forward.19} parent=11 // pred_fallthru
        _
      // Predicated region
      $region33: #{transformer_forward.19} parent=11 // pred_check
        %p319 = pneg %p221
      $region34: #{transformer_forward.19} parent=11 // pred_check_branch
        %321 = sbr.rel (%p319) target = $region36
      $region35: #{transformer_forward.19} parent=11 // pred_region
        _
      $region36: #{transformer_forward.19} parent=11 // pred_fallthru
        _
      // Predicated region
      $region37: #{transformer_forward.19} parent=11 // pred_check
        %p322 = pneg %p242
      $region38: #{transformer_forward.19} parent=11 // pred_check_branch
        %324 = sbr.rel (%p322) target = $region40
      $region39: #{transformer_forward.19} parent=11 // pred_region
        _
      $region40: #{transformer_forward.19} parent=11 // pred_fallthru
        _
      // Predicated region
      $region41: #{transformer_forward.19} parent=11 // pred_check
        %p325 = pneg %p263
      $region42: #{transformer_forward.19} parent=11 // pred_check_branch
        %327 = sbr.rel (%p325) target = $region44
      $region43: #{transformer_forward.19} parent=11 // pred_region
        _
      $region44: #{transformer_forward.19} parent=11 // pred_fallthru
        _
    $region12: #{transformer_forward.19} parent=5 // pred_fallthru
      _
    %p328 = scmp.lt.s32.totalorder %s17, 2
    // Predicated region
    $region45: #{transformer_forward.19} parent=5 // pred_check
      %p329 = pneg %p328
    $region46: #{transformer_forward.19} parent=5 // pred_check_branch
      %331 = sbr.rel (%p329) target = $region48
    $region47: #{transformer_forward.19} parent=5 // pred_region
      // Predicated region
      $region49: #{transformer_forward.19} parent=47 // pred_check
        %p332 = pneg %p37
      $region50: #{transformer_forward.19} parent=47 // pred_check_branch
        %334 = sbr.rel (%p332) target = $region52
      $region51: #{transformer_forward.19} parent=47 // pred_region
        %p335 = scmp.lt.s32.totalorder %s17, 1
        %s336 = scalar_select %p335, %s17, 1
        %s337 = smul.addr %s336, 4
        %s338 = scalar_lea.vmem %s0, %s337
      $region52: #{transformer_forward.19} parent=47 // pred_fallthru
        _
      // Predicated region
      $region53: #{transformer_forward.19} parent=47 // pred_check
        %p339 = pneg %p63
      $region54: #{transformer_forward.19} parent=47 // pred_check_branch
        %341 = sbr.rel (%p339) target = $region56
      $region55: #{transformer_forward.19} parent=47 // pred_region
        %p342 = scmp.lt.s32.totalorder %s17, 1
        %s343 = scalar_select %p342, %s17, 1
        %s344 = smul.addr %s343, 4
        %s345 = scalar_lea.vmem %s1, %s344
      $region56: #{transformer_forward.19} parent=47 // pred_fallthru
        _
      // Predicated region
      $region57: #{transformer_forward.19} parent=47 // pred_check
        %p346 = pneg %p89
      $region58: #{transformer_forward.19} parent=47 // pred_check_branch
        %348 = sbr.rel (%p346) target = $region60
      $region59: #{transformer_forward.19} parent=47 // pred_region
        %p349 = scmp.lt.s32.totalorder %s17, 1
        %s350 = scalar_select %p349, %s17, 1
        %s351 = smul.addr %s350, 8
        %s352 = scalar_lea.vmem %s2, %s351
      $region60: #{transformer_forward.19} parent=47 // pred_fallthru
        _
    $region48: #{transformer_forward.19} parent=5 // pred_fallthru
      _
    %p353 = scmp.le.s32.totalorder 1, %s17
    %p354 = scmp.lt.s32.totalorder %s17, 3
    %p355 = pnand %p353, %p354
    %p356 = pneg %p355
    // Predicated region
    $region61: #{transformer_forward.19} parent=5 // pred_check
      _
    $region62: #{transformer_forward.19} parent=5 // pred_check_branch
      %358 = sbr.rel (%p355) target = $region64
    $region63: #{transformer_forward.19} parent=5 // pred_region
      %s359 = ssub.s32 %s17, 1
      %p360 = scmp.lt.s32.totalorder %s22, 1
      %s361 = scalar_select %p360, %s22, 1
      %s362 = smul.addr %s361, 4
      %s363 = scalar_lea.vmem %s0, %s362
      %p364 = pneg %p43
      %p365 = pneg %p40
      %p366 = scmp.lt.s32.totalorder %s22, 1
      %s367 = scalar_select %p366, %s22, 1
      %s368 = smul.addr %s367, 4
      %s369 = scalar_lea.vmem %s1, %s368
      %p370 = pneg %p69
      %p371 = pneg %p66
      %p372 = scmp.lt.s32.totalorder %s22, 1
      %s373 = scalar_select %p372, %s22, 1
      %s374 = smul.addr %s373, 8
      %s375 = scalar_lea.vmem %s2, %s374
      %p376 = pneg %p95
      %p377 = pneg %p92
      %p378 = pneg %p116
      %p379 = pneg %p113
      %p380 = pneg %p137
      %p381 = pneg %p134
      %p382 = pneg %p158
      %p383 = pneg %p155
      %p384 = pneg %p179
      %p385 = pneg %p176
      %p386 = pneg %p200
      %p387 = pneg %p197
      %p388 = pneg %p221
      %p389 = pneg %p218
      %p390 = pneg %p242
      %p391 = pneg %p239
      %p392 = pneg %p263
      %p393 = pneg %p260
      %p394 = pneg %p289
      %p395 = pneg %p286
      %p396 = scmp.lt.s32.totalorder %s22, 1
      %s397 = scalar_select %p396, %s22, 1
      %s398 = smul.addr %s397, 4
      %s399 = scalar_lea.vmem %s11, %s398
      %p400 = scmp.lt.s32.totalorder %s22, 1
      %s401 = scalar_select %p400, %s22, 1
      %s402 = smul.addr %s401, 4
      %s403 = scalar_lea.vmem %s0, %s402
      %p404 = scmp.lt.s32.totalorder %s22, 1
      %s405 = scalar_select %p404, %s22, 1
      %s406 = smul.addr %s405, 4
      %s407 = scalar_lea.vmem %s1, %s406
      %p408 = scmp.lt.s32.totalorder %s22, 1
      %s409 = scalar_select %p408, %s22, 1
      %s410 = smul.addr %s409, 8
      %s411 = scalar_lea.vmem %s2, %s410
      %p412 = scmp.lt.s32.totalorder %s22, 1
      %s413 = scalar_select %p412, %s22, 1
      %s414 = smul.addr %s413, 4
      %s415 = scalar_lea.vmem %s11, %s414
      %v417 = vld [vmem:[%s403] sm:$0xf]
      %v418 = vld [vmem:[%s407] sm:$0xf]
      %v419 = vld [vmem:[%s3] sm:$0xff]
      %v420 = vld [vmem:[%s3 + $0x8] sm:$0xff]
      %v421 = vld [vmem:[%s3 + $0x10] sm:$0xff]
      %v422 = vld [vmem:[%s3 + $0x18] sm:$0xff]
      %v423 = vld [vmem:[%s3 + $0x20] sm:$0xff]
      %v424 = vld [vmem:[%s3 + $0x28] sm:$0xff]
      %v425 = vld [vmem:[%s3 + $0x30] sm:$0xff]
      %v426 = vld [vmem:[%s3 + $0x38] sm:$0xff]
      %v427 = vld [vmem:[%s3 + $0x40] sm:$0xff]
      %v428 = vld [vmem:[%s3 + $0x48] sm:$0xff]
      %v429 = vld [vmem:[%s3 + $0x50] sm:$0xff]
      %v430 = vld [vmem:[%s3 + $0x58] sm:$0xff]
      %v431 = vld [vmem:[%s3 + $0x60] sm:$0xff]
      %v432 = vld [vmem:[%s3 + $0x68] sm:$0xff]
      %v433 = vld [vmem:[%s3 + $0x70] sm:$0xff]
      %v434 = vld [vmem:[%s3 + $0x78] sm:$0xff]
      %v435 = vld [vmem:[%s3 + $0x80] sm:$0xff]
      %v436 = vld [vmem:[%s3 + $0x88] sm:$0xff]
      %v437 = vld [vmem:[%s3 + $0x90] sm:$0xff]
      %v438 = vld [vmem:[%s3 + $0x98] sm:$0xff]
      %v439 = vld [vmem:[%s3 + $0xa0] sm:$0xff]
      %v440 = vld [vmem:[%s3 + $0xa8] sm:$0xff]
      %v441 = vld [vmem:[%s3 + $0xb0] sm:$0xff]
      %v442 = vld [vmem:[%s3 + $0xb8] sm:$0xff]
      %v443 = vld [vmem:[%s3 + $0xc0] sm:$0xff]
      %v444 = vld [vmem:[%s3 + $0xc8] sm:$0xff]
      %v445 = vld [vmem:[%s3 + $0xd0] sm:$0xff]
      %v446 = vld [vmem:[%s3 + $0xd8] sm:$0xff]
      %v447 = vld [vmem:[%s3 + $0xe0] sm:$0xff]
      %v448 = vld [vmem:[%s3 + $0xe8] sm:$0xff]
      %v449 = vld [vmem:[%s3 + $0xf0] sm:$0xff]
      %v450 = vld [vmem:[%s3 + $0xf8] sm:$0xff]
      %v451 = vld [vmem:[%s4] sm:$0xf]
      %v453 = vlaneseq
      %v454 = vshrl.u32 %v453, 7
      %v455 = vsub.s32 0, %v454
      %v456 = vrot.slane %v451, %v455
      %v457 = vlaneseq
      %v458 = vshrl.u32 %v457, 7
      %v459 = vsub.s32 1, %v458
      %v460 = vrot.slane %v451, %v459
      %v461 = vlaneseq
      %v462 = vshrl.u32 %v461, 7
      %v463 = vsub.s32 2, %v462
      %v464 = vrot.slane %v451, %v463
      %v465 = vlaneseq
      %v466 = vshrl.u32 %v465, 7
      %v467 = vsub.s32 3, %v466
      %v468 = vrot.slane %v451, %v467
      %v505 = vunpack.c.l.b16 %v419
      %v506 = vunpack.c.h.b16 %v419
      %v507 = vunpack.c.l.b16 %v420
      %v508 = vunpack.c.h.b16 %v420
      %v509 = vunpack.c.l.b16 %v421
      %v510 = vunpack.c.h.b16 %v421
      %v511 = vunpack.c.l.b16 %v422
      %v512 = vunpack.c.h.b16 %v422
      %v513 = vunpack.c.l.b16 %v423
      %v514 = vunpack.c.h.b16 %v423
      %v515 = vunpack.c.l.b16 %v424
      %v516 = vunpack.c.h.b16 %v424
      %v517 = vunpack.c.l.b16 %v425
      %v518 = vunpack.c.h.b16 %v425
      %v519 = vunpack.c.l.b16 %v426
      %v520 = vunpack.c.h.b16 %v426
      %v521 = vunpack.c.l.b16 %v427
      %v522 = vunpack.c.h.b16 %v427
      %v523 = vunpack.c.l.b16 %v428
      %v524 = vunpack.c.h.b16 %v428
      %v525 = vunpack.c.l.b16 %v429
      %v526 = vunpack.c.h.b16 %v429
      %v527 = vunpack.c.l.b16 %v430
      %v528 = vunpack.c.h.b16 %v430
      %v529 = vunpack.c.l.b16 %v431
      %v530 = vunpack.c.h.b16 %v431
      %v531 = vunpack.c.l.b16 %v432
      %v532 = vunpack.c.h.b16 %v432
      %v533 = vunpack.c.l.b16 %v433
      %v534 = vunpack.c.h.b16 %v433
      %v535 = vunpack.c.l.b16 %v434
      %v536 = vunpack.c.h.b16 %v434
      %v537 = vunpack.c.l.b16 %v435
      %v538 = vunpack.c.h.b16 %v435
      %v539 = vunpack.c.l.b16 %v436
      %v540 = vunpack.c.h.b16 %v436
      %v541 = vunpack.c.l.b16 %v437
      %v542 = vunpack.c.h.b16 %v437
      %v543 = vunpack.c.l.b16 %v438
      %v544 = vunpack.c.h.b16 %v438
      %v545 = vunpack.c.l.b16 %v439
      %v546 = vunpack.c.h.b16 %v439
      %v547 = vunpack.c.l.b16 %v440
      %v548 = vunpack.c.h.b16 %v440
      %v549 = vunpack.c.l.b16 %v441
      %v550 = vunpack.c.h.b16 %v441
      %v551 = vunpack.c.l.b16 %v442
      %v552 = vunpack.c.h.b16 %v442
      %v553 = vunpack.c.l.b16 %v443
      %v554 = vunpack.c.h.b16 %v443
      %v555 = vunpack.c.l.b16 %v444
      %v556 = vunpack.c.h.b16 %v444
      %v557 = vunpack.c.l.b16 %v445
      %v558 = vunpack.c.h.b16 %v445
      %v559 = vunpack.c.l.b16 %v446
      %v560 = vunpack.c.h.b16 %v446
      %v561 = vunpack.c.l.b16 %v447
      %v562 = vunpack.c.h.b16 %v447
      %v563 = vunpack.c.l.b16 %v448
      %v564 = vunpack.c.h.b16 %v448
      %v565 = vunpack.c.l.b16 %v449
      %v566 = vunpack.c.h.b16 %v449
      %v567 = vunpack.c.l.b16 %v450
      %v568 = vunpack.c.h.b16 %v450
      %v569 = vpack.c.b16 %v509, %v505
      %v570 = vpack.c.b16 %v510, %v506
      %v571 = vpack.c.b16 %v511, %v507
      %v572 = vpack.c.b16 %v512, %v508
      %v573 = vpack.c.b16 %v517, %v513
      %v574 = vpack.c.b16 %v518, %v514
      %v575 = vpack.c.b16 %v519, %v515
      %v576 = vpack.c.b16 %v520, %v516
      %v577 = vpack.c.b16 %v525, %v521
      %v578 = vpack.c.b16 %v526, %v522
      %v579 = vpack.c.b16 %v527, %v523
      %v580 = vpack.c.b16 %v528, %v524
      %v581 = vpack.c.b16 %v533, %v529
      %v582 = vpack.c.b16 %v534, %v530
      %v583 = vpack.c.b16 %v535, %v531
      %v584 = vpack.c.b16 %v536, %v532
      %v585 = vpack.c.b16 %v541, %v537
      %v586 = vpack.c.b16 %v542, %v538
      %v587 = vpack.c.b16 %v543, %v539
      %v588 = vpack.c.b16 %v544, %v540
      %v589 = vpack.c.b16 %v549, %v545
      %v590 = vpack.c.b16 %v550, %v546
      %v591 = vpack.c.b16 %v551, %v547
      %v592 = vpack.c.b16 %v552, %v548
      %v593 = vpack.c.b16 %v557, %v553
      %v594 = vpack.c.b16 %v558, %v554
      %v595 = vpack.c.b16 %v559, %v555
      %v596 = vpack.c.b16 %v560, %v556
      %v597 = vpack.c.b16 %v565, %v561
      %v598 = vpack.c.b16 %v566, %v562
      %v599 = vpack.c.b16 %v567, %v563
      %v600 = vpack.c.b16 %v568, %v564
      %633 = vmatprep.subr.bf16.mxu0 %v570
      %634 = vmatpush1.bf16.msra.mxu0 %v569
      %635 = vmatprep.subr.bf16.mxu0 %v574
      %636 = vmatpush1.bf16.msra.mxu0 %v573
      %637 = vmatprep.subr.bf16.mxu0 %v578
      %638 = vmatpush1.bf16.msra.mxu0 %v577
      %639 = vmatprep.subr.bf16.mxu0 %v582
      %640 = vmatpush1.bf16.msra.mxu0 %v581
      %641 = vmatprep.subr.bf16.mxu0 %v586
      %642 = vmatpush1.bf16.msra.mxu0 %v585
      %643 = vmatprep.subr.bf16.mxu0 %v590
      %644 = vmatpush1.bf16.msra.mxu0 %v589
      %645 = vmatprep.subr.bf16.mxu0 %v594
      %646 = vmatpush1.bf16.msra.mxu0 %v593
      %647 = vmatprep.subr.bf16.mxu0 %v598
      %648 = vmatpush1.bf16.msra.mxu0 %v597
      %649 = vmatprep.subr.bf16.mxu0 0
      %650 = vmatpush1.bf16.msra.mxu0 0
      %651 = vmatprep.subr.bf16.mxu0 0
      %652 = vmatpush1.bf16.msra.mxu0 0
      %653 = vmatprep.subr.bf16.mxu0 0
      %654 = vmatpush1.bf16.msra.mxu0 0
      %655 = vmatprep.subr.bf16.mxu0 0
      %656 = vmatpush1.bf16.msra.mxu0 0
      %657 = vmatprep.subr.bf16.mxu0 0
      %658 = vmatpush1.bf16.msra.mxu0 0
      %659 = vmatprep.subr.bf16.mxu0 0
      %660 = vmatpush1.bf16.msra.mxu0 0
      %661 = vmatprep.subr.bf16.mxu0 0
      %662 = vmatpush1.bf16.msra.mxu0 0
      %663 = vmatprep.subr.bf16.mxu0 0
      %664 = vmatpush1.bf16.msra.mxu0 0
      %665 = vmatprep.mubr.bf16.mxu0 0
      %666 = vmatmul.mubr.bf16.gmra.mrb[0].mxu0 %v417
      %v667 = vpop.f32.mrb[0].mxu0
      %v668 = vadd.f32 %v456, %v667
      %v669 = vpop.f32.mrb[0].mxu0
      %v670 = vadd.f32 %v460, %v669
      %v671 = vpop.f32.mrb[0].mxu0
      %v672 = vpop.f32.mrb[0].mxu0
      %673 = vdwg.mxu0
      %674 = vmatprep.subr.bf16.mxu0 %v572
      %675 = vmatpush1.bf16.msra.mxu0 %v571
      %676 = vmatprep.subr.bf16.mxu0 %v576
      %677 = vmatpush1.bf16.msra.mxu0 %v575
      %678 = vmatprep.subr.bf16.mxu0 %v580
      %679 = vmatpush1.bf16.msra.mxu0 %v579
      %680 = vmatprep.subr.bf16.mxu0 %v584
      %681 = vmatpush1.bf16.msra.mxu0 %v583
      %682 = vmatprep.subr.bf16.mxu0 %v588
      %683 = vmatpush1.bf16.msra.mxu0 %v587
      %684 = vmatprep.subr.bf16.mxu0 %v592
      %685 = vmatpush1.bf16.msra.mxu0 %v591
      %686 = vmatprep.subr.bf16.mxu0 %v596
      %687 = vmatpush1.bf16.msra.mxu0 %v595
      %688 = vmatprep.subr.bf16.mxu0 %v600
      %689 = vmatpush1.bf16.msra.mxu0 %v599
      %690 = vmatprep.subr.bf16.mxu0 0
      %691 = vmatpush1.bf16.msra.mxu0 0
      %692 = vmatprep.subr.bf16.mxu0 0
      %693 = vmatpush1.bf16.msra.mxu0 0
      %694 = vmatprep.subr.bf16.mxu0 0
      %695 = vmatpush1.bf16.msra.mxu0 0
      %696 = vmatprep.subr.bf16.mxu0 0
      %697 = vmatpush1.bf16.msra.mxu0 0
      %698 = vmatprep.subr.bf16.mxu0 0
      %699 = vmatpush1.bf16.msra.mxu0 0
      %700 = vmatprep.subr.bf16.mxu0 0
      %701 = vmatpush1.bf16.msra.mxu0 0
      %702 = vmatprep.subr.bf16.mxu0 0
      %703 = vmatpush1.bf16.msra.mxu0 0
      %704 = vmatprep.subr.bf16.mxu0 0
      %705 = vmatpush1.bf16.msra.mxu0 0
      %706 = vmatprep.mubr.bf16.mxu0 0
      %707 = vmatmul.mubr.bf16.gmra.mrb[0].mxu0 %v417
      %v708 = vpop.f32.mrb[0].mxu0
      %v709 = vadd.f32 %v464, %v708
      %v710 = vpop.f32.mrb[0].mxu0
      %v711 = vadd.f32 %v468, %v710
      %v712 = vpop.f32.mrb[0].mxu0
      %v713 = vpop.f32.mrb[0].mxu0
      %714 = vdwg.mxu0
      %v715 = vld [vmem:[%s5] sm:$0xff]
      %v716 = vld [vmem:[%s5 + $0x8] sm:$0xff]
      %v717 = vld [vmem:[%s5 + $0x10] sm:$0xff]
      %v718 = vld [vmem:[%s5 + $0x18] sm:$0xff]
      %v719 = vld [vmem:[%s5 + $0x20] sm:$0xff]
      %v720 = vld [vmem:[%s5 + $0x28] sm:$0xff]
      %v721 = vld [vmem:[%s5 + $0x30] sm:$0xff]
      %v722 = vld [vmem:[%s5 + $0x38] sm:$0xff]
      %v723 = vld [vmem:[%s5 + $0x40] sm:$0xff]
      %v724 = vld [vmem:[%s5 + $0x48] sm:$0xff]
      %v725 = vld [vmem:[%s5 + $0x50] sm:$0xff]
      %v726 = vld [vmem:[%s5 + $0x58] sm:$0xff]
      %v727 = vld [vmem:[%s5 + $0x60] sm:$0xff]
      %v728 = vld [vmem:[%s5 + $0x68] sm:$0xff]
      %v729 = vld [vmem:[%s5 + $0x70] sm:$0xff]
      %v730 = vld [vmem:[%s5 + $0x78] sm:$0xff]
      %v731 = vld [vmem:[%s5 + $0x80] sm:$0xff]
      %v732 = vld [vmem:[%s5 + $0x88] sm:$0xff]
      %v733 = vld [vmem:[%s5 + $0x90] sm:$0xff]
      %v734 = vld [vmem:[%s5 + $0x98] sm:$0xff]
      %v735 = vld [vmem:[%s5 + $0xa0] sm:$0xff]
      %v736 = vld [vmem:[%s5 + $0xa8] sm:$0xff]
      %v737 = vld [vmem:[%s5 + $0xb0] sm:$0xff]
      %v738 = vld [vmem:[%s5 + $0xb8] sm:$0xff]
      %v739 = vld [vmem:[%s5 + $0xc0] sm:$0xff]
      %v740 = vld [vmem:[%s5 + $0xc8] sm:$0xff]
      %v741 = vld [vmem:[%s5 + $0xd0] sm:$0xff]
      %v742 = vld [vmem:[%s5 + $0xd8] sm:$0xff]
      %v743 = vld [vmem:[%s5 + $0xe0] sm:$0xff]
      %v744 = vld [vmem:[%s5 + $0xe8] sm:$0xff]
      %v745 = vld [vmem:[%s5 + $0xf0] sm:$0xff]
      %v746 = vld [vmem:[%s5 + $0xf8] sm:$0xff]
      %v747 = vld [vmem:[%s5 + $0x100] sm:$0xff]
      %v748 = vld [vmem:[%s5 + $0x108] sm:$0xff]
      %v749 = vld [vmem:[%s5 + $0x110] sm:$0xff]
      %v750 = vld [vmem:[%s5 + $0x118] sm:$0xff]
      %v751 = vld [vmem:[%s5 + $0x120] sm:$0xff]
      %v752 = vld [vmem:[%s5 + $0x128] sm:$0xff]
      %v753 = vld [vmem:[%s5 + $0x130] sm:$0xff]
      %v754 = vld [vmem:[%s5 + $0x138] sm:$0xff]
      %v755 = vld [vmem:[%s5 + $0x140] sm:$0xff]
      %v756 = vld [vmem:[%s5 + $0x148] sm:$0xff]
      %v757 = vld [vmem:[%s5 + $0x150] sm:$0xff]
      %v758 = vld [vmem:[%s5 + $0x158] sm:$0xff]
      %v759 = vld [vmem:[%s5 + $0x160] sm:$0xff]
      %v760 = vld [vmem:[%s5 + $0x168] sm:$0xff]
      %v761 = vld [vmem:[%s5 + $0x170] sm:$0xff]
      %v762 = vld [vmem:[%s5 + $0x178] sm:$0xff]
      %v763 = vld [vmem:[%s5 + $0x180] sm:$0xff]
      %v764 = vld [vmem:[%s5 + $0x188] sm:$0xff]
      %v765 = vld [vmem:[%s5 + $0x190] sm:$0xff]
      %v766 = vld [vmem:[%s5 + $0x198] sm:$0xff]
      %v767 = vld [vmem:[%s5 + $0x1a0] sm:$0xff]
      %v768 = vld [vmem:[%s5 + $0x1a8] sm:$0xff]
      %v769 = vld [vmem:[%s5 + $0x1b0] sm:$0xff]
      %v770 = vld [vmem:[%s5 + $0x1b8] sm:$0xff]
      %v771 = vld [vmem:[%s5 + $0x1c0] sm:$0xff]
      %v772 = vld [vmem:[%s5 + $0x1c8] sm:$0xff]
      %v773 = vld [vmem:[%s5 + $0x1d0] sm:$0xff]
      %v774 = vld [vmem:[%s5 + $0x1d8] sm:$0xff]
      %v775 = vld [vmem:[%s5 + $0x1e0] sm:$0xff]
      %v776 = vld [vmem:[%s5 + $0x1e8] sm:$0xff]
      %v777 = vld [vmem:[%s5 + $0x1f0] sm:$0xff]
      %v778 = vld [vmem:[%s5 + $0x1f8] sm:$0xff]
      %v779 = vld [vmem:[%s6] sm:$0xff]
      %v781 = vlaneseq
      %v782 = vshrl.u32 %v781, 7
      %v783 = vsub.s32 0, %v782
      %v784 = vrot.slane %v779, %v783
      %v785 = vlaneseq
      %v786 = vshrl.u32 %v785, 7
      %v787 = vsub.s32 1, %v786
      %v788 = vrot.slane %v779, %v787
      %v789 = vlaneseq
      %v790 = vshrl.u32 %v789, 7
      %v791 = vsub.s32 2, %v790
      %v792 = vrot.slane %v779, %v791
      %v793 = vlaneseq
      %v794 = vshrl.u32 %v793, 7
      %v795 = vsub.s32 3, %v794
      %v796 = vrot.slane %v779, %v795
      %v797 = vlaneseq
      %v798 = vshrl.u32 %v797, 7
      %v799 = vsub.s32 4, %v798
      %v800 = vrot.slane %v779, %v799
      %v801 = vlaneseq
      %v802 = vshrl.u32 %v801, 7
      %v803 = vsub.s32 5, %v802
      %v804 = vrot.slane %v779, %v803
      %v805 = vlaneseq
      %v806 = vshrl.u32 %v805, 7
      %v807 = vsub.s32 6, %v806
      %v808 = vrot.slane %v779, %v807
      %v809 = vlaneseq
      %v810 = vshrl.u32 %v809, 7
      %v811 = vsub.s32 7, %v810
      %v812 = vrot.slane %v779, %v811
      %v885 = vunpack.c.l.b16 %v715
      %v886 = vunpack.c.h.b16 %v715
      %v887 = vunpack.c.l.b16 %v716
      %v888 = vunpack.c.h.b16 %v716
      %v889 = vunpack.c.l.b16 %v717
      %v890 = vunpack.c.h.b16 %v717
      %v891 = vunpack.c.l.b16 %v718
      %v892 = vunpack.c.h.b16 %v718
      %v893 = vunpack.c.l.b16 %v719
      %v894 = vunpack.c.h.b16 %v719
      %v895 = vunpack.c.l.b16 %v720
      %v896 = vunpack.c.h.b16 %v720
      %v897 = vunpack.c.l.b16 %v721
      %v898 = vunpack.c.h.b16 %v721
      %v899 = vunpack.c.l.b16 %v722
      %v900 = vunpack.c.h.b16 %v722
      %v901 = vunpack.c.l.b16 %v723
      %v902 = vunpack.c.h.b16 %v723
      %v903 = vunpack.c.l.b16 %v724
      %v904 = vunpack.c.h.b16 %v724
      %v905 = vunpack.c.l.b16 %v725
      %v906 = vunpack.c.h.b16 %v725
      %v907 = vunpack.c.l.b16 %v726
      %v908 = vunpack.c.h.b16 %v726
      %v909 = vunpack.c.l.b16 %v727
      %v910 = vunpack.c.h.b16 %v727
      %v911 = vunpack.c.l.b16 %v728
      %v912 = vunpack.c.h.b16 %v728
      %v913 = vunpack.c.l.b16 %v729
      %v914 = vunpack.c.h.b16 %v729
      %v915 = vunpack.c.l.b16 %v730
      %v916 = vunpack.c.h.b16 %v730
      %v917 = vunpack.c.l.b16 %v731
      %v918 = vunpack.c.h.b16 %v731
      %v919 = vunpack.c.l.b16 %v732
      %v920 = vunpack.c.h.b16 %v732
      %v921 = vunpack.c.l.b16 %v733
      %v922 = vunpack.c.h.b16 %v733
      %v923 = vunpack.c.l.b16 %v734
      %v924 = vunpack.c.h.b16 %v734
      %v925 = vunpack.c.l.b16 %v735
      %v926 = vunpack.c.h.b16 %v735
      %v927 = vunpack.c.l.b16 %v736
      %v928 = vunpack.c.h.b16 %v736
      %v929 = vunpack.c.l.b16 %v737
      %v930 = vunpack.c.h.b16 %v737
      %v931 = vunpack.c.l.b16 %v738
      %v932 = vunpack.c.h.b16 %v738
      %v933 = vunpack.c.l.b16 %v739
      %v934 = vunpack.c.h.b16 %v739
      %v935 = vunpack.c.l.b16 %v740
      %v936 = vunpack.c.h.b16 %v740
      %v937 = vunpack.c.l.b16 %v741
      %v938 = vunpack.c.h.b16 %v741
      %v939 = vunpack.c.l.b16 %v742
      %v940 = vunpack.c.h.b16 %v742
      %v941 = vunpack.c.l.b16 %v743
      %v942 = vunpack.c.h.b16 %v743
      %v943 = vunpack.c.l.b16 %v744
      %v944 = vunpack.c.h.b16 %v744
      %v945 = vunpack.c.l.b16 %v745
      %v946 = vunpack.c.h.b16 %v745
      %v947 = vunpack.c.l.b16 %v746
      %v948 = vunpack.c.h.b16 %v746
      %v949 = vunpack.c.l.b16 %v747
      %v950 = vunpack.c.h.b16 %v747
      %v951 = vunpack.c.l.b16 %v748
      %v952 = vunpack.c.h.b16 %v748
      %v953 = vunpack.c.l.b16 %v749
      %v954 = vunpack.c.h.b16 %v749
      %v955 = vunpack.c.l.b16 %v750
      %v956 = vunpack.c.h.b16 %v750
      %v957 = vunpack.c.l.b16 %v751
      %v958 = vunpack.c.h.b16 %v751
      %v959 = vunpack.c.l.b16 %v752
      %v960 = vunpack.c.h.b16 %v752
      %v961 = vunpack.c.l.b16 %v753
      %v962 = vunpack.c.h.b16 %v753
      %v963 = vunpack.c.l.b16 %v754
      %v964 = vunpack.c.h.b16 %v754
      %v965 = vunpack.c.l.b16 %v755
      %v966 = vunpack.c.h.b16 %v755
      %v967 = vunpack.c.l.b16 %v756
      %v968 = vunpack.c.h.b16 %v756
      %v969 = vunpack.c.l.b16 %v757
      %v970 = vunpack.c.h.b16 %v757
      %v971 = vunpack.c.l.b16 %v758
      %v972 = vunpack.c.h.b16 %v758
      %v973 = vunpack.c.l.b16 %v759
      %v974 = vunpack.c.h.b16 %v759
      %v975 = vunpack.c.l.b16 %v760
      %v976 = vunpack.c.h.b16 %v760
      %v977 = vunpack.c.l.b16 %v761
      %v978 = vunpack.c.h.b16 %v761
      %v979 = vunpack.c.l.b16 %v762
      %v980 = vunpack.c.h.b16 %v762
      %v981 = vunpack.c.l.b16 %v763
      %v982 = vunpack.c.h.b16 %v763
      %v983 = vunpack.c.l.b16 %v764
      %v984 = vunpack.c.h.b16 %v764
      %v985 = vunpack.c.l.b16 %v765
      %v986 = vunpack.c.h.b16 %v765
      %v987 = vunpack.c.l.b16 %v766
      %v988 = vunpack.c.h.b16 %v766
      %v989 = vunpack.c.l.b16 %v767
      %v990 = vunpack.c.h.b16 %v767
      %v991 = vunpack.c.l.b16 %v768
      %v992 = vunpack.c.h.b16 %v768
      %v993 = vunpack.c.l.b16 %v769
      %v994 = vunpack.c.h.b16 %v769
      %v995 = vunpack.c.l.b16 %v770
      %v996 = vunpack.c.h.b16 %v770
      %v997 = vunpack.c.l.b16 %v771
      %v998 = vunpack.c.h.b16 %v771
      %v999 = vunpack.c.l.b16 %v772
      %v1000 = vunpack.c.h.b16 %v772
      %v1001 = vunpack.c.l.b16 %v773
      %v1002 = vunpack.c.h.b16 %v773
      %v1003 = vunpack.c.l.b16 %v774
      %v1004 = vunpack.c.h.b16 %v774
      %v1005 = vunpack.c.l.b16 %v775
      %v1006 = vunpack.c.h.b16 %v775
      %v1007 = vunpack.c.l.b16 %v776
      %v1008 = vunpack.c.h.b16 %v776
      %v1009 = vunpack.c.l.b16 %v777
      %v1010 = vunpack.c.h.b16 %v777
      %v1011 = vunpack.c.l.b16 %v778
      %v1012 = vunpack.c.h.b16 %v778
      %v1013 = vpack.c.b16 %v893, %v885
      %v1014 = vpack.c.b16 %v894, %v886
      %v1015 = vpack.c.b16 %v895, %v887
      %v1016 = vpack.c.b16 %v896, %v888
      %v1017 = vpack.c.b16 %v897, %v889
      %v1018 = vpack.c.b16 %v898, %v890
      %v1019 = vpack.c.b16 %v899, %v891
      %v1020 = vpack.c.b16 %v900, %v892
      %v1021 = vpack.c.b16 %v909, %v901
      %v1022 = vpack.c.b16 %v910, %v902
      %v1023 = vpack.c.b16 %v911, %v903
      %v1024 = vpack.c.b16 %v912, %v904
      %v1025 = vpack.c.b16 %v913, %v905
      %v1026 = vpack.c.b16 %v914, %v906
      %v1027 = vpack.c.b16 %v915, %v907
      %v1028 = vpack.c.b16 %v916, %v908
      %v1029 = vpack.c.b16 %v925, %v917
      %v1030 = vpack.c.b16 %v926, %v918
      %v1031 = vpack.c.b16 %v927, %v919
      %v1032 = vpack.c.b16 %v928, %v920
      %v1033 = vpack.c.b16 %v929, %v921
      %v1034 = vpack.c.b16 %v930, %v922
      %v1035 = vpack.c.b16 %v931, %v923
      %v1036 = vpack.c.b16 %v932, %v924
      %v1037 = vpack.c.b16 %v941, %v933
      %v1038 = vpack.c.b16 %v942, %v934
      %v1039 = vpack.c.b16 %v943, %v935
      %v1040 = vpack.c.b16 %v944, %v936
      %v1041 = vpack.c.b16 %v945, %v937
      %v1042 = vpack.c.b16 %v946, %v938
      %v1043 = vpack.c.b16 %v947, %v939
      %v1044 = vpack.c.b16 %v948, %v940
      %v1045 = vpack.c.b16 %v957, %v949
      %v1046 = vpack.c.b16 %v958, %v950
      %v1047 = vpack.c.b16 %v959, %v951
      %v1048 = vpack.c.b16 %v960, %v952
      %v1049 = vpack.c.b16 %v961, %v953
      %v1050 = vpack.c.b16 %v962, %v954
      %v1051 = vpack.c.b16 %v963, %v955
      %v1052 = vpack.c.b16 %v964, %v956
      %v1053 = vpack.c.b16 %v973, %v965
      %v1054 = vpack.c.b16 %v974, %v966
      %v1055 = vpack.c.b16 %v975, %v967
      %v1056 = vpack.c.b16 %v976, %v968
      %v1057 = vpack.c.b16 %v977, %v969
      %v1058 = vpack.c.b16 %v978, %v970
      %v1059 = vpack.c.b16 %v979, %v971
      %v1060 = vpack.c.b16 %v980, %v972
      %v1061 = vpack.c.b16 %v989, %v981
      %v1062 = vpack.c.b16 %v990, %v982
      %v1063 = vpack.c.b16 %v991, %v983
      %v1064 = vpack.c.b16 %v992, %v984
      %v1065 = vpack.c.b16 %v993, %v985
      %v1066 = vpack.c.b16 %v994, %v986
      %v1067 = vpack.c.b16 %v995, %v987
      %v1068 = vpack.c.b16 %v996, %v988
      %v1069 = vpack.c.b16 %v1005, %v997
      %v1070 = vpack.c.b16 %v1006, %v998
      %v1071 = vpack.c.b16 %v1007, %v999
      %v1072 = vpack.c.b16 %v1008, %v1000
      %v1073 = vpack.c.b16 %v1009, %v1001
      %v1074 = vpack.c.b16 %v1010, %v1002
      %v1075 = vpack.c.b16 %v1011, %v1003
      %v1076 = vpack.c.b16 %v1012, %v1004
      %1141 = vmatprep.subr.bf16.mxu0 %v1014
      %1142 = vmatpush1.bf16.msra.mxu0 %v1013
      %1143 = vmatprep.subr.bf16.mxu0 %v1022
      %1144 = vmatpush1.bf16.msra.mxu0 %v1021
      %1145 = vmatprep.subr.bf16.mxu0 %v1030
      %1146 = vmatpush1.bf16.msra.mxu0 %v1029
      %1147 = vmatprep.subr.bf16.mxu0 %v1038
      %1148 = vmatpush1.bf16.msra.mxu0 %v1037
      %1149 = vmatprep.subr.bf16.mxu0 %v1046
      %1150 = vmatpush1.bf16.msra.mxu0 %v1045
      %1151 = vmatprep.subr.bf16.mxu0 %v1054
      %1152 = vmatpush1.bf16.msra.mxu0 %v1053
      %1153 = vmatprep.subr.bf16.mxu0 %v1062
      %1154 = vmatpush1.bf16.msra.mxu0 %v1061
      %1155 = vmatprep.subr.bf16.mxu0 %v1070
      %1156 = vmatpush1.bf16.msra.mxu0 %v1069
      %1157 = vmatprep.subr.bf16.mxu0 0
      %1158 = vmatpush1.bf16.msra.mxu0 0
      %1159 = vmatprep.subr.bf16.mxu0 0
      %1160 = vmatpush1.bf16.msra.mxu0 0
      %1161 = vmatprep.subr.bf16.mxu0 0
      %1162 = vmatpush1.bf16.msra.mxu0 0
      %1163 = vmatprep.subr.bf16.mxu0 0
      %1164 = vmatpush1.bf16.msra.mxu0 0
      %1165 = vmatprep.subr.bf16.mxu0 0
      %1166 = vmatpush1.bf16.msra.mxu0 0
      %1167 = vmatprep.subr.bf16.mxu0 0
      %1168 = vmatpush1.bf16.msra.mxu0 0
      %1169 = vmatprep.subr.bf16.mxu0 0
      %1170 = vmatpush1.bf16.msra.mxu0 0
      %1171 = vmatprep.subr.bf16.mxu0 0
      %1172 = vmatpush1.bf16.msra.mxu0 0
      %1173 = vmatprep.mubr.bf16.mxu0 0
      %1174 = vmatmul.mubr.bf16.gmra.mrb[0].mxu0 %v418
      %v1175 = vpop.f32.mrb[0].mxu0
      %v1176 = vadd.f32 %v784, %v1175
      %v1177 = vpop.f32.mrb[0].mxu0
      %v1178 = vadd.f32 %v788, %v1177
      %v1179 = vpop.f32.mrb[0].mxu0
      %v1180 = vpop.f32.mrb[0].mxu0
      %1181 = vdwg.mxu0
      %1182 = vmatprep.subr.bf16.mxu0 %v1016
      %1183 = vmatpush1.bf16.msra.mxu0 %v1015
      %1184 = vmatprep.subr.bf16.mxu0 %v1024
      %1185 = vmatpush1.bf16.msra.mxu0 %v1023
      %1186 = vmatprep.subr.bf16.mxu0 %v1032
      %1187 = vmatpush1.bf16.msra.mxu0 %v1031
      %1188 = vmatprep.subr.bf16.mxu0 %v1040
      %1189 = vmatpush1.bf16.msra.mxu0 %v1039
      %1190 = vmatprep.subr.bf16.mxu0 %v1048
      %1191 = vmatpush1.bf16.msra.mxu0 %v1047
      %1192 = vmatprep.subr.bf16.mxu0 %v1056
      %1193 = vmatpush1.bf16.msra.mxu0 %v1055
      %1194 = vmatprep.subr.bf16.mxu0 %v1064
      %1195 = vmatpush1.bf16.msra.mxu0 %v1063
      %1196 = vmatprep.subr.bf16.mxu0 %v1072
      %1197 = vmatpush1.bf16.msra.mxu0 %v1071
      %1198 = vmatprep.subr.bf16.mxu0 0
      %1199 = vmatpush1.bf16.msra.mxu0 0
      %1200 = vmatprep.subr.bf16.mxu0 0
      %1201 = vmatpush1.bf16.msra.mxu0 0
      %1202 = vmatprep.subr.bf16.mxu0 0
      %1203 = vmatpush1.bf16.msra.mxu0 0
      %1204 = vmatprep.subr.bf16.mxu0 0
      %1205 = vmatpush1.bf16.msra.mxu0 0
      %1206 = vmatprep.subr.bf16.mxu0 0
      %1207 = vmatpush1.bf16.msra.mxu0 0
      %1208 = vmatprep.subr.bf16.mxu0 0
      %1209 = vmatpush1.bf16.msra.mxu0 0
      %1210 = vmatprep.subr.bf16.mxu0 0
      %1211 = vmatpush1.bf16.msra.mxu0 0
      %1212 = vmatprep.subr.bf16.mxu0 0
      %1213 = vmatpush1.bf16.msra.mxu0 0
      %1214 = vmatprep.mubr.bf16.mxu0 0
      %1215 = vmatmul.mubr.bf16.gmra.mrb[0].mxu0 %v418
      %v1216 = vpop.f32.mrb[0].mxu0
      %v1217 = vadd.f32 %v792, %v1216
      %v1218 = vpop.f32.mrb[0].mxu0
      %v1219 = vadd.f32 %v796, %v1218
      %v1220 = vpop.f32.mrb[0].mxu0
      %v1221 = vpop.f32.mrb[0].mxu0
      %1222 = vdwg.mxu0
      %1223 = vmatprep.subr.bf16.mxu0 %v1018
      %1224 = vmatpush1.bf16.msra.mxu0 %v1017
      %1225 = vmatprep.subr.bf16.mxu0 %v1026
      %1226 = vmatpush1.bf16.msra.mxu0 %v1025
      %1227 = vmatprep.subr.bf16.mxu0 %v1034
      %1228 = vmatpush1.bf16.msra.mxu0 %v1033
      %1229 = vmatprep.subr.bf16.mxu0 %v1042
      %1230 = vmatpush1.bf16.msra.mxu0 %v1041
      %1231 = vmatprep.subr.bf16.mxu0 %v1050
      %1232 = vmatpush1.bf16.msra.mxu0 %v1049
      %1233 = vmatprep.subr.bf16.mxu0 %v1058
      %1234 = vmatpush1.bf16.msra.mxu0 %v1057
      %1235 = vmatprep.subr.bf16.mxu0 %v1066
      %1236 = vmatpush1.bf16.msra.mxu0 %v1065
      %1237 = vmatprep.subr.bf16.mxu0 %v1074
      %1238 = vmatpush1.bf16.msra.mxu0 %v1073
      %1239 = vmatprep.subr.bf16.mxu0 0
      %1240 = vmatpush1.bf16.msra.mxu0 0
      %1241 = vmatprep.subr.bf16.mxu0 0
      %1242 = vmatpush1.bf16.msra.mxu0 0
      %1243 = vmatprep.subr.bf16.mxu0 0
      %1244 = vmatpush1.bf16.msra.mxu0 0
      %1245 = vmatprep.subr.bf16.mxu0 0
      %1246 = vmatpush1.bf16.msra.mxu0 0
      %1247 = vmatprep.subr.bf16.mxu0 0
      %1248 = vmatpush1.bf16.msra.mxu0 0
      %1249 = vmatprep.subr.bf16.mxu0 0
      %1250 = vmatpush1.bf16.msra.mxu0 0
      %1251 = vmatprep.subr.bf16.mxu0 0
      %1252 = vmatpush1.bf16.msra.mxu0 0
      %1253 = vmatprep.subr.bf16.mxu0 0
      %1254 = vmatpush1.bf16.msra.mxu0 0
      %1255 = vmatprep.mubr.bf16.mxu0 0
      %1256 = vmatmul.mubr.bf16.gmra.mrb[0].mxu0 %v418
      %v1257 = vpop.f32.mrb[0].mxu0
      %v1258 = vadd.f32 %v800, %v1257
      %v1259 = vpop.f32.mrb[0].mxu0
      %v1260 = vadd.f32 %v804, %v1259
      %v1261 = vpop.f32.mrb[0].mxu0
      %v1262 = vpop.f32.mrb[0].mxu0
      %1263 = vdwg.mxu0
      %1264 = vmatprep.subr.bf16.mxu0 %v1020
      %1265 = vmatpush1.bf16.msra.mxu0 %v1019
      %1266 = vmatprep.subr.bf16.mxu0 %v1028
      %1267 = vmatpush1.bf16.msra.mxu0 %v1027
      %1268 = vmatprep.subr.bf16.mxu0 %v1036
      %1269 = vmatpush1.bf16.msra.mxu0 %v1035
      %1270 = vmatprep.subr.bf16.mxu0 %v1044
      %1271 = vmatpush1.bf16.msra.mxu0 %v1043
      %1272 = vmatprep.subr.bf16.mxu0 %v1052
      %1273 = vmatpush1.bf16.msra.mxu0 %v1051
      %1274 = vmatprep.subr.bf16.mxu0 %v1060
      %1275 = vmatpush1.bf16.msra.mxu0 %v1059
      %1276 = vmatprep.subr.bf16.mxu0 %v1068
      %1277 = vmatpush1.bf16.msra.mxu0 %v1067
      %1278 = vmatprep.subr.bf16.mxu0 %v1076
      %1279 = vmatpush1.bf16.msra.mxu0 %v1075
      %1280 = vmatprep.subr.bf16.mxu0 0
      %1281 = vmatpush1.bf16.msra.mxu0 0
      %1282 = vmatprep.subr.bf16.mxu0 0
      %1283 = vmatpush1.bf16.msra.mxu0 0
      %1284 = vmatprep.subr.bf16.mxu0 0
      %1285 = vmatpush1.bf16.msra.mxu0 0
      %1286 = vmatprep.subr.bf16.mxu0 0
      %1287 = vmatpush1.bf16.msra.mxu0 0
      %1288 = vmatprep.subr.bf16.mxu0 0
      %1289 = vmatpush1.bf16.msra.mxu0 0
      %1290 = vmatprep.subr.bf16.mxu0 0
      %1291 = vmatpush1.bf16.msra.mxu0 0
      %1292 = vmatprep.subr.bf16.mxu0 0
      %1293 = vmatpush1.bf16.msra.mxu0 0
      %1294 = vmatprep.subr.bf16.mxu0 0
      %1295 = vmatpush1.bf16.msra.mxu0 0
      %1296 = vmatprep.mubr.bf16.mxu0 0
      %1297 = vmatmul.mubr.bf16.gmra.mrb[0].mxu0 %v418
      %v1298 = vpop.f32.mrb[0].mxu0
      %v1299 = vadd.f32 %v808, %v1298
      %v1300 = vpop.f32.mrb[0].mxu0
      %v1301 = vadd.f32 %v812, %v1300
      %v1302 = vpop.f32.mrb[0].mxu0
      %v1303 = vpop.f32.mrb[0].mxu0
      %1304 = vdwg.mxu0
      %v1305 = vld [vmem:[%s411] sm:$0xff]
      %vm1306 = vcmp.eq.s32.totalorder %v1305, 0
      %v1307 = vpack.c.bf16 %v668, %v668
      %v1308 = vpack.c.bf16 %v1176, %v1176
      %v1309 = vpack.c.bf16 %v1258, %v1258
      %1310 = vmatprep.subr.bf16.mxu0 0
      %1311 = vmatpush1.bf16.xpose.msra.mxu0 %v1308
      %1312 = vmatprep.subr.bf16.mxu0 0
      %1313 = vmatpush1.bf16.xpose.msra.mxu0 0
      %1314 = vmatprep.subr.bf16.mxu0 0
      %1315 = vmatpush1.bf16.xpose.msra.mxu0 0
      %1316 = vmatprep.subr.bf16.mxu0 0
      %1317 = vmatpush1.bf16.xpose.msra.mxu0 0
      %1318 = vmatprep.subr.bf16.mxu0 0
      %1319 = vmatpush1.bf16.xpose.msra.mxu0 0
      %1320 = vmatprep.subr.bf16.mxu0 0
      %1321 = vmatpush1.bf16.xpose.msra.mxu0 0
      %1322 = vmatprep.subr.bf16.mxu0 0
      %1323 = vmatpush1.bf16.xpose.msra.mxu0 0
      %1324 = vmatprep.subr.bf16.mxu0 0
      %1325 = vmatpush1.bf16.xpose.msra.mxu0 0
      %1326 = vmatprep.subr.bf16.mxu0 0
      %1327 = vmatpush1.bf16.xpose.msra.mxu0 0
      %1328 = vmatprep.subr.bf16.mxu0 0
      %1329 = vmatpush1.bf16.xpose.msra.mxu0 0
      %1330 = vmatprep.subr.bf16.mxu0 0
      %1331 = vmatpush1.bf16.xpose.msra.mxu0 0
      %1332 = vmatprep.subr.bf16.mxu0 0
      %1333 = vmatpush1.bf16.xpose.msra.mxu0 0
      %1334 = vmatprep.subr.bf16.mxu0 0
      %1335 = vmatpush1.bf16.xpose.msra.mxu0 0
      %1336 = vmatprep.subr.bf16.mxu0 0
      %1337 = vmatpush1.bf16.xpose.msra.mxu0 0
      %1338 = vmatprep.subr.bf16.mxu0 0
      %1339 = vmatpush1.bf16.xpose.msra.mxu0 0
      %1340 = vmatprep.subr.bf16.mxu0 0
      %1341 = vmatpush1.bf16.xpose.msra.mxu0 0
      %1342 = vmatprep.mubr.bf16.mxu0 0
      %1343 = vmatmul.mubr.bf16.gmra.mrb[0].mxu0 %v1307
      %v1344 = vpop.f32.mrb[0].mxu0
      %v1345 = vadd.f32 0.0, %v1344
      %v1346 = vpop.f32.mrb[0].mxu0
      %v1347 = vpop.f32.mrb[0].mxu0
      %v1348 = vpop.f32.mrb[0].mxu0
      %1349 = vdwg.mxu0
      %v1350 = vmul.f32 %v1345, 0.35355338
      %v1351 = vsel %vm1306, -1e+09, %v1350
      %vm1352 = vcmask 64512
      %v1353 = vsel %vm1352, %v1351, -inf
      %1354 = vmax.xlane.f32.xlu0 %v1353
      %v1355 = vpop.xlane.xlu0 %1354
      %v1356 = vsub.f32 %v1351, %v1355
      %v1357 = vmul.f32 %v1356, 1.442695
      %v1358 = vpow.pop %v1357
      %v1359 = vsel %vm1352, %v1358, 0.0
      %1360 = vadd.xlane.f32.xlu0 %v1359
      %v1361 = vpop.xlane.xlu0 %1360
      %v1362 = vrcp.pop %v1361
      %v1363 = vmul.f32 %v1358, %v1362
      %v1364 = vpack.c.bf16 %v1363, %v1363
      %v1366 = vsel %vm1352, %v1364, 0
      %vm1368 = vcmask 1043456
      %v1370 = vsel %vm1368, %v1309, 0
      %1372 = vmatprep.subr.bf16.mxu0 0
      %1373 = vmatpush1.bf16.msra.mxu0 %v1370
      %1374 = vmatprep.subr.bf16.mxu0 0
      %1375 = vmatpush1.bf16.msra.mxu0 0
      %1376 = vmatprep.subr.bf16.mxu0 0
      %1377 = vmatpush1.bf16.msra.mxu0 0
      %1378 = vmatprep.subr.bf16.mxu0 0
      %1379 = vmatpush1.bf16.msra.mxu0 0
      %1380 = vmatprep.subr.bf16.mxu0 0
      %1381 = vmatpush1.bf16.msra.mxu0 0
      %1382 = vmatprep.subr.bf16.mxu0 0
      %1383 = vmatpush1.bf16.msra.mxu0 0
      %1384 = vmatprep.subr.bf16.mxu0 0
      %1385 = vmatpush1.bf16.msra.mxu0 0
      %1386 = vmatprep.subr.bf16.mxu0 0
      %1387 = vmatpush1.bf16.msra.mxu0 0
      %1388 = vmatprep.subr.bf16.mxu0 0
      %1389 = vmatpush1.bf16.msra.mxu0 0
      %1390 = vmatprep.subr.bf16.mxu0 0
      %1391 = vmatpush1.bf16.msra.mxu0 0
      %1392 = vmatprep.subr.bf16.mxu0 0
      %1393 = vmatpush1.bf16.msra.mxu0 0
      %1394 = vmatprep.subr.bf16.mxu0 0
      %1395 = vmatpush1.bf16.msra.mxu0 0
      %1396 = vmatprep.subr.bf16.mxu0 0
      %1397 = vmatpush1.bf16.msra.mxu0 0
      %1398 = vmatprep.subr.bf16.mxu0 0
      %1399 = vmatpush1.bf16.msra.mxu0 0
      %1400 = vmatprep.subr.bf16.mxu0 0
      %1401 = vmatpush1.bf16.msra.mxu0 0
      %1402 = vmatprep.subr.bf16.mxu0 0
      %1403 = vmatpush1.bf16.msra.mxu0 0
      %1404 = vmatprep.mubr.bf16.mxu0 0
      %1405 = vmatmul.mubr.bf16.gmra.mrb[0].mxu0 %v1366
      %v1406 = vpop.f32.mrb[0].mxu0
      %v1407 = vadd.f32 0.0, %v1406
      %v1408 = vpop.f32.mrb[0].mxu0
      %v1409 = vpop.f32.mrb[0].mxu0
      %v1410 = vpop.f32.mrb[0].mxu0
      %1411 = vdwg.mxu0
      %v1412 = vpack.c.bf16 %v1407, %v1407
      %v1413 = vld [vmem:[%s7] sm:$0xf]
      %v1414 = vld [vmem:[%s7 + $0x4] sm:$0xf]
      %v1415 = vld [vmem:[%s7 + $0x8] sm:$0xf]
      %v1416 = vld [vmem:[%s7 + $0xc] sm:$0xf]
      %v1417 = vld [vmem:[%s7 + $0x10] sm:$0xf]
      %v1418 = vld [vmem:[%s7 + $0x14] sm:$0xf]
      %v1419 = vld [vmem:[%s7 + $0x18] sm:$0xf]
      %v1420 = vld [vmem:[%s7 + $0x1c] sm:$0xf]
      %v1421 = vld [vmem:[%s7 + $0x20] sm:$0xf]
      %v1422 = vld [vmem:[%s7 + $0x24] sm:$0xf]
      %v1423 = vld [vmem:[%s7 + $0x28] sm:$0xf]
      %v1424 = vld [vmem:[%s7 + $0x2c] sm:$0xf]
      %v1425 = vld [vmem:[%s7 + $0x30] sm:$0xf]
      %v1426 = vld [vmem:[%s7 + $0x34] sm:$0xf]
      %v1427 = vld [vmem:[%s7 + $0x38] sm:$0xf]
      %v1428 = vld [vmem:[%s7 + $0x3c] sm:$0xf]
      %v1429 = vpack.c.bf16 %v670, %v670
      %v1430 = vpack.c.bf16 %v1178, %v1178
      %v1431 = vpack.c.bf16 %v1260, %v1260
      %1432 = vmatprep.subr.bf16.mxu0 0
      %1433 = vmatpush1.bf16.xpose.msra.mxu0 %v1430
      %1434 = vmatprep.subr.bf16.mxu0 0
      %1435 = vmatpush1.bf16.xpose.msra.mxu0 0
      %1436 = vmatprep.subr.bf16.mxu0 0
      %1437 = vmatpush1.bf16.xpose.msra.mxu0 0
      %1438 = vmatprep.subr.bf16.mxu0 0
      %1439 = vmatpush1.bf16.xpose.msra.mxu0 0
      %1440 = vmatprep.subr.bf16.mxu0 0
      %1441 = vmatpush1.bf16.xpose.msra.mxu0 0
      %1442 = vmatprep.subr.bf16.mxu0 0
      %1443 = vmatpush1.bf16.xpose.msra.mxu0 0
      %1444 = vmatprep.subr.bf16.mxu0 0
      %1445 = vmatpush1.bf16.xpose.msra.mxu0 0
      %1446 = vmatprep.subr.bf16.mxu0 0
      %1447 = vmatpush1.bf16.xpose.msra.mxu0 0
      %1448 = vmatprep.subr.bf16.mxu0 0
      %1449 = vmatpush1.bf16.xpose.msra.mxu0 0
      %1450 = vmatprep.subr.bf16.mxu0 0
      %1451 = vmatpush1.bf16.xpose.msra.mxu0 0
      %1452 = vmatprep.subr.bf16.mxu0 0
      %1453 = vmatpush1.bf16.xpose.msra.mxu0 0
      %1454 = vmatprep.subr.bf16.mxu0 0
      %1455 = vmatpush1.bf16.xpose.msra.mxu0 0
      %1456 = vmatprep.subr.bf16.mxu0 0
      %1457 = vmatpush1.bf16.xpose.msra.mxu0 0
      %1458 = vmatprep.subr.bf16.mxu0 0
      %1459 = vmatpush1.bf16.xpose.msra.mxu0 0
      %1460 = vmatprep.subr.bf16.mxu0 0
      %1461 = vmatpush1.bf16.xpose.msra.mxu0 0
      %1462 = vmatprep.subr.bf16.mxu0 0
      %1463 = vmatpush1.bf16.xpose.msra.mxu0 0
      %1464 = vmatprep.mubr.bf16.mxu0 0
      %1465 = vmatmul.mubr.bf16.gmra.mrb[0].mxu0 %v1429
      %v1466 = vpop.f32.mrb[0].mxu0
      %v1467 = vadd.f32 0.0, %v1466
      %v1468 = vpop.f32.mrb[0].mxu0
      %v1469 = vpop.f32.mrb[0].mxu0
      %v1470 = vpop.f32.mrb[0].mxu0
      %1471 = vdwg.mxu0
      %v1472 = vmul.f32 %v1467, 0.35355338
      %v1473 = vsel %vm1306, -1e+09, %v1472
      %v1474 = vsel %vm1352, %v1473, -inf
      %1475 = vmax.xlane.f32.xlu0 %v1474
      %v1476 = vpop.xlane.xlu0 %1475
      %v1477 = vsub.f32 %v1473, %v1476
      %v1478 = vmul.f32 %v1477, 1.442695
      %v1479 = vpow.pop %v1478
      %v1480 = vsel %vm1352, %v1479, 0.0
      %1481 = vadd.xlane.f32.xlu0 %v1480
      %v1482 = vpop.xlane.xlu0 %1481
      %v1483 = vrcp.pop %v1482
      %v1484 = vmul.f32 %v1479, %v1483
      %v1485 = vpack.c.bf16 %v1484, %v1484
      %v1487 = vsel %vm1352, %v1485, 0
      %v1490 = vsel %vm1368, %v1431, 0
      %1492 = vmatprep.subr.bf16.mxu0 0
      %1493 = vmatpush1.bf16.msra.mxu0 %v1490
      %1494 = vmatprep.subr.bf16.mxu0 0
      %1495 = vmatpush1.bf16.msra.mxu0 0
      %1496 = vmatprep.subr.bf16.mxu0 0
      %1497 = vmatpush1.bf16.msra.mxu0 0
      %1498 = vmatprep.subr.bf16.mxu0 0
      %1499 = vmatpush1.bf16.msra.mxu0 0
      %1500 = vmatprep.subr.bf16.mxu0 0
      %1501 = vmatpush1.bf16.msra.mxu0 0
      %1502 = vmatprep.subr.bf16.mxu0 0
      %1503 = vmatpush1.bf16.msra.mxu0 0
      %1504 = vmatprep.subr.bf16.mxu0 0
      %1505 = vmatpush1.bf16.msra.mxu0 0
      %1506 = vmatprep.subr.bf16.mxu0 0
      %1507 = vmatpush1.bf16.msra.mxu0 0
      %1508 = vmatprep.subr.bf16.mxu0 0
      %1509 = vmatpush1.bf16.msra.mxu0 0
      %1510 = vmatprep.subr.bf16.mxu0 0
      %1511 = vmatpush1.bf16.msra.mxu0 0
      %1512 = vmatprep.subr.bf16.mxu0 0
      %1513 = vmatpush1.bf16.msra.mxu0 0
      %1514 = vmatprep.subr.bf16.mxu0 0
      %1515 = vmatpush1.bf16.msra.mxu0 0
      %1516 = vmatprep.subr.bf16.mxu0 0
      %1517 = vmatpush1.bf16.msra.mxu0 0
      %1518 = vmatprep.subr.bf16.mxu0 0
      %1519 = vmatpush1.bf16.msra.mxu0 0
      %1520 = vmatprep.subr.bf16.mxu0 0
      %1521 = vmatpush1.bf16.msra.mxu0 0
      %1522 = vmatprep.subr.bf16.mxu0 0
      %1523 = vmatpush1.bf16.msra.mxu0 0
      %1524 = vmatprep.mubr.bf16.mxu0 0
      %1525 = vmatmul.mubr.bf16.gmra.mrb[0].mxu0 %v1487
      %v1526 = vpop.f32.mrb[0].mxu0
      %v1527 = vadd.f32 0.0, %v1526
      %v1528 = vpop.f32.mrb[0].mxu0
      %v1529 = vpop.f32.mrb[0].mxu0
      %v1530 = vpop.f32.mrb[0].mxu0
      %1531 = vdwg.mxu0
      %v1532 = vpack.c.bf16 %v1527, %v1527
      %v1533 = vld [vmem:[%s7 + $0x40] sm:$0xf]
      %v1534 = vld [vmem:[%s7 + $0x44] sm:$0xf]
      %v1535 = vld [vmem:[%s7 + $0x48] sm:$0xf]
      %v1536 = vld [vmem:[%s7 + $0x4c] sm:$0xf]
      %v1537 = vld [vmem:[%s7 + $0x50] sm:$0xf]
      %v1538 = vld [vmem:[%s7 + $0x54] sm:$0xf]
      %v1539 = vld [vmem:[%s7 + $0x58] sm:$0xf]
      %v1540 = vld [vmem:[%s7 + $0x5c] sm:$0xf]
      %v1541 = vld [vmem:[%s7 + $0x60] sm:$0xf]
      %v1542 = vld [vmem:[%s7 + $0x64] sm:$0xf]
      %v1543 = vld [vmem:[%s7 + $0x68] sm:$0xf]
      %v1544 = vld [vmem:[%s7 + $0x6c] sm:$0xf]
      %v1545 = vld [vmem:[%s7 + $0x70] sm:$0xf]
      %v1546 = vld [vmem:[%s7 + $0x74] sm:$0xf]
      %v1547 = vld [vmem:[%s7 + $0x78] sm:$0xf]
      %v1548 = vld [vmem:[%s7 + $0x7c] sm:$0xf]
      %v1565 = vunpack.c.l.b16 %v1533
      %v1566 = vunpack.c.l.b16 %v1534
      %v1567 = vunpack.c.l.b16 %v1535
      %v1568 = vunpack.c.l.b16 %v1536
      %v1569 = vunpack.c.l.b16 %v1537
      %v1570 = vunpack.c.l.b16 %v1538
      %v1571 = vunpack.c.l.b16 %v1539
      %v1572 = vunpack.c.l.b16 %v1540
      %v1573 = vunpack.c.l.b16 %v1541
      %v1574 = vunpack.c.l.b16 %v1542
      %v1575 = vunpack.c.l.b16 %v1543
      %v1576 = vunpack.c.l.b16 %v1544
      %v1577 = vunpack.c.l.b16 %v1545
      %v1578 = vunpack.c.l.b16 %v1546
      %v1579 = vunpack.c.l.b16 %v1547
      %v1580 = vunpack.c.l.b16 %v1548
      %v1581 = vpack.c.b16 %v1566, %v1565
      %v1582 = vpack.c.b16 %v1568, %v1567
      %v1583 = vpack.c.b16 %v1570, %v1569
      %v1584 = vpack.c.b16 %v1572, %v1571
      %v1585 = vpack.c.b16 %v1574, %v1573
      %v1586 = vpack.c.b16 %v1576, %v1575
      %v1587 = vpack.c.b16 %v1578, %v1577
      %v1588 = vpack.c.b16 %v1580, %v1579
      %1597 = vmatprep.subr.bf16.mxu0 0
      %1598 = vmatpush1.bf16.msra.mxu0 %v1581
      %1599 = vmatprep.subr.bf16.mxu0 0
      %1600 = vmatpush1.bf16.msra.mxu0 %v1582
      %1601 = vmatprep.subr.bf16.mxu0 0
      %1602 = vmatpush1.bf16.msra.mxu0 %v1583
      %1603 = vmatprep.subr.bf16.mxu0 0
      %1604 = vmatpush1.bf16.msra.mxu0 %v1584
      %1605 = vmatprep.subr.bf16.mxu0 0
      %1606 = vmatpush1.bf16.msra.mxu0 %v1585
      %1607 = vmatprep.subr.bf16.mxu0 0
      %1608 = vmatpush1.bf16.msra.mxu0 %v1586
      %1609 = vmatprep.subr.bf16.mxu0 0
      %1610 = vmatpush1.bf16.msra.mxu0 %v1587
      %1611 = vmatprep.subr.bf16.mxu0 0
      %1612 = vmatpush1.bf16.msra.mxu0 %v1588
      %1613 = vmatprep.subr.bf16.mxu0 0
      %1614 = vmatpush1.bf16.msra.mxu0 0
      %1615 = vmatprep.subr.bf16.mxu0 0
      %1616 = vmatpush1.bf16.msra.mxu0 0
      %1617 = vmatprep.subr.bf16.mxu0 0
      %1618 = vmatpush1.bf16.msra.mxu0 0
      %1619 = vmatprep.subr.bf16.mxu0 0
      %1620 = vmatpush1.bf16.msra.mxu0 0
      %1621 = vmatprep.subr.bf16.mxu0 0
      %1622 = vmatpush1.bf16.msra.mxu0 0
      %1623 = vmatprep.subr.bf16.mxu0 0
      %1624 = vmatpush1.bf16.msra.mxu0 0
      %1625 = vmatprep.subr.bf16.mxu0 0
      %1626 = vmatpush1.bf16.msra.mxu0 0
      %1627 = vmatprep.subr.bf16.mxu0 0
      %1628 = vmatpush1.bf16.msra.mxu0 0
      %1629 = vmatprep.mubr.bf16.mxu0 0
      %1630 = vmatmul.mubr.bf16.gmra.mrb[0].mxu0 %v1532
      %v1631 = vpop.f32.mrb[0].mxu0
      %v1632 = vadd.f32 0.0, %v1631
      %v1633 = vpop.f32.mrb[0].mxu0
      %v1634 = vpop.f32.mrb[0].mxu0
      %v1635 = vpop.f32.mrb[0].mxu0
      %1636 = vdwg.mxu0
      %v1653 = vunpack.c.l.b16 %v1413
      %v1654 = vunpack.c.l.b16 %v1414
      %v1655 = vunpack.c.l.b16 %v1415
      %v1656 = vunpack.c.l.b16 %v1416
      %v1657 = vunpack.c.l.b16 %v1417
      %v1658 = vunpack.c.l.b16 %v1418
      %v1659 = vunpack.c.l.b16 %v1419
      %v1660 = vunpack.c.l.b16 %v1420
      %v1661 = vunpack.c.l.b16 %v1421
      %v1662 = vunpack.c.l.b16 %v1422
      %v1663 = vunpack.c.l.b16 %v1423
      %v1664 = vunpack.c.l.b16 %v1424
      %v1665 = vunpack.c.l.b16 %v1425
      %v1666 = vunpack.c.l.b16 %v1426
      %v1667 = vunpack.c.l.b16 %v1427
      %v1668 = vunpack.c.l.b16 %v1428
      %v1669 = vpack.c.b16 %v1654, %v1653
      %v1670 = vpack.c.b16 %v1656, %v1655
      %v1671 = vpack.c.b16 %v1658, %v1657
      %v1672 = vpack.c.b16 %v1660, %v1659
      %v1673 = vpack.c.b16 %v1662, %v1661
      %v1674 = vpack.c.b16 %v1664, %v1663
      %v1675 = vpack.c.b16 %v1666, %v1665
      %v1676 = vpack.c.b16 %v1668, %v1667
      %1685 = vmatprep.subr.bf16.mxu0 0
      %1686 = vmatpush1.bf16.msra.mxu0 %v1669
      %1687 = vmatprep.subr.bf16.mxu0 0
      %1688 = vmatpush1.bf16.msra.mxu0 %v1670
      %1689 = vmatprep.subr.bf16.mxu0 0
      %1690 = vmatpush1.bf16.msra.mxu0 %v1671
      %1691 = vmatprep.subr.bf16.mxu0 0
      %1692 = vmatpush1.bf16.msra.mxu0 %v1672
      %1693 = vmatprep.subr.bf16.mxu0 0
      %1694 = vmatpush1.bf16.msra.mxu0 %v1673
      %1695 = vmatprep.subr.bf16.mxu0 0
      %1696 = vmatpush1.bf16.msra.mxu0 %v1674
      %1697 = vmatprep.subr.bf16.mxu0 0
      %1698 = vmatpush1.bf16.msra.mxu0 %v1675
      %1699 = vmatprep.subr.bf16.mxu0 0
      %1700 = vmatpush1.bf16.msra.mxu0 %v1676
      %1701 = vmatprep.subr.bf16.mxu0 0
      %1702 = vmatpush1.bf16.msra.mxu0 0
      %1703 = vmatprep.subr.bf16.mxu0 0
      %1704 = vmatpush1.bf16.msra.mxu0 0
      %1705 = vmatprep.subr.bf16.mxu0 0
      %1706 = vmatpush1.bf16.msra.mxu0 0
      %1707 = vmatprep.subr.bf16.mxu0 0
      %1708 = vmatpush1.bf16.msra.mxu0 0
      %1709 = vmatprep.subr.bf16.mxu0 0
      %1710 = vmatpush1.bf16.msra.mxu0 0
      %1711 = vmatprep.subr.bf16.mxu0 0
      %1712 = vmatpush1.bf16.msra.mxu0 0
      %1713 = vmatprep.subr.bf16.mxu0 0
      %1714 = vmatpush1.bf16.msra.mxu0 0
      %1715 = vmatprep.subr.bf16.mxu0 0
      %1716 = vmatpush1.bf16.msra.mxu0 0
      %1717 = vmatprep.mubr.bf16.mxu0 0
      %1718 = vmatmul.mubr.bf16.gmra.mrb[0].mxu0 %v1412
      %v1719 = vpop.f32.mrb[0].mxu0
      %v1720 = vadd.f32 %v1632, %v1719
      %v1721 = vpop.f32.mrb[0].mxu0
      %v1722 = vpop.f32.mrb[0].mxu0
      %v1723 = vpop.f32.mrb[0].mxu0
      %1724 = vdwg.mxu0
      %v1725 = vpack.c.bf16 %v709, %v709
      %v1726 = vpack.c.bf16 %v1217, %v1217
      %v1727 = vpack.c.bf16 %v1299, %v1299
      %1728 = vmatprep.subr.bf16.mxu0 0
      %1729 = vmatpush1.bf16.xpose.msra.mxu0 %v1726
      %1730 = vmatprep.subr.bf16.mxu0 0
      %1731 = vmatpush1.bf16.xpose.msra.mxu0 0
      %1732 = vmatprep.subr.bf16.mxu0 0
      %1733 = vmatpush1.bf16.xpose.msra.mxu0 0
      %1734 = vmatprep.subr.bf16.mxu0 0
      %1735 = vmatpush1.bf16.xpose.msra.mxu0 0
      %1736 = vmatprep.subr.bf16.mxu0 0
      %1737 = vmatpush1.bf16.xpose.msra.mxu0 0
      %1738 = vmatprep.subr.bf16.mxu0 0
      %1739 = vmatpush1.bf16.xpose.msra.mxu0 0
      %1740 = vmatprep.subr.bf16.mxu0 0
      %1741 = vmatpush1.bf16.xpose.msra.mxu0 0
      %1742 = vmatprep.subr.bf16.mxu0 0
      %1743 = vmatpush1.bf16.xpose.msra.mxu0 0
      %1744 = vmatprep.subr.bf16.mxu0 0
      %1745 = vmatpush1.bf16.xpose.msra.mxu0 0
      %1746 = vmatprep.subr.bf16.mxu0 0
      %1747 = vmatpush1.bf16.xpose.msra.mxu0 0
      %1748 = vmatprep.subr.bf16.mxu0 0
      %1749 = vmatpush1.bf16.xpose.msra.mxu0 0
      %1750 = vmatprep.subr.bf16.mxu0 0
      %1751 = vmatpush1.bf16.xpose.msra.mxu0 0
      %1752 = vmatprep.subr.bf16.mxu0 0
      %1753 = vmatpush1.bf16.xpose.msra.mxu0 0
      %1754 = vmatprep.subr.bf16.mxu0 0
      %1755 = vmatpush1.bf16.xpose.msra.mxu0 0
      %1756 = vmatprep.subr.bf16.mxu0 0
      %1757 = vmatpush1.bf16.xpose.msra.mxu0 0
      %1758 = vmatprep.subr.bf16.mxu0 0
      %1759 = vmatpush1.bf16.xpose.msra.mxu0 0
      %1760 = vmatprep.mubr.bf16.mxu0 0
      %1761 = vmatmul.mubr.bf16.gmra.mrb[0].mxu0 %v1725
      %v1762 = vpop.f32.mrb[0].mxu0
      %v1763 = vadd.f32 0.0, %v1762
      %v1764 = vpop.f32.mrb[0].mxu0
      %v1765 = vpop.f32.mrb[0].mxu0
      %v1766 = vpop.f32.mrb[0].mxu0
      %1767 = vdwg.mxu0
      %v1768 = vmul.f32 %v1763, 0.35355338
      %v1769 = vsel %vm1306, -1e+09, %v1768
      %v1770 = vsel %vm1352, %v1769, -inf
      %1771 = vmax.xlane.f32.xlu0 %v1770
      %v1772 = vpop.xlane.xlu0 %1771
      %v1773 = vsub.f32 %v1769, %v1772
      %v1774 = vmul.f32 %v1773, 1.442695
      %v1775 = vpow.pop %v1774
      %v1776 = vsel %vm1352, %v1775, 0.0
      %1777 = vadd.xlane.f32.xlu0 %v1776
      %v1778 = vpop.xlane.xlu0 %1777
      %v1779 = vrcp.pop %v1778
      %v1780 = vmul.f32 %v1775, %v1779
      %v1781 = vpack.c.bf16 %v1780, %v1780
      %v1783 = vsel %vm1352, %v1781, 0
      %v1786 = vsel %vm1368, %v1727, 0
      %1788 = vmatprep.subr.bf16.mxu0 0
      %1789 = vmatpush1.bf16.msra.mxu0 %v1786
      %1790 = vmatprep.subr.bf16.mxu0 0
      %1791 = vmatpush1.bf16.msra.mxu0 0
      %1792 = vmatprep.subr.bf16.mxu0 0
      %1793 = vmatpush1.bf16.msra.mxu0 0
      %1794 = vmatprep.subr.bf16.mxu0 0
      %1795 = vmatpush1.bf16.msra.mxu0 0
      %1796 = vmatprep.subr.bf16.mxu0 0
      %1797 = vmatpush1.bf16.msra.mxu0 0
      %1798 = vmatprep.subr.bf16.mxu0 0
      %1799 = vmatpush1.bf16.msra.mxu0 0
      %1800 = vmatprep.subr.bf16.mxu0 0
      %1801 = vmatpush1.bf16.msra.mxu0 0
      %1802 = vmatprep.subr.bf16.mxu0 0
      %1803 = vmatpush1.bf16.msra.mxu0 0
      %1804 = vmatprep.subr.bf16.mxu0 0
      %1805 = vmatpush1.bf16.msra.mxu0 0
      %1806 = vmatprep.subr.bf16.mxu0 0
      %1807 = vmatpush1.bf16.msra.mxu0 0
      %1808 = vmatprep.subr.bf16.mxu0 0
      %1809 = vmatpush1.bf16.msra.mxu0 0
      %1810 = vmatprep.subr.bf16.mxu0 0
      %1811 = vmatpush1.bf16.msra.mxu0 0
      %1812 = vmatprep.subr.bf16.mxu0 0
      %1813 = vmatpush1.bf16.msra.mxu0 0
      %1814 = vmatprep.subr.bf16.mxu0 0
      %1815 = vmatpush1.bf16.msra.mxu0 0
      %1816 = vmatprep.subr.bf16.mxu0 0
      %1817 = vmatpush1.bf16.msra.mxu0 0
      %1818 = vmatprep.subr.bf16.mxu0 0
      %1819 = vmatpush1.bf16.msra.mxu0 0
      %1820 = vmatprep.mubr.bf16.mxu0 0
      %1821 = vmatmul.mubr.bf16.gmra.mrb[0].mxu0 %v1783
      %v1822 = vpop.f32.mrb[0].mxu0
      %v1823 = vadd.f32 0.0, %v1822
      %v1824 = vpop.f32.mrb[0].mxu0
      %v1825 = vpop.f32.mrb[0].mxu0
      %v1826 = vpop.f32.mrb[0].mxu0
      %1827 = vdwg.mxu0
      %v1828 = vpack.c.bf16 %v1823, %v1823
      %v1829 = vld [vmem:[%s7 + $0x80] sm:$0xf]
      %v1830 = vld [vmem:[%s7 + $0x84] sm:$0xf]
      %v1831 = vld [vmem:[%s7 + $0x88] sm:$0xf]
      %v1832 = vld [vmem:[%s7 + $0x8c] sm:$0xf]
      %v1833 = vld [vmem:[%s7 + $0x90] sm:$0xf]
      %v1834 = vld [vmem:[%s7 + $0x94] sm:$0xf]
      %v1835 = vld [vmem:[%s7 + $0x98] sm:$0xf]
      %v1836 = vld [vmem:[%s7 + $0x9c] sm:$0xf]
      %v1837 = vld [vmem:[%s7 + $0xa0] sm:$0xf]
      %v1838 = vld [vmem:[%s7 + $0xa4] sm:$0xf]
      %v1839 = vld [vmem:[%s7 + $0xa8] sm:$0xf]
      %v1840 = vld [vmem:[%s7 + $0xac] sm:$0xf]
      %v1841 = vld [vmem:[%s7 + $0xb0] sm:$0xf]
      %v1842 = vld [vmem:[%s7 + $0xb4] sm:$0xf]
      %v1843 = vld [vmem:[%s7 + $0xb8] sm:$0xf]
      %v1844 = vld [vmem:[%s7 + $0xbc] sm:$0xf]
      %v1861 = vunpack.c.l.b16 %v1829
      %v1862 = vunpack.c.l.b16 %v1830
      %v1863 = vunpack.c.l.b16 %v1831
      %v1864 = vunpack.c.l.b16 %v1832
      %v1865 = vunpack.c.l.b16 %v1833
      %v1866 = vunpack.c.l.b16 %v1834
      %v1867 = vunpack.c.l.b16 %v1835
      %v1868 = vunpack.c.l.b16 %v1836
      %v1869 = vunpack.c.l.b16 %v1837
      %v1870 = vunpack.c.l.b16 %v1838
      %v1871 = vunpack.c.l.b16 %v1839
      %v1872 = vunpack.c.l.b16 %v1840
      %v1873 = vunpack.c.l.b16 %v1841
      %v1874 = vunpack.c.l.b16 %v1842
      %v1875 = vunpack.c.l.b16 %v1843
      %v1876 = vunpack.c.l.b16 %v1844
      %v1877 = vpack.c.b16 %v1862, %v1861
      %v1878 = vpack.c.b16 %v1864, %v1863
      %v1879 = vpack.c.b16 %v1866, %v1865
      %v1880 = vpack.c.b16 %v1868, %v1867
      %v1881 = vpack.c.b16 %v1870, %v1869
      %v1882 = vpack.c.b16 %v1872, %v1871
      %v1883 = vpack.c.b16 %v1874, %v1873
      %v1884 = vpack.c.b16 %v1876, %v1875
      %1893 = vmatprep.subr.bf16.mxu0 0
      %1894 = vmatpush1.bf16.msra.mxu0 %v1877
      %1895 = vmatprep.subr.bf16.mxu0 0
      %1896 = vmatpush1.bf16.msra.mxu0 %v1878
      %1897 = vmatprep.subr.bf16.mxu0 0
      %1898 = vmatpush1.bf16.msra.mxu0 %v1879
      %1899 = vmatprep.subr.bf16.mxu0 0
      %1900 = vmatpush1.bf16.msra.mxu0 %v1880
      %1901 = vmatprep.subr.bf16.mxu0 0
      %1902 = vmatpush1.bf16.msra.mxu0 %v1881
      %1903 = vmatprep.subr.bf16.mxu0 0
      %1904 = vmatpush1.bf16.msra.mxu0 %v1882
      %1905 = vmatprep.subr.bf16.mxu0 0
      %1906 = vmatpush1.bf16.msra.mxu0 %v1883
      %1907 = vmatprep.subr.bf16.mxu0 0
      %1908 = vmatpush1.bf16.msra.mxu0 %v1884
      %1909 = vmatprep.subr.bf16.mxu0 0
      %1910 = vmatpush1.bf16.msra.mxu0 0
      %1911 = vmatprep.subr.bf16.mxu0 0
      %1912 = vmatpush1.bf16.msra.mxu0 0
      %1913 = vmatprep.subr.bf16.mxu0 0
      %1914 = vmatpush1.bf16.msra.mxu0 0
      %1915 = vmatprep.subr.bf16.mxu0 0
      %1916 = vmatpush1.bf16.msra.mxu0 0
      %1917 = vmatprep.subr.bf16.mxu0 0
      %1918 = vmatpush1.bf16.msra.mxu0 0
      %1919 = vmatprep.subr.bf16.mxu0 0
      %1920 = vmatpush1.bf16.msra.mxu0 0
      %1921 = vmatprep.subr.bf16.mxu0 0
      %1922 = vmatpush1.bf16.msra.mxu0 0
      %1923 = vmatprep.subr.bf16.mxu0 0
      %1924 = vmatpush1.bf16.msra.mxu0 0
      %1925 = vmatprep.mubr.bf16.mxu0 0
      %1926 = vmatmul.mubr.bf16.gmra.mrb[0].mxu0 %v1828
      %v1927 = vpop.f32.mrb[0].mxu0
      %v1928 = vadd.f32 0.0, %v1927
      %v1929 = vpop.f32.mrb[0].mxu0
      %v1930 = vpop.f32.mrb[0].mxu0
      %v1931 = vpop.f32.mrb[0].mxu0
      %1932 = vdwg.mxu0
      %v1933 = vadd.f32 %v1720, %v1928
      %v1934 = vpack.c.bf16 %v711, %v711
      %v1935 = vpack.c.bf16 %v1219, %v1219
      %v1936 = vpack.c.bf16 %v1301, %v1301
      %1937 = vmatprep.subr.bf16.mxu0 0
      %1938 = vmatpush1.bf16.xpose.msra.mxu0 %v1935
      %1939 = vmatprep.subr.bf16.mxu0 0
      %1940 = vmatpush1.bf16.xpose.msra.mxu0 0
      %1941 = vmatprep.subr.bf16.mxu0 0
      %1942 = vmatpush1.bf16.xpose.msra.mxu0 0
      %1943 = vmatprep.subr.bf16.mxu0 0
      %1944 = vmatpush1.bf16.xpose.msra.mxu0 0
      %1945 = vmatprep.subr.bf16.mxu0 0
      %1946 = vmatpush1.bf16.xpose.msra.mxu0 0
      %1947 = vmatprep.subr.bf16.mxu0 0
      %1948 = vmatpush1.bf16.xpose.msra.mxu0 0
      %1949 = vmatprep.subr.bf16.mxu0 0
      %1950 = vmatpush1.bf16.xpose.msra.mxu0 0
      %1951 = vmatprep.subr.bf16.mxu0 0
      %1952 = vmatpush1.bf16.xpose.msra.mxu0 0
      %1953 = vmatprep.subr.bf16.mxu0 0
      %1954 = vmatpush1.bf16.xpose.msra.mxu0 0
      %1955 = vmatprep.subr.bf16.mxu0 0
      %1956 = vmatpush1.bf16.xpose.msra.mxu0 0
      %1957 = vmatprep.subr.bf16.mxu0 0
      %1958 = vmatpush1.bf16.xpose.msra.mxu0 0
      %1959 = vmatprep.subr.bf16.mxu0 0
      %1960 = vmatpush1.bf16.xpose.msra.mxu0 0
      %1961 = vmatprep.subr.bf16.mxu0 0
      %1962 = vmatpush1.bf16.xpose.msra.mxu0 0
      %1963 = vmatprep.subr.bf16.mxu0 0
      %1964 = vmatpush1.bf16.xpose.msra.mxu0 0
      %1965 = vmatprep.subr.bf16.mxu0 0
      %1966 = vmatpush1.bf16.xpose.msra.mxu0 0
      %1967 = vmatprep.subr.bf16.mxu0 0
      %1968 = vmatpush1.bf16.xpose.msra.mxu0 0
      %1969 = vmatprep.mubr.bf16.mxu0 0
      %1970 = vmatmul.mubr.bf16.gmra.mrb[0].mxu0 %v1934
      %v1971 = vpop.f32.mrb[0].mxu0
      %v1972 = vadd.f32 0.0, %v1971
      %v1973 = vpop.f32.mrb[0].mxu0
      %v1974 = vpop.f32.mrb[0].mxu0
      %v1975 = vpop.f32.mrb[0].mxu0
      %1976 = vdwg.mxu0
      %v1977 = vmul.f32 %v1972, 0.35355338
      %v1978 = vsel %vm1306, -1e+09, %v1977
      %v1979 = vsel %vm1352, %v1978, -inf
      %1980 = vmax.xlane.f32.xlu0 %v1979
      %v1981 = vpop.xlane.xlu0 %1980
      %v1982 = vsub.f32 %v1978, %v1981
      %v1983 = vmul.f32 %v1982, 1.442695
      %v1984 = vpow.pop %v1983
      %v1985 = vsel %vm1352, %v1984, 0.0
      %1986 = vadd.xlane.f32.xlu0 %v1985
      %v1987 = vpop.xlane.xlu0 %1986
      %v1988 = vrcp.pop %v1987
      %v1989 = vmul.f32 %v1984, %v1988
      %v1990 = vpack.c.bf16 %v1989, %v1989
      %v1992 = vsel %vm1352, %v1990, 0
      %v1995 = vsel %vm1368, %v1936, 0
      %1997 = vmatprep.subr.bf16.mxu0 0
      %1998 = vmatpush1.bf16.msra.mxu0 %v1995
      %1999 = vmatprep.subr.bf16.mxu0 0
      %2000 = vmatpush1.bf16.msra.mxu0 0
      %2001 = vmatprep.subr.bf16.mxu0 0
      %2002 = vmatpush1.bf16.msra.mxu0 0
      %2003 = vmatprep.subr.bf16.mxu0 0
      %2004 = vmatpush1.bf16.msra.mxu0 0
      %2005 = vmatprep.subr.bf16.mxu0 0
      %2006 = vmatpush1.bf16.msra.mxu0 0
      %2007 = vmatprep.subr.bf16.mxu0 0
      %2008 = vmatpush1.bf16.msra.mxu0 0
      %2009 = vmatprep.subr.bf16.mxu0 0
      %2010 = vmatpush1.bf16.msra.mxu0 0
      %2011 = vmatprep.subr.bf16.mxu0 0
      %2012 = vmatpush1.bf16.msra.mxu0 0
      %2013 = vmatprep.subr.bf16.mxu0 0
      %2014 = vmatpush1.bf16.msra.mxu0 0
      %2015 = vmatprep.subr.bf16.mxu0 0
      %2016 = vmatpush1.bf16.msra.mxu0 0
      %2017 = vmatprep.subr.bf16.mxu0 0
      %2018 = vmatpush1.bf16.msra.mxu0 0
      %2019 = vmatprep.subr.bf16.mxu0 0
      %2020 = vmatpush1.bf16.msra.mxu0 0
      %2021 = vmatprep.subr.bf16.mxu0 0
      %2022 = vmatpush1.bf16.msra.mxu0 0
      %2023 = vmatprep.subr.bf16.mxu0 0
      %2024 = vmatpush1.bf16.msra.mxu0 0
      %2025 = vmatprep.subr.bf16.mxu0 0
      %2026 = vmatpush1.bf16.msra.mxu0 0
      %2027 = vmatprep.subr.bf16.mxu0 0
      %2028 = vmatpush1.bf16.msra.mxu0 0
      %2029 = vmatprep.mubr.bf16.mxu0 0
      %2030 = vmatmul.mubr.bf16.gmra.mrb[0].mxu0 %v1992
      %v2031 = vpop.f32.mrb[0].mxu0
      %v2032 = vadd.f32 0.0, %v2031
      %v2033 = vpop.f32.mrb[0].mxu0
      %v2034 = vpop.f32.mrb[0].mxu0
      %v2035 = vpop.f32.mrb[0].mxu0
      %2036 = vdwg.mxu0
      %v2037 = vpack.c.bf16 %v2032, %v2032
      %v2038 = vld [vmem:[%s7 + $0xc0] sm:$0xf]
      %v2039 = vld [vmem:[%s7 + $0xc4] sm:$0xf]
      %v2040 = vld [vmem:[%s7 + $0xc8] sm:$0xf]
      %v2041 = vld [vmem:[%s7 + $0xcc] sm:$0xf]
      %v2042 = vld [vmem:[%s7 + $0xd0] sm:$0xf]
      %v2043 = vld [vmem:[%s7 + $0xd4] sm:$0xf]
      %v2044 = vld [vmem:[%s7 + $0xd8] sm:$0xf]
      %v2045 = vld [vmem:[%s7 + $0xdc] sm:$0xf]
      %v2046 = vld [vmem:[%s7 + $0xe0] sm:$0xf]
      %v2047 = vld [vmem:[%s7 + $0xe4] sm:$0xf]
      %v2048 = vld [vmem:[%s7 + $0xe8] sm:$0xf]
      %v2049 = vld [vmem:[%s7 + $0xec] sm:$0xf]
      %v2050 = vld [vmem:[%s7 + $0xf0] sm:$0xf]
      %v2051 = vld [vmem:[%s7 + $0xf4] sm:$0xf]
      %v2052 = vld [vmem:[%s7 + $0xf8] sm:$0xf]
      %v2053 = vld [vmem:[%s7 + $0xfc] sm:$0xf]
      %v2070 = vunpack.c.l.b16 %v2038
      %v2071 = vunpack.c.l.b16 %v2039
      %v2072 = vunpack.c.l.b16 %v2040
      %v2073 = vunpack.c.l.b16 %v2041
      %v2074 = vunpack.c.l.b16 %v2042
      %v2075 = vunpack.c.l.b16 %v2043
      %v2076 = vunpack.c.l.b16 %v2044
      %v2077 = vunpack.c.l.b16 %v2045
      %v2078 = vunpack.c.l.b16 %v2046
      %v2079 = vunpack.c.l.b16 %v2047
      %v2080 = vunpack.c.l.b16 %v2048
      %v2081 = vunpack.c.l.b16 %v2049
      %v2082 = vunpack.c.l.b16 %v2050
      %v2083 = vunpack.c.l.b16 %v2051
      %v2084 = vunpack.c.l.b16 %v2052
      %v2085 = vunpack.c.l.b16 %v2053
      %v2086 = vpack.c.b16 %v2071, %v2070
      %v2087 = vpack.c.b16 %v2073, %v2072
      %v2088 = vpack.c.b16 %v2075, %v2074
      %v2089 = vpack.c.b16 %v2077, %v2076
      %v2090 = vpack.c.b16 %v2079, %v2078
      %v2091 = vpack.c.b16 %v2081, %v2080
      %v2092 = vpack.c.b16 %v2083, %v2082
      %v2093 = vpack.c.b16 %v2085, %v2084
      %2102 = vmatprep.subr.bf16.mxu0 0
      %2103 = vmatpush1.bf16.msra.mxu0 %v2086
      %2104 = vmatprep.subr.bf16.mxu0 0
      %2105 = vmatpush1.bf16.msra.mxu0 %v2087
      %2106 = vmatprep.subr.bf16.mxu0 0
      %2107 = vmatpush1.bf16.msra.mxu0 %v2088
      %2108 = vmatprep.subr.bf16.mxu0 0
      %2109 = vmatpush1.bf16.msra.mxu0 %v2089
      %2110 = vmatprep.subr.bf16.mxu0 0
      %2111 = vmatpush1.bf16.msra.mxu0 %v2090
      %2112 = vmatprep.subr.bf16.mxu0 0
      %2113 = vmatpush1.bf16.msra.mxu0 %v2091
      %2114 = vmatprep.subr.bf16.mxu0 0
      %2115 = vmatpush1.bf16.msra.mxu0 %v2092
      %2116 = vmatprep.subr.bf16.mxu0 0
      %2117 = vmatpush1.bf16.msra.mxu0 %v2093
      %2118 = vmatprep.subr.bf16.mxu0 0
      %2119 = vmatpush1.bf16.msra.mxu0 0
      %2120 = vmatprep.subr.bf16.mxu0 0
      %2121 = vmatpush1.bf16.msra.mxu0 0
      %2122 = vmatprep.subr.bf16.mxu0 0
      %2123 = vmatpush1.bf16.msra.mxu0 0
      %2124 = vmatprep.subr.bf16.mxu0 0
      %2125 = vmatpush1.bf16.msra.mxu0 0
      %2126 = vmatprep.subr.bf16.mxu0 0
      %2127 = vmatpush1.bf16.msra.mxu0 0
      %2128 = vmatprep.subr.bf16.mxu0 0
      %2129 = vmatpush1.bf16.msra.mxu0 0
      %2130 = vmatprep.subr.bf16.mxu0 0
      %2131 = vmatpush1.bf16.msra.mxu0 0
      %2132 = vmatprep.subr.bf16.mxu0 0
      %2133 = vmatpush1.bf16.msra.mxu0 0
      %2134 = vmatprep.mubr.bf16.mxu0 0
      %2135 = vmatmul.mubr.bf16.gmra.mrb[0].mxu0 %v2037
      %v2136 = vpop.f32.mrb[0].mxu0
      %v2137 = vadd.f32 0.0, %v2136
      %v2138 = vpop.f32.mrb[0].mxu0
      %v2139 = vpop.f32.mrb[0].mxu0
      %v2140 = vpop.f32.mrb[0].mxu0
      %2141 = vdwg.mxu0
      %v2142 = vadd.f32 %v1933, %v2137
      %v2143 = vld [vmem:[%s8] sm:$0x1]
      %v2145 = vlaneseq
      %v2146 = vshrl.u32 %v2145, 7
      %v2147 = vsub.s32 0, %v2146
      %v2148 = vrot.slane %v2143, %v2147
      %v2150 = vadd.f32 %v2142, %v2148
      %v2151 = vunpack.c.l.bf16 %v417
      %v2152 = vadd.f32 %v2150, %v2151
      %v2153 = vld [vmem:[%s9] sm:$0x1]
      %v2154 = vld [vmem:[%s10] sm:$0x1]
      %2155 = vadd.xlane.f32.xlu0 %v2152
      %v2156 = vpop.xlane.xlu0 %2155
      %v2157 = vmul.f32 %v2156, 0.03125
      %v2158 = vmul.f32 %v2152, %v2152
      %2159 = vadd.xlane.f32.xlu0 %v2158
      %v2160 = vpop.xlane.xlu0 %2159
      %v2161 = vmul.f32 %v2160, 0.03125
      %v2162 = vmul.f32 %v2157, %v2157
      %v2163 = vsub.f32 %v2161, %v2162
      %v2164 = vmax.f32 %v2163, 0.0
      %v2165 = vsub.f32 %v2152, %v2157
      %v2166 = vadd.f32 %v2164, 1e-05
      %v2167 = vrsqrt.pop %v2166
      %v2168 = vmul.f32 %v2165, %v2167
      %v2170 = vlaneseq
      %v2171 = vshrl.u32 %v2170, 7
      %v2172 = vsub.s32 0, %v2171
      %v2173 = vrot.slane %v2153, %v2172
      %v2175 = vmul.f32 %v2168, %v2173
      %v2177 = vlaneseq
      %v2178 = vshrl.u32 %v2177, 7
      %v2179 = vsub.s32 0, %v2178
      %v2180 = vrot.slane %v2154, %v2179
      %v2182 = vadd.f32 %v2175, %v2180
      %v2183 = vpack.c.bf16 %v2182, %v2182
      %2184 = vst [vmem:[%s415] sm:$0xf] %v2183
      %p2185 = scmp.lt.s32.totalorder %s22, 1
      %s2186 = scalar_select %p2185, %s22, 1
      %s2187 = smul.addr %s2186, 4
      %s2188 = scalar_lea.vmem %s11, %s2187
      // Predicated region
      $region65: #{transformer_forward.19} parent=63 // pred_check
        %p2189 = pneg %p286
      $region66: #{transformer_forward.19} parent=63 // pred_check_branch
        %2191 = sbr.rel (%p2189) target = $region68
      $region67: #{transformer_forward.19} parent=63 // pred_region
        _
      $region68: #{transformer_forward.19} parent=63 // pred_fallthru
        _
    $region64: #{transformer_forward.19} parent=5 // pred_fallthru
      _
    %p2192 = scmp.le.s32.totalorder 2, %s17
    // Predicated region
    $region69: #{transformer_forward.19} parent=5 // pred_check
      %p2193 = pneg %p2192
    $region70: #{transformer_forward.19} parent=5 // pred_check_branch
      %2195 = sbr.rel (%p2193) target = $region72
    $region71: #{transformer_forward.19} parent=5 // pred_region
      %s2196 = ssub.s32 %s17, 2
      // Predicated region
      $region73: #{transformer_forward.19} parent=71 // pred_check
        %p2197 = pneg %p292
      $region74: #{transformer_forward.19} parent=71 // pred_check_branch
        %2199 = sbr.rel (%p2197) target = $region76
      $region75: #{transformer_forward.19} parent=71 // pred_region
        %p2200 = scmp.lt.s32.totalorder %s23, 1
        %s2201 = scalar_select %p2200, %s23, 1
        %s2202 = smul.addr %s2201, 4
        %s2203 = scalar_lea.vmem %s11, %s2202
      $region76: #{transformer_forward.19} parent=71 // pred_fallthru
        _
    $region72: #{transformer_forward.19} parent=5 // pred_fallthru
      _
  $region6: #{transformer_forward.19} parent=0 // loop_footer
    %s21 = sadd.s32 1, %s17
  $region7: #{transformer_forward.19} parent=0 // loop_footer_branch
    %16 = sbr.rel target = $region3
  $region8: #{transformer_forward.19} parent=0 // loop_exit
    _

</llo_original>
